<compile_context>
chip_gen: v6e
topology: v6e:2x2x1
jax: 0.10.0
libtpu: 0.0.40
codegen_flags: <defaults>
</compile_context>

<pallas_src>
import functools

import jax
import jax.numpy as jnp
from jax import lax
from jax.experimental import pallas as pl
from jax.experimental.pallas import tpu as pltpu


# ----------------------------- Conv + BN + ReLU -----------------------------

def _conv_bn_relu_kernel(x_ref, w_ref, ss_ref, o_ref, *, wo, hw):
    # x_ref : (1, 2, (Ho+1)*Wo, 4*Cin)  bf16  width-shifted sub-sampled input
    # w_ref : (4, 4*Cin, Cout)          bf16  regrouped conv weights
    # ss_ref: (2, Cout)                 f32   folded BN (row0=scale, row1=shift)
    # o_ref : (1, Ho*Wo, Cout)          bf16
    cout = w_ref.shape[-1]
    acc = jnp.zeros((hw, cout), jnp.float32)
    for a in (0, 1):                       # row shift
        for b in (0, 1):                   # col shift (pre-built copy)
            xs = x_ref[0, b, a * wo:a * wo + hw, :]          # (Ho*Wo, 4*Cin)
            acc = acc + jnp.dot(xs, w_ref[2 * a + b],
                                preferred_element_type=jnp.float32)
    y = acc * ss_ref[0:1, :] + ss_ref[1:2, :]                # folded BN (eval)
    o_ref[0, :, :] = jnp.maximum(y, 0.0).astype(o_ref.dtype)


def conv_bn_relu(x_nhwc, w4, ss):
    """x_nhwc: (N,H,W,Cin); w4: (4, 4*Cin, Cout) bf16; ss: (2, Cout) f32."""
    N, H, W, cin = x_nhwc.shape
    assert H % 2 == 0 and W % 2 == 0, (H, W)
    ho, wo = H // 2, W // 2
    hw, hw1 = ho * wo, (ho + 1) * wo
    c4 = 4 * cin
    cout = w4.shape[-1]

    # Space-to-depth: 4 stride-2 sub-images of the padded input, channel-concat.
    xp = jnp.pad(x_nhwc, ((0, 0), (1, 1), (1, 1), (0, 0)))
    xcat = jnp.concatenate(
        [xp[:, di::2, dj::2, :] for di in (0, 1) for dj in (0, 1)], axis=-1)
    # Two width-shifted copies flattened over (row, col); the two row shifts
    # are handled in-kernel by static slices rows [a*Wo : a*Wo + Ho*Wo].
    x0 = xcat[:, :, 0:wo, :].reshape(N, hw1, c4)
    x1 = xcat[:, :, 1:wo + 1, :].reshape(N, hw1, c4)
    xsh = jnp.stack([x0, x1], axis=1).astype(jnp.bfloat16)    # (N, 2, hw1, c4)

    out = pl.pallas_call(
        functools.partial(_conv_bn_relu_kernel, wo=wo, hw=hw),
        out_shape=jax.ShapeDtypeStruct((N, hw, cout), jnp.bfloat16),
        grid=(N,),
        in_specs=[
            pl.BlockSpec((1, 2, hw1, c4), lambda n: (n, 0, 0, 0)),
            pl.BlockSpec((4, c4, cout), lambda n: (0, 0, 0)),
            pl.BlockSpec((2, cout), lambda n: (0, 0)),
        ],
        out_specs=pl.BlockSpec((1, hw, cout), lambda n: (n, 0, 0)),
        compiler_params=pltpu.CompilerParams(
            dimension_semantics=("parallel",)),
    )(xsh, w4, ss)
    return out.reshape(N, ho, wo, cout)


# ------------------------- spatial sum + FC head ----------------------------

def _sum_fc_kernel(x_ref, w1_ref, b1_ref, w2_ref, b2_ref, o_ref):
    # x_ref: (N, H*W, C) bf16 -> sum over spatial, then Linear/ReLU/Linear.
    pooled = jnp.sum(x_ref[...].astype(jnp.float32), axis=1)
    h = jnp.dot(pooled.astype(jnp.bfloat16), w1_ref[...],
                preferred_element_type=jnp.float32) + b1_ref[...]
    h = jnp.maximum(h, 0.0)
    out = jnp.dot(h.astype(jnp.bfloat16), w2_ref[...],
                  preferred_element_type=jnp.float32) + b2_ref[...]
    o_ref[...] = out.astype(o_ref.dtype)


def sum_and_fc(x_nhwc, w1, b1, w2, b2):
    N, ho, wo, c = x_nhwc.shape
    hw = ho * wo
    d1, d2 = w1.shape[1], w2.shape[1]
    x = x_nhwc.reshape(N, hw, c)
    return pl.pallas_call(
        _sum_fc_kernel,
        out_shape=jax.ShapeDtypeStruct((N, d2), jnp.float32),
        grid=(1,),
        in_specs=[
            pl.BlockSpec((N, hw, c), lambda i: (0, 0, 0)),
            pl.BlockSpec((c, d1), lambda i: (0, 0)),
            pl.BlockSpec((1, d1), lambda i: (0, 0)),
            pl.BlockSpec((d1, d2), lambda i: (0, 0)),
            pl.BlockSpec((1, d2), lambda i: (0, 0)),
        ],
        out_specs=pl.BlockSpec((N, d2), lambda i: (0, 0)),
        compiler_params=pltpu.CompilerParams(
            dimension_semantics=("arbitrary",)),
    )(x, w1, b1.reshape(1, -1), w2, b2.reshape(1, -1))


# ------------------------------- Encoder -------------------------------------

def _reorg_conv_weight(w):
    """(Cout, Cin, 4, 4) PyTorch conv weight -> (4, 4*Cin, Cout).
    Index 2a+b selects the (row, col) shift; rows are the 4 sub-image channel
    groups in order s = 2*di + dj (matching the wrapper's channel concat)."""
    mats = []
    for a in (0, 1):
        for b in (0, 1):
            taps = [jnp.transpose(w[:, :, 2 * a + di, 2 * b + dj], (1, 0))
                    for di in (0, 1) for dj in (0, 1)]
            mats.append(jnp.concatenate(taps, axis=0))        # (4*Cin, Cout)
    return jnp.stack(mats, axis=0)


def init_params(key, ndf, img_dim):
    eps = 1e-5
    chans = [img_dim, ndf, ndf * 2, ndf * 4, ndf * 8, ndf * 16]
    convs, convs_ref = [], []
    for l in range(5):
        cin, cout = chans[l], chans[l + 1]
        key, kw, kg, kb, km, kv = jax.random.split(key, 6)
        # PyTorch conv weight layout: (Cout, Cin, kh, kw)
        w = jax.random.normal(kw, (cout, cin, 4, 4), jnp.float32) * 0.05
        gamma = 1.0 + 0.1 * jax.random.normal(kg, (cout,), jnp.float32)
        beta = 0.1 * jax.random.normal(kb, (cout,), jnp.float32)
        rmean = 0.1 * jax.random.normal(km, (cout,), jnp.float32)
        rvar = 1.0 + 0.1 * jax.random.uniform(kv, (cout,), jnp.float32)
        scale = gamma / jnp.sqrt(rvar + eps)
        shift = beta - rmean * scale
        convs.append((_reorg_conv_weight(w).astype(jnp.bfloat16),
                      jnp.stack([scale, shift], axis=0)))
        convs_ref.append((w, scale, shift))

    key, k1, k2, k3, k4 = jax.random.split(key, 5)
    # PyTorch Linear weight layout: (out, in); store transposed for x @ W
    w1 = jax.random.normal(k1, (ndf * 8, ndf * 16), jnp.float32) * 0.05
    b1 = 0.1 * jax.random.normal(k2, (ndf * 8,), jnp.float32)
    w2 = jax.random.normal(k3, (ndf * 2, ndf * 8), jnp.float32) * 0.05
    b2 = 0.1 * jax.random.normal(k4, (ndf * 2,), jnp.float32)
    params = {"convs": convs,
              "fc": (w1.T.astype(jnp.bfloat16), b1,
                     w2.T.astype(jnp.bfloat16), b2)}
    ref_params = {"convs": convs_ref, "fc": (w1.T, b1, w2.T, b2)}
    return params, ref_params, key


@jax.jit
def encoder_forward(x_nchw, params):
    # NCHW (PyTorch convention) -> NHWC for the kernels.
    x = jnp.transpose(x_nchw, (0, 2, 3, 1)).astype(jnp.float32)
    for (w4, ss) in params["convs"]:
        x = conv_bn_relu(x, w4, ss)
    w1, b1, w2, b2 = params["fc"]
    return sum_and_fc(x, w1, b1, w2, b2)


def encoder_reference(x_nchw, ref_params):
    # Pure-JAX f32 reference (eval-mode folded BN), for a sanity check.
    x = jnp.transpose(x_nchw, (0, 2, 3, 1)).astype(jnp.float32)
    for (w, scale, shift) in ref_params["convs"]:
        y = lax.conv_general_dilated(
            x, w, window_strides=(2, 2), padding=((1, 1), (1, 1)),
            dimension_numbers=("NHWC", "OIHW", "NHWC"),
            precision=lax.Precision.HIGHEST)
        x = jnp.maximum(y * scale + shift, 0.0)
    pooled = jnp.sum(x, axis=(1, 2))
    w1, b1, w2, b2 = ref_params["fc"]
    h = jnp.maximum(
        jnp.dot(pooled, w1, precision=lax.Precision.HIGHEST) + b1, 0.0)
    return jnp.dot(h, w2, precision=lax.Precision.HIGHEST) + b2


if __name__ == "__main__":
    ndf, img_dim = 16, 3          # scaled-down ndf; same architecture
    N, H, W = 2, 32, 32           # 32 / 2^5 = 1 -> conv5 output is (N,1,1,16*ndf)

    key = jax.random.PRNGKey(0)
    params, ref_params, key = init_params(key, ndf, img_dim)
    key, kx = jax.random.split(key)
    x = jax.random.normal(kx, (N, img_dim, H, W), jnp.float32)

    out = jax.block_until_ready(encoder_forward(x, params))
    assert out.shape == (N, ndf * 2), out.shape
    assert bool(jnp.all(jnp.isfinite(out)))

    # bf16-tolerant correctness check against a pure-JAX f32 reference.
    ref = encoder_reference(x, ref_params)
    rel_err = float(jnp.linalg.norm(out - ref) / (jnp.linalg.norm(ref) + 1e-6))
    assert rel_err < 0.1, rel_err

    print("KERNEL_OK")
</pallas_src>

<mosaic_0001>
module attributes {stable_mosaic.version = 11 : i64} {
  func.func @_conv_bn_relu_kernel(%arg0: i32, %arg1: memref<1x2x272x12xbf16, #tpu.memory_space<vmem>>, %arg2: memref<4x12x16xbf16, #tpu.memory_space<vmem>>, %arg3: memref<2x16xf32, #tpu.memory_space<vmem>>, %arg4: memref<1x256x16xbf16, #tpu.memory_space<vmem>>) attributes {dimension_semantics = [#tpu.dimension_semantics<parallel>], iteration_bounds = array<i64: 2>, scalar_prefetch = 0 : i64, scratch_operands = 0 : i64, tpu.core_type = #tpu.core_type<tc>, window_params = [{transform_indices = @transform_0, window_bounds = array<i64: 1, 2, 272, 12>}, {pipeline_mode = #tpu.pipeline_mode<synchronous>, transform_indices = @transform_1, window_bounds = array<i64: 4, 12, 16>}, {pipeline_mode = #tpu.pipeline_mode<synchronous>, transform_indices = @transform_2, window_bounds = array<i64: 2, 16>}, {transform_indices = @transform_3, window_bounds = array<i64: 1, 256, 16>}]} {
    %cst = arith.constant 0.000000e+00 : f32
    %0 = vector.broadcast %cst : f32 to vector<256x16xf32>
    %c0 = arith.constant 0 : index
    %c0_0 = arith.constant 0 : index
    %c0_1 = arith.constant 0 : index
    %c0_2 = arith.constant 0 : index
    %1 = vector.load %arg1[%c0, %c0_0, %c0_1, %c0_2] : memref<1x2x272x12xbf16, #tpu.memory_space<vmem>>, vector<1x1x256x12xbf16>
    %2 = vector.shape_cast %1 : vector<1x1x256x12xbf16> to vector<256x12xbf16>
    %c0_3 = arith.constant 0 : index
    %c0_4 = arith.constant 0 : index
    %c0_5 = arith.constant 0 : index
    %3 = vector.load %arg2[%c0_3, %c0_4, %c0_5] : memref<4x12x16xbf16, #tpu.memory_space<vmem>>, vector<1x12x16xbf16>
    %4 = vector.shape_cast %3 : vector<1x12x16xbf16> to vector<12x16xbf16>
    %cst_6 = arith.constant dense<0.000000e+00> : vector<256x16xf32>
    %5 = tpu.matmul %2, %4, %cst_6 {dimension_numbers = #tpu.dot_dimension_numbers<[1], [0], [0], [1], [0, 0, 1, 1], [], []>} : vector<256x12xbf16>, vector<12x16xbf16>, vector<256x16xf32> -> vector<256x16xf32>
    %6 = arith.addf %0, %5 : vector<256x16xf32>
    %c0_7 = arith.constant 0 : index
    %c1 = arith.constant 1 : index
    %c0_8 = arith.constant 0 : index
    %c0_9 = arith.constant 0 : index
    %7 = vector.load %arg1[%c0_7, %c1, %c0_8, %c0_9] : memref<1x2x272x12xbf16, #tpu.memory_space<vmem>>, vector<1x1x256x12xbf16>
    %8 = vector.shape_cast %7 : vector<1x1x256x12xbf16> to vector<256x12xbf16>
    %c1_10 = arith.constant 1 : index
    %c0_11 = arith.constant 0 : index
    %c0_12 = arith.constant 0 : index
    %9 = vector.load %arg2[%c1_10, %c0_11, %c0_12] : memref<4x12x16xbf16, #tpu.memory_space<vmem>>, vector<1x12x16xbf16>
    %10 = vector.shape_cast %9 : vector<1x12x16xbf16> to vector<12x16xbf16>
    %cst_13 = arith.constant dense<0.000000e+00> : vector<256x16xf32>
    %11 = tpu.matmul %8, %10, %cst_13 {dimension_numbers = #tpu.dot_dimension_numbers<[1], [0], [0], [1], [0, 0, 1, 1], [], []>} : vector<256x12xbf16>, vector<12x16xbf16>, vector<256x16xf32> -> vector<256x16xf32>
    %12 = arith.addf %6, %11 : vector<256x16xf32>
    %c0_14 = arith.constant 0 : index
    %c0_15 = arith.constant 0 : index
    %c16 = arith.constant 16 : index
    %c0_16 = arith.constant 0 : index
    %13 = vector.load %arg1[%c0_14, %c0_15, %c16, %c0_16] : memref<1x2x272x12xbf16, #tpu.memory_space<vmem>>, vector<1x1x256x12xbf16>
    %14 = vector.shape_cast %13 : vector<1x1x256x12xbf16> to vector<256x12xbf16>
    %c2 = arith.constant 2 : index
    %c0_17 = arith.constant 0 : index
    %c0_18 = arith.constant 0 : index
    %15 = vector.load %arg2[%c2, %c0_17, %c0_18] : memref<4x12x16xbf16, #tpu.memory_space<vmem>>, vector<1x12x16xbf16>
    %16 = vector.shape_cast %15 : vector<1x12x16xbf16> to vector<12x16xbf16>
    %cst_19 = arith.constant dense<0.000000e+00> : vector<256x16xf32>
    %17 = tpu.matmul %14, %16, %cst_19 {dimension_numbers = #tpu.dot_dimension_numbers<[1], [0], [0], [1], [0, 0, 1, 1], [], []>} : vector<256x12xbf16>, vector<12x16xbf16>, vector<256x16xf32> -> vector<256x16xf32>
    %18 = arith.addf %12, %17 : vector<256x16xf32>
    %c0_20 = arith.constant 0 : index
    %c1_21 = arith.constant 1 : index
    %c16_22 = arith.constant 16 : index
    %c0_23 = arith.constant 0 : index
    %19 = vector.load %arg1[%c0_20, %c1_21, %c16_22, %c0_23] : memref<1x2x272x12xbf16, #tpu.memory_space<vmem>>, vector<1x1x256x12xbf16>
    %20 = vector.shape_cast %19 : vector<1x1x256x12xbf16> to vector<256x12xbf16>
    %c3 = arith.constant 3 : index
    %c0_24 = arith.constant 0 : index
    %c0_25 = arith.constant 0 : index
    %21 = vector.load %arg2[%c3, %c0_24, %c0_25] : memref<4x12x16xbf16, #tpu.memory_space<vmem>>, vector<1x12x16xbf16>
    %22 = vector.shape_cast %21 : vector<1x12x16xbf16> to vector<12x16xbf16>
    %cst_26 = arith.constant dense<0.000000e+00> : vector<256x16xf32>
    %23 = tpu.matmul %20, %22, %cst_26 {dimension_numbers = #tpu.dot_dimension_numbers<[1], [0], [0], [1], [0, 0, 1, 1], [], []>} : vector<256x12xbf16>, vector<12x16xbf16>, vector<256x16xf32> -> vector<256x16xf32>
    %24 = arith.addf %18, %23 : vector<256x16xf32>
    %c0_27 = arith.constant 0 : index
    %c0_28 = arith.constant 0 : index
    %25 = vector.load %arg3[%c0_27, %c0_28] : memref<2x16xf32, #tpu.memory_space<vmem>>, vector<1x16xf32>
    %26 = vector.broadcast %25 : vector<1x16xf32> to vector<256x16xf32>
    %27 = arith.mulf %24, %26 : vector<256x16xf32>
    %c1_29 = arith.constant 1 : index
    %c0_30 = arith.constant 0 : index
    %28 = vector.load %arg3[%c1_29, %c0_30] : memref<2x16xf32, #tpu.memory_space<vmem>>, vector<1x16xf32>
    %29 = vector.broadcast %28 : vector<1x16xf32> to vector<256x16xf32>
    %30 = arith.addf %27, %29 : vector<256x16xf32>
    %cst_31 = arith.constant 0.000000e+00 : f32
    %31 = vector.broadcast %cst_31 : f32 to vector<256x16xf32>
    %32 = arith.maximumf %30, %31 : vector<256x16xf32>
    %33 = arith.truncf %32 : vector<256x16xf32> to vector<256x16xbf16>
    %c0_32 = arith.constant 0 : index
    %c0_33 = arith.constant 0 : index
    %c0_34 = arith.constant 0 : index
    %34 = vector.load %arg4[%c0_32, %c0_33, %c0_34] : memref<1x256x16xbf16, #tpu.memory_space<vmem>>, vector<1x256x16xbf16>
    %35 = vector.shape_cast %34 : vector<1x256x16xbf16> to vector<256x16xbf16>
    %36 = vector.shape_cast %33 : vector<256x16xbf16> to vector<1x256x16xbf16>
    tpu.vector_store %arg4[%c0_32, %c0_33, %c0_34], %36 {strides = array<i32>} : memref<1x256x16xbf16, #tpu.memory_space<vmem>>, vector<1x256x16xbf16>,
    return
  }
  func.func @transform_0(%arg0: i32) -> (i32, i32, i32, i32) {
    %c0_i32 = arith.constant 0 : i32
    %c0_i32_0 = arith.constant 0 : i32
    %c0_i32_1 = arith.constant 0 : i32
    %c0_i32_2 = arith.constant 0 : i32
    return %arg0, %c0_i32, %c0_i32_0, %c0_i32_1 : i32, i32, i32, i32
  }
  func.func @transform_1(%arg0: i32) -> (i32, i32, i32) {
    %c0_i32 = arith.constant 0 : i32
    %c0_i32_0 = arith.constant 0 : i32
    %c0_i32_1 = arith.constant 0 : i32
    %c0_i32_2 = arith.constant 0 : i32
    return %c0_i32, %c0_i32_0, %c0_i32_1 : i32, i32, i32
  }
  func.func @transform_2(%arg0: i32) -> (i32, i32) {
    %c0_i32 = arith.constant 0 : i32
    %c0_i32_0 = arith.constant 0 : i32
    %c0_i32_1 = arith.constant 0 : i32
    return %c0_i32, %c0_i32_0 : i32, i32
  }
  func.func @transform_3(%arg0: i32) -> (i32, i32, i32) {
    %c0_i32 = arith.constant 0 : i32
    %c0_i32_0 = arith.constant 0 : i32
    %c0_i32_1 = arith.constant 0 : i32
    return %arg0, %c0_i32, %c0_i32_0 : i32, i32, i32
  }
}

module attributes {stable_mosaic.version = 11 : i64} {
  func.func @_conv_bn_relu_kernel(%arg0: i32, %arg1: memref<1x2x72x64xbf16, #tpu.memory_space<vmem>>, %arg2: memref<4x64x32xbf16, #tpu.memory_space<vmem>>, %arg3: memref<2x32xf32, #tpu.memory_space<vmem>>, %arg4: memref<1x64x32xbf16, #tpu.memory_space<vmem>>) attributes {dimension_semantics = [#tpu.dimension_semantics<parallel>], iteration_bounds = array<i64: 2>, scalar_prefetch = 0 : i64, scratch_operands = 0 : i64, tpu.core_type = #tpu.core_type<tc>, window_params = [{transform_indices = @transform_0, window_bounds = array<i64: 1, 2, 72, 64>}, {pipeline_mode = #tpu.pipeline_mode<synchronous>, transform_indices = @transform_1, window_bounds = array<i64: 4, 64, 32>}, {pipeline_mode = #tpu.pipeline_mode<synchronous>, transform_indices = @transform_2, window_bounds = array<i64: 2, 32>}, {transform_indices = @transform_3, window_bounds = array<i64: 1, 64, 32>}]} {
    %cst = arith.constant 0.000000e+00 : f32
    %0 = vector.broadcast %cst : f32 to vector<64x32xf32>
    %c0 = arith.constant 0 : index
    %c0_0 = arith.constant 0 : index
    %c0_1 = arith.constant 0 : index
    %c0_2 = arith.constant 0 : index
    %1 = vector.load %arg1[%c0, %c0_0, %c0_1, %c0_2] : memref<1x2x72x64xbf16, #tpu.memory_space<vmem>>, vector<1x1x64x64xbf16>
    %2 = vector.shape_cast %1 : vector<1x1x64x64xbf16> to vector<64x64xbf16>
    %c0_3 = arith.constant 0 : index
    %c0_4 = arith.constant 0 : index
    %c0_5 = arith.constant 0 : index
    %3 = vector.load %arg2[%c0_3, %c0_4, %c0_5] : memref<4x64x32xbf16, #tpu.memory_space<vmem>>, vector<1x64x32xbf16>
    %4 = vector.shape_cast %3 : vector<1x64x32xbf16> to vector<64x32xbf16>
    %cst_6 = arith.constant dense<0.000000e+00> : vector<64x32xf32>
    %5 = tpu.matmul %2, %4, %cst_6 {dimension_numbers = #tpu.dot_dimension_numbers<[1], [0], [0], [1], [0, 0, 1, 1], [], []>} : vector<64x64xbf16>, vector<64x32xbf16>, vector<64x32xf32> -> vector<64x32xf32>
    %6 = arith.addf %0, %5 : vector<64x32xf32>
    %c0_7 = arith.constant 0 : index
    %c1 = arith.constant 1 : index
    %c0_8 = arith.constant 0 : index
    %c0_9 = arith.constant 0 : index
    %7 = vector.load %arg1[%c0_7, %c1, %c0_8, %c0_9] : memref<1x2x72x64xbf16, #tpu.memory_space<vmem>>, vector<1x1x64x64xbf16>
    %8 = vector.shape_cast %7 : vector<1x1x64x64xbf16> to vector<64x64xbf16>
    %c1_10 = arith.constant 1 : index
    %c0_11 = arith.constant 0 : index
    %c0_12 = arith.constant 0 : index
    %9 = vector.load %arg2[%c1_10, %c0_11, %c0_12] : memref<4x64x32xbf16, #tpu.memory_space<vmem>>, vector<1x64x32xbf16>
    %10 = vector.shape_cast %9 : vector<1x64x32xbf16> to vector<64x32xbf16>
    %cst_13 = arith.constant dense<0.000000e+00> : vector<64x32xf32>
    %11 = tpu.matmul %8, %10, %cst_13 {dimension_numbers = #tpu.dot_dimension_numbers<[1], [0], [0], [1], [0, 0, 1, 1], [], []>} : vector<64x64xbf16>, vector<64x32xbf16>, vector<64x32xf32> -> vector<64x32xf32>
    %12 = arith.addf %6, %11 : vector<64x32xf32>
    %c0_14 = arith.constant 0 : index
    %c0_15 = arith.constant 0 : index
    %c8 = arith.constant 8 : index
    %c0_16 = arith.constant 0 : index
    %13 = vector.load %arg1[%c0_14, %c0_15, %c8, %c0_16] : memref<1x2x72x64xbf16, #tpu.memory_space<vmem>>, vector<1x1x64x64xbf16>
    %14 = vector.shape_cast %13 : vector<1x1x64x64xbf16> to vector<64x64xbf16>
    %c2 = arith.constant 2 : index
    %c0_17 = arith.constant 0 : index
    %c0_18 = arith.constant 0 : index
    %15 = vector.load %arg2[%c2, %c0_17, %c0_18] : memref<4x64x32xbf16, #tpu.memory_space<vmem>>, vector<1x64x32xbf16>
    %16 = vector.shape_cast %15 : vector<1x64x32xbf16> to vector<64x32xbf16>
    %cst_19 = arith.constant dense<0.000000e+00> : vector<64x32xf32>
    %17 = tpu.matmul %14, %16, %cst_19 {dimension_numbers = #tpu.dot_dimension_numbers<[1], [0], [0], [1], [0, 0, 1, 1], [], []>} : vector<64x64xbf16>, vector<64x32xbf16>, vector<64x32xf32> -> vector<64x32xf32>
    %18 = arith.addf %12, %17 : vector<64x32xf32>
    %c0_20 = arith.constant 0 : index
    %c1_21 = arith.constant 1 : index
    %c8_22 = arith.constant 8 : index
    %c0_23 = arith.constant 0 : index
    %19 = vector.load %arg1[%c0_20, %c1_21, %c8_22, %c0_23] : memref<1x2x72x64xbf16, #tpu.memory_space<vmem>>, vector<1x1x64x64xbf16>
    %20 = vector.shape_cast %19 : vector<1x1x64x64xbf16> to vector<64x64xbf16>
    %c3 = arith.constant 3 : index
    %c0_24 = arith.constant 0 : index
    %c0_25 = arith.constant 0 : index
    %21 = vector.load %arg2[%c3, %c0_24, %c0_25] : memref<4x64x32xbf16, #tpu.memory_space<vmem>>, vector<1x64x32xbf16>
    %22 = vector.shape_cast %21 : vector<1x64x32xbf16> to vector<64x32xbf16>
    %cst_26 = arith.constant dense<0.000000e+00> : vector<64x32xf32>
    %23 = tpu.matmul %20, %22, %cst_26 {dimension_numbers = #tpu.dot_dimension_numbers<[1], [0], [0], [1], [0, 0, 1, 1], [], []>} : vector<64x64xbf16>, vector<64x32xbf16>, vector<64x32xf32> -> vector<64x32xf32>
    %24 = arith.addf %18, %23 : vector<64x32xf32>
    %c0_27 = arith.constant 0 : index
    %c0_28 = arith.constant 0 : index
    %25 = vector.load %arg3[%c0_27, %c0_28] : memref<2x32xf32, #tpu.memory_space<vmem>>, vector<1x32xf32>
    %26 = vector.broadcast %25 : vector<1x32xf32> to vector<64x32xf32>
    %27 = arith.mulf %24, %26 : vector<64x32xf32>
    %c1_29 = arith.constant 1 : index
    %c0_30 = arith.constant 0 : index
    %28 = vector.load %arg3[%c1_29, %c0_30] : memref<2x32xf32, #tpu.memory_space<vmem>>, vector<1x32xf32>
    %29 = vector.broadcast %28 : vector<1x32xf32> to vector<64x32xf32>
    %30 = arith.addf %27, %29 : vector<64x32xf32>
    %cst_31 = arith.constant 0.000000e+00 : f32
    %31 = vector.broadcast %cst_31 : f32 to vector<64x32xf32>
    %32 = arith.maximumf %30, %31 : vector<64x32xf32>
    %33 = arith.truncf %32 : vector<64x32xf32> to vector<64x32xbf16>
    %c0_32 = arith.constant 0 : index
    %c0_33 = arith.constant 0 : index
    %c0_34 = arith.constant 0 : index
    %34 = vector.load %arg4[%c0_32, %c0_33, %c0_34] : memref<1x64x32xbf16, #tpu.memory_space<vmem>>, vector<1x64x32xbf16>
    %35 = vector.shape_cast %34 : vector<1x64x32xbf16> to vector<64x32xbf16>
    %36 = vector.shape_cast %33 : vector<64x32xbf16> to vector<1x64x32xbf16>
    tpu.vector_store %arg4[%c0_32, %c0_33, %c0_34], %36 {strides = array<i32>} : memref<1x64x32xbf16, #tpu.memory_space<vmem>>, vector<1x64x32xbf16>,
    return
  }
  func.func @transform_0(%arg0: i32) -> (i32, i32, i32, i32) {
    %c0_i32 = arith.constant 0 : i32
    %c0_i32_0 = arith.constant 0 : i32
    %c0_i32_1 = arith.constant 0 : i32
    %c0_i32_2 = arith.constant 0 : i32
    return %arg0, %c0_i32, %c0_i32_0, %c0_i32_1 : i32, i32, i32, i32
  }
  func.func @transform_1(%arg0: i32) -> (i32, i32, i32) {
    %c0_i32 = arith.constant 0 : i32
    %c0_i32_0 = arith.constant 0 : i32
    %c0_i32_1 = arith.constant 0 : i32
    %c0_i32_2 = arith.constant 0 : i32
    return %c0_i32, %c0_i32_0, %c0_i32_1 : i32, i32, i32
  }
  func.func @transform_2(%arg0: i32) -> (i32, i32) {
    %c0_i32 = arith.constant 0 : i32
    %c0_i32_0 = arith.constant 0 : i32
    %c0_i32_1 = arith.constant 0 : i32
    return %c0_i32, %c0_i32_0 : i32, i32
  }
  func.func @transform_3(%arg0: i32) -> (i32, i32, i32) {
    %c0_i32 = arith.constant 0 : i32
    %c0_i32_0 = arith.constant 0 : i32
    %c0_i32_1 = arith.constant 0 : i32
    return %arg0, %c0_i32, %c0_i32_0 : i32, i32, i32
  }
}

module attributes {stable_mosaic.version = 11 : i64} {
  func.func @_conv_bn_relu_kernel(%arg0: i32, %arg1: memref<1x2x20x128xbf16, #tpu.memory_space<vmem>>, %arg2: memref<4x128x64xbf16, #tpu.memory_space<vmem>>, %arg3: memref<2x64xf32, #tpu.memory_space<vmem>>, %arg4: memref<1x16x64xbf16, #tpu.memory_space<vmem>>) attributes {dimension_semantics = [#tpu.dimension_semantics<parallel>], iteration_bounds = array<i64: 2>, scalar_prefetch = 0 : i64, scratch_operands = 0 : i64, tpu.core_type = #tpu.core_type<tc>, window_params = [{transform_indices = @transform_0, window_bounds = array<i64: 1, 2, 20, 128>}, {pipeline_mode = #tpu.pipeline_mode<synchronous>, transform_indices = @transform_1, window_bounds = array<i64: 4, 128, 64>}, {pipeline_mode = #tpu.pipeline_mode<synchronous>, transform_indices = @transform_2, window_bounds = array<i64: 2, 64>}, {transform_indices = @transform_3, window_bounds = array<i64: 1, 16, 64>}]} {
    %cst = arith.constant 0.000000e+00 : f32
    %0 = vector.broadcast %cst : f32 to vector<16x64xf32>
    %c0 = arith.constant 0 : index
    %c0_0 = arith.constant 0 : index
    %c0_1 = arith.constant 0 : index
    %c0_2 = arith.constant 0 : index
    %1 = vector.load %arg1[%c0, %c0_0, %c0_1, %c0_2] : memref<1x2x20x128xbf16, #tpu.memory_space<vmem>>, vector<1x1x16x128xbf16>
    %2 = vector.shape_cast %1 : vector<1x1x16x128xbf16> to vector<16x128xbf16>
    %c0_3 = arith.constant 0 : index
    %c0_4 = arith.constant 0 : index
    %c0_5 = arith.constant 0 : index
    %3 = vector.load %arg2[%c0_3, %c0_4, %c0_5] : memref<4x128x64xbf16, #tpu.memory_space<vmem>>, vector<1x128x64xbf16>
    %4 = vector.shape_cast %3 : vector<1x128x64xbf16> to vector<128x64xbf16>
    %cst_6 = arith.constant dense<0.000000e+00> : vector<16x64xf32>
    %5 = tpu.matmul %2, %4, %cst_6 {dimension_numbers = #tpu.dot_dimension_numbers<[1], [0], [0], [1], [0, 0, 1, 1], [], []>} : vector<16x128xbf16>, vector<128x64xbf16>, vector<16x64xf32> -> vector<16x64xf32>
    %6 = arith.addf %0, %5 : vector<16x64xf32>
    %c0_7 = arith.constant 0 : index
    %c1 = arith.constant 1 : index
    %c0_8 = arith.constant 0 : index
    %c0_9 = arith.constant 0 : index
    %7 = vector.load %arg1[%c0_7, %c1, %c0_8, %c0_9] : memref<1x2x20x128xbf16, #tpu.memory_space<vmem>>, vector<1x1x16x128xbf16>
    %8 = vector.shape_cast %7 : vector<1x1x16x128xbf16> to vector<16x128xbf16>
    %c1_10 = arith.constant 1 : index
    %c0_11 = arith.constant 0 : index
    %c0_12 = arith.constant 0 : index
    %9 = vector.load %arg2[%c1_10, %c0_11, %c0_12] : memref<4x128x64xbf16, #tpu.memory_space<vmem>>, vector<1x128x64xbf16>
    %10 = vector.shape_cast %9 : vector<1x128x64xbf16> to vector<128x64xbf16>
    %cst_13 = arith.constant dense<0.000000e+00> : vector<16x64xf32>
    %11 = tpu.matmul %8, %10, %cst_13 {dimension_numbers = #tpu.dot_dimension_numbers<[1], [0], [0], [1], [0, 0, 1, 1], [], []>} : vector<16x128xbf16>, vector<128x64xbf16>, vector<16x64xf32> -> vector<16x64xf32>
    %12 = arith.addf %6, %11 : vector<16x64xf32>
    %c0_14 = arith.constant 0 : index
    %c0_15 = arith.constant 0 : index
    %c4 = arith.constant 4 : index
    %c0_16 = arith.constant 0 : index
    %13 = vector.load %arg1[%c0_14, %c0_15, %c4, %c0_16] : memref<1x2x20x128xbf16, #tpu.memory_space<vmem>>, vector<1x1x16x128xbf16>
    %14 = vector.shape_cast %13 : vector<1x1x16x128xbf16> to vector<16x128xbf16>
    %c2 = arith.constant 2 : index
    %c0_17 = arith.constant 0 : index
    %c0_18 = arith.constant 0 : index
    %15 = vector.load %arg2[%c2, %c0_17, %c0_18] : memref<4x128x64xbf16, #tpu.memory_space<vmem>>, vector<1x128x64xbf16>
    %16 = vector.shape_cast %15 : vector<1x128x64xbf16> to vector<128x64xbf16>
    %cst_19 = arith.constant dense<0.000000e+00> : vector<16x64xf32>
    %17 = tpu.matmul %14, %16, %cst_19 {dimension_numbers = #tpu.dot_dimension_numbers<[1], [0], [0], [1], [0, 0, 1, 1], [], []>} : vector<16x128xbf16>, vector<128x64xbf16>, vector<16x64xf32> -> vector<16x64xf32>
    %18 = arith.addf %12, %17 : vector<16x64xf32>
    %c0_20 = arith.constant 0 : index
    %c1_21 = arith.constant 1 : index
    %c4_22 = arith.constant 4 : index
    %c0_23 = arith.constant 0 : index
    %19 = vector.load %arg1[%c0_20, %c1_21, %c4_22, %c0_23] : memref<1x2x20x128xbf16, #tpu.memory_space<vmem>>, vector<1x1x16x128xbf16>
    %20 = vector.shape_cast %19 : vector<1x1x16x128xbf16> to vector<16x128xbf16>
    %c3 = arith.constant 3 : index
    %c0_24 = arith.constant 0 : index
    %c0_25 = arith.constant 0 : index
    %21 = vector.load %arg2[%c3, %c0_24, %c0_25] : memref<4x128x64xbf16, #tpu.memory_space<vmem>>, vector<1x128x64xbf16>
    %22 = vector.shape_cast %21 : vector<1x128x64xbf16> to vector<128x64xbf16>
    %cst_26 = arith.constant dense<0.000000e+00> : vector<16x64xf32>
    %23 = tpu.matmul %20, %22, %cst_26 {dimension_numbers = #tpu.dot_dimension_numbers<[1], [0], [0], [1], [0, 0, 1, 1], [], []>} : vector<16x128xbf16>, vector<128x64xbf16>, vector<16x64xf32> -> vector<16x64xf32>
    %24 = arith.addf %18, %23 : vector<16x64xf32>
    %c0_27 = arith.constant 0 : index
    %c0_28 = arith.constant 0 : index
    %25 = vector.load %arg3[%c0_27, %c0_28] : memref<2x64xf32, #tpu.memory_space<vmem>>, vector<1x64xf32>
    %26 = vector.broadcast %25 : vector<1x64xf32> to vector<16x64xf32>
    %27 = arith.mulf %24, %26 : vector<16x64xf32>
    %c1_29 = arith.constant 1 : index
    %c0_30 = arith.constant 0 : index
    %28 = vector.load %arg3[%c1_29, %c0_30] : memref<2x64xf32, #tpu.memory_space<vmem>>, vector<1x64xf32>
    %29 = vector.broadcast %28 : vector<1x64xf32> to vector<16x64xf32>
    %30 = arith.addf %27, %29 : vector<16x64xf32>
    %cst_31 = arith.constant 0.000000e+00 : f32
    %31 = vector.broadcast %cst_31 : f32 to vector<16x64xf32>
    %32 = arith.maximumf %30, %31 : vector<16x64xf32>
    %33 = arith.truncf %32 : vector<16x64xf32> to vector<16x64xbf16>
    %c0_32 = arith.constant 0 : index
    %c0_33 = arith.constant 0 : index
    %c0_34 = arith.constant 0 : index
    %34 = vector.load %arg4[%c0_32, %c0_33, %c0_34] : memref<1x16x64xbf16, #tpu.memory_space<vmem>>, vector<1x16x64xbf16>
    %35 = vector.shape_cast %34 : vector<1x16x64xbf16> to vector<16x64xbf16>
    %36 = vector.shape_cast %33 : vector<16x64xbf16> to vector<1x16x64xbf16>
    tpu.vector_store %arg4[%c0_32, %c0_33, %c0_34], %36 {strides = array<i32>} : memref<1x16x64xbf16, #tpu.memory_space<vmem>>, vector<1x16x64xbf16>,
    return
  }
  func.func @transform_0(%arg0: i32) -> (i32, i32, i32, i32) {
    %c0_i32 = arith.constant 0 : i32
    %c0_i32_0 = arith.constant 0 : i32
    %c0_i32_1 = arith.constant 0 : i32
    %c0_i32_2 = arith.constant 0 : i32
    return %arg0, %c0_i32, %c0_i32_0, %c0_i32_1 : i32, i32, i32, i32
  }
  func.func @transform_1(%arg0: i32) -> (i32, i32, i32) {
    %c0_i32 = arith.constant 0 : i32
    %c0_i32_0 = arith.constant 0 : i32
    %c0_i32_1 = arith.constant 0 : i32
    %c0_i32_2 = arith.constant 0 : i32
    return %c0_i32, %c0_i32_0, %c0_i32_1 : i32, i32, i32
  }
  func.func @transform_2(%arg0: i32) -> (i32, i32) {
    %c0_i32 = arith.constant 0 : i32
    %c0_i32_0 = arith.constant 0 : i32
    %c0_i32_1 = arith.constant 0 : i32
    return %c0_i32, %c0_i32_0 : i32, i32
  }
  func.func @transform_3(%arg0: i32) -> (i32, i32, i32) {
    %c0_i32 = arith.constant 0 : i32
    %c0_i32_0 = arith.constant 0 : i32
    %c0_i32_1 = arith.constant 0 : i32
    return %arg0, %c0_i32, %c0_i32_0 : i32, i32, i32
  }
}

module attributes {stable_mosaic.version = 11 : i64} {
  func.func @_conv_bn_relu_kernel(%arg0: i32, %arg1: memref<1x2x6x256xbf16, #tpu.memory_space<vmem>>, %arg2: memref<4x256x128xbf16, #tpu.memory_space<vmem>>, %arg3: memref<2x128xf32, #tpu.memory_space<vmem>>, %arg4: memref<1x4x128xbf16, #tpu.memory_space<vmem>>) attributes {dimension_semantics = [#tpu.dimension_semantics<parallel>], iteration_bounds = array<i64: 2>, scalar_prefetch = 0 : i64, scratch_operands = 0 : i64, tpu.core_type = #tpu.core_type<tc>, window_params = [{transform_indices = @transform_0, window_bounds = array<i64: 1, 2, 6, 256>}, {pipeline_mode = #tpu.pipeline_mode<synchronous>, transform_indices = @transform_1, window_bounds = array<i64: 4, 256, 128>}, {pipeline_mode = #tpu.pipeline_mode<synchronous>, transform_indices = @transform_2, window_bounds = array<i64: 2, 128>}, {transform_indices = @transform_3, window_bounds = array<i64: 1, 4, 128>}]} {
    %cst = arith.constant 0.000000e+00 : f32
    %0 = vector.broadcast %cst : f32 to vector<4x128xf32>
    %c0 = arith.constant 0 : index
    %c0_0 = arith.constant 0 : index
    %c0_1 = arith.constant 0 : index
    %c0_2 = arith.constant 0 : index
    %1 = vector.load %arg1[%c0, %c0_0, %c0_1, %c0_2] : memref<1x2x6x256xbf16, #tpu.memory_space<vmem>>, vector<1x1x4x256xbf16>
    %2 = vector.shape_cast %1 : vector<1x1x4x256xbf16> to vector<4x256xbf16>
    %c0_3 = arith.constant 0 : index
    %c0_4 = arith.constant 0 : index
    %c0_5 = arith.constant 0 : index
    %3 = vector.load %arg2[%c0_3, %c0_4, %c0_5] : memref<4x256x128xbf16, #tpu.memory_space<vmem>>, vector<1x256x128xbf16>
    %4 = vector.shape_cast %3 : vector<1x256x128xbf16> to vector<256x128xbf16>
    %cst_6 = arith.constant dense<0.000000e+00> : vector<4x128xf32>
    %5 = tpu.matmul %2, %4, %cst_6 {dimension_numbers = #tpu.dot_dimension_numbers<[1], [0], [0], [1], [0, 0, 1, 1], [], []>} : vector<4x256xbf16>, vector<256x128xbf16>, vector<4x128xf32> -> vector<4x128xf32>
    %6 = arith.addf %0, %5 : vector<4x128xf32>
    %c0_7 = arith.constant 0 : index
    %c1 = arith.constant 1 : index
    %c0_8 = arith.constant 0 : index
    %c0_9 = arith.constant 0 : index
    %7 = vector.load %arg1[%c0_7, %c1, %c0_8, %c0_9] : memref<1x2x6x256xbf16, #tpu.memory_space<vmem>>, vector<1x1x4x256xbf16>
    %8 = vector.shape_cast %7 : vector<1x1x4x256xbf16> to vector<4x256xbf16>
    %c1_10 = arith.constant 1 : index
    %c0_11 = arith.constant 0 : index
    %c0_12 = arith.constant 0 : index
    %9 = vector.load %arg2[%c1_10, %c0_11, %c0_12] : memref<4x256x128xbf16, #tpu.memory_space<vmem>>, vector<1x256x128xbf16>
    %10 = vector.shape_cast %9 : vector<1x256x128xbf16> to vector<256x128xbf16>
    %cst_13 = arith.constant dense<0.000000e+00> : vector<4x128xf32>
    %11 = tpu.matmul %8, %10, %cst_13 {dimension_numbers = #tpu.dot_dimension_numbers<[1], [0], [0], [1], [0, 0, 1, 1], [], []>} : vector<4x256xbf16>, vector<256x128xbf16>, vector<4x128xf32> -> vector<4x128xf32>
    %12 = arith.addf %6, %11 : vector<4x128xf32>
    %c0_14 = arith.constant 0 : index
    %c0_15 = arith.constant 0 : index
    %c2 = arith.constant 2 : index
    %c0_16 = arith.constant 0 : index
    %13 = vector.load %arg1[%c0_14, %c0_15, %c2, %c0_16] : memref<1x2x6x256xbf16, #tpu.memory_space<vmem>>, vector<1x1x4x256xbf16>
    %14 = vector.shape_cast %13 : vector<1x1x4x256xbf16> to vector<4x256xbf16>
    %c2_17 = arith.constant 2 : index
    %c0_18 = arith.constant 0 : index
    %c0_19 = arith.constant 0 : index
    %15 = vector.load %arg2[%c2_17, %c0_18, %c0_19] : memref<4x256x128xbf16, #tpu.memory_space<vmem>>, vector<1x256x128xbf16>
    %16 = vector.shape_cast %15 : vector<1x256x128xbf16> to vector<256x128xbf16>
    %cst_20 = arith.constant dense<0.000000e+00> : vector<4x128xf32>
    %17 = tpu.matmul %14, %16, %cst_20 {dimension_numbers = #tpu.dot_dimension_numbers<[1], [0], [0], [1], [0, 0, 1, 1], [], []>} : vector<4x256xbf16>, vector<256x128xbf16>, vector<4x128xf32> -> vector<4x128xf32>
    %18 = arith.addf %12, %17 : vector<4x128xf32>
    %c0_21 = arith.constant 0 : index
    %c1_22 = arith.constant 1 : index
    %c2_23 = arith.constant 2 : index
    %c0_24 = arith.constant 0 : index
    %19 = vector.load %arg1[%c0_21, %c1_22, %c2_23, %c0_24] : memref<1x2x6x256xbf16, #tpu.memory_space<vmem>>, vector<1x1x4x256xbf16>
    %20 = vector.shape_cast %19 : vector<1x1x4x256xbf16> to vector<4x256xbf16>
    %c3 = arith.constant 3 : index
    %c0_25 = arith.constant 0 : index
    %c0_26 = arith.constant 0 : index
    %21 = vector.load %arg2[%c3, %c0_25, %c0_26] : memref<4x256x128xbf16, #tpu.memory_space<vmem>>, vector<1x256x128xbf16>
    %22 = vector.shape_cast %21 : vector<1x256x128xbf16> to vector<256x128xbf16>
    %cst_27 = arith.constant dense<0.000000e+00> : vector<4x128xf32>
    %23 = tpu.matmul %20, %22, %cst_27 {dimension_numbers = #tpu.dot_dimension_numbers<[1], [0], [0], [1], [0, 0, 1, 1], [], []>} : vector<4x256xbf16>, vector<256x128xbf16>, vector<4x128xf32> -> vector<4x128xf32>
    %24 = arith.addf %18, %23 : vector<4x128xf32>
    %c0_28 = arith.constant 0 : index
    %c0_29 = arith.constant 0 : index
    %25 = vector.load %arg3[%c0_28, %c0_29] : memref<2x128xf32, #tpu.memory_space<vmem>>, vector<1x128xf32>
    %26 = vector.broadcast %25 : vector<1x128xf32> to vector<4x128xf32>
    %27 = arith.mulf %24, %26 : vector<4x128xf32>
    %c1_30 = arith.constant 1 : index
    %c0_31 = arith.constant 0 : index
    %28 = vector.load %arg3[%c1_30, %c0_31] : memref<2x128xf32, #tpu.memory_space<vmem>>, vector<1x128xf32>
    %29 = vector.broadcast %28 : vector<1x128xf32> to vector<4x128xf32>
    %30 = arith.addf %27, %29 : vector<4x128xf32>
    %cst_32 = arith.constant 0.000000e+00 : f32
    %31 = vector.broadcast %cst_32 : f32 to vector<4x128xf32>
    %32 = arith.maximumf %30, %31 : vector<4x128xf32>
    %33 = arith.truncf %32 : vector<4x128xf32> to vector<4x128xbf16>
    %c0_33 = arith.constant 0 : index
    %c0_34 = arith.constant 0 : index
    %c0_35 = arith.constant 0 : index
    %34 = vector.load %arg4[%c0_33, %c0_34, %c0_35] : memref<1x4x128xbf16, #tpu.memory_space<vmem>>, vector<1x4x128xbf16>
    %35 = vector.shape_cast %34 : vector<1x4x128xbf16> to vector<4x128xbf16>
    %36 = vector.shape_cast %33 : vector<4x128xbf16> to vector<1x4x128xbf16>
    tpu.vector_store %arg4[%c0_33, %c0_34, %c0_35], %36 {strides = array<i32>} : memref<1x4x128xbf16, #tpu.memory_space<vmem>>, vector<1x4x128xbf16>,
    return
  }
  func.func @transform_0(%arg0: i32) -> (i32, i32, i32, i32) {
    %c0_i32 = arith.constant 0 : i32
    %c0_i32_0 = arith.constant 0 : i32
    %c0_i32_1 = arith.constant 0 : i32
    %c0_i32_2 = arith.constant 0 : i32
    return %arg0, %c0_i32, %c0_i32_0, %c0_i32_1 : i32, i32, i32, i32
  }
  func.func @transform_1(%arg0: i32) -> (i32, i32, i32) {
    %c0_i32 = arith.constant 0 : i32
    %c0_i32_0 = arith.constant 0 : i32
    %c0_i32_1 = arith.constant 0 : i32
    %c0_i32_2 = arith.constant 0 : i32
    return %c0_i32, %c0_i32_0, %c0_i32_1 : i32, i32, i32
  }
  func.func @transform_2(%arg0: i32) -> (i32, i32) {
    %c0_i32 = arith.constant 0 : i32
    %c0_i32_0 = arith.constant 0 : i32
    %c0_i32_1 = arith.constant 0 : i32
    return %c0_i32, %c0_i32_0 : i32, i32
  }
  func.func @transform_3(%arg0: i32) -> (i32, i32, i32) {
    %c0_i32 = arith.constant 0 : i32
    %c0_i32_0 = arith.constant 0 : i32
    %c0_i32_1 = arith.constant 0 : i32
    return %arg0, %c0_i32, %c0_i32_0 : i32, i32, i32
  }
}

module attributes {stable_mosaic.version = 11 : i64} {
  func.func @_conv_bn_relu_kernel(%arg0: i32, %arg1: memref<1x2x2x512xbf16, #tpu.memory_space<vmem>>, %arg2: memref<4x512x256xbf16, #tpu.memory_space<vmem>>, %arg3: memref<2x256xf32, #tpu.memory_space<vmem>>, %arg4: memref<1x1x256xbf16, #tpu.memory_space<vmem>>) attributes {dimension_semantics = [#tpu.dimension_semantics<parallel>], iteration_bounds = array<i64: 2>, scalar_prefetch = 0 : i64, scratch_operands = 0 : i64, tpu.core_type = #tpu.core_type<tc>, window_params = [{transform_indices = @transform_0, window_bounds = array<i64: 1, 2, 2, 512>}, {pipeline_mode = #tpu.pipeline_mode<synchronous>, transform_indices = @transform_1, window_bounds = array<i64: 4, 512, 256>}, {pipeline_mode = #tpu.pipeline_mode<synchronous>, transform_indices = @transform_2, window_bounds = array<i64: 2, 256>}, {transform_indices = @transform_3, window_bounds = array<i64: 1, 1, 256>}]} {
    %cst = arith.constant 0.000000e+00 : f32
    %0 = vector.broadcast %cst : f32 to vector<1x256xf32>
    %c0 = arith.constant 0 : index
    %c0_0 = arith.constant 0 : index
    %c0_1 = arith.constant 0 : index
    %c0_2 = arith.constant 0 : index
    %1 = vector.load %arg1[%c0, %c0_0, %c0_1, %c0_2] : memref<1x2x2x512xbf16, #tpu.memory_space<vmem>>, vector<1x1x1x512xbf16>
    %2 = vector.shape_cast %1 : vector<1x1x1x512xbf16> to vector<1x512xbf16>
    %c0_3 = arith.constant 0 : index
    %c0_4 = arith.constant 0 : index
    %c0_5 = arith.constant 0 : index
    %3 = vector.load %arg2[%c0_3, %c0_4, %c0_5] : memref<4x512x256xbf16, #tpu.memory_space<vmem>>, vector<1x512x256xbf16>
    %4 = vector.shape_cast %3 : vector<1x512x256xbf16> to vector<512x256xbf16>
    %cst_6 = arith.constant dense<0.000000e+00> : vector<1x256xf32>
    %5 = tpu.matmul %2, %4, %cst_6 {dimension_numbers = #tpu.dot_dimension_numbers<[1], [0], [0], [1], [0, 0, 1, 1], [], []>} : vector<1x512xbf16>, vector<512x256xbf16>, vector<1x256xf32> -> vector<1x256xf32>
    %6 = arith.addf %0, %5 : vector<1x256xf32>
    %c0_7 = arith.constant 0 : index
    %c1 = arith.constant 1 : index
    %c0_8 = arith.constant 0 : index
    %c0_9 = arith.constant 0 : index
    %7 = vector.load %arg1[%c0_7, %c1, %c0_8, %c0_9] : memref<1x2x2x512xbf16, #tpu.memory_space<vmem>>, vector<1x1x1x512xbf16>
    %8 = vector.shape_cast %7 : vector<1x1x1x512xbf16> to vector<1x512xbf16>
    %c1_10 = arith.constant 1 : index
    %c0_11 = arith.constant 0 : index
    %c0_12 = arith.constant 0 : index
    %9 = vector.load %arg2[%c1_10, %c0_11, %c0_12] : memref<4x512x256xbf16, #tpu.memory_space<vmem>>, vector<1x512x256xbf16>
    %10 = vector.shape_cast %9 : vector<1x512x256xbf16> to vector<512x256xbf16>
    %cst_13 = arith.constant dense<0.000000e+00> : vector<1x256xf32>
    %11 = tpu.matmul %8, %10, %cst_13 {dimension_numbers = #tpu.dot_dimension_numbers<[1], [0], [0], [1], [0, 0, 1, 1], [], []>} : vector<1x512xbf16>, vector<512x256xbf16>, vector<1x256xf32> -> vector<1x256xf32>
    %12 = arith.addf %6, %11 : vector<1x256xf32>
    %c0_14 = arith.constant 0 : index
    %c0_15 = arith.constant 0 : index
    %c1_16 = arith.constant 1 : index
    %c0_17 = arith.constant 0 : index
    %13 = vector.load %arg1[%c0_14, %c0_15, %c1_16, %c0_17] : memref<1x2x2x512xbf16, #tpu.memory_space<vmem>>, vector<1x1x1x512xbf16>
    %14 = vector.shape_cast %13 : vector<1x1x1x512xbf16> to vector<1x512xbf16>
    %c2 = arith.constant 2 : index
    %c0_18 = arith.constant 0 : index
    %c0_19 = arith.constant 0 : index
    %15 = vector.load %arg2[%c2, %c0_18, %c0_19] : memref<4x512x256xbf16, #tpu.memory_space<vmem>>, vector<1x512x256xbf16>
    %16 = vector.shape_cast %15 : vector<1x512x256xbf16> to vector<512x256xbf16>
    %cst_20 = arith.constant dense<0.000000e+00> : vector<1x256xf32>
    %17 = tpu.matmul %14, %16, %cst_20 {dimension_numbers = #tpu.dot_dimension_numbers<[1], [0], [0], [1], [0, 0, 1, 1], [], []>} : vector<1x512xbf16>, vector<512x256xbf16>, vector<1x256xf32> -> vector<1x256xf32>
    %18 = arith.addf %12, %17 : vector<1x256xf32>
    %c0_21 = arith.constant 0 : index
    %c1_22 = arith.constant 1 : index
    %c1_23 = arith.constant 1 : index
    %c0_24 = arith.constant 0 : index
    %19 = vector.load %arg1[%c0_21, %c1_22, %c1_23, %c0_24] : memref<1x2x2x512xbf16, #tpu.memory_space<vmem>>, vector<1x1x1x512xbf16>
    %20 = vector.shape_cast %19 : vector<1x1x1x512xbf16> to vector<1x512xbf16>
    %c3 = arith.constant 3 : index
    %c0_25 = arith.constant 0 : index
    %c0_26 = arith.constant 0 : index
    %21 = vector.load %arg2[%c3, %c0_25, %c0_26] : memref<4x512x256xbf16, #tpu.memory_space<vmem>>, vector<1x512x256xbf16>
    %22 = vector.shape_cast %21 : vector<1x512x256xbf16> to vector<512x256xbf16>
    %cst_27 = arith.constant dense<0.000000e+00> : vector<1x256xf32>
    %23 = tpu.matmul %20, %22, %cst_27 {dimension_numbers = #tpu.dot_dimension_numbers<[1], [0], [0], [1], [0, 0, 1, 1], [], []>} : vector<1x512xbf16>, vector<512x256xbf16>, vector<1x256xf32> -> vector<1x256xf32>
    %24 = arith.addf %18, %23 : vector<1x256xf32>
    %c0_28 = arith.constant 0 : index
    %c0_29 = arith.constant 0 : index
    %25 = vector.load %arg3[%c0_28, %c0_29] : memref<2x256xf32, #tpu.memory_space<vmem>>, vector<1x256xf32>
    %26 = arith.mulf %24, %25 : vector<1x256xf32>
    %c1_30 = arith.constant 1 : index
    %c0_31 = arith.constant 0 : index
    %27 = vector.load %arg3[%c1_30, %c0_31] : memref<2x256xf32, #tpu.memory_space<vmem>>, vector<1x256xf32>
    %28 = arith.addf %26, %27 : vector<1x256xf32>
    %cst_32 = arith.constant 0.000000e+00 : f32
    %29 = vector.broadcast %cst_32 : f32 to vector<1x256xf32>
    %30 = arith.maximumf %28, %29 : vector<1x256xf32>
    %31 = arith.truncf %30 : vector<1x256xf32> to vector<1x256xbf16>
    %c0_33 = arith.constant 0 : index
    %c0_34 = arith.constant 0 : index
    %c0_35 = arith.constant 0 : index
    %32 = vector.load %arg4[%c0_33, %c0_34, %c0_35] : memref<1x1x256xbf16, #tpu.memory_space<vmem>>, vector<1x1x256xbf16>
    %33 = vector.shape_cast %32 : vector<1x1x256xbf16> to vector<1x256xbf16>
    %34 = vector.shape_cast %31 : vector<1x256xbf16> to vector<1x1x256xbf16>
    tpu.vector_store %arg4[%c0_33, %c0_34, %c0_35], %34 {strides = array<i32>} : memref<1x1x256xbf16, #tpu.memory_space<vmem>>, vector<1x1x256xbf16>,
    return
  }
  func.func @transform_0(%arg0: i32) -> (i32, i32, i32, i32) {
    %c0_i32 = arith.constant 0 : i32
    %c0_i32_0 = arith.constant 0 : i32
    %c0_i32_1 = arith.constant 0 : i32
    %c0_i32_2 = arith.constant 0 : i32
    return %arg0, %c0_i32, %c0_i32_0, %c0_i32_1 : i32, i32, i32, i32
  }
  func.func @transform_1(%arg0: i32) -> (i32, i32, i32) {
    %c0_i32 = arith.constant 0 : i32
    %c0_i32_0 = arith.constant 0 : i32
    %c0_i32_1 = arith.constant 0 : i32
    %c0_i32_2 = arith.constant 0 : i32
    return %c0_i32, %c0_i32_0, %c0_i32_1 : i32, i32, i32
  }
  func.func @transform_2(%arg0: i32) -> (i32, i32) {
    %c0_i32 = arith.constant 0 : i32
    %c0_i32_0 = arith.constant 0 : i32
    %c0_i32_1 = arith.constant 0 : i32
    return %c0_i32, %c0_i32_0 : i32, i32
  }
  func.func @transform_3(%arg0: i32) -> (i32, i32, i32) {
    %c0_i32 = arith.constant 0 : i32
    %c0_i32_0 = arith.constant 0 : i32
    %c0_i32_1 = arith.constant 0 : i32
    return %arg0, %c0_i32, %c0_i32_0 : i32, i32, i32
  }
}

module attributes {stable_mosaic.version = 11 : i64} {
  func.func @_sum_fc_kernel(%arg0: i32, %arg1: memref<2x1x256xbf16, #tpu.memory_space<vmem>>, %arg2: memref<256x128xbf16, #tpu.memory_space<vmem>>, %arg3: memref<1x128xf32, #tpu.memory_space<vmem>>, %arg4: memref<128x32xbf16, #tpu.memory_space<vmem>>, %arg5: memref<1x32xf32, #tpu.memory_space<vmem>>, %arg6: memref<2x32xf32, #tpu.memory_space<vmem>>) attributes {dimension_semantics = [#tpu.dimension_semantics<arbitrary>], iteration_bounds = array<i64: 1>, scalar_prefetch = 0 : i64, scratch_operands = 0 : i64, tpu.core_type = #tpu.core_type<tc>, window_params = [{pipeline_mode = #tpu.pipeline_mode<synchronous>, transform_indices = @transform_0, window_bounds = array<i64: 2, 1, 256>}, {pipeline_mode = #tpu.pipeline_mode<synchronous>, transform_indices = @transform_1, window_bounds = array<i64: 256, 128>}, {pipeline_mode = #tpu.pipeline_mode<synchronous>, transform_indices = @transform_2, window_bounds = array<i64: 1, 128>}, {pipeline_mode = #tpu.pipeline_mode<synchronous>, transform_indices = @transform_3, window_bounds = array<i64: 128, 32>}, {pipeline_mode = #tpu.pipeline_mode<synchronous>, transform_indices = @transform_4, window_bounds = array<i64: 1, 32>}, {pipeline_mode = #tpu.pipeline_mode<synchronous>, transform_indices = @transform_5, window_bounds = array<i64: 2, 32>}]} {
    %c0 = arith.constant 0 : index
    %c0_0 = arith.constant 0 : index
    %c0_1 = arith.constant 0 : index
    %0 = vector.load %arg1[%c0, %c0_0, %c0_1] : memref<2x1x256xbf16, #tpu.memory_space<vmem>>, vector<2x1x256xbf16>
    %1 = arith.extf %0 : vector<2x1x256xbf16> to vector<2x1x256xf32>
    %cst = arith.constant dense<0.000000e+00> : vector<2x256xf32>
    %2 = vector.multi_reduction <add>, %1, %cst [1] : vector<2x1x256xf32> to vector<2x256xf32>
    %3 = arith.truncf %2 : vector<2x256xf32> to vector<2x256xbf16>
    %c0_2 = arith.constant 0 : index
    %c0_3 = arith.constant 0 : index
    %4 = vector.load %arg2[%c0_2, %c0_3] : memref<256x128xbf16, #tpu.memory_space<vmem>>, vector<256x128xbf16>
    %cst_4 = arith.constant dense<0.000000e+00> : vector<2x128xf32>
    %5 = tpu.matmul %3, %4, %cst_4 {dimension_numbers = #tpu.dot_dimension_numbers<[1], [0], [0], [1], [0, 0, 1, 1], [], []>} : vector<2x256xbf16>, vector<256x128xbf16>, vector<2x128xf32> -> vector<2x128xf32>
    %c0_5 = arith.constant 0 : index
    %c0_6 = arith.constant 0 : index
    %6 = vector.load %arg3[%c0_5, %c0_6] : memref<1x128xf32, #tpu.memory_space<vmem>>, vector<1x128xf32>
    %7 = vector.broadcast %6 : vector<1x128xf32> to vector<2x128xf32>
    %8 = arith.addf %5, %7 : vector<2x128xf32>
    %cst_7 = arith.constant 0.000000e+00 : f32
    %9 = vector.broadcast %cst_7 : f32 to vector<2x128xf32>
    %10 = arith.maximumf %8, %9 : vector<2x128xf32>
    %11 = arith.truncf %10 : vector<2x128xf32> to vector<2x128xbf16>
    %c0_8 = arith.constant 0 : index
    %c0_9 = arith.constant 0 : index
    %12 = vector.load %arg4[%c0_8, %c0_9] : memref<128x32xbf16, #tpu.memory_space<vmem>>, vector<128x32xbf16>
    %cst_10 = arith.constant dense<0.000000e+00> : vector<2x32xf32>
    %13 = tpu.matmul %11, %12, %cst_10 {dimension_numbers = #tpu.dot_dimension_numbers<[1], [0], [0], [1], [0, 0, 1, 1], [], []>} : vector<2x128xbf16>, vector<128x32xbf16>, vector<2x32xf32> -> vector<2x32xf32>
    %c0_11 = arith.constant 0 : index
    %c0_12 = arith.constant 0 : index
    %14 = vector.load %arg5[%c0_11, %c0_12] : memref<1x32xf32, #tpu.memory_space<vmem>>, vector<1x32xf32>
    %15 = vector.broadcast %14 : vector<1x32xf32> to vector<2x32xf32>
    %16 = arith.addf %13, %15 : vector<2x32xf32>
    %c0_13 = arith.constant 0 : index
    %c0_14 = arith.constant 0 : index
    %17 = vector.load %arg6[%c0_13, %c0_14] : memref<2x32xf32, #tpu.memory_space<vmem>>, vector<2x32xf32>
    tpu.vector_store %arg6[%c0_13, %c0_14], %16 {strides = array<i32>} : memref<2x32xf32, #tpu.memory_space<vmem>>, vector<2x32xf32>,
    return
  }
  func.func @transform_0(%arg0: i32) -> (i32, i32, i32) {
    %c0_i32 = arith.constant 0 : i32
    %c0_i32_0 = arith.constant 0 : i32
    %c0_i32_1 = arith.constant 0 : i32
    %c0_i32_2 = arith.constant 0 : i32
    return %c0_i32, %c0_i32_0, %c0_i32_1 : i32, i32, i32
  }
  func.func @transform_1(%arg0: i32) -> (i32, i32) {
    %c0_i32 = arith.constant 0 : i32
    %c0_i32_0 = arith.constant 0 : i32
    %c0_i32_1 = arith.constant 0 : i32
    return %c0_i32, %c0_i32_0 : i32, i32
  }
  func.func @transform_2(%arg0: i32) -> (i32, i32) {
    %c0_i32 = arith.constant 0 : i32
    %c0_i32_0 = arith.constant 0 : i32
    %c0_i32_1 = arith.constant 0 : i32
    return %c0_i32, %c0_i32_0 : i32, i32
  }
  func.func @transform_3(%arg0: i32) -> (i32, i32) {
    %c0_i32 = arith.constant 0 : i32
    %c0_i32_0 = arith.constant 0 : i32
    %c0_i32_1 = arith.constant 0 : i32
    return %c0_i32, %c0_i32_0 : i32, i32
  }
  func.func @transform_4(%arg0: i32) -> (i32, i32) {
    %c0_i32 = arith.constant 0 : i32
    %c0_i32_0 = arith.constant 0 : i32
    %c0_i32_1 = arith.constant 0 : i32
    return %c0_i32, %c0_i32_0 : i32, i32
  }
  func.func @transform_5(%arg0: i32) -> (i32, i32) {
    %c0_i32 = arith.constant 0 : i32
    %c0_i32_0 = arith.constant 0 : i32
    %c0_i32_1 = arith.constant 0 : i32
    return %c0_i32, %c0_i32_0 : i32, i32
  }
}

</mosaic_0001>

<llo_original>
// kernel: encoder_forward.6
$region0: #{encoder_forward.6}
  #allocation0 [shape = 'u32[]', space=smem, size = 0x4, offset = 0x4, fixed_abs, tag = 'smem constant byte address 0x4 - core index']
  #allocation1 [shape = 'u32[144,128]{1,0:T(1,128)}', space=vmem, size = 0x12000, scoped, tag = 'internal scratch']
  %s0 = inlined_call_operand.vmem [shape: bf16[2,2,272,12], index: 0, kind: input, shape index: {}]
  %s1 = inlined_call_operand.vmem [shape: bf16[4,12,16], index: 1, kind: input, shape index: {}]
  %s2 = inlined_call_operand.vmem [shape: f32[2,16], index: 2, kind: input, shape index: {}]
  %s3 = inlined_call_operand.vmem [shape: bf16[2,256,16], index: 3, kind: output, shape index: {}]
  %s4 = sld [smem:[#allocation0]]
  $region45: #{encoder_forward.6} parent=0
    _
  %s6 = ssub.s32 1, %s4
  %s7 = scalar_select 0, %s6, %s4
  loop: start=0, step=1, limit=4
  $region2: #{encoder_forward.6} parent=0 // loop_pre_header
    _
  $region3: #{encoder_forward.6} parent=0 // loop_header
    %s9 = sphi 0, %s13
    %p10 = scmp.ge.s32.totalorder %s9, 4
    %s19 = sphi 0, %s21
    %s22 = sphi 0, %s19
    %s23 = sphi 0, %s22
    %s39 = sphi 0, %s23
    %s43 = sphi 0, %s43
    %s45 = sphi 0, %s43
    %s46 = sphi 0, %s45
    %s60 = sphi 0, %s46
    %s64 = sphi 0, %s64
    %s66 = sphi 0, %s64
    %s67 = sphi 0, %s66
    %s81 = sphi 0, %s67
    %s87 = sphi 0, %s89
    %s90 = sphi 0, %s87
    %s91 = sphi 0, %s90
    %s107 = sphi 0, %s91
  $region4: #{encoder_forward.6} parent=0 // loop_header_branch
    %12 = sbr.rel (%p10) target = $region8
  $region5: #{encoder_forward.6} parent=0 // loop_body
    %s14 = ssub.s32 %s9, 1
    %s15 = ssub.s32 %s9, 2
    %s16 = sadd.s32 %s9, 1
    %s17 = ssub.s32 %s9, %s16
    %p18 = scmp.eq.s32.totalorder %s17, 0
    %s20 = sadd.s32 %s19, 1
    %s21 = scalar_select %p18, %s19, %s20
    %p24 = pneg %p18
    %p25 = scmp.eq.s32.totalorder %s9, 1
    %p26 = por %p24, %p25
    %p27 = scmp.ne.s32.totalorder %s19, %s22
    %p28 = scmp.eq.s32.totalorder %s9, 0
    %p29 = por %p27, %p28
    %p30 = scmp.ne.s32.totalorder %s19, %s22
    %p31 = scmp.eq.s32.totalorder %s14, 1
    %p32 = por %p30, %p31
    %p33 = scmp.ne.s32.totalorder %s22, %s23
    %p34 = scmp.eq.s32.totalorder %s14, 0
    %p35 = por %p33, %p34
    %p36 = scmp.ne.s32.totalorder %s22, %s23
    %p37 = scmp.eq.s32.totalorder %s15, 1
    %p38 = por %p36, %p37
    %p40 = scmp.ne.s32.totalorder %s23, %s39
    %p41 = scmp.eq.s32.totalorder %s15, 0
    %p42 = por %p40, %p41
    %s44 = sadd.s32 %s43, 1
    %p47 = scmp.eq.s32.totalorder %s9, 1
    %p48 = scmp.ne.s32.totalorder %s43, %s45
    %p49 = scmp.eq.s32.totalorder %s9, 0
    %p50 = por %p48, %p49
    %p51 = scmp.ne.s32.totalorder %s43, %s45
    %p52 = scmp.eq.s32.totalorder %s14, 1
    %p53 = por %p51, %p52
    %p54 = scmp.ne.s32.totalorder %s45, %s46
    %p55 = scmp.eq.s32.totalorder %s14, 0
    %p56 = por %p54, %p55
    %p57 = scmp.ne.s32.totalorder %s45, %s46
    %p58 = scmp.eq.s32.totalorder %s15, 1
    %p59 = por %p57, %p58
    %p61 = scmp.ne.s32.totalorder %s46, %s60
    %p62 = scmp.eq.s32.totalorder %s15, 0
    %p63 = por %p61, %p62
    %s65 = sadd.s32 %s64, 1
    %p68 = scmp.eq.s32.totalorder %s9, 1
    %p69 = scmp.ne.s32.totalorder %s64, %s66
    %p70 = scmp.eq.s32.totalorder %s9, 0
    %p71 = por %p69, %p70
    %p72 = scmp.ne.s32.totalorder %s64, %s66
    %p73 = scmp.eq.s32.totalorder %s14, 1
    %p74 = por %p72, %p73
    %p75 = scmp.ne.s32.totalorder %s66, %s67
    %p76 = scmp.eq.s32.totalorder %s14, 0
    %p77 = por %p75, %p76
    %p78 = scmp.ne.s32.totalorder %s66, %s67
    %p79 = scmp.eq.s32.totalorder %s15, 1
    %p80 = por %p78, %p79
    %p82 = scmp.ne.s32.totalorder %s67, %s81
    %p83 = scmp.eq.s32.totalorder %s15, 0
    %p84 = por %p82, %p83
    %s85 = ssub.s32 %s9, %s16
    %p86 = scmp.eq.s32.totalorder %s85, 0
    %s88 = sadd.s32 %s87, 1
    %s89 = scalar_select %p86, %s87, %s88
    %p92 = pneg %p86
    %p93 = scmp.eq.s32.totalorder %s9, 1
    %p94 = por %p92, %p93
    %p95 = scmp.ne.s32.totalorder %s87, %s90
    %p96 = scmp.eq.s32.totalorder %s9, 0
    %p97 = por %p95, %p96
    %p98 = scmp.ne.s32.totalorder %s87, %s90
    %p99 = scmp.eq.s32.totalorder %s14, 1
    %p100 = por %p98, %p99
    %p101 = scmp.ne.s32.totalorder %s90, %s91
    %p102 = scmp.eq.s32.totalorder %s14, 0
    %p103 = por %p101, %p102
    %p104 = scmp.ne.s32.totalorder %s90, %s91
    %p105 = scmp.eq.s32.totalorder %s15, 1
    %p106 = por %p104, %p105
    %p108 = scmp.ne.s32.totalorder %s91, %s107
    %p109 = scmp.eq.s32.totalorder %s15, 0
    %p110 = por %p108, %p109
    %p111 = scmp.le.s32.totalorder 1, %s9
    %p112 = scmp.lt.s32.totalorder %s9, 3
    %p113 = pnand %p111, %p112
    %p114 = pneg %p113
    // Predicated region
    $region9: #{encoder_forward.6} parent=5 // pred_check
      _
    $region10: #{encoder_forward.6} parent=5 // pred_check_branch
      %116 = sbr.rel (%p113) target = $region12
    $region11: #{encoder_forward.6} parent=5 // pred_region
      %s117 = ssub.s32 %s9, 1
      // Predicated region
      $region13: #{encoder_forward.6} parent=11 // pred_check
        %p118 = pneg %p56
      $region14: #{encoder_forward.6} parent=11 // pred_check_branch
        %120 = sbr.rel (%p118) target = $region16
      $region15: #{encoder_forward.6} parent=11 // pred_region
        _
      $region16: #{encoder_forward.6} parent=11 // pred_fallthru
        _
      // Predicated region
      $region17: #{encoder_forward.6} parent=11 // pred_check
        %p121 = pneg %p77
      $region18: #{encoder_forward.6} parent=11 // pred_check_branch
        %123 = sbr.rel (%p121) target = $region20
      $region19: #{encoder_forward.6} parent=11 // pred_region
        _
      $region20: #{encoder_forward.6} parent=11 // pred_fallthru
        _
    $region12: #{encoder_forward.6} parent=5 // pred_fallthru
      _
    %p124 = scmp.lt.s32.totalorder %s9, 2
    // Predicated region
    $region21: #{encoder_forward.6} parent=5 // pred_check
      %p125 = pneg %p124
    $region22: #{encoder_forward.6} parent=5 // pred_check_branch
      %127 = sbr.rel (%p125) target = $region24
    $region23: #{encoder_forward.6} parent=5 // pred_region
      // Predicated region
      $region25: #{encoder_forward.6} parent=23 // pred_check
        %p128 = pneg %p29
      $region26: #{encoder_forward.6} parent=23 // pred_check_branch
        %130 = sbr.rel (%p128) target = $region28
      $region27: #{encoder_forward.6} parent=23 // pred_region
        %p131 = scmp.lt.s32.totalorder %s9, 1
        %s132 = scalar_select %p131, %s9, 1
        %s133 = smul.addr %s132, 68
        %s134 = smul.addr %s133, 4
        %s135 = scalar_lea.vmem %s0, %s134
      $region28: #{encoder_forward.6} parent=23 // pred_fallthru
        _
    $region24: #{encoder_forward.6} parent=5 // pred_fallthru
      _
    %p136 = scmp.le.s32.totalorder 1, %s9
    %p137 = scmp.lt.s32.totalorder %s9, 3
    %p138 = pnand %p136, %p137
    %p139 = pneg %p138
    // Predicated region
    $region29: #{encoder_forward.6} parent=5 // pred_check
      _
    $region30: #{encoder_forward.6} parent=5 // pred_check_branch
      %141 = sbr.rel (%p138) target = $region32
    $region31: #{encoder_forward.6} parent=5 // pred_region
      %s142 = ssub.s32 %s9, 1
      %p143 = scmp.lt.s32.totalorder %s14, 1
      %s144 = scalar_select %p143, %s14, 1
      %s145 = smul.addr %s144, 68
      %s146 = smul.addr %s145, 4
      %s147 = scalar_lea.vmem %s0, %s146
      %p148 = pneg %p35
      %p149 = pneg %p32
      %p150 = pneg %p56
      %p151 = pneg %p53
      %p152 = pneg %p77
      %p153 = pneg %p74
      %p154 = pneg %p103
      %p155 = pneg %p100
      %p156 = scmp.lt.s32.totalorder %s14, 1
      %s157 = scalar_select %p156, %s14, 1
      %s158 = smul.addr %s157, 32
      %s159 = smul.addr %s158, 4
      %s160 = scalar_lea.vmem %s3, %s159
      %p161 = scmp.lt.s32.totalorder %s14, 1
      %s162 = scalar_select %p161, %s14, 1
      %s163 = smul.addr %s162, 68
      %s164 = smul.addr %s163, 4
      %s165 = scalar_lea.vmem %s0, %s164
      %p166 = scmp.lt.s32.totalorder %s14, 1
      %s167 = scalar_select %p166, %s14, 1
      %s168 = smul.addr %s167, 32
      %s169 = smul.addr %s168, 4
      %s170 = scalar_lea.vmem %s3, %s169
      %v172 = vld [vmem:[%s165] sm:$0xf]
      %v173 = vld [vmem:[%s165 + $0x4] sm:$0xf]
      %v174 = vld [vmem:[%s165 + $0x8] sm:$0xf]
      %v175 = vld [vmem:[%s165 + $0xc] sm:$0xf]
      %v176 = vld [vmem:[%s165 + $0x10] sm:$0xf]
      %v177 = vld [vmem:[%s165 + $0x14] sm:$0xf]
      %v178 = vld [vmem:[%s165 + $0x18] sm:$0xf]
      %v179 = vld [vmem:[%s165 + $0x1c] sm:$0xf]
      %v180 = vld [vmem:[%s165 + $0x20] sm:$0xf]
      %v181 = vld [vmem:[%s165 + $0x24] sm:$0xf]
      %v182 = vld [vmem:[%s165 + $0x28] sm:$0xf]
      %v183 = vld [vmem:[%s165 + $0x2c] sm:$0xf]
      %v184 = vld [vmem:[%s165 + $0x30] sm:$0xf]
      %v185 = vld [vmem:[%s165 + $0x34] sm:$0xf]
      %v186 = vld [vmem:[%s165 + $0x38] sm:$0xf]
      %v187 = vld [vmem:[%s165 + $0x3c] sm:$0xf]
      %v188 = vld [vmem:[%s165 + $0x40] sm:$0xf]
      %v189 = vld [vmem:[%s165 + $0x44] sm:$0xf]
      %v190 = vld [vmem:[%s165 + $0x48] sm:$0xf]
      %v191 = vld [vmem:[%s165 + $0x4c] sm:$0xf]
      %v192 = vld [vmem:[%s165 + $0x50] sm:$0xf]
      %v193 = vld [vmem:[%s165 + $0x54] sm:$0xf]
      %v194 = vld [vmem:[%s165 + $0x58] sm:$0xf]
      %v195 = vld [vmem:[%s165 + $0x5c] sm:$0xf]
      %v196 = vld [vmem:[%s165 + $0x60] sm:$0xf]
      %v197 = vld [vmem:[%s165 + $0x64] sm:$0xf]
      %v198 = vld [vmem:[%s165 + $0x68] sm:$0xf]
      %v199 = vld [vmem:[%s165 + $0x6c] sm:$0xf]
      %v200 = vld [vmem:[%s165 + $0x70] sm:$0xf]
      %v201 = vld [vmem:[%s165 + $0x74] sm:$0xf]
      %v202 = vld [vmem:[%s165 + $0x78] sm:$0xf]
      %v203 = vld [vmem:[%s165 + $0x7c] sm:$0xf]
      %v204 = vld [vmem:[%s1] sm:$0xf]
      %v205 = vld [vmem:[%s1 + $0x4] sm:$0x3]
      %s206 = scalar_lea.vmem %s165, 136
      %v207 = vld [vmem:[%s206] sm:$0xf]
      %v208 = vld [vmem:[%s206 + $0x4] sm:$0xf]
      %v209 = vld [vmem:[%s206 + $0x8] sm:$0xf]
      %v210 = vld [vmem:[%s206 + $0xc] sm:$0xf]
      %v211 = vld [vmem:[%s206 + $0x10] sm:$0xf]
      %v212 = vld [vmem:[%s206 + $0x14] sm:$0xf]
      %v213 = vld [vmem:[%s206 + $0x18] sm:$0xf]
      %v214 = vld [vmem:[%s206 + $0x1c] sm:$0xf]
      %v215 = vld [vmem:[%s206 + $0x20] sm:$0xf]
      %v216 = vld [vmem:[%s206 + $0x24] sm:$0xf]
      %v217 = vld [vmem:[%s206 + $0x28] sm:$0xf]
      %v218 = vld [vmem:[%s206 + $0x2c] sm:$0xf]
      %v219 = vld [vmem:[%s206 + $0x30] sm:$0xf]
      %v220 = vld [vmem:[%s206 + $0x34] sm:$0xf]
      %v221 = vld [vmem:[%s206 + $0x38] sm:$0xf]
      %v222 = vld [vmem:[%s206 + $0x3c] sm:$0xf]
      %v223 = vld [vmem:[%s206 + $0x40] sm:$0xf]
      %v224 = vld [vmem:[%s206 + $0x44] sm:$0xf]
      %v225 = vld [vmem:[%s206 + $0x48] sm:$0xf]
      %v226 = vld [vmem:[%s206 + $0x4c] sm:$0xf]
      %v227 = vld [vmem:[%s206 + $0x50] sm:$0xf]
      %v228 = vld [vmem:[%s206 + $0x54] sm:$0xf]
      %v229 = vld [vmem:[%s206 + $0x58] sm:$0xf]
      %v230 = vld [vmem:[%s206 + $0x5c] sm:$0xf]
      %v231 = vld [vmem:[%s206 + $0x60] sm:$0xf]
      %v232 = vld [vmem:[%s206 + $0x64] sm:$0xf]
      %v233 = vld [vmem:[%s206 + $0x68] sm:$0xf]
      %v234 = vld [vmem:[%s206 + $0x6c] sm:$0xf]
      %v235 = vld [vmem:[%s206 + $0x70] sm:$0xf]
      %v236 = vld [vmem:[%s206 + $0x74] sm:$0xf]
      %v237 = vld [vmem:[%s206 + $0x78] sm:$0xf]
      %v238 = vld [vmem:[%s206 + $0x7c] sm:$0xf]
      %s239 = scalar_lea.vmem %s1, 8
      %v240 = vld [vmem:[%s239] sm:$0xf]
      %v241 = vld [vmem:[%s239 + $0x4] sm:$0x3]
      %v274 = vunpack.c.l.b16 %v207
      %v275 = vunpack.c.l.b16 %v208
      %v276 = vunpack.c.l.b16 %v209
      %v277 = vunpack.c.l.b16 %v210
      %v278 = vunpack.c.l.b16 %v211
      %v279 = vunpack.c.l.b16 %v212
      %v280 = vunpack.c.l.b16 %v213
      %v281 = vunpack.c.l.b16 %v214
      %v282 = vunpack.c.l.b16 %v215
      %v283 = vunpack.c.l.b16 %v216
      %v284 = vunpack.c.l.b16 %v217
      %v285 = vunpack.c.l.b16 %v218
      %v286 = vunpack.c.l.b16 %v219
      %v287 = vunpack.c.l.b16 %v220
      %v288 = vunpack.c.l.b16 %v221
      %v289 = vunpack.c.l.b16 %v222
      %v290 = vunpack.c.l.b16 %v223
      %v291 = vunpack.c.l.b16 %v224
      %v292 = vunpack.c.l.b16 %v225
      %v293 = vunpack.c.l.b16 %v226
      %v294 = vunpack.c.l.b16 %v227
      %v295 = vunpack.c.l.b16 %v228
      %v296 = vunpack.c.l.b16 %v229
      %v297 = vunpack.c.l.b16 %v230
      %v298 = vunpack.c.l.b16 %v231
      %v299 = vunpack.c.l.b16 %v232
      %v300 = vunpack.c.l.b16 %v233
      %v301 = vunpack.c.l.b16 %v234
      %v302 = vunpack.c.l.b16 %v235
      %v303 = vunpack.c.l.b16 %v236
      %v304 = vunpack.c.l.b16 %v237
      %v305 = vunpack.c.l.b16 %v238
      %v306 = vpack.c.b16 %v275, %v274
      %v307 = vpack.c.b16 %v277, %v276
      %v308 = vpack.c.b16 %v279, %v278
      %v309 = vpack.c.b16 %v281, %v280
      %v310 = vpack.c.b16 %v283, %v282
      %v311 = vpack.c.b16 %v285, %v284
      %v312 = vpack.c.b16 %v287, %v286
      %v313 = vpack.c.b16 %v289, %v288
      %v314 = vpack.c.b16 %v291, %v290
      %v315 = vpack.c.b16 %v293, %v292
      %v316 = vpack.c.b16 %v295, %v294
      %v317 = vpack.c.b16 %v297, %v296
      %v318 = vpack.c.b16 %v299, %v298
      %v319 = vpack.c.b16 %v301, %v300
      %v320 = vpack.c.b16 %v303, %v302
      %v321 = vpack.c.b16 %v305, %v304
      %v324 = vunpack.c.l.b16 %v240
      %v325 = vunpack.c.l.b16 %v241
      %v326 = vpack.c.b16 %v325, %v324
      %vm327 = vcmask 97280
      %v329 = vsel %vm327, %v306, 0
      %v332 = vsel %vm327, %v307, 0
      %v335 = vsel %vm327, %v308, 0
      %v338 = vsel %vm327, %v309, 0
      %v341 = vsel %vm327, %v310, 0
      %v344 = vsel %vm327, %v311, 0
      %v347 = vsel %vm327, %v312, 0
      %v350 = vsel %vm327, %v313, 0
      %v353 = vsel %vm327, %v314, 0
      %v356 = vsel %vm327, %v315, 0
      %v359 = vsel %vm327, %v316, 0
      %v362 = vsel %vm327, %v317, 0
      %v365 = vsel %vm327, %v318, 0
      %v368 = vsel %vm327, %v319, 0
      %v371 = vsel %vm327, %v320, 0
      %v374 = vsel %vm327, %v321, 0
      %vm376 = vcmask 1045504
      %v378 = vsel %vm376, %v326, 0
      %380 = vmatprep.subr.bf16.mxu0 0
      %381 = vmatpush1.bf16.msra.mxu0 0
      %382 = vmatprep.subr.bf16.mxu0 0
      %383 = vmatpush1.bf16.msra.mxu0 0
      %384 = vmatprep.subr.bf16.mxu0 0
      %385 = vmatpush1.bf16.msra.mxu0 0
      %386 = vmatprep.subr.bf16.mxu0 0
      %387 = vmatpush1.bf16.msra.mxu0 0
      %388 = vmatprep.subr.bf16.mxu0 0
      %389 = vmatpush1.bf16.msra.mxu0 0
      %390 = vmatprep.subr.bf16.mxu0 0
      %391 = vmatpush1.bf16.msra.mxu0 0
      %392 = vmatprep.subr.bf16.mxu0 0
      %393 = vmatpush1.bf16.msra.mxu0 0
      %394 = vmatprep.subr.bf16.mxu0 0
      %395 = vmatpush1.bf16.msra.mxu0 %v378
      %396 = vmatprep.subr.bf16.mxu0 0
      %397 = vmatpush2.bf16.msra.mxu0 0
      %398 = vmatprep.subr.bf16.mxu0 0
      %399 = vmatpush2.bf16.msra.mxu0 0
      %400 = vmatprep.subr.bf16.mxu0 0
      %401 = vmatpush2.bf16.msra.mxu0 0
      %402 = vmatprep.subr.bf16.mxu0 0
      %403 = vmatpush2.bf16.msra.mxu0 0
      %404 = vmatprep.subr.bf16.mxu0 0
      %405 = vmatpush2.bf16.msra.mxu0 0
      %406 = vmatprep.subr.bf16.mxu0 0
      %407 = vmatpush2.bf16.msra.mxu0 0
      %408 = vmatprep.subr.bf16.mxu0 0
      %409 = vmatpush2.bf16.msra.mxu0 0
      %410 = vmatprep.subr.bf16.mxu0 0
      %411 = vmatpush2.bf16.msra.mxu0 0
      %412 = vmatprep.mubr.bf16.mxu0 0
      %413 = vmatmul.mubr.bf16.gmra.mxu0 %v329
      %v414 = vpop.f32.mrf.mxu0
      %v415 = vadd.f32 0.0, %v414
      %v416 = vpop.f32.mrf.mxu0
      %v417 = vpop.f32.mrf.mxu0
      %v418 = vadd.f32 0.0, %v417
      %v419 = vpop.f32.mrf.mxu0
      %420 = vmatprep.mubr.bf16.mxu0 0
      %421 = vmatmul.mubr.bf16.gmra.mxu0 %v332
      %v422 = vpop.f32.mrf.mxu0
      %v423 = vadd.f32 0.0, %v422
      %v424 = vpop.f32.mrf.mxu0
      %v425 = vpop.f32.mrf.mxu0
      %v426 = vadd.f32 0.0, %v425
      %v427 = vpop.f32.mrf.mxu0
      %428 = vmatprep.mubr.bf16.mxu0 0
      %429 = vmatmul.mubr.bf16.gmra.mxu0 %v335
      %v430 = vpop.f32.mrf.mxu0
      %v431 = vadd.f32 0.0, %v430
      %v432 = vpop.f32.mrf.mxu0
      %v433 = vpop.f32.mrf.mxu0
      %v434 = vadd.f32 0.0, %v433
      %v435 = vpop.f32.mrf.mxu0
      %436 = vmatprep.mubr.bf16.mxu0 0
      %437 = vmatmul.mubr.bf16.gmra.mxu0 %v338
      %v438 = vpop.f32.mrf.mxu0
      %v439 = vadd.f32 0.0, %v438
      %v440 = vpop.f32.mrf.mxu0
      %v441 = vpop.f32.mrf.mxu0
      %v442 = vadd.f32 0.0, %v441
      %v443 = vpop.f32.mrf.mxu0
      %444 = vmatprep.mubr.bf16.mxu0 0
      %445 = vmatmul.mubr.bf16.gmra.mxu0 %v341
      %v446 = vpop.f32.mrf.mxu0
      %v447 = vadd.f32 0.0, %v446
      %v448 = vpop.f32.mrf.mxu0
      %v449 = vpop.f32.mrf.mxu0
      %v450 = vadd.f32 0.0, %v449
      %v451 = vpop.f32.mrf.mxu0
      %452 = vmatprep.mubr.bf16.mxu0 0
      %453 = vmatmul.mubr.bf16.gmra.mxu0 %v344
      %v454 = vpop.f32.mrf.mxu0
      %v455 = vadd.f32 0.0, %v454
      %v456 = vpop.f32.mrf.mxu0
      %v457 = vpop.f32.mrf.mxu0
      %v458 = vadd.f32 0.0, %v457
      %v459 = vpop.f32.mrf.mxu0
      %460 = vmatprep.mubr.bf16.mxu0 0
      %461 = vmatmul.mubr.bf16.gmra.mxu0 %v347
      %v462 = vpop.f32.mrf.mxu0
      %v463 = vadd.f32 0.0, %v462
      %v464 = vpop.f32.mrf.mxu0
      %v465 = vpop.f32.mrf.mxu0
      %v466 = vadd.f32 0.0, %v465
      %v467 = vpop.f32.mrf.mxu0
      %468 = vmatprep.mubr.bf16.mxu0 0
      %469 = vmatmul.mubr.bf16.gmra.mxu0 %v350
      %v470 = vpop.f32.mrf.mxu0
      %v471 = vadd.f32 0.0, %v470
      %v472 = vpop.f32.mrf.mxu0
      %v473 = vpop.f32.mrf.mxu0
      %v474 = vadd.f32 0.0, %v473
      %v475 = vpop.f32.mrf.mxu0
      %476 = vmatprep.mubr.bf16.mxu0 0
      %477 = vmatmul.mubr.bf16.gmra.mxu0 %v353
      %v478 = vpop.f32.mrf.mxu0
      %v479 = vadd.f32 0.0, %v478
      %v480 = vpop.f32.mrf.mxu0
      %v481 = vpop.f32.mrf.mxu0
      %v482 = vadd.f32 0.0, %v481
      %v483 = vpop.f32.mrf.mxu0
      %484 = vmatprep.mubr.bf16.mxu0 0
      %485 = vmatmul.mubr.bf16.gmra.mxu0 %v356
      %v486 = vpop.f32.mrf.mxu0
      %v487 = vadd.f32 0.0, %v486
      %v488 = vpop.f32.mrf.mxu0
      %v489 = vpop.f32.mrf.mxu0
      %v490 = vadd.f32 0.0, %v489
      %v491 = vpop.f32.mrf.mxu0
      %492 = vmatprep.mubr.bf16.mxu0 0
      %493 = vmatmul.mubr.bf16.gmra.mxu0 %v359
      %v494 = vpop.f32.mrf.mxu0
      %v495 = vadd.f32 0.0, %v494
      %v496 = vpop.f32.mrf.mxu0
      %v497 = vpop.f32.mrf.mxu0
      %v498 = vadd.f32 0.0, %v497
      %v499 = vpop.f32.mrf.mxu0
      %500 = vmatprep.mubr.bf16.mxu0 0
      %501 = vmatmul.mubr.bf16.gmra.mxu0 %v362
      %v502 = vpop.f32.mrf.mxu0
      %v503 = vadd.f32 0.0, %v502
      %v504 = vpop.f32.mrf.mxu0
      %v505 = vpop.f32.mrf.mxu0
      %v506 = vadd.f32 0.0, %v505
      %v507 = vpop.f32.mrf.mxu0
      %508 = vmatprep.mubr.bf16.mxu0 0
      %509 = vmatmul.mubr.bf16.gmra.mxu0 %v365
      %v510 = vpop.f32.mrf.mxu0
      %v511 = vadd.f32 0.0, %v510
      %v512 = vpop.f32.mrf.mxu0
      %v513 = vpop.f32.mrf.mxu0
      %v514 = vadd.f32 0.0, %v513
      %v515 = vpop.f32.mrf.mxu0
      %516 = vmatprep.mubr.bf16.mxu0 0
      %517 = vmatmul.mubr.bf16.gmra.mxu0 %v368
      %v518 = vpop.f32.mrf.mxu0
      %v519 = vadd.f32 0.0, %v518
      %v520 = vpop.f32.mrf.mxu0
      %v521 = vpop.f32.mrf.mxu0
      %v522 = vadd.f32 0.0, %v521
      %v523 = vpop.f32.mrf.mxu0
      %524 = vmatprep.mubr.bf16.mxu0 0
      %525 = vmatmul.mubr.bf16.gmra.mxu0 %v371
      %v526 = vpop.f32.mrf.mxu0
      %v527 = vadd.f32 0.0, %v526
      %v528 = vpop.f32.mrf.mxu0
      %v529 = vpop.f32.mrf.mxu0
      %v530 = vadd.f32 0.0, %v529
      %v531 = vpop.f32.mrf.mxu0
      %532 = vmatprep.mubr.bf16.mxu0 0
      %533 = vmatmul.mubr.bf16.gmra.mxu0 %v374
      %v534 = vpop.f32.mrf.mxu0
      %v535 = vadd.f32 0.0, %v534
      %v536 = vpop.f32.mrf.mxu0
      %v537 = vpop.f32.mrf.mxu0
      %v538 = vadd.f32 0.0, %v537
      %v539 = vpop.f32.mrf.mxu0
      %540 = vdwg.mxu0
      %v573 = vunpack.c.l.b16 %v172
      %v574 = vunpack.c.l.b16 %v173
      %v575 = vunpack.c.l.b16 %v174
      %v576 = vunpack.c.l.b16 %v175
      %v577 = vunpack.c.l.b16 %v176
      %v578 = vunpack.c.l.b16 %v177
      %v579 = vunpack.c.l.b16 %v178
      %v580 = vunpack.c.l.b16 %v179
      %v581 = vunpack.c.l.b16 %v180
      %v582 = vunpack.c.l.b16 %v181
      %v583 = vunpack.c.l.b16 %v182
      %v584 = vunpack.c.l.b16 %v183
      %v585 = vunpack.c.l.b16 %v184
      %v586 = vunpack.c.l.b16 %v185
      %v587 = vunpack.c.l.b16 %v186
      %v588 = vunpack.c.l.b16 %v187
      %v589 = vunpack.c.l.b16 %v188
      %v590 = vunpack.c.l.b16 %v189
      %v591 = vunpack.c.l.b16 %v190
      %v592 = vunpack.c.l.b16 %v191
      %v593 = vunpack.c.l.b16 %v192
      %v594 = vunpack.c.l.b16 %v193
      %v595 = vunpack.c.l.b16 %v194
      %v596 = vunpack.c.l.b16 %v195
      %v597 = vunpack.c.l.b16 %v196
      %v598 = vunpack.c.l.b16 %v197
      %v599 = vunpack.c.l.b16 %v198
      %v600 = vunpack.c.l.b16 %v199
      %v601 = vunpack.c.l.b16 %v200
      %v602 = vunpack.c.l.b16 %v201
      %v603 = vunpack.c.l.b16 %v202
      %v604 = vunpack.c.l.b16 %v203
      %v605 = vpack.c.b16 %v574, %v573
      %v606 = vpack.c.b16 %v576, %v575
      %v607 = vpack.c.b16 %v578, %v577
      %v608 = vpack.c.b16 %v580, %v579
      %v609 = vpack.c.b16 %v582, %v581
      %v610 = vpack.c.b16 %v584, %v583
      %v611 = vpack.c.b16 %v586, %v585
      %v612 = vpack.c.b16 %v588, %v587
      %v613 = vpack.c.b16 %v590, %v589
      %v614 = vpack.c.b16 %v592, %v591
      %v615 = vpack.c.b16 %v594, %v593
      %v616 = vpack.c.b16 %v596, %v595
      %v617 = vpack.c.b16 %v598, %v597
      %v618 = vpack.c.b16 %v600, %v599
      %v619 = vpack.c.b16 %v602, %v601
      %v620 = vpack.c.b16 %v604, %v603
      %v623 = vunpack.c.l.b16 %v204
      %v624 = vunpack.c.l.b16 %v205
      %v625 = vpack.c.b16 %v624, %v623
      %v627 = vsel %vm327, %v605, 0
      %v630 = vsel %vm327, %v606, 0
      %v633 = vsel %vm327, %v607, 0
      %v636 = vsel %vm327, %v608, 0
      %v639 = vsel %vm327, %v609, 0
      %v642 = vsel %vm327, %v610, 0
      %v645 = vsel %vm327, %v611, 0
      %v648 = vsel %vm327, %v612, 0
      %v651 = vsel %vm327, %v613, 0
      %v654 = vsel %vm327, %v614, 0
      %v657 = vsel %vm327, %v615, 0
      %v660 = vsel %vm327, %v616, 0
      %v663 = vsel %vm327, %v617, 0
      %v666 = vsel %vm327, %v618, 0
      %v669 = vsel %vm327, %v619, 0
      %v672 = vsel %vm327, %v620, 0
      %v675 = vsel %vm376, %v625, 0
      %677 = vmatprep.subr.bf16.mxu0 0
      %678 = vmatpush1.bf16.msra.mxu0 0
      %679 = vmatprep.subr.bf16.mxu0 0
      %680 = vmatpush1.bf16.msra.mxu0 0
      %681 = vmatprep.subr.bf16.mxu0 0
      %682 = vmatpush1.bf16.msra.mxu0 0
      %683 = vmatprep.subr.bf16.mxu0 0
      %684 = vmatpush1.bf16.msra.mxu0 0
      %685 = vmatprep.subr.bf16.mxu0 0
      %686 = vmatpush1.bf16.msra.mxu0 0
      %687 = vmatprep.subr.bf16.mxu0 0
      %688 = vmatpush1.bf16.msra.mxu0 0
      %689 = vmatprep.subr.bf16.mxu0 0
      %690 = vmatpush1.bf16.msra.mxu0 0
      %691 = vmatprep.subr.bf16.mxu0 0
      %692 = vmatpush1.bf16.msra.mxu0 %v675
      %693 = vmatprep.subr.bf16.mxu0 0
      %694 = vmatpush2.bf16.msra.mxu0 0
      %695 = vmatprep.subr.bf16.mxu0 0
      %696 = vmatpush2.bf16.msra.mxu0 0
      %697 = vmatprep.subr.bf16.mxu0 0
      %698 = vmatpush2.bf16.msra.mxu0 0
      %699 = vmatprep.subr.bf16.mxu0 0
      %700 = vmatpush2.bf16.msra.mxu0 0
      %701 = vmatprep.subr.bf16.mxu0 0
      %702 = vmatpush2.bf16.msra.mxu0 0
      %703 = vmatprep.subr.bf16.mxu0 0
      %704 = vmatpush2.bf16.msra.mxu0 0
      %705 = vmatprep.subr.bf16.mxu0 0
      %706 = vmatpush2.bf16.msra.mxu0 0
      %707 = vmatprep.subr.bf16.mxu0 0
      %708 = vmatpush2.bf16.msra.mxu0 0
      %709 = vmatprep.mubr.bf16.mxu0 0
      %710 = vmatmul.mubr.bf16.gmra.mxu0 %v627
      %v711 = vpop.f32.mrf.mxu0
      %v712 = vadd.f32 %v415, %v711
      %v713 = vpop.f32.mrf.mxu0
      %v714 = vpop.f32.mrf.mxu0
      %v715 = vadd.f32 %v418, %v714
      %v716 = vpop.f32.mrf.mxu0
      %717 = vmatprep.mubr.bf16.mxu0 0
      %718 = vmatmul.mubr.bf16.gmra.mxu0 %v630
      %v719 = vpop.f32.mrf.mxu0
      %v720 = vadd.f32 %v423, %v719
      %v721 = vpop.f32.mrf.mxu0
      %v722 = vpop.f32.mrf.mxu0
      %v723 = vadd.f32 %v426, %v722
      %v724 = vpop.f32.mrf.mxu0
      %725 = vmatprep.mubr.bf16.mxu0 0
      %726 = vmatmul.mubr.bf16.gmra.mxu0 %v633
      %v727 = vpop.f32.mrf.mxu0
      %v728 = vadd.f32 %v431, %v727
      %v729 = vpop.f32.mrf.mxu0
      %v730 = vpop.f32.mrf.mxu0
      %v731 = vadd.f32 %v434, %v730
      %v732 = vpop.f32.mrf.mxu0
      %733 = vmatprep.mubr.bf16.mxu0 0
      %734 = vmatmul.mubr.bf16.gmra.mxu0 %v636
      %v735 = vpop.f32.mrf.mxu0
      %v736 = vadd.f32 %v439, %v735
      %v737 = vpop.f32.mrf.mxu0
      %v738 = vpop.f32.mrf.mxu0
      %v739 = vadd.f32 %v442, %v738
      %v740 = vpop.f32.mrf.mxu0
      %741 = vmatprep.mubr.bf16.mxu0 0
      %742 = vmatmul.mubr.bf16.gmra.mxu0 %v639
      %v743 = vpop.f32.mrf.mxu0
      %v744 = vadd.f32 %v447, %v743
      %v745 = vpop.f32.mrf.mxu0
      %v746 = vpop.f32.mrf.mxu0
      %v747 = vadd.f32 %v450, %v746
      %v748 = vpop.f32.mrf.mxu0
      %749 = vmatprep.mubr.bf16.mxu0 0
      %750 = vmatmul.mubr.bf16.gmra.mxu0 %v642
      %v751 = vpop.f32.mrf.mxu0
      %v752 = vadd.f32 %v455, %v751
      %v753 = vpop.f32.mrf.mxu0
      %v754 = vpop.f32.mrf.mxu0
      %v755 = vadd.f32 %v458, %v754
      %v756 = vpop.f32.mrf.mxu0
      %757 = vmatprep.mubr.bf16.mxu0 0
      %758 = vmatmul.mubr.bf16.gmra.mxu0 %v645
      %v759 = vpop.f32.mrf.mxu0
      %v760 = vadd.f32 %v463, %v759
      %v761 = vpop.f32.mrf.mxu0
      %v762 = vpop.f32.mrf.mxu0
      %v763 = vadd.f32 %v466, %v762
      %v764 = vpop.f32.mrf.mxu0
      %765 = vmatprep.mubr.bf16.mxu0 0
      %766 = vmatmul.mubr.bf16.gmra.mxu0 %v648
      %v767 = vpop.f32.mrf.mxu0
      %v768 = vadd.f32 %v471, %v767
      %v769 = vpop.f32.mrf.mxu0
      %v770 = vpop.f32.mrf.mxu0
      %v771 = vadd.f32 %v474, %v770
      %v772 = vpop.f32.mrf.mxu0
      %773 = vmatprep.mubr.bf16.mxu0 0
      %774 = vmatmul.mubr.bf16.gmra.mxu0 %v651
      %v775 = vpop.f32.mrf.mxu0
      %v776 = vadd.f32 %v479, %v775
      %v777 = vpop.f32.mrf.mxu0
      %v778 = vpop.f32.mrf.mxu0
      %v779 = vadd.f32 %v482, %v778
      %v780 = vpop.f32.mrf.mxu0
      %781 = vmatprep.mubr.bf16.mxu0 0
      %782 = vmatmul.mubr.bf16.gmra.mxu0 %v654
      %v783 = vpop.f32.mrf.mxu0
      %v784 = vadd.f32 %v487, %v783
      %v785 = vpop.f32.mrf.mxu0
      %v786 = vpop.f32.mrf.mxu0
      %v787 = vadd.f32 %v490, %v786
      %v788 = vpop.f32.mrf.mxu0
      %789 = vmatprep.mubr.bf16.mxu0 0
      %790 = vmatmul.mubr.bf16.gmra.mxu0 %v657
      %v791 = vpop.f32.mrf.mxu0
      %v792 = vadd.f32 %v495, %v791
      %v793 = vpop.f32.mrf.mxu0
      %v794 = vpop.f32.mrf.mxu0
      %v795 = vadd.f32 %v498, %v794
      %v796 = vpop.f32.mrf.mxu0
      %797 = vmatprep.mubr.bf16.mxu0 0
      %798 = vmatmul.mubr.bf16.gmra.mxu0 %v660
      %v799 = vpop.f32.mrf.mxu0
      %v800 = vadd.f32 %v503, %v799
      %v801 = vpop.f32.mrf.mxu0
      %v802 = vpop.f32.mrf.mxu0
      %v803 = vadd.f32 %v506, %v802
      %v804 = vpop.f32.mrf.mxu0
      %805 = vmatprep.mubr.bf16.mxu0 0
      %806 = vmatmul.mubr.bf16.gmra.mxu0 %v663
      %v807 = vpop.f32.mrf.mxu0
      %v808 = vadd.f32 %v511, %v807
      %v809 = vpop.f32.mrf.mxu0
      %v810 = vpop.f32.mrf.mxu0
      %v811 = vadd.f32 %v514, %v810
      %v812 = vpop.f32.mrf.mxu0
      %813 = vmatprep.mubr.bf16.mxu0 0
      %814 = vmatmul.mubr.bf16.gmra.mxu0 %v666
      %v815 = vpop.f32.mrf.mxu0
      %v816 = vadd.f32 %v519, %v815
      %v817 = vpop.f32.mrf.mxu0
      %v818 = vpop.f32.mrf.mxu0
      %v819 = vadd.f32 %v522, %v818
      %v820 = vpop.f32.mrf.mxu0
      %821 = vmatprep.mubr.bf16.mxu0 0
      %822 = vmatmul.mubr.bf16.gmra.mxu0 %v669
      %v823 = vpop.f32.mrf.mxu0
      %v824 = vadd.f32 %v527, %v823
      %v825 = vpop.f32.mrf.mxu0
      %v826 = vpop.f32.mrf.mxu0
      %v827 = vadd.f32 %v530, %v826
      %v828 = vpop.f32.mrf.mxu0
      %829 = vmatprep.mubr.bf16.mxu0 0
      %830 = vmatmul.mubr.bf16.gmra.mxu0 %v672
      %v831 = vpop.f32.mrf.mxu0
      %v832 = vadd.f32 %v535, %v831
      %v833 = vpop.f32.mrf.mxu0
      %v834 = vpop.f32.mrf.mxu0
      %v835 = vadd.f32 %v538, %v834
      %v836 = vpop.f32.mrf.mxu0
      %837 = vdwg.mxu0
      %v838 = vld [vmem:[%s165 + $0x8] sm:$0xf]
      %v839 = vld [vmem:[%s165 + $0xc] sm:$0xf]
      %v840 = vld [vmem:[%s165 + $0x10] sm:$0xf]
      %v841 = vld [vmem:[%s165 + $0x14] sm:$0xf]
      %v842 = vld [vmem:[%s165 + $0x18] sm:$0xf]
      %v843 = vld [vmem:[%s165 + $0x1c] sm:$0xf]
      %v844 = vld [vmem:[%s165 + $0x20] sm:$0xf]
      %v845 = vld [vmem:[%s165 + $0x24] sm:$0xf]
      %v846 = vld [vmem:[%s165 + $0x28] sm:$0xf]
      %v847 = vld [vmem:[%s165 + $0x2c] sm:$0xf]
      %v848 = vld [vmem:[%s165 + $0x30] sm:$0xf]
      %v849 = vld [vmem:[%s165 + $0x34] sm:$0xf]
      %v850 = vld [vmem:[%s165 + $0x38] sm:$0xf]
      %v851 = vld [vmem:[%s165 + $0x3c] sm:$0xf]
      %v852 = vld [vmem:[%s165 + $0x40] sm:$0xf]
      %v853 = vld [vmem:[%s165 + $0x44] sm:$0xf]
      %v854 = vld [vmem:[%s165 + $0x48] sm:$0xf]
      %v855 = vld [vmem:[%s165 + $0x4c] sm:$0xf]
      %v856 = vld [vmem:[%s165 + $0x50] sm:$0xf]
      %v857 = vld [vmem:[%s165 + $0x54] sm:$0xf]
      %v858 = vld [vmem:[%s165 + $0x58] sm:$0xf]
      %v859 = vld [vmem:[%s165 + $0x5c] sm:$0xf]
      %v860 = vld [vmem:[%s165 + $0x60] sm:$0xf]
      %v861 = vld [vmem:[%s165 + $0x64] sm:$0xf]
      %v862 = vld [vmem:[%s165 + $0x68] sm:$0xf]
      %v863 = vld [vmem:[%s165 + $0x6c] sm:$0xf]
      %v864 = vld [vmem:[%s165 + $0x70] sm:$0xf]
      %v865 = vld [vmem:[%s165 + $0x74] sm:$0xf]
      %v866 = vld [vmem:[%s165 + $0x78] sm:$0xf]
      %v867 = vld [vmem:[%s165 + $0x7c] sm:$0xf]
      %v868 = vld [vmem:[%s165 + $0x80] sm:$0xf]
      %v869 = vld [vmem:[%s165 + $0x84] sm:$0xf]
      %s870 = scalar_lea.vmem %s1, 16
      %v871 = vld [vmem:[%s870] sm:$0xf]
      %v872 = vld [vmem:[%s870 + $0x4] sm:$0x3]
      %v905 = vunpack.c.l.b16 %v838
      %v906 = vunpack.c.l.b16 %v839
      %v907 = vunpack.c.l.b16 %v840
      %v908 = vunpack.c.l.b16 %v841
      %v909 = vunpack.c.l.b16 %v842
      %v910 = vunpack.c.l.b16 %v843
      %v911 = vunpack.c.l.b16 %v844
      %v912 = vunpack.c.l.b16 %v845
      %v913 = vunpack.c.l.b16 %v846
      %v914 = vunpack.c.l.b16 %v847
      %v915 = vunpack.c.l.b16 %v848
      %v916 = vunpack.c.l.b16 %v849
      %v917 = vunpack.c.l.b16 %v850
      %v918 = vunpack.c.l.b16 %v851
      %v919 = vunpack.c.l.b16 %v852
      %v920 = vunpack.c.l.b16 %v853
      %v921 = vunpack.c.l.b16 %v854
      %v922 = vunpack.c.l.b16 %v855
      %v923 = vunpack.c.l.b16 %v856
      %v924 = vunpack.c.l.b16 %v857
      %v925 = vunpack.c.l.b16 %v858
      %v926 = vunpack.c.l.b16 %v859
      %v927 = vunpack.c.l.b16 %v860
      %v928 = vunpack.c.l.b16 %v861
      %v929 = vunpack.c.l.b16 %v862
      %v930 = vunpack.c.l.b16 %v863
      %v931 = vunpack.c.l.b16 %v864
      %v932 = vunpack.c.l.b16 %v865
      %v933 = vunpack.c.l.b16 %v866
      %v934 = vunpack.c.l.b16 %v867
      %v935 = vunpack.c.l.b16 %v868
      %v936 = vunpack.c.l.b16 %v869
      %v937 = vpack.c.b16 %v906, %v905
      %v938 = vpack.c.b16 %v908, %v907
      %v939 = vpack.c.b16 %v910, %v909
      %v940 = vpack.c.b16 %v912, %v911
      %v941 = vpack.c.b16 %v914, %v913
      %v942 = vpack.c.b16 %v916, %v915
      %v943 = vpack.c.b16 %v918, %v917
      %v944 = vpack.c.b16 %v920, %v919
      %v945 = vpack.c.b16 %v922, %v921
      %v946 = vpack.c.b16 %v924, %v923
      %v947 = vpack.c.b16 %v926, %v925
      %v948 = vpack.c.b16 %v928, %v927
      %v949 = vpack.c.b16 %v930, %v929
      %v950 = vpack.c.b16 %v932, %v931
      %v951 = vpack.c.b16 %v934, %v933
      %v952 = vpack.c.b16 %v936, %v935
      %v955 = vunpack.c.l.b16 %v871
      %v956 = vunpack.c.l.b16 %v872
      %v957 = vpack.c.b16 %v956, %v955
      %v959 = vsel %vm327, %v937, 0
      %v962 = vsel %vm327, %v938, 0
      %v965 = vsel %vm327, %v939, 0
      %v968 = vsel %vm327, %v940, 0
      %v971 = vsel %vm327, %v941, 0
      %v974 = vsel %vm327, %v942, 0
      %v977 = vsel %vm327, %v943, 0
      %v980 = vsel %vm327, %v944, 0
      %v983 = vsel %vm327, %v945, 0
      %v986 = vsel %vm327, %v946, 0
      %v989 = vsel %vm327, %v947, 0
      %v992 = vsel %vm327, %v948, 0
      %v995 = vsel %vm327, %v949, 0
      %v998 = vsel %vm327, %v950, 0
      %v1001 = vsel %vm327, %v951, 0
      %v1004 = vsel %vm327, %v952, 0
      %v1007 = vsel %vm376, %v957, 0
      %1009 = vmatprep.subr.bf16.mxu0 0
      %1010 = vmatpush1.bf16.msra.mxu0 0
      %1011 = vmatprep.subr.bf16.mxu0 0
      %1012 = vmatpush1.bf16.msra.mxu0 0
      %1013 = vmatprep.subr.bf16.mxu0 0
      %1014 = vmatpush1.bf16.msra.mxu0 0
      %1015 = vmatprep.subr.bf16.mxu0 0
      %1016 = vmatpush1.bf16.msra.mxu0 0
      %1017 = vmatprep.subr.bf16.mxu0 0
      %1018 = vmatpush1.bf16.msra.mxu0 0
      %1019 = vmatprep.subr.bf16.mxu0 0
      %1020 = vmatpush1.bf16.msra.mxu0 0
      %1021 = vmatprep.subr.bf16.mxu0 0
      %1022 = vmatpush1.bf16.msra.mxu0 0
      %1023 = vmatprep.subr.bf16.mxu0 0
      %1024 = vmatpush1.bf16.msra.mxu0 %v1007
      %1025 = vmatprep.subr.bf16.mxu0 0
      %1026 = vmatpush2.bf16.msra.mxu0 0
      %1027 = vmatprep.subr.bf16.mxu0 0
      %1028 = vmatpush2.bf16.msra.mxu0 0
      %1029 = vmatprep.subr.bf16.mxu0 0
      %1030 = vmatpush2.bf16.msra.mxu0 0
      %1031 = vmatprep.subr.bf16.mxu0 0
      %1032 = vmatpush2.bf16.msra.mxu0 0
      %1033 = vmatprep.subr.bf16.mxu0 0
      %1034 = vmatpush2.bf16.msra.mxu0 0
      %1035 = vmatprep.subr.bf16.mxu0 0
      %1036 = vmatpush2.bf16.msra.mxu0 0
      %1037 = vmatprep.subr.bf16.mxu0 0
      %1038 = vmatpush2.bf16.msra.mxu0 0
      %1039 = vmatprep.subr.bf16.mxu0 0
      %1040 = vmatpush2.bf16.msra.mxu0 0
      %1041 = vmatprep.mubr.bf16.mxu0 0
      %1042 = vmatmul.mubr.bf16.gmra.mxu0 %v959
      %v1043 = vpop.f32.mrf.mxu0
      %v1044 = vadd.f32 0.0, %v1043
      %v1045 = vpop.f32.mrf.mxu0
      %v1046 = vpop.f32.mrf.mxu0
      %v1047 = vadd.f32 0.0, %v1046
      %v1048 = vpop.f32.mrf.mxu0
      %1049 = vmatprep.mubr.bf16.mxu0 0
      %1050 = vmatmul.mubr.bf16.gmra.mxu0 %v962
      %v1051 = vpop.f32.mrf.mxu0
      %v1052 = vadd.f32 0.0, %v1051
      %v1053 = vpop.f32.mrf.mxu0
      %v1054 = vpop.f32.mrf.mxu0
      %v1055 = vadd.f32 0.0, %v1054
      %v1056 = vpop.f32.mrf.mxu0
      %1057 = vmatprep.mubr.bf16.mxu0 0
      %1058 = vmatmul.mubr.bf16.gmra.mxu0 %v965
      %v1059 = vpop.f32.mrf.mxu0
      %v1060 = vadd.f32 0.0, %v1059
      %v1061 = vpop.f32.mrf.mxu0
      %v1062 = vpop.f32.mrf.mxu0
      %v1063 = vadd.f32 0.0, %v1062
      %v1064 = vpop.f32.mrf.mxu0
      %1065 = vmatprep.mubr.bf16.mxu0 0
      %1066 = vmatmul.mubr.bf16.gmra.mxu0 %v968
      %v1067 = vpop.f32.mrf.mxu0
      %v1068 = vadd.f32 0.0, %v1067
      %v1069 = vpop.f32.mrf.mxu0
      %v1070 = vpop.f32.mrf.mxu0
      %v1071 = vadd.f32 0.0, %v1070
      %v1072 = vpop.f32.mrf.mxu0
      %1073 = vmatprep.mubr.bf16.mxu0 0
      %1074 = vmatmul.mubr.bf16.gmra.mxu0 %v971
      %v1075 = vpop.f32.mrf.mxu0
      %v1076 = vadd.f32 0.0, %v1075
      %v1077 = vpop.f32.mrf.mxu0
      %v1078 = vpop.f32.mrf.mxu0
      %v1079 = vadd.f32 0.0, %v1078
      %v1080 = vpop.f32.mrf.mxu0
      %1081 = vmatprep.mubr.bf16.mxu0 0
      %1082 = vmatmul.mubr.bf16.gmra.mxu0 %v974
      %v1083 = vpop.f32.mrf.mxu0
      %v1084 = vadd.f32 0.0, %v1083
      %v1085 = vpop.f32.mrf.mxu0
      %v1086 = vpop.f32.mrf.mxu0
      %v1087 = vadd.f32 0.0, %v1086
      %v1088 = vpop.f32.mrf.mxu0
      %1089 = vmatprep.mubr.bf16.mxu0 0
      %1090 = vmatmul.mubr.bf16.gmra.mxu0 %v977
      %v1091 = vpop.f32.mrf.mxu0
      %v1092 = vadd.f32 0.0, %v1091
      %v1093 = vpop.f32.mrf.mxu0
      %v1094 = vpop.f32.mrf.mxu0
      %v1095 = vadd.f32 0.0, %v1094
      %v1096 = vpop.f32.mrf.mxu0
      %1097 = vmatprep.mubr.bf16.mxu0 0
      %1098 = vmatmul.mubr.bf16.gmra.mxu0 %v980
      %v1099 = vpop.f32.mrf.mxu0
      %v1100 = vadd.f32 0.0, %v1099
      %v1101 = vpop.f32.mrf.mxu0
      %v1102 = vpop.f32.mrf.mxu0
      %v1103 = vadd.f32 0.0, %v1102
      %v1104 = vpop.f32.mrf.mxu0
      %1105 = vmatprep.mubr.bf16.mxu0 0
      %1106 = vmatmul.mubr.bf16.gmra.mxu0 %v983
      %v1107 = vpop.f32.mrf.mxu0
      %v1108 = vadd.f32 0.0, %v1107
      %v1109 = vpop.f32.mrf.mxu0
      %v1110 = vpop.f32.mrf.mxu0
      %v1111 = vadd.f32 0.0, %v1110
      %v1112 = vpop.f32.mrf.mxu0
      %1113 = vmatprep.mubr.bf16.mxu0 0
      %1114 = vmatmul.mubr.bf16.gmra.mxu0 %v986
      %v1115 = vpop.f32.mrf.mxu0
      %v1116 = vadd.f32 0.0, %v1115
      %v1117 = vpop.f32.mrf.mxu0
      %v1118 = vpop.f32.mrf.mxu0
      %v1119 = vadd.f32 0.0, %v1118
      %v1120 = vpop.f32.mrf.mxu0
      %1121 = vmatprep.mubr.bf16.mxu0 0
      %1122 = vmatmul.mubr.bf16.gmra.mxu0 %v989
      %v1123 = vpop.f32.mrf.mxu0
      %v1124 = vadd.f32 0.0, %v1123
      %v1125 = vpop.f32.mrf.mxu0
      %v1126 = vpop.f32.mrf.mxu0
      %v1127 = vadd.f32 0.0, %v1126
      %v1128 = vpop.f32.mrf.mxu0
      %1129 = vmatprep.mubr.bf16.mxu0 0
      %1130 = vmatmul.mubr.bf16.gmra.mxu0 %v992
      %v1131 = vpop.f32.mrf.mxu0
      %v1132 = vadd.f32 0.0, %v1131
      %v1133 = vpop.f32.mrf.mxu0
      %v1134 = vpop.f32.mrf.mxu0
      %v1135 = vadd.f32 0.0, %v1134
      %v1136 = vpop.f32.mrf.mxu0
      %1137 = vmatprep.mubr.bf16.mxu0 0
      %1138 = vmatmul.mubr.bf16.gmra.mxu0 %v995
      %v1139 = vpop.f32.mrf.mxu0
      %v1140 = vadd.f32 0.0, %v1139
      %v1141 = vpop.f32.mrf.mxu0
      %v1142 = vpop.f32.mrf.mxu0
      %v1143 = vadd.f32 0.0, %v1142
      %v1144 = vpop.f32.mrf.mxu0
      %1145 = vmatprep.mubr.bf16.mxu0 0
      %1146 = vmatmul.mubr.bf16.gmra.mxu0 %v998
      %v1147 = vpop.f32.mrf.mxu0
      %v1148 = vadd.f32 0.0, %v1147
      %v1149 = vpop.f32.mrf.mxu0
      %v1150 = vpop.f32.mrf.mxu0
      %v1151 = vadd.f32 0.0, %v1150
      %v1152 = vpop.f32.mrf.mxu0
      %1153 = vmatprep.mubr.bf16.mxu0 0
      %1154 = vmatmul.mubr.bf16.gmra.mxu0 %v1001
      %v1155 = vpop.f32.mrf.mxu0
      %v1156 = vadd.f32 0.0, %v1155
      %v1157 = vpop.f32.mrf.mxu0
      %v1158 = vpop.f32.mrf.mxu0
      %v1159 = vadd.f32 0.0, %v1158
      %v1160 = vpop.f32.mrf.mxu0
      %1161 = vmatprep.mubr.bf16.mxu0 0
      %1162 = vmatmul.mubr.bf16.gmra.mxu0 %v1004
      %v1163 = vpop.f32.mrf.mxu0
      %v1164 = vadd.f32 0.0, %v1163
      %v1165 = vpop.f32.mrf.mxu0
      %v1166 = vpop.f32.mrf.mxu0
      %v1167 = vadd.f32 0.0, %v1166
      %v1168 = vpop.f32.mrf.mxu0
      %1169 = vdwg.mxu0
      %v1170 = vadd.f32 %v712, %v1044
      %v1171 = vadd.f32 %v715, %v1047
      %v1172 = vadd.f32 %v720, %v1052
      %v1173 = vadd.f32 %v723, %v1055
      %v1174 = vadd.f32 %v728, %v1060
      %v1175 = vadd.f32 %v731, %v1063
      %v1176 = vadd.f32 %v736, %v1068
      %v1177 = vadd.f32 %v739, %v1071
      %v1178 = vadd.f32 %v744, %v1076
      %v1179 = vadd.f32 %v747, %v1079
      %v1180 = vadd.f32 %v752, %v1084
      %v1181 = vadd.f32 %v755, %v1087
      %v1182 = vadd.f32 %v760, %v1092
      %v1183 = vadd.f32 %v763, %v1095
      %v1184 = vadd.f32 %v768, %v1100
      %v1185 = vadd.f32 %v771, %v1103
      %v1186 = vadd.f32 %v776, %v1108
      %v1187 = vadd.f32 %v779, %v1111
      %v1188 = vadd.f32 %v784, %v1116
      %v1189 = vadd.f32 %v787, %v1119
      %v1190 = vadd.f32 %v792, %v1124
      %v1191 = vadd.f32 %v795, %v1127
      %v1192 = vadd.f32 %v800, %v1132
      %v1193 = vadd.f32 %v803, %v1135
      %v1194 = vadd.f32 %v808, %v1140
      %v1195 = vadd.f32 %v811, %v1143
      %v1196 = vadd.f32 %v816, %v1148
      %v1197 = vadd.f32 %v819, %v1151
      %v1198 = vadd.f32 %v824, %v1156
      %v1199 = vadd.f32 %v827, %v1159
      %v1200 = vadd.f32 %v832, %v1164
      %v1201 = vadd.f32 %v835, %v1167
      %v1202 = vld [vmem:[%s206 + $0x8] sm:$0xf]
      %v1203 = vld [vmem:[%s206 + $0xc] sm:$0xf]
      %v1204 = vld [vmem:[%s206 + $0x10] sm:$0xf]
      %v1205 = vld [vmem:[%s206 + $0x14] sm:$0xf]
      %v1206 = vld [vmem:[%s206 + $0x18] sm:$0xf]
      %v1207 = vld [vmem:[%s206 + $0x1c] sm:$0xf]
      %v1208 = vld [vmem:[%s206 + $0x20] sm:$0xf]
      %v1209 = vld [vmem:[%s206 + $0x24] sm:$0xf]
      %v1210 = vld [vmem:[%s206 + $0x28] sm:$0xf]
      %v1211 = vld [vmem:[%s206 + $0x2c] sm:$0xf]
      %v1212 = vld [vmem:[%s206 + $0x30] sm:$0xf]
      %v1213 = vld [vmem:[%s206 + $0x34] sm:$0xf]
      %v1214 = vld [vmem:[%s206 + $0x38] sm:$0xf]
      %v1215 = vld [vmem:[%s206 + $0x3c] sm:$0xf]
      %v1216 = vld [vmem:[%s206 + $0x40] sm:$0xf]
      %v1217 = vld [vmem:[%s206 + $0x44] sm:$0xf]
      %v1218 = vld [vmem:[%s206 + $0x48] sm:$0xf]
      %v1219 = vld [vmem:[%s206 + $0x4c] sm:$0xf]
      %v1220 = vld [vmem:[%s206 + $0x50] sm:$0xf]
      %v1221 = vld [vmem:[%s206 + $0x54] sm:$0xf]
      %v1222 = vld [vmem:[%s206 + $0x58] sm:$0xf]
      %v1223 = vld [vmem:[%s206 + $0x5c] sm:$0xf]
      %v1224 = vld [vmem:[%s206 + $0x60] sm:$0xf]
      %v1225 = vld [vmem:[%s206 + $0x64] sm:$0xf]
      %v1226 = vld [vmem:[%s206 + $0x68] sm:$0xf]
      %v1227 = vld [vmem:[%s206 + $0x6c] sm:$0xf]
      %v1228 = vld [vmem:[%s206 + $0x70] sm:$0xf]
      %v1229 = vld [vmem:[%s206 + $0x74] sm:$0xf]
      %v1230 = vld [vmem:[%s206 + $0x78] sm:$0xf]
      %v1231 = vld [vmem:[%s206 + $0x7c] sm:$0xf]
      %v1232 = vld [vmem:[%s206 + $0x80] sm:$0xf]
      %v1233 = vld [vmem:[%s206 + $0x84] sm:$0xf]
      %s1234 = scalar_lea.vmem %s1, 24
      %v1235 = vld [vmem:[%s1234] sm:$0xf]
      %v1236 = vld [vmem:[%s1234 + $0x4] sm:$0x3]
      %v1269 = vunpack.c.l.b16 %v1202
      %v1270 = vunpack.c.l.b16 %v1203
      %v1271 = vunpack.c.l.b16 %v1204
      %v1272 = vunpack.c.l.b16 %v1205
      %v1273 = vunpack.c.l.b16 %v1206
      %v1274 = vunpack.c.l.b16 %v1207
      %v1275 = vunpack.c.l.b16 %v1208
      %v1276 = vunpack.c.l.b16 %v1209
      %v1277 = vunpack.c.l.b16 %v1210
      %v1278 = vunpack.c.l.b16 %v1211
      %v1279 = vunpack.c.l.b16 %v1212
      %v1280 = vunpack.c.l.b16 %v1213
      %v1281 = vunpack.c.l.b16 %v1214
      %v1282 = vunpack.c.l.b16 %v1215
      %v1283 = vunpack.c.l.b16 %v1216
      %v1284 = vunpack.c.l.b16 %v1217
      %v1285 = vunpack.c.l.b16 %v1218
      %v1286 = vunpack.c.l.b16 %v1219
      %v1287 = vunpack.c.l.b16 %v1220
      %v1288 = vunpack.c.l.b16 %v1221
      %v1289 = vunpack.c.l.b16 %v1222
      %v1290 = vunpack.c.l.b16 %v1223
      %v1291 = vunpack.c.l.b16 %v1224
      %v1292 = vunpack.c.l.b16 %v1225
      %v1293 = vunpack.c.l.b16 %v1226
      %v1294 = vunpack.c.l.b16 %v1227
      %v1295 = vunpack.c.l.b16 %v1228
      %v1296 = vunpack.c.l.b16 %v1229
      %v1297 = vunpack.c.l.b16 %v1230
      %v1298 = vunpack.c.l.b16 %v1231
      %v1299 = vunpack.c.l.b16 %v1232
      %v1300 = vunpack.c.l.b16 %v1233
      %v1301 = vpack.c.b16 %v1270, %v1269
      %v1302 = vpack.c.b16 %v1272, %v1271
      %v1303 = vpack.c.b16 %v1274, %v1273
      %v1304 = vpack.c.b16 %v1276, %v1275
      %v1305 = vpack.c.b16 %v1278, %v1277
      %v1306 = vpack.c.b16 %v1280, %v1279
      %v1307 = vpack.c.b16 %v1282, %v1281
      %v1308 = vpack.c.b16 %v1284, %v1283
      %v1309 = vpack.c.b16 %v1286, %v1285
      %v1310 = vpack.c.b16 %v1288, %v1287
      %v1311 = vpack.c.b16 %v1290, %v1289
      %v1312 = vpack.c.b16 %v1292, %v1291
      %v1313 = vpack.c.b16 %v1294, %v1293
      %v1314 = vpack.c.b16 %v1296, %v1295
      %v1315 = vpack.c.b16 %v1298, %v1297
      %v1316 = vpack.c.b16 %v1300, %v1299
      %v1319 = vunpack.c.l.b16 %v1235
      %v1320 = vunpack.c.l.b16 %v1236
      %v1321 = vpack.c.b16 %v1320, %v1319
      %v1323 = vsel %vm327, %v1301, 0
      %v1326 = vsel %vm327, %v1302, 0
      %v1329 = vsel %vm327, %v1303, 0
      %v1332 = vsel %vm327, %v1304, 0
      %v1335 = vsel %vm327, %v1305, 0
      %v1338 = vsel %vm327, %v1306, 0
      %v1341 = vsel %vm327, %v1307, 0
      %v1344 = vsel %vm327, %v1308, 0
      %v1347 = vsel %vm327, %v1309, 0
      %v1350 = vsel %vm327, %v1310, 0
      %v1353 = vsel %vm327, %v1311, 0
      %v1356 = vsel %vm327, %v1312, 0
      %v1359 = vsel %vm327, %v1313, 0
      %v1362 = vsel %vm327, %v1314, 0
      %v1365 = vsel %vm327, %v1315, 0
      %v1368 = vsel %vm327, %v1316, 0
      %v1371 = vsel %vm376, %v1321, 0
      %1373 = vmatprep.subr.bf16.mxu0 0
      %1374 = vmatpush1.bf16.msra.mxu0 0
      %1375 = vmatprep.subr.bf16.mxu0 0
      %1376 = vmatpush1.bf16.msra.mxu0 0
      %1377 = vmatprep.subr.bf16.mxu0 0
      %1378 = vmatpush1.bf16.msra.mxu0 0
      %1379 = vmatprep.subr.bf16.mxu0 0
      %1380 = vmatpush1.bf16.msra.mxu0 0
      %1381 = vmatprep.subr.bf16.mxu0 0
      %1382 = vmatpush1.bf16.msra.mxu0 0
      %1383 = vmatprep.subr.bf16.mxu0 0
      %1384 = vmatpush1.bf16.msra.mxu0 0
      %1385 = vmatprep.subr.bf16.mxu0 0
      %1386 = vmatpush1.bf16.msra.mxu0 0
      %1387 = vmatprep.subr.bf16.mxu0 0
      %1388 = vmatpush1.bf16.msra.mxu0 %v1371
      %1389 = vmatprep.subr.bf16.mxu0 0
      %1390 = vmatpush2.bf16.msra.mxu0 0
      %1391 = vmatprep.subr.bf16.mxu0 0
      %1392 = vmatpush2.bf16.msra.mxu0 0
      %1393 = vmatprep.subr.bf16.mxu0 0
      %1394 = vmatpush2.bf16.msra.mxu0 0
      %1395 = vmatprep.subr.bf16.mxu0 0
      %1396 = vmatpush2.bf16.msra.mxu0 0
      %1397 = vmatprep.subr.bf16.mxu0 0
      %1398 = vmatpush2.bf16.msra.mxu0 0
      %1399 = vmatprep.subr.bf16.mxu0 0
      %1400 = vmatpush2.bf16.msra.mxu0 0
      %1401 = vmatprep.subr.bf16.mxu0 0
      %1402 = vmatpush2.bf16.msra.mxu0 0
      %1403 = vmatprep.subr.bf16.mxu0 0
      %1404 = vmatpush2.bf16.msra.mxu0 0
      %1405 = vmatprep.mubr.bf16.mxu0 0
      %1406 = vmatmul.mubr.bf16.gmra.mxu0 %v1323
      %v1407 = vpop.f32.mrf.mxu0
      %v1408 = vadd.f32 0.0, %v1407
      %v1409 = vpop.f32.mrf.mxu0
      %v1410 = vpop.f32.mrf.mxu0
      %v1411 = vadd.f32 0.0, %v1410
      %v1412 = vpop.f32.mrf.mxu0
      %1413 = vmatprep.mubr.bf16.mxu0 0
      %1414 = vmatmul.mubr.bf16.gmra.mxu0 %v1326
      %v1415 = vpop.f32.mrf.mxu0
      %v1416 = vadd.f32 0.0, %v1415
      %v1417 = vpop.f32.mrf.mxu0
      %v1418 = vpop.f32.mrf.mxu0
      %v1419 = vadd.f32 0.0, %v1418
      %v1420 = vpop.f32.mrf.mxu0
      %1421 = vmatprep.mubr.bf16.mxu0 0
      %1422 = vmatmul.mubr.bf16.gmra.mxu0 %v1329
      %v1423 = vpop.f32.mrf.mxu0
      %v1424 = vadd.f32 0.0, %v1423
      %v1425 = vpop.f32.mrf.mxu0
      %v1426 = vpop.f32.mrf.mxu0
      %v1427 = vadd.f32 0.0, %v1426
      %v1428 = vpop.f32.mrf.mxu0
      %1429 = vmatprep.mubr.bf16.mxu0 0
      %1430 = vmatmul.mubr.bf16.gmra.mxu0 %v1332
      %v1431 = vpop.f32.mrf.mxu0
      %v1432 = vadd.f32 0.0, %v1431
      %v1433 = vpop.f32.mrf.mxu0
      %v1434 = vpop.f32.mrf.mxu0
      %v1435 = vadd.f32 0.0, %v1434
      %v1436 = vpop.f32.mrf.mxu0
      %1437 = vmatprep.mubr.bf16.mxu0 0
      %1438 = vmatmul.mubr.bf16.gmra.mxu0 %v1335
      %v1439 = vpop.f32.mrf.mxu0
      %v1440 = vadd.f32 0.0, %v1439
      %v1441 = vpop.f32.mrf.mxu0
      %v1442 = vpop.f32.mrf.mxu0
      %v1443 = vadd.f32 0.0, %v1442
      %v1444 = vpop.f32.mrf.mxu0
      %1445 = vmatprep.mubr.bf16.mxu0 0
      %1446 = vmatmul.mubr.bf16.gmra.mxu0 %v1338
      %v1447 = vpop.f32.mrf.mxu0
      %v1448 = vadd.f32 0.0, %v1447
      %v1449 = vpop.f32.mrf.mxu0
      %v1450 = vpop.f32.mrf.mxu0
      %v1451 = vadd.f32 0.0, %v1450
      %v1452 = vpop.f32.mrf.mxu0
      %1453 = vmatprep.mubr.bf16.mxu0 0
      %1454 = vmatmul.mubr.bf16.gmra.mxu0 %v1341
      %v1455 = vpop.f32.mrf.mxu0
      %v1456 = vadd.f32 0.0, %v1455
      %v1457 = vpop.f32.mrf.mxu0
      %v1458 = vpop.f32.mrf.mxu0
      %v1459 = vadd.f32 0.0, %v1458
      %v1460 = vpop.f32.mrf.mxu0
      %1461 = vmatprep.mubr.bf16.mxu0 0
      %1462 = vmatmul.mubr.bf16.gmra.mxu0 %v1344
      %v1463 = vpop.f32.mrf.mxu0
      %v1464 = vadd.f32 0.0, %v1463
      %v1465 = vpop.f32.mrf.mxu0
      %v1466 = vpop.f32.mrf.mxu0
      %v1467 = vadd.f32 0.0, %v1466
      %v1468 = vpop.f32.mrf.mxu0
      %1469 = vmatprep.mubr.bf16.mxu0 0
      %1470 = vmatmul.mubr.bf16.gmra.mxu0 %v1347
      %v1471 = vpop.f32.mrf.mxu0
      %v1472 = vadd.f32 0.0, %v1471
      %v1473 = vpop.f32.mrf.mxu0
      %v1474 = vpop.f32.mrf.mxu0
      %v1475 = vadd.f32 0.0, %v1474
      %v1476 = vpop.f32.mrf.mxu0
      %1477 = vmatprep.mubr.bf16.mxu0 0
      %1478 = vmatmul.mubr.bf16.gmra.mxu0 %v1350
      %v1479 = vpop.f32.mrf.mxu0
      %v1480 = vadd.f32 0.0, %v1479
      %v1481 = vpop.f32.mrf.mxu0
      %v1482 = vpop.f32.mrf.mxu0
      %v1483 = vadd.f32 0.0, %v1482
      %v1484 = vpop.f32.mrf.mxu0
      %1485 = vmatprep.mubr.bf16.mxu0 0
      %1486 = vmatmul.mubr.bf16.gmra.mxu0 %v1353
      %v1487 = vpop.f32.mrf.mxu0
      %v1488 = vadd.f32 0.0, %v1487
      %v1489 = vpop.f32.mrf.mxu0
      %v1490 = vpop.f32.mrf.mxu0
      %v1491 = vadd.f32 0.0, %v1490
      %v1492 = vpop.f32.mrf.mxu0
      %1493 = vmatprep.mubr.bf16.mxu0 0
      %1494 = vmatmul.mubr.bf16.gmra.mxu0 %v1356
      %v1495 = vpop.f32.mrf.mxu0
      %v1496 = vadd.f32 0.0, %v1495
      %v1497 = vpop.f32.mrf.mxu0
      %v1498 = vpop.f32.mrf.mxu0
      %v1499 = vadd.f32 0.0, %v1498
      %v1500 = vpop.f32.mrf.mxu0
      %1501 = vmatprep.mubr.bf16.mxu0 0
      %1502 = vmatmul.mubr.bf16.gmra.mxu0 %v1359
      %v1503 = vpop.f32.mrf.mxu0
      %v1504 = vadd.f32 0.0, %v1503
      %v1505 = vpop.f32.mrf.mxu0
      %v1506 = vpop.f32.mrf.mxu0
      %v1507 = vadd.f32 0.0, %v1506
      %v1508 = vpop.f32.mrf.mxu0
      %1509 = vmatprep.mubr.bf16.mxu0 0
      %1510 = vmatmul.mubr.bf16.gmra.mxu0 %v1362
      %v1511 = vpop.f32.mrf.mxu0
      %v1512 = vadd.f32 0.0, %v1511
      %v1513 = vpop.f32.mrf.mxu0
      %v1514 = vpop.f32.mrf.mxu0
      %v1515 = vadd.f32 0.0, %v1514
      %v1516 = vpop.f32.mrf.mxu0
      %1517 = vmatprep.mubr.bf16.mxu0 0
      %1518 = vmatmul.mubr.bf16.gmra.mxu0 %v1365
      %v1519 = vpop.f32.mrf.mxu0
      %v1520 = vadd.f32 0.0, %v1519
      %v1521 = vpop.f32.mrf.mxu0
      %v1522 = vpop.f32.mrf.mxu0
      %v1523 = vadd.f32 0.0, %v1522
      %v1524 = vpop.f32.mrf.mxu0
      %1525 = vmatprep.mubr.bf16.mxu0 0
      %1526 = vmatmul.mubr.bf16.gmra.mxu0 %v1368
      %v1527 = vpop.f32.mrf.mxu0
      %v1528 = vadd.f32 0.0, %v1527
      %v1529 = vpop.f32.mrf.mxu0
      %v1530 = vpop.f32.mrf.mxu0
      %v1531 = vadd.f32 0.0, %v1530
      %v1532 = vpop.f32.mrf.mxu0
      %1533 = vdwg.mxu0
      %v1534 = vadd.f32 %v1170, %v1408
      %v1535 = vadd.f32 %v1171, %v1411
      %v1536 = vadd.f32 %v1172, %v1416
      %v1537 = vadd.f32 %v1173, %v1419
      %v1538 = vadd.f32 %v1174, %v1424
      %v1539 = vadd.f32 %v1175, %v1427
      %v1540 = vadd.f32 %v1176, %v1432
      %v1541 = vadd.f32 %v1177, %v1435
      %v1542 = vadd.f32 %v1178, %v1440
      %v1543 = vadd.f32 %v1179, %v1443
      %v1544 = vadd.f32 %v1180, %v1448
      %v1545 = vadd.f32 %v1181, %v1451
      %v1546 = vadd.f32 %v1182, %v1456
      %v1547 = vadd.f32 %v1183, %v1459
      %v1548 = vadd.f32 %v1184, %v1464
      %v1549 = vadd.f32 %v1185, %v1467
      %v1550 = vadd.f32 %v1186, %v1472
      %v1551 = vadd.f32 %v1187, %v1475
      %v1552 = vadd.f32 %v1188, %v1480
      %v1553 = vadd.f32 %v1189, %v1483
      %v1554 = vadd.f32 %v1190, %v1488
      %v1555 = vadd.f32 %v1191, %v1491
      %v1556 = vadd.f32 %v1192, %v1496
      %v1557 = vadd.f32 %v1193, %v1499
      %v1558 = vadd.f32 %v1194, %v1504
      %v1559 = vadd.f32 %v1195, %v1507
      %v1560 = vadd.f32 %v1196, %v1512
      %v1561 = vadd.f32 %v1197, %v1515
      %v1562 = vadd.f32 %v1198, %v1520
      %v1563 = vadd.f32 %v1199, %v1523
      %v1564 = vadd.f32 %v1200, %v1528
      %v1565 = vadd.f32 %v1201, %v1531
      %v1566 = vld [vmem:[%s2] sm:$0x1]
      %v1567 = vlaneseq
      %v1568 = vshrl.u32 %v1567, 7
      %v1569 = vsub.s32 0, %v1568
      %v1570 = vrot.slane %v1566, %v1569
      %v1571 = vmul.f32 %v1534, %v1570
      %v1572 = vmul.f32 %v1535, %v1570
      %v1573 = vmul.f32 %v1536, %v1570
      %v1574 = vmul.f32 %v1537, %v1570
      %v1575 = vmul.f32 %v1538, %v1570
      %v1576 = vmul.f32 %v1539, %v1570
      %v1577 = vmul.f32 %v1540, %v1570
      %v1578 = vmul.f32 %v1541, %v1570
      %v1579 = vmul.f32 %v1542, %v1570
      %v1580 = vmul.f32 %v1543, %v1570
      %v1581 = vmul.f32 %v1544, %v1570
      %v1582 = vmul.f32 %v1545, %v1570
      %v1583 = vmul.f32 %v1546, %v1570
      %v1584 = vmul.f32 %v1547, %v1570
      %v1585 = vmul.f32 %v1548, %v1570
      %v1586 = vmul.f32 %v1549, %v1570
      %v1587 = vmul.f32 %v1550, %v1570
      %v1588 = vmul.f32 %v1551, %v1570
      %v1589 = vmul.f32 %v1552, %v1570
      %v1590 = vmul.f32 %v1553, %v1570
      %v1591 = vmul.f32 %v1554, %v1570
      %v1592 = vmul.f32 %v1555, %v1570
      %v1593 = vmul.f32 %v1556, %v1570
      %v1594 = vmul.f32 %v1557, %v1570
      %v1595 = vmul.f32 %v1558, %v1570
      %v1596 = vmul.f32 %v1559, %v1570
      %v1597 = vmul.f32 %v1560, %v1570
      %v1598 = vmul.f32 %v1561, %v1570
      %v1599 = vmul.f32 %v1562, %v1570
      %v1600 = vmul.f32 %v1563, %v1570
      %v1601 = vmul.f32 %v1564, %v1570
      %v1602 = vmul.f32 %v1565, %v1570
      %v1603 = vld [vmem:[%s2 + $0x1] sm:$0x1]
      %v1604 = vlaneseq
      %v1605 = vshrl.u32 %v1604, 7
      %v1606 = vsub.s32 0, %v1605
      %v1607 = vrot.slane %v1603, %v1606
      %v1608 = vadd.f32 %v1571, %v1607
      %v1609 = vadd.f32 %v1572, %v1607
      %v1610 = vadd.f32 %v1573, %v1607
      %v1611 = vadd.f32 %v1574, %v1607
      %v1612 = vadd.f32 %v1575, %v1607
      %v1613 = vadd.f32 %v1576, %v1607
      %v1614 = vadd.f32 %v1577, %v1607
      %v1615 = vadd.f32 %v1578, %v1607
      %v1616 = vadd.f32 %v1579, %v1607
      %v1617 = vadd.f32 %v1580, %v1607
      %v1618 = vadd.f32 %v1581, %v1607
      %v1619 = vadd.f32 %v1582, %v1607
      %v1620 = vadd.f32 %v1583, %v1607
      %v1621 = vadd.f32 %v1584, %v1607
      %v1622 = vadd.f32 %v1585, %v1607
      %v1623 = vadd.f32 %v1586, %v1607
      %v1624 = vadd.f32 %v1587, %v1607
      %v1625 = vadd.f32 %v1588, %v1607
      %v1626 = vadd.f32 %v1589, %v1607
      %v1627 = vadd.f32 %v1590, %v1607
      %v1628 = vadd.f32 %v1591, %v1607
      %v1629 = vadd.f32 %v1592, %v1607
      %v1630 = vadd.f32 %v1593, %v1607
      %v1631 = vadd.f32 %v1594, %v1607
      %v1632 = vadd.f32 %v1595, %v1607
      %v1633 = vadd.f32 %v1596, %v1607
      %v1634 = vadd.f32 %v1597, %v1607
      %v1635 = vadd.f32 %v1598, %v1607
      %v1636 = vadd.f32 %v1599, %v1607
      %v1637 = vadd.f32 %v1600, %v1607
      %v1638 = vadd.f32 %v1601, %v1607
      %v1639 = vadd.f32 %v1602, %v1607
      %v1640 = vmax.f32 %v1608, 0.0
      %v1641 = vmax.f32 %v1609, 0.0
      %v1642 = vmax.f32 %v1610, 0.0
      %v1643 = vmax.f32 %v1611, 0.0
      %v1644 = vmax.f32 %v1612, 0.0
      %v1645 = vmax.f32 %v1613, 0.0
      %v1646 = vmax.f32 %v1614, 0.0
      %v1647 = vmax.f32 %v1615, 0.0
      %v1648 = vmax.f32 %v1616, 0.0
      %v1649 = vmax.f32 %v1617, 0.0
      %v1650 = vmax.f32 %v1618, 0.0
      %v1651 = vmax.f32 %v1619, 0.0
      %v1652 = vmax.f32 %v1620, 0.0
      %v1653 = vmax.f32 %v1621, 0.0
      %v1654 = vmax.f32 %v1622, 0.0
      %v1655 = vmax.f32 %v1623, 0.0
      %v1656 = vmax.f32 %v1624, 0.0
      %v1657 = vmax.f32 %v1625, 0.0
      %v1658 = vmax.f32 %v1626, 0.0
      %v1659 = vmax.f32 %v1627, 0.0
      %v1660 = vmax.f32 %v1628, 0.0
      %v1661 = vmax.f32 %v1629, 0.0
      %v1662 = vmax.f32 %v1630, 0.0
      %v1663 = vmax.f32 %v1631, 0.0
      %v1664 = vmax.f32 %v1632, 0.0
      %v1665 = vmax.f32 %v1633, 0.0
      %v1666 = vmax.f32 %v1634, 0.0
      %v1667 = vmax.f32 %v1635, 0.0
      %v1668 = vmax.f32 %v1636, 0.0
      %v1669 = vmax.f32 %v1637, 0.0
      %v1670 = vmax.f32 %v1638, 0.0
      %v1671 = vmax.f32 %v1639, 0.0
      %v1672 = vpack.c.bf16 %v1641, %v1640
      %v1673 = vpack.c.bf16 %v1643, %v1642
      %v1674 = vpack.c.bf16 %v1645, %v1644
      %v1675 = vpack.c.bf16 %v1647, %v1646
      %v1676 = vpack.c.bf16 %v1649, %v1648
      %v1677 = vpack.c.bf16 %v1651, %v1650
      %v1678 = vpack.c.bf16 %v1653, %v1652
      %v1679 = vpack.c.bf16 %v1655, %v1654
      %v1680 = vpack.c.bf16 %v1657, %v1656
      %v1681 = vpack.c.bf16 %v1659, %v1658
      %v1682 = vpack.c.bf16 %v1661, %v1660
      %v1683 = vpack.c.bf16 %v1663, %v1662
      %v1684 = vpack.c.bf16 %v1665, %v1664
      %v1685 = vpack.c.bf16 %v1667, %v1666
      %v1686 = vpack.c.bf16 %v1669, %v1668
      %v1687 = vpack.c.bf16 %v1671, %v1670
      %v1704 = vunpack.c.l.b16 %v1672
      %v1705 = vunpack.c.h.b16 %v1672
      %v1706 = vunpack.c.l.b16 %v1673
      %v1707 = vunpack.c.h.b16 %v1673
      %v1708 = vunpack.c.l.b16 %v1674
      %v1709 = vunpack.c.h.b16 %v1674
      %v1710 = vunpack.c.l.b16 %v1675
      %v1711 = vunpack.c.h.b16 %v1675
      %v1712 = vunpack.c.l.b16 %v1676
      %v1713 = vunpack.c.h.b16 %v1676
      %v1714 = vunpack.c.l.b16 %v1677
      %v1715 = vunpack.c.h.b16 %v1677
      %v1716 = vunpack.c.l.b16 %v1678
      %v1717 = vunpack.c.h.b16 %v1678
      %v1718 = vunpack.c.l.b16 %v1679
      %v1719 = vunpack.c.h.b16 %v1679
      %v1720 = vunpack.c.l.b16 %v1680
      %v1721 = vunpack.c.h.b16 %v1680
      %v1722 = vunpack.c.l.b16 %v1681
      %v1723 = vunpack.c.h.b16 %v1681
      %v1724 = vunpack.c.l.b16 %v1682
      %v1725 = vunpack.c.h.b16 %v1682
      %v1726 = vunpack.c.l.b16 %v1683
      %v1727 = vunpack.c.h.b16 %v1683
      %v1728 = vunpack.c.l.b16 %v1684
      %v1729 = vunpack.c.h.b16 %v1684
      %v1730 = vunpack.c.l.b16 %v1685
      %v1731 = vunpack.c.h.b16 %v1685
      %v1732 = vunpack.c.l.b16 %v1686
      %v1733 = vunpack.c.h.b16 %v1686
      %v1734 = vunpack.c.l.b16 %v1687
      %v1735 = vunpack.c.h.b16 %v1687
      %v1736 = vpack.c.b16 %v1704, %v1704
      %v1737 = vpack.c.b16 %v1705, %v1705
      %v1738 = vpack.c.b16 %v1706, %v1706
      %v1739 = vpack.c.b16 %v1707, %v1707
      %v1740 = vpack.c.b16 %v1708, %v1708
      %v1741 = vpack.c.b16 %v1709, %v1709
      %v1742 = vpack.c.b16 %v1710, %v1710
      %v1743 = vpack.c.b16 %v1711, %v1711
      %v1744 = vpack.c.b16 %v1712, %v1712
      %v1745 = vpack.c.b16 %v1713, %v1713
      %v1746 = vpack.c.b16 %v1714, %v1714
      %v1747 = vpack.c.b16 %v1715, %v1715
      %v1748 = vpack.c.b16 %v1716, %v1716
      %v1749 = vpack.c.b16 %v1717, %v1717
      %v1750 = vpack.c.b16 %v1718, %v1718
      %v1751 = vpack.c.b16 %v1719, %v1719
      %v1752 = vpack.c.b16 %v1720, %v1720
      %v1753 = vpack.c.b16 %v1721, %v1721
      %v1754 = vpack.c.b16 %v1722, %v1722
      %v1755 = vpack.c.b16 %v1723, %v1723
      %v1756 = vpack.c.b16 %v1724, %v1724
      %v1757 = vpack.c.b16 %v1725, %v1725
      %v1758 = vpack.c.b16 %v1726, %v1726
      %v1759 = vpack.c.b16 %v1727, %v1727
      %v1760 = vpack.c.b16 %v1728, %v1728
      %v1761 = vpack.c.b16 %v1729, %v1729
      %v1762 = vpack.c.b16 %v1730, %v1730
      %v1763 = vpack.c.b16 %v1731, %v1731
      %v1764 = vpack.c.b16 %v1732, %v1732
      %v1765 = vpack.c.b16 %v1733, %v1733
      %v1766 = vpack.c.b16 %v1734, %v1734
      %v1767 = vpack.c.b16 %v1735, %v1735
      %vm1800 = vcmask 125952
      %1801 = vst.msk [vmem:[%s170] sm:$0xf] %vm1800, %v1736
      %1802 = vst.msk [vmem:[%s170 + $0x4] sm:$0xf] %vm1800, %v1737
      %1803 = vst.msk [vmem:[%s170 + $0x8] sm:$0xf] %vm1800, %v1738
      %1804 = vst.msk [vmem:[%s170 + $0xc] sm:$0xf] %vm1800, %v1739
      %1805 = vst.msk [vmem:[%s170 + $0x10] sm:$0xf] %vm1800, %v1740
      %1806 = vst.msk [vmem:[%s170 + $0x14] sm:$0xf] %vm1800, %v1741
      %1807 = vst.msk [vmem:[%s170 + $0x18] sm:$0xf] %vm1800, %v1742
      %1808 = vst.msk [vmem:[%s170 + $0x1c] sm:$0xf] %vm1800, %v1743
      %1809 = vst.msk [vmem:[%s170 + $0x20] sm:$0xf] %vm1800, %v1744
      %1810 = vst.msk [vmem:[%s170 + $0x24] sm:$0xf] %vm1800, %v1745
      %1811 = vst.msk [vmem:[%s170 + $0x28] sm:$0xf] %vm1800, %v1746
      %1812 = vst.msk [vmem:[%s170 + $0x2c] sm:$0xf] %vm1800, %v1747
      %1813 = vst.msk [vmem:[%s170 + $0x30] sm:$0xf] %vm1800, %v1748
      %1814 = vst.msk [vmem:[%s170 + $0x34] sm:$0xf] %vm1800, %v1749
      %1815 = vst.msk [vmem:[%s170 + $0x38] sm:$0xf] %vm1800, %v1750
      %1816 = vst.msk [vmem:[%s170 + $0x3c] sm:$0xf] %vm1800, %v1751
      %1817 = vst.msk [vmem:[%s170 + $0x40] sm:$0xf] %vm1800, %v1752
      %1818 = vst.msk [vmem:[%s170 + $0x44] sm:$0xf] %vm1800, %v1753
      %1819 = vst.msk [vmem:[%s170 + $0x48] sm:$0xf] %vm1800, %v1754
      %1820 = vst.msk [vmem:[%s170 + $0x4c] sm:$0xf] %vm1800, %v1755
      %1821 = vst.msk [vmem:[%s170 + $0x50] sm:$0xf] %vm1800, %v1756
      %1822 = vst.msk [vmem:[%s170 + $0x54] sm:$0xf] %vm1800, %v1757
      %1823 = vst.msk [vmem:[%s170 + $0x58] sm:$0xf] %vm1800, %v1758
      %1824 = vst.msk [vmem:[%s170 + $0x5c] sm:$0xf] %vm1800, %v1759
      %1825 = vst.msk [vmem:[%s170 + $0x60] sm:$0xf] %vm1800, %v1760
      %1826 = vst.msk [vmem:[%s170 + $0x64] sm:$0xf] %vm1800, %v1761
      %1827 = vst.msk [vmem:[%s170 + $0x68] sm:$0xf] %vm1800, %v1762
      %1828 = vst.msk [vmem:[%s170 + $0x6c] sm:$0xf] %vm1800, %v1763
      %1829 = vst.msk [vmem:[%s170 + $0x70] sm:$0xf] %vm1800, %v1764
      %1830 = vst.msk [vmem:[%s170 + $0x74] sm:$0xf] %vm1800, %v1765
      %1831 = vst.msk [vmem:[%s170 + $0x78] sm:$0xf] %vm1800, %v1766
      %1832 = vst.msk [vmem:[%s170 + $0x7c] sm:$0xf] %vm1800, %v1767
      %p1833 = scmp.lt.s32.totalorder %s14, 1
      %s1834 = scalar_select %p1833, %s14, 1
      %s1835 = smul.addr %s1834, 32
      %s1836 = smul.addr %s1835, 4
      %s1837 = scalar_lea.vmem %s3, %s1836
      // Predicated region
      $region33: #{encoder_forward.6} parent=31 // pred_check
        %p1838 = pneg %p100
      $region34: #{encoder_forward.6} parent=31 // pred_check_branch
        %1840 = sbr.rel (%p1838) target = $region36
      $region35: #{encoder_forward.6} parent=31 // pred_region
        _
      $region36: #{encoder_forward.6} parent=31 // pred_fallthru
        _
    $region32: #{encoder_forward.6} parent=5 // pred_fallthru
      _
    %p1841 = scmp.le.s32.totalorder 2, %s9
    // Predicated region
    $region37: #{encoder_forward.6} parent=5 // pred_check
      %p1842 = pneg %p1841
    $region38: #{encoder_forward.6} parent=5 // pred_check_branch
      %1844 = sbr.rel (%p1842) target = $region40
    $region39: #{encoder_forward.6} parent=5 // pred_region
      %s1845 = ssub.s32 %s9, 2
      // Predicated region
      $region41: #{encoder_forward.6} parent=39 // pred_check
        %p1846 = pneg %p106
      $region42: #{encoder_forward.6} parent=39 // pred_check_branch
        %1848 = sbr.rel (%p1846) target = $region44
      $region43: #{encoder_forward.6} parent=39 // pred_region
        %p1849 = scmp.lt.s32.totalorder %s15, 1
        %s1850 = scalar_select %p1849, %s15, 1
        %s1851 = smul.addr %s1850, 32
        %s1852 = smul.addr %s1851, 4
        %s1853 = scalar_lea.vmem %s3, %s1852
      $region44: #{encoder_forward.6} parent=39 // pred_fallthru
        _
    $region40: #{encoder_forward.6} parent=5 // pred_fallthru
      _
  $region6: #{encoder_forward.6} parent=0 // loop_footer
    %s13 = sadd.s32 1, %s9
  $region7: #{encoder_forward.6} parent=0 // loop_footer_branch
    %8 = sbr.rel target = $region3
  $region8: #{encoder_forward.6} parent=0 // loop_exit
    _

// kernel: encoder_forward.7
$region0: #{encoder_forward.7}
  #allocation0 [shape = 'u32[]', space=smem, size = 0x4, offset = 0x4, fixed_abs, tag = 'smem constant byte address 0x4 - core index']
  #allocation1 [shape = 'u32[144,128]{1,0:T(1,128)}', space=vmem, size = 0x12000, scoped, tag = 'internal scratch']
  %s0 = inlined_call_operand.vmem [shape: bf16[2,2,72,64], index: 0, kind: input, shape index: {}]
  %s1 = inlined_call_operand.vmem [shape: bf16[4,64,32], index: 1, kind: input, shape index: {}]
  %s2 = inlined_call_operand.vmem [shape: f32[2,32], index: 2, kind: input, shape index: {}]
  %s3 = inlined_call_operand.vmem [shape: bf16[2,64,32], index: 3, kind: output, shape index: {}]
  %s4 = sld [smem:[#allocation0]]
  $region45: #{encoder_forward.7} parent=0
    _
  %s6 = ssub.s32 1, %s4
  %s7 = scalar_select 0, %s6, %s4
  loop: start=0, step=1, limit=4
  $region2: #{encoder_forward.7} parent=0 // loop_pre_header
    _
  $region3: #{encoder_forward.7} parent=0 // loop_header
    %s9 = sphi 0, %s13
    %p10 = scmp.ge.s32.totalorder %s9, 4
    %s19 = sphi 0, %s21
    %s22 = sphi 0, %s19
    %s23 = sphi 0, %s22
    %s39 = sphi 0, %s23
    %s43 = sphi 0, %s43
    %s45 = sphi 0, %s43
    %s46 = sphi 0, %s45
    %s60 = sphi 0, %s46
    %s64 = sphi 0, %s64
    %s66 = sphi 0, %s64
    %s67 = sphi 0, %s66
    %s81 = sphi 0, %s67
    %s87 = sphi 0, %s89
    %s90 = sphi 0, %s87
    %s91 = sphi 0, %s90
    %s107 = sphi 0, %s91
  $region4: #{encoder_forward.7} parent=0 // loop_header_branch
    %12 = sbr.rel (%p10) target = $region8
  $region5: #{encoder_forward.7} parent=0 // loop_body
    %s14 = ssub.s32 %s9, 1
    %s15 = ssub.s32 %s9, 2
    %s16 = sadd.s32 %s9, 1
    %s17 = ssub.s32 %s9, %s16
    %p18 = scmp.eq.s32.totalorder %s17, 0
    %s20 = sadd.s32 %s19, 1
    %s21 = scalar_select %p18, %s19, %s20
    %p24 = pneg %p18
    %p25 = scmp.eq.s32.totalorder %s9, 1
    %p26 = por %p24, %p25
    %p27 = scmp.ne.s32.totalorder %s19, %s22
    %p28 = scmp.eq.s32.totalorder %s9, 0
    %p29 = por %p27, %p28
    %p30 = scmp.ne.s32.totalorder %s19, %s22
    %p31 = scmp.eq.s32.totalorder %s14, 1
    %p32 = por %p30, %p31
    %p33 = scmp.ne.s32.totalorder %s22, %s23
    %p34 = scmp.eq.s32.totalorder %s14, 0
    %p35 = por %p33, %p34
    %p36 = scmp.ne.s32.totalorder %s22, %s23
    %p37 = scmp.eq.s32.totalorder %s15, 1
    %p38 = por %p36, %p37
    %p40 = scmp.ne.s32.totalorder %s23, %s39
    %p41 = scmp.eq.s32.totalorder %s15, 0
    %p42 = por %p40, %p41
    %s44 = sadd.s32 %s43, 1
    %p47 = scmp.eq.s32.totalorder %s9, 1
    %p48 = scmp.ne.s32.totalorder %s43, %s45
    %p49 = scmp.eq.s32.totalorder %s9, 0
    %p50 = por %p48, %p49
    %p51 = scmp.ne.s32.totalorder %s43, %s45
    %p52 = scmp.eq.s32.totalorder %s14, 1
    %p53 = por %p51, %p52
    %p54 = scmp.ne.s32.totalorder %s45, %s46
    %p55 = scmp.eq.s32.totalorder %s14, 0
    %p56 = por %p54, %p55
    %p57 = scmp.ne.s32.totalorder %s45, %s46
    %p58 = scmp.eq.s32.totalorder %s15, 1
    %p59 = por %p57, %p58
    %p61 = scmp.ne.s32.totalorder %s46, %s60
    %p62 = scmp.eq.s32.totalorder %s15, 0
    %p63 = por %p61, %p62
    %s65 = sadd.s32 %s64, 1
    %p68 = scmp.eq.s32.totalorder %s9, 1
    %p69 = scmp.ne.s32.totalorder %s64, %s66
    %p70 = scmp.eq.s32.totalorder %s9, 0
    %p71 = por %p69, %p70
    %p72 = scmp.ne.s32.totalorder %s64, %s66
    %p73 = scmp.eq.s32.totalorder %s14, 1
    %p74 = por %p72, %p73
    %p75 = scmp.ne.s32.totalorder %s66, %s67
    %p76 = scmp.eq.s32.totalorder %s14, 0
    %p77 = por %p75, %p76
    %p78 = scmp.ne.s32.totalorder %s66, %s67
    %p79 = scmp.eq.s32.totalorder %s15, 1
    %p80 = por %p78, %p79
    %p82 = scmp.ne.s32.totalorder %s67, %s81
    %p83 = scmp.eq.s32.totalorder %s15, 0
    %p84 = por %p82, %p83
    %s85 = ssub.s32 %s9, %s16
    %p86 = scmp.eq.s32.totalorder %s85, 0
    %s88 = sadd.s32 %s87, 1
    %s89 = scalar_select %p86, %s87, %s88
    %p92 = pneg %p86
    %p93 = scmp.eq.s32.totalorder %s9, 1
    %p94 = por %p92, %p93
    %p95 = scmp.ne.s32.totalorder %s87, %s90
    %p96 = scmp.eq.s32.totalorder %s9, 0
    %p97 = por %p95, %p96
    %p98 = scmp.ne.s32.totalorder %s87, %s90
    %p99 = scmp.eq.s32.totalorder %s14, 1
    %p100 = por %p98, %p99
    %p101 = scmp.ne.s32.totalorder %s90, %s91
    %p102 = scmp.eq.s32.totalorder %s14, 0
    %p103 = por %p101, %p102
    %p104 = scmp.ne.s32.totalorder %s90, %s91
    %p105 = scmp.eq.s32.totalorder %s15, 1
    %p106 = por %p104, %p105
    %p108 = scmp.ne.s32.totalorder %s91, %s107
    %p109 = scmp.eq.s32.totalorder %s15, 0
    %p110 = por %p108, %p109
    %p111 = scmp.le.s32.totalorder 1, %s9
    %p112 = scmp.lt.s32.totalorder %s9, 3
    %p113 = pnand %p111, %p112
    %p114 = pneg %p113
    // Predicated region
    $region9: #{encoder_forward.7} parent=5 // pred_check
      _
    $region10: #{encoder_forward.7} parent=5 // pred_check_branch
      %116 = sbr.rel (%p113) target = $region12
    $region11: #{encoder_forward.7} parent=5 // pred_region
      %s117 = ssub.s32 %s9, 1
      // Predicated region
      $region13: #{encoder_forward.7} parent=11 // pred_check
        %p118 = pneg %p56
      $region14: #{encoder_forward.7} parent=11 // pred_check_branch
        %120 = sbr.rel (%p118) target = $region16
      $region15: #{encoder_forward.7} parent=11 // pred_region
        _
      $region16: #{encoder_forward.7} parent=11 // pred_fallthru
        _
      // Predicated region
      $region17: #{encoder_forward.7} parent=11 // pred_check
        %p121 = pneg %p77
      $region18: #{encoder_forward.7} parent=11 // pred_check_branch
        %123 = sbr.rel (%p121) target = $region20
      $region19: #{encoder_forward.7} parent=11 // pred_region
        _
      $region20: #{encoder_forward.7} parent=11 // pred_fallthru
        _
    $region12: #{encoder_forward.7} parent=5 // pred_fallthru
      _
    %p124 = scmp.lt.s32.totalorder %s9, 2
    // Predicated region
    $region21: #{encoder_forward.7} parent=5 // pred_check
      %p125 = pneg %p124
    $region22: #{encoder_forward.7} parent=5 // pred_check_branch
      %127 = sbr.rel (%p125) target = $region24
    $region23: #{encoder_forward.7} parent=5 // pred_region
      // Predicated region
      $region25: #{encoder_forward.7} parent=23 // pred_check
        %p128 = pneg %p29
      $region26: #{encoder_forward.7} parent=23 // pred_check_branch
        %130 = sbr.rel (%p128) target = $region28
      $region27: #{encoder_forward.7} parent=23 // pred_region
        %p131 = scmp.lt.s32.totalorder %s9, 1
        %s132 = scalar_select %p131, %s9, 1
        %s133 = smul.addr %s132, 18
        %s134 = smul.addr %s133, 4
        %s135 = scalar_lea.vmem %s0, %s134
      $region28: #{encoder_forward.7} parent=23 // pred_fallthru
        _
    $region24: #{encoder_forward.7} parent=5 // pred_fallthru
      _
    %p136 = scmp.le.s32.totalorder 1, %s9
    %p137 = scmp.lt.s32.totalorder %s9, 3
    %p138 = pnand %p136, %p137
    %p139 = pneg %p138
    // Predicated region
    $region29: #{encoder_forward.7} parent=5 // pred_check
      _
    $region30: #{encoder_forward.7} parent=5 // pred_check_branch
      %141 = sbr.rel (%p138) target = $region32
    $region31: #{encoder_forward.7} parent=5 // pred_region
      %s142 = ssub.s32 %s9, 1
      %p143 = scmp.lt.s32.totalorder %s14, 1
      %s144 = scalar_select %p143, %s14, 1
      %s145 = smul.addr %s144, 18
      %s146 = smul.addr %s145, 4
      %s147 = scalar_lea.vmem %s0, %s146
      %p148 = pneg %p35
      %p149 = pneg %p32
      %p150 = pneg %p56
      %p151 = pneg %p53
      %p152 = pneg %p77
      %p153 = pneg %p74
      %p154 = pneg %p103
      %p155 = pneg %p100
      %p156 = scmp.lt.s32.totalorder %s14, 1
      %s157 = scalar_select %p156, %s14, 1
      %s158 = smul.addr %s157, 8
      %s159 = smul.addr %s158, 4
      %s160 = scalar_lea.vmem %s3, %s159
      %p161 = scmp.lt.s32.totalorder %s14, 1
      %s162 = scalar_select %p161, %s14, 1
      %s163 = smul.addr %s162, 18
      %s164 = smul.addr %s163, 4
      %s165 = scalar_lea.vmem %s0, %s164
      %p166 = scmp.lt.s32.totalorder %s14, 1
      %s167 = scalar_select %p166, %s14, 1
      %s168 = smul.addr %s167, 8
      %s169 = smul.addr %s168, 4
      %s170 = scalar_lea.vmem %s3, %s169
      %v172 = vld [vmem:[%s165] sm:$0xf]
      %v173 = vld [vmem:[%s165 + $0x4] sm:$0xf]
      %v174 = vld [vmem:[%s165 + $0x8] sm:$0xf]
      %v175 = vld [vmem:[%s165 + $0xc] sm:$0xf]
      %v176 = vld [vmem:[%s165 + $0x10] sm:$0xf]
      %v177 = vld [vmem:[%s165 + $0x14] sm:$0xf]
      %v178 = vld [vmem:[%s165 + $0x18] sm:$0xf]
      %v179 = vld [vmem:[%s165 + $0x1c] sm:$0xf]
      %v180 = vld [vmem:[%s1] sm:$0xf]
      %v181 = vld [vmem:[%s1 + $0x4] sm:$0xf]
      %v182 = vld [vmem:[%s1 + $0x8] sm:$0xf]
      %v183 = vld [vmem:[%s1 + $0xc] sm:$0xf]
      %v184 = vld [vmem:[%s1 + $0x10] sm:$0xf]
      %v185 = vld [vmem:[%s1 + $0x14] sm:$0xf]
      %v186 = vld [vmem:[%s1 + $0x18] sm:$0xf]
      %v187 = vld [vmem:[%s1 + $0x1c] sm:$0xf]
      %s188 = scalar_lea.vmem %s165, 36
      %v189 = vld [vmem:[%s188] sm:$0xf]
      %v190 = vld [vmem:[%s188 + $0x4] sm:$0xf]
      %v191 = vld [vmem:[%s188 + $0x8] sm:$0xf]
      %v192 = vld [vmem:[%s188 + $0xc] sm:$0xf]
      %v193 = vld [vmem:[%s188 + $0x10] sm:$0xf]
      %v194 = vld [vmem:[%s188 + $0x14] sm:$0xf]
      %v195 = vld [vmem:[%s188 + $0x18] sm:$0xf]
      %v196 = vld [vmem:[%s188 + $0x1c] sm:$0xf]
      %s197 = scalar_lea.vmem %s1, 32
      %v198 = vld [vmem:[%s197] sm:$0xf]
      %v199 = vld [vmem:[%s197 + $0x4] sm:$0xf]
      %v200 = vld [vmem:[%s197 + $0x8] sm:$0xf]
      %v201 = vld [vmem:[%s197 + $0xc] sm:$0xf]
      %v202 = vld [vmem:[%s197 + $0x10] sm:$0xf]
      %v203 = vld [vmem:[%s197 + $0x14] sm:$0xf]
      %v204 = vld [vmem:[%s197 + $0x18] sm:$0xf]
      %v205 = vld [vmem:[%s197 + $0x1c] sm:$0xf]
      %v214 = vunpack.c.l.b16 %v189
      %v215 = vunpack.c.l.b16 %v190
      %v216 = vunpack.c.l.b16 %v191
      %v217 = vunpack.c.l.b16 %v192
      %v218 = vunpack.c.l.b16 %v193
      %v219 = vunpack.c.l.b16 %v194
      %v220 = vunpack.c.l.b16 %v195
      %v221 = vunpack.c.l.b16 %v196
      %v222 = vpack.c.b16 %v215, %v214
      %v223 = vpack.c.b16 %v217, %v216
      %v224 = vpack.c.b16 %v219, %v218
      %v225 = vpack.c.b16 %v221, %v220
      %v234 = vunpack.c.l.b16 %v198
      %v235 = vunpack.c.l.b16 %v199
      %v236 = vunpack.c.l.b16 %v200
      %v237 = vunpack.c.l.b16 %v201
      %v238 = vunpack.c.l.b16 %v202
      %v239 = vunpack.c.l.b16 %v203
      %v240 = vunpack.c.l.b16 %v204
      %v241 = vunpack.c.l.b16 %v205
      %v242 = vpack.c.b16 %v235, %v234
      %v243 = vpack.c.b16 %v237, %v236
      %v244 = vpack.c.b16 %v239, %v238
      %v245 = vpack.c.b16 %v241, %v240
      %vm250 = vcmask 523264
      %v252 = vsel %vm250, %v222, 0
      %v255 = vsel %vm250, %v223, 0
      %v258 = vsel %vm250, %v224, 0
      %v261 = vsel %vm250, %v225, 0
      %263 = vmatprep.subr.bf16.mxu0 0
      %264 = vmatpush1.bf16.msra.mxu0 0
      %265 = vmatprep.subr.bf16.mxu0 0
      %266 = vmatpush1.bf16.msra.mxu0 0
      %267 = vmatprep.subr.bf16.mxu0 0
      %268 = vmatpush1.bf16.msra.mxu0 0
      %269 = vmatprep.subr.bf16.mxu0 0
      %270 = vmatpush1.bf16.msra.mxu0 0
      %271 = vmatprep.subr.bf16.mxu0 0
      %272 = vmatpush1.bf16.msra.mxu0 %v245
      %273 = vmatprep.subr.bf16.mxu0 0
      %274 = vmatpush1.bf16.msra.mxu0 %v244
      %275 = vmatprep.subr.bf16.mxu0 0
      %276 = vmatpush1.bf16.msra.mxu0 %v243
      %277 = vmatprep.subr.bf16.mxu0 0
      %278 = vmatpush1.bf16.msra.mxu0 %v242
      %279 = vmatprep.subr.bf16.mxu0 0
      %280 = vmatpush2.bf16.msra.mxu0 0
      %281 = vmatprep.subr.bf16.mxu0 0
      %282 = vmatpush2.bf16.msra.mxu0 0
      %283 = vmatprep.subr.bf16.mxu0 0
      %284 = vmatpush2.bf16.msra.mxu0 0
      %285 = vmatprep.subr.bf16.mxu0 0
      %286 = vmatpush2.bf16.msra.mxu0 0
      %287 = vmatprep.subr.bf16.mxu0 0
      %288 = vmatpush2.bf16.msra.mxu0 0
      %289 = vmatprep.subr.bf16.mxu0 0
      %290 = vmatpush2.bf16.msra.mxu0 0
      %291 = vmatprep.subr.bf16.mxu0 0
      %292 = vmatpush2.bf16.msra.mxu0 0
      %293 = vmatprep.subr.bf16.mxu0 0
      %294 = vmatpush2.bf16.msra.mxu0 0
      %295 = vmatprep.mubr.bf16.mxu0 0
      %296 = vmatmul.mubr.bf16.gmra.mxu0 %v252
      %v297 = vpop.f32.mrf.mxu0
      %v298 = vadd.f32 0.0, %v297
      %v299 = vpop.f32.mrf.mxu0
      %v300 = vpop.f32.mrf.mxu0
      %v301 = vadd.f32 0.0, %v300
      %v302 = vpop.f32.mrf.mxu0
      %303 = vmatprep.mubr.bf16.mxu0 0
      %304 = vmatmul.mubr.bf16.gmra.mxu0 %v255
      %v305 = vpop.f32.mrf.mxu0
      %v306 = vadd.f32 0.0, %v305
      %v307 = vpop.f32.mrf.mxu0
      %v308 = vpop.f32.mrf.mxu0
      %v309 = vadd.f32 0.0, %v308
      %v310 = vpop.f32.mrf.mxu0
      %311 = vmatprep.mubr.bf16.mxu0 0
      %312 = vmatmul.mubr.bf16.gmra.mxu0 %v258
      %v313 = vpop.f32.mrf.mxu0
      %v314 = vadd.f32 0.0, %v313
      %v315 = vpop.f32.mrf.mxu0
      %v316 = vpop.f32.mrf.mxu0
      %v317 = vadd.f32 0.0, %v316
      %v318 = vpop.f32.mrf.mxu0
      %319 = vmatprep.mubr.bf16.mxu0 0
      %320 = vmatmul.mubr.bf16.gmra.mxu0 %v261
      %v321 = vpop.f32.mrf.mxu0
      %v322 = vadd.f32 0.0, %v321
      %v323 = vpop.f32.mrf.mxu0
      %v324 = vpop.f32.mrf.mxu0
      %v325 = vadd.f32 0.0, %v324
      %v326 = vpop.f32.mrf.mxu0
      %327 = vdwg.mxu0
      %v336 = vunpack.c.l.b16 %v172
      %v337 = vunpack.c.l.b16 %v173
      %v338 = vunpack.c.l.b16 %v174
      %v339 = vunpack.c.l.b16 %v175
      %v340 = vunpack.c.l.b16 %v176
      %v341 = vunpack.c.l.b16 %v177
      %v342 = vunpack.c.l.b16 %v178
      %v343 = vunpack.c.l.b16 %v179
      %v344 = vpack.c.b16 %v337, %v336
      %v345 = vpack.c.b16 %v339, %v338
      %v346 = vpack.c.b16 %v341, %v340
      %v347 = vpack.c.b16 %v343, %v342
      %v356 = vunpack.c.l.b16 %v180
      %v357 = vunpack.c.l.b16 %v181
      %v358 = vunpack.c.l.b16 %v182
      %v359 = vunpack.c.l.b16 %v183
      %v360 = vunpack.c.l.b16 %v184
      %v361 = vunpack.c.l.b16 %v185
      %v362 = vunpack.c.l.b16 %v186
      %v363 = vunpack.c.l.b16 %v187
      %v364 = vpack.c.b16 %v357, %v356
      %v365 = vpack.c.b16 %v359, %v358
      %v366 = vpack.c.b16 %v361, %v360
      %v367 = vpack.c.b16 %v363, %v362
      %v373 = vsel %vm250, %v344, 0
      %v376 = vsel %vm250, %v345, 0
      %v379 = vsel %vm250, %v346, 0
      %v382 = vsel %vm250, %v347, 0
      %384 = vmatprep.subr.bf16.mxu0 0
      %385 = vmatpush1.bf16.msra.mxu0 0
      %386 = vmatprep.subr.bf16.mxu0 0
      %387 = vmatpush1.bf16.msra.mxu0 0
      %388 = vmatprep.subr.bf16.mxu0 0
      %389 = vmatpush1.bf16.msra.mxu0 0
      %390 = vmatprep.subr.bf16.mxu0 0
      %391 = vmatpush1.bf16.msra.mxu0 0
      %392 = vmatprep.subr.bf16.mxu0 0
      %393 = vmatpush1.bf16.msra.mxu0 %v367
      %394 = vmatprep.subr.bf16.mxu0 0
      %395 = vmatpush1.bf16.msra.mxu0 %v366
      %396 = vmatprep.subr.bf16.mxu0 0
      %397 = vmatpush1.bf16.msra.mxu0 %v365
      %398 = vmatprep.subr.bf16.mxu0 0
      %399 = vmatpush1.bf16.msra.mxu0 %v364
      %400 = vmatprep.subr.bf16.mxu0 0
      %401 = vmatpush2.bf16.msra.mxu0 0
      %402 = vmatprep.subr.bf16.mxu0 0
      %403 = vmatpush2.bf16.msra.mxu0 0
      %404 = vmatprep.subr.bf16.mxu0 0
      %405 = vmatpush2.bf16.msra.mxu0 0
      %406 = vmatprep.subr.bf16.mxu0 0
      %407 = vmatpush2.bf16.msra.mxu0 0
      %408 = vmatprep.subr.bf16.mxu0 0
      %409 = vmatpush2.bf16.msra.mxu0 0
      %410 = vmatprep.subr.bf16.mxu0 0
      %411 = vmatpush2.bf16.msra.mxu0 0
      %412 = vmatprep.subr.bf16.mxu0 0
      %413 = vmatpush2.bf16.msra.mxu0 0
      %414 = vmatprep.subr.bf16.mxu0 0
      %415 = vmatpush2.bf16.msra.mxu0 0
      %416 = vmatprep.mubr.bf16.mxu0 0
      %417 = vmatmul.mubr.bf16.gmra.mxu0 %v373
      %v418 = vpop.f32.mrf.mxu0
      %v419 = vadd.f32 %v298, %v418
      %v420 = vpop.f32.mrf.mxu0
      %v421 = vpop.f32.mrf.mxu0
      %v422 = vadd.f32 %v301, %v421
      %v423 = vpop.f32.mrf.mxu0
      %424 = vmatprep.mubr.bf16.mxu0 0
      %425 = vmatmul.mubr.bf16.gmra.mxu0 %v376
      %v426 = vpop.f32.mrf.mxu0
      %v427 = vadd.f32 %v306, %v426
      %v428 = vpop.f32.mrf.mxu0
      %v429 = vpop.f32.mrf.mxu0
      %v430 = vadd.f32 %v309, %v429
      %v431 = vpop.f32.mrf.mxu0
      %432 = vmatprep.mubr.bf16.mxu0 0
      %433 = vmatmul.mubr.bf16.gmra.mxu0 %v379
      %v434 = vpop.f32.mrf.mxu0
      %v435 = vadd.f32 %v314, %v434
      %v436 = vpop.f32.mrf.mxu0
      %v437 = vpop.f32.mrf.mxu0
      %v438 = vadd.f32 %v317, %v437
      %v439 = vpop.f32.mrf.mxu0
      %440 = vmatprep.mubr.bf16.mxu0 0
      %441 = vmatmul.mubr.bf16.gmra.mxu0 %v382
      %v442 = vpop.f32.mrf.mxu0
      %v443 = vadd.f32 %v322, %v442
      %v444 = vpop.f32.mrf.mxu0
      %v445 = vpop.f32.mrf.mxu0
      %v446 = vadd.f32 %v325, %v445
      %v447 = vpop.f32.mrf.mxu0
      %448 = vdwg.mxu0
      %v449 = vld [vmem:[%s165 + $0x4] sm:$0xf]
      %v450 = vld [vmem:[%s165 + $0x8] sm:$0xf]
      %v451 = vld [vmem:[%s165 + $0xc] sm:$0xf]
      %v452 = vld [vmem:[%s165 + $0x10] sm:$0xf]
      %v453 = vld [vmem:[%s165 + $0x14] sm:$0xf]
      %v454 = vld [vmem:[%s165 + $0x18] sm:$0xf]
      %v455 = vld [vmem:[%s165 + $0x1c] sm:$0xf]
      %v456 = vld [vmem:[%s165 + $0x20] sm:$0xf]
      %s457 = scalar_lea.vmem %s1, 64
      %v458 = vld [vmem:[%s457] sm:$0xf]
      %v459 = vld [vmem:[%s457 + $0x4] sm:$0xf]
      %v460 = vld [vmem:[%s457 + $0x8] sm:$0xf]
      %v461 = vld [vmem:[%s457 + $0xc] sm:$0xf]
      %v462 = vld [vmem:[%s457 + $0x10] sm:$0xf]
      %v463 = vld [vmem:[%s457 + $0x14] sm:$0xf]
      %v464 = vld [vmem:[%s457 + $0x18] sm:$0xf]
      %v465 = vld [vmem:[%s457 + $0x1c] sm:$0xf]
      %v474 = vunpack.c.l.b16 %v449
      %v475 = vunpack.c.l.b16 %v450
      %v476 = vunpack.c.l.b16 %v451
      %v477 = vunpack.c.l.b16 %v452
      %v478 = vunpack.c.l.b16 %v453
      %v479 = vunpack.c.l.b16 %v454
      %v480 = vunpack.c.l.b16 %v455
      %v481 = vunpack.c.l.b16 %v456
      %v482 = vpack.c.b16 %v475, %v474
      %v483 = vpack.c.b16 %v477, %v476
      %v484 = vpack.c.b16 %v479, %v478
      %v485 = vpack.c.b16 %v481, %v480
      %v494 = vunpack.c.l.b16 %v458
      %v495 = vunpack.c.l.b16 %v459
      %v496 = vunpack.c.l.b16 %v460
      %v497 = vunpack.c.l.b16 %v461
      %v498 = vunpack.c.l.b16 %v462
      %v499 = vunpack.c.l.b16 %v463
      %v500 = vunpack.c.l.b16 %v464
      %v501 = vunpack.c.l.b16 %v465
      %v502 = vpack.c.b16 %v495, %v494
      %v503 = vpack.c.b16 %v497, %v496
      %v504 = vpack.c.b16 %v499, %v498
      %v505 = vpack.c.b16 %v501, %v500
      %v511 = vsel %vm250, %v482, 0
      %v514 = vsel %vm250, %v483, 0
      %v517 = vsel %vm250, %v484, 0
      %v520 = vsel %vm250, %v485, 0
      %522 = vmatprep.subr.bf16.mxu0 0
      %523 = vmatpush1.bf16.msra.mxu0 0
      %524 = vmatprep.subr.bf16.mxu0 0
      %525 = vmatpush1.bf16.msra.mxu0 0
      %526 = vmatprep.subr.bf16.mxu0 0
      %527 = vmatpush1.bf16.msra.mxu0 0
      %528 = vmatprep.subr.bf16.mxu0 0
      %529 = vmatpush1.bf16.msra.mxu0 0
      %530 = vmatprep.subr.bf16.mxu0 0
      %531 = vmatpush1.bf16.msra.mxu0 %v505
      %532 = vmatprep.subr.bf16.mxu0 0
      %533 = vmatpush1.bf16.msra.mxu0 %v504
      %534 = vmatprep.subr.bf16.mxu0 0
      %535 = vmatpush1.bf16.msra.mxu0 %v503
      %536 = vmatprep.subr.bf16.mxu0 0
      %537 = vmatpush1.bf16.msra.mxu0 %v502
      %538 = vmatprep.subr.bf16.mxu0 0
      %539 = vmatpush2.bf16.msra.mxu0 0
      %540 = vmatprep.subr.bf16.mxu0 0
      %541 = vmatpush2.bf16.msra.mxu0 0
      %542 = vmatprep.subr.bf16.mxu0 0
      %543 = vmatpush2.bf16.msra.mxu0 0
      %544 = vmatprep.subr.bf16.mxu0 0
      %545 = vmatpush2.bf16.msra.mxu0 0
      %546 = vmatprep.subr.bf16.mxu0 0
      %547 = vmatpush2.bf16.msra.mxu0 0
      %548 = vmatprep.subr.bf16.mxu0 0
      %549 = vmatpush2.bf16.msra.mxu0 0
      %550 = vmatprep.subr.bf16.mxu0 0
      %551 = vmatpush2.bf16.msra.mxu0 0
      %552 = vmatprep.subr.bf16.mxu0 0
      %553 = vmatpush2.bf16.msra.mxu0 0
      %554 = vmatprep.mubr.bf16.mxu0 0
      %555 = vmatmul.mubr.bf16.gmra.mxu0 %v511
      %v556 = vpop.f32.mrf.mxu0
      %v557 = vadd.f32 0.0, %v556
      %v558 = vpop.f32.mrf.mxu0
      %v559 = vpop.f32.mrf.mxu0
      %v560 = vadd.f32 0.0, %v559
      %v561 = vpop.f32.mrf.mxu0
      %562 = vmatprep.mubr.bf16.mxu0 0
      %563 = vmatmul.mubr.bf16.gmra.mxu0 %v514
      %v564 = vpop.f32.mrf.mxu0
      %v565 = vadd.f32 0.0, %v564
      %v566 = vpop.f32.mrf.mxu0
      %v567 = vpop.f32.mrf.mxu0
      %v568 = vadd.f32 0.0, %v567
      %v569 = vpop.f32.mrf.mxu0
      %570 = vmatprep.mubr.bf16.mxu0 0
      %571 = vmatmul.mubr.bf16.gmra.mxu0 %v517
      %v572 = vpop.f32.mrf.mxu0
      %v573 = vadd.f32 0.0, %v572
      %v574 = vpop.f32.mrf.mxu0
      %v575 = vpop.f32.mrf.mxu0
      %v576 = vadd.f32 0.0, %v575
      %v577 = vpop.f32.mrf.mxu0
      %578 = vmatprep.mubr.bf16.mxu0 0
      %579 = vmatmul.mubr.bf16.gmra.mxu0 %v520
      %v580 = vpop.f32.mrf.mxu0
      %v581 = vadd.f32 0.0, %v580
      %v582 = vpop.f32.mrf.mxu0
      %v583 = vpop.f32.mrf.mxu0
      %v584 = vadd.f32 0.0, %v583
      %v585 = vpop.f32.mrf.mxu0
      %586 = vdwg.mxu0
      %v587 = vadd.f32 %v419, %v557
      %v588 = vadd.f32 %v422, %v560
      %v589 = vadd.f32 %v427, %v565
      %v590 = vadd.f32 %v430, %v568
      %v591 = vadd.f32 %v435, %v573
      %v592 = vadd.f32 %v438, %v576
      %v593 = vadd.f32 %v443, %v581
      %v594 = vadd.f32 %v446, %v584
      %v595 = vld [vmem:[%s188 + $0x4] sm:$0xf]
      %v596 = vld [vmem:[%s188 + $0x8] sm:$0xf]
      %v597 = vld [vmem:[%s188 + $0xc] sm:$0xf]
      %v598 = vld [vmem:[%s188 + $0x10] sm:$0xf]
      %v599 = vld [vmem:[%s188 + $0x14] sm:$0xf]
      %v600 = vld [vmem:[%s188 + $0x18] sm:$0xf]
      %v601 = vld [vmem:[%s188 + $0x1c] sm:$0xf]
      %v602 = vld [vmem:[%s188 + $0x20] sm:$0xf]
      %s603 = scalar_lea.vmem %s1, 96
      %v604 = vld [vmem:[%s603] sm:$0xf]
      %v605 = vld [vmem:[%s603 + $0x4] sm:$0xf]
      %v606 = vld [vmem:[%s603 + $0x8] sm:$0xf]
      %v607 = vld [vmem:[%s603 + $0xc] sm:$0xf]
      %v608 = vld [vmem:[%s603 + $0x10] sm:$0xf]
      %v609 = vld [vmem:[%s603 + $0x14] sm:$0xf]
      %v610 = vld [vmem:[%s603 + $0x18] sm:$0xf]
      %v611 = vld [vmem:[%s603 + $0x1c] sm:$0xf]
      %v620 = vunpack.c.l.b16 %v595
      %v621 = vunpack.c.l.b16 %v596
      %v622 = vunpack.c.l.b16 %v597
      %v623 = vunpack.c.l.b16 %v598
      %v624 = vunpack.c.l.b16 %v599
      %v625 = vunpack.c.l.b16 %v600
      %v626 = vunpack.c.l.b16 %v601
      %v627 = vunpack.c.l.b16 %v602
      %v628 = vpack.c.b16 %v621, %v620
      %v629 = vpack.c.b16 %v623, %v622
      %v630 = vpack.c.b16 %v625, %v624
      %v631 = vpack.c.b16 %v627, %v626
      %v640 = vunpack.c.l.b16 %v604
      %v641 = vunpack.c.l.b16 %v605
      %v642 = vunpack.c.l.b16 %v606
      %v643 = vunpack.c.l.b16 %v607
      %v644 = vunpack.c.l.b16 %v608
      %v645 = vunpack.c.l.b16 %v609
      %v646 = vunpack.c.l.b16 %v610
      %v647 = vunpack.c.l.b16 %v611
      %v648 = vpack.c.b16 %v641, %v640
      %v649 = vpack.c.b16 %v643, %v642
      %v650 = vpack.c.b16 %v645, %v644
      %v651 = vpack.c.b16 %v647, %v646
      %v657 = vsel %vm250, %v628, 0
      %v660 = vsel %vm250, %v629, 0
      %v663 = vsel %vm250, %v630, 0
      %v666 = vsel %vm250, %v631, 0
      %668 = vmatprep.subr.bf16.mxu0 0
      %669 = vmatpush1.bf16.msra.mxu0 0
      %670 = vmatprep.subr.bf16.mxu0 0
      %671 = vmatpush1.bf16.msra.mxu0 0
      %672 = vmatprep.subr.bf16.mxu0 0
      %673 = vmatpush1.bf16.msra.mxu0 0
      %674 = vmatprep.subr.bf16.mxu0 0
      %675 = vmatpush1.bf16.msra.mxu0 0
      %676 = vmatprep.subr.bf16.mxu0 0
      %677 = vmatpush1.bf16.msra.mxu0 %v651
      %678 = vmatprep.subr.bf16.mxu0 0
      %679 = vmatpush1.bf16.msra.mxu0 %v650
      %680 = vmatprep.subr.bf16.mxu0 0
      %681 = vmatpush1.bf16.msra.mxu0 %v649
      %682 = vmatprep.subr.bf16.mxu0 0
      %683 = vmatpush1.bf16.msra.mxu0 %v648
      %684 = vmatprep.subr.bf16.mxu0 0
      %685 = vmatpush2.bf16.msra.mxu0 0
      %686 = vmatprep.subr.bf16.mxu0 0
      %687 = vmatpush2.bf16.msra.mxu0 0
      %688 = vmatprep.subr.bf16.mxu0 0
      %689 = vmatpush2.bf16.msra.mxu0 0
      %690 = vmatprep.subr.bf16.mxu0 0
      %691 = vmatpush2.bf16.msra.mxu0 0
      %692 = vmatprep.subr.bf16.mxu0 0
      %693 = vmatpush2.bf16.msra.mxu0 0
      %694 = vmatprep.subr.bf16.mxu0 0
      %695 = vmatpush2.bf16.msra.mxu0 0
      %696 = vmatprep.subr.bf16.mxu0 0
      %697 = vmatpush2.bf16.msra.mxu0 0
      %698 = vmatprep.subr.bf16.mxu0 0
      %699 = vmatpush2.bf16.msra.mxu0 0
      %700 = vmatprep.mubr.bf16.mxu0 0
      %701 = vmatmul.mubr.bf16.gmra.mxu0 %v657
      %v702 = vpop.f32.mrf.mxu0
      %v703 = vadd.f32 0.0, %v702
      %v704 = vpop.f32.mrf.mxu0
      %v705 = vpop.f32.mrf.mxu0
      %v706 = vadd.f32 0.0, %v705
      %v707 = vpop.f32.mrf.mxu0
      %708 = vmatprep.mubr.bf16.mxu0 0
      %709 = vmatmul.mubr.bf16.gmra.mxu0 %v660
      %v710 = vpop.f32.mrf.mxu0
      %v711 = vadd.f32 0.0, %v710
      %v712 = vpop.f32.mrf.mxu0
      %v713 = vpop.f32.mrf.mxu0
      %v714 = vadd.f32 0.0, %v713
      %v715 = vpop.f32.mrf.mxu0
      %716 = vmatprep.mubr.bf16.mxu0 0
      %717 = vmatmul.mubr.bf16.gmra.mxu0 %v663
      %v718 = vpop.f32.mrf.mxu0
      %v719 = vadd.f32 0.0, %v718
      %v720 = vpop.f32.mrf.mxu0
      %v721 = vpop.f32.mrf.mxu0
      %v722 = vadd.f32 0.0, %v721
      %v723 = vpop.f32.mrf.mxu0
      %724 = vmatprep.mubr.bf16.mxu0 0
      %725 = vmatmul.mubr.bf16.gmra.mxu0 %v666
      %v726 = vpop.f32.mrf.mxu0
      %v727 = vadd.f32 0.0, %v726
      %v728 = vpop.f32.mrf.mxu0
      %v729 = vpop.f32.mrf.mxu0
      %v730 = vadd.f32 0.0, %v729
      %v731 = vpop.f32.mrf.mxu0
      %732 = vdwg.mxu0
      %v733 = vadd.f32 %v587, %v703
      %v734 = vadd.f32 %v588, %v706
      %v735 = vadd.f32 %v589, %v711
      %v736 = vadd.f32 %v590, %v714
      %v737 = vadd.f32 %v591, %v719
      %v738 = vadd.f32 %v592, %v722
      %v739 = vadd.f32 %v593, %v727
      %v740 = vadd.f32 %v594, %v730
      %v741 = vld [vmem:[%s2] sm:$0x1]
      %v742 = vlaneseq
      %v743 = vshrl.u32 %v742, 7
      %v744 = vsub.s32 0, %v743
      %v745 = vrot.slane %v741, %v744
      %v746 = vmul.f32 %v733, %v745
      %v747 = vmul.f32 %v734, %v745
      %v748 = vmul.f32 %v735, %v745
      %v749 = vmul.f32 %v736, %v745
      %v750 = vmul.f32 %v737, %v745
      %v751 = vmul.f32 %v738, %v745
      %v752 = vmul.f32 %v739, %v745
      %v753 = vmul.f32 %v740, %v745
      %v754 = vld [vmem:[%s2 + $0x1] sm:$0x1]
      %v755 = vlaneseq
      %v756 = vshrl.u32 %v755, 7
      %v757 = vsub.s32 0, %v756
      %v758 = vrot.slane %v754, %v757
      %v759 = vadd.f32 %v746, %v758
      %v760 = vadd.f32 %v747, %v758
      %v761 = vadd.f32 %v748, %v758
      %v762 = vadd.f32 %v749, %v758
      %v763 = vadd.f32 %v750, %v758
      %v764 = vadd.f32 %v751, %v758
      %v765 = vadd.f32 %v752, %v758
      %v766 = vadd.f32 %v753, %v758
      %v767 = vmax.f32 %v759, 0.0
      %v768 = vmax.f32 %v760, 0.0
      %v769 = vmax.f32 %v761, 0.0
      %v770 = vmax.f32 %v762, 0.0
      %v771 = vmax.f32 %v763, 0.0
      %v772 = vmax.f32 %v764, 0.0
      %v773 = vmax.f32 %v765, 0.0
      %v774 = vmax.f32 %v766, 0.0
      %v775 = vpack.c.bf16 %v768, %v767
      %v776 = vpack.c.bf16 %v770, %v769
      %v777 = vpack.c.bf16 %v772, %v771
      %v778 = vpack.c.bf16 %v774, %v773
      %v783 = vunpack.c.l.b16 %v775
      %v784 = vunpack.c.h.b16 %v775
      %v785 = vunpack.c.l.b16 %v776
      %v786 = vunpack.c.h.b16 %v776
      %v787 = vunpack.c.l.b16 %v777
      %v788 = vunpack.c.h.b16 %v777
      %v789 = vunpack.c.l.b16 %v778
      %v790 = vunpack.c.h.b16 %v778
      %v791 = vpack.c.b16 %v783, %v783
      %v792 = vpack.c.b16 %v784, %v784
      %v793 = vpack.c.b16 %v785, %v785
      %v794 = vpack.c.b16 %v786, %v786
      %v795 = vpack.c.b16 %v787, %v787
      %v796 = vpack.c.b16 %v788, %v788
      %v797 = vpack.c.b16 %v789, %v789
      %v798 = vpack.c.b16 %v790, %v790
      %vm807 = vcmask 257024
      %808 = vst.msk [vmem:[%s170] sm:$0xf] %vm807, %v791
      %809 = vst.msk [vmem:[%s170 + $0x4] sm:$0xf] %vm807, %v792
      %810 = vst.msk [vmem:[%s170 + $0x8] sm:$0xf] %vm807, %v793
      %811 = vst.msk [vmem:[%s170 + $0xc] sm:$0xf] %vm807, %v794
      %812 = vst.msk [vmem:[%s170 + $0x10] sm:$0xf] %vm807, %v795
      %813 = vst.msk [vmem:[%s170 + $0x14] sm:$0xf] %vm807, %v796
      %814 = vst.msk [vmem:[%s170 + $0x18] sm:$0xf] %vm807, %v797
      %815 = vst.msk [vmem:[%s170 + $0x1c] sm:$0xf] %vm807, %v798
      %p816 = scmp.lt.s32.totalorder %s14, 1
      %s817 = scalar_select %p816, %s14, 1
      %s818 = smul.addr %s817, 8
      %s819 = smul.addr %s818, 4
      %s820 = scalar_lea.vmem %s3, %s819
      // Predicated region
      $region33: #{encoder_forward.7} parent=31 // pred_check
        %p821 = pneg %p100
      $region34: #{encoder_forward.7} parent=31 // pred_check_branch
        %823 = sbr.rel (%p821) target = $region36
      $region35: #{encoder_forward.7} parent=31 // pred_region
        _
      $region36: #{encoder_forward.7} parent=31 // pred_fallthru
        _
    $region32: #{encoder_forward.7} parent=5 // pred_fallthru
      _
    %p824 = scmp.le.s32.totalorder 2, %s9
    // Predicated region
    $region37: #{encoder_forward.7} parent=5 // pred_check
      %p825 = pneg %p824
    $region38: #{encoder_forward.7} parent=5 // pred_check_branch
      %827 = sbr.rel (%p825) target = $region40
    $region39: #{encoder_forward.7} parent=5 // pred_region
      %s828 = ssub.s32 %s9, 2
      // Predicated region
      $region41: #{encoder_forward.7} parent=39 // pred_check
        %p829 = pneg %p106
      $region42: #{encoder_forward.7} parent=39 // pred_check_branch
        %831 = sbr.rel (%p829) target = $region44
      $region43: #{encoder_forward.7} parent=39 // pred_region
        %p832 = scmp.lt.s32.totalorder %s15, 1
        %s833 = scalar_select %p832, %s15, 1
        %s834 = smul.addr %s833, 8
        %s835 = smul.addr %s834, 4
        %s836 = scalar_lea.vmem %s3, %s835
      $region44: #{encoder_forward.7} parent=39 // pred_fallthru
        _
    $region40: #{encoder_forward.7} parent=5 // pred_fallthru
      _
  $region6: #{encoder_forward.7} parent=0 // loop_footer
    %s13 = sadd.s32 1, %s9
  $region7: #{encoder_forward.7} parent=0 // loop_footer_branch
    %8 = sbr.rel target = $region3
  $region8: #{encoder_forward.7} parent=0 // loop_exit
    _

// kernel: encoder_forward.8
$region0: #{encoder_forward.8}
  #allocation0 [shape = 'u32[]', space=smem, size = 0x4, offset = 0x4, fixed_abs, tag = 'smem constant byte address 0x4 - core index']
  #allocation1 [shape = 'u32[144,128]{1,0:T(1,128)}', space=vmem, size = 0x12000, scoped, tag = 'internal scratch']
  %s0 = inlined_call_operand.vmem [shape: bf16[2,2,20,128], index: 0, kind: input, shape index: {}]
  %s1 = inlined_call_operand.vmem [shape: bf16[4,128,64], index: 1, kind: input, shape index: {}]
  %s2 = inlined_call_operand.vmem [shape: f32[2,64], index: 2, kind: input, shape index: {}]
  %s3 = inlined_call_operand.vmem [shape: bf16[2,16,64], index: 3, kind: output, shape index: {}]
  %s4 = sld [smem:[#allocation0]]
  $region45: #{encoder_forward.8} parent=0
    _
  %s6 = ssub.s32 1, %s4
  %s7 = scalar_select 0, %s6, %s4
  loop: start=0, step=1, limit=4
  $region2: #{encoder_forward.8} parent=0 // loop_pre_header
    _
  $region3: #{encoder_forward.8} parent=0 // loop_header
    %s9 = sphi 0, %s13
    %p10 = scmp.ge.s32.totalorder %s9, 4
    %s19 = sphi 0, %s21
    %s22 = sphi 0, %s19
    %s23 = sphi 0, %s22
    %s39 = sphi 0, %s23
    %s43 = sphi 0, %s43
    %s45 = sphi 0, %s43
    %s46 = sphi 0, %s45
    %s60 = sphi 0, %s46
    %s64 = sphi 0, %s64
    %s66 = sphi 0, %s64
    %s67 = sphi 0, %s66
    %s81 = sphi 0, %s67
    %s87 = sphi 0, %s89
    %s90 = sphi 0, %s87
    %s91 = sphi 0, %s90
    %s107 = sphi 0, %s91
  $region4: #{encoder_forward.8} parent=0 // loop_header_branch
    %12 = sbr.rel (%p10) target = $region8
  $region5: #{encoder_forward.8} parent=0 // loop_body
    %s14 = ssub.s32 %s9, 1
    %s15 = ssub.s32 %s9, 2
    %s16 = sadd.s32 %s9, 1
    %s17 = ssub.s32 %s9, %s16
    %p18 = scmp.eq.s32.totalorder %s17, 0
    %s20 = sadd.s32 %s19, 1
    %s21 = scalar_select %p18, %s19, %s20
    %p24 = pneg %p18
    %p25 = scmp.eq.s32.totalorder %s9, 1
    %p26 = por %p24, %p25
    %p27 = scmp.ne.s32.totalorder %s19, %s22
    %p28 = scmp.eq.s32.totalorder %s9, 0
    %p29 = por %p27, %p28
    %p30 = scmp.ne.s32.totalorder %s19, %s22
    %p31 = scmp.eq.s32.totalorder %s14, 1
    %p32 = por %p30, %p31
    %p33 = scmp.ne.s32.totalorder %s22, %s23
    %p34 = scmp.eq.s32.totalorder %s14, 0
    %p35 = por %p33, %p34
    %p36 = scmp.ne.s32.totalorder %s22, %s23
    %p37 = scmp.eq.s32.totalorder %s15, 1
    %p38 = por %p36, %p37
    %p40 = scmp.ne.s32.totalorder %s23, %s39
    %p41 = scmp.eq.s32.totalorder %s15, 0
    %p42 = por %p40, %p41
    %s44 = sadd.s32 %s43, 1
    %p47 = scmp.eq.s32.totalorder %s9, 1
    %p48 = scmp.ne.s32.totalorder %s43, %s45
    %p49 = scmp.eq.s32.totalorder %s9, 0
    %p50 = por %p48, %p49
    %p51 = scmp.ne.s32.totalorder %s43, %s45
    %p52 = scmp.eq.s32.totalorder %s14, 1
    %p53 = por %p51, %p52
    %p54 = scmp.ne.s32.totalorder %s45, %s46
    %p55 = scmp.eq.s32.totalorder %s14, 0
    %p56 = por %p54, %p55
    %p57 = scmp.ne.s32.totalorder %s45, %s46
    %p58 = scmp.eq.s32.totalorder %s15, 1
    %p59 = por %p57, %p58
    %p61 = scmp.ne.s32.totalorder %s46, %s60
    %p62 = scmp.eq.s32.totalorder %s15, 0
    %p63 = por %p61, %p62
    %s65 = sadd.s32 %s64, 1
    %p68 = scmp.eq.s32.totalorder %s9, 1
    %p69 = scmp.ne.s32.totalorder %s64, %s66
    %p70 = scmp.eq.s32.totalorder %s9, 0
    %p71 = por %p69, %p70
    %p72 = scmp.ne.s32.totalorder %s64, %s66
    %p73 = scmp.eq.s32.totalorder %s14, 1
    %p74 = por %p72, %p73
    %p75 = scmp.ne.s32.totalorder %s66, %s67
    %p76 = scmp.eq.s32.totalorder %s14, 0
    %p77 = por %p75, %p76
    %p78 = scmp.ne.s32.totalorder %s66, %s67
    %p79 = scmp.eq.s32.totalorder %s15, 1
    %p80 = por %p78, %p79
    %p82 = scmp.ne.s32.totalorder %s67, %s81
    %p83 = scmp.eq.s32.totalorder %s15, 0
    %p84 = por %p82, %p83
    %s85 = ssub.s32 %s9, %s16
    %p86 = scmp.eq.s32.totalorder %s85, 0
    %s88 = sadd.s32 %s87, 1
    %s89 = scalar_select %p86, %s87, %s88
    %p92 = pneg %p86
    %p93 = scmp.eq.s32.totalorder %s9, 1
    %p94 = por %p92, %p93
    %p95 = scmp.ne.s32.totalorder %s87, %s90
    %p96 = scmp.eq.s32.totalorder %s9, 0
    %p97 = por %p95, %p96
    %p98 = scmp.ne.s32.totalorder %s87, %s90
    %p99 = scmp.eq.s32.totalorder %s14, 1
    %p100 = por %p98, %p99
    %p101 = scmp.ne.s32.totalorder %s90, %s91
    %p102 = scmp.eq.s32.totalorder %s14, 0
    %p103 = por %p101, %p102
    %p104 = scmp.ne.s32.totalorder %s90, %s91
    %p105 = scmp.eq.s32.totalorder %s15, 1
    %p106 = por %p104, %p105
    %p108 = scmp.ne.s32.totalorder %s91, %s107
    %p109 = scmp.eq.s32.totalorder %s15, 0
    %p110 = por %p108, %p109
    %p111 = scmp.le.s32.totalorder 1, %s9
    %p112 = scmp.lt.s32.totalorder %s9, 3
    %p113 = pnand %p111, %p112
    %p114 = pneg %p113
    // Predicated region
    $region9: #{encoder_forward.8} parent=5 // pred_check
      _
    $region10: #{encoder_forward.8} parent=5 // pred_check_branch
      %116 = sbr.rel (%p113) target = $region12
    $region11: #{encoder_forward.8} parent=5 // pred_region
      %s117 = ssub.s32 %s9, 1
      // Predicated region
      $region13: #{encoder_forward.8} parent=11 // pred_check
        %p118 = pneg %p56
      $region14: #{encoder_forward.8} parent=11 // pred_check_branch
        %120 = sbr.rel (%p118) target = $region16
      $region15: #{encoder_forward.8} parent=11 // pred_region
        _
      $region16: #{encoder_forward.8} parent=11 // pred_fallthru
        _
      // Predicated region
      $region17: #{encoder_forward.8} parent=11 // pred_check
        %p121 = pneg %p77
      $region18: #{encoder_forward.8} parent=11 // pred_check_branch
        %123 = sbr.rel (%p121) target = $region20
      $region19: #{encoder_forward.8} parent=11 // pred_region
        _
      $region20: #{encoder_forward.8} parent=11 // pred_fallthru
        _
    $region12: #{encoder_forward.8} parent=5 // pred_fallthru
      _
    %p124 = scmp.lt.s32.totalorder %s9, 2
    // Predicated region
    $region21: #{encoder_forward.8} parent=5 // pred_check
      %p125 = pneg %p124
    $region22: #{encoder_forward.8} parent=5 // pred_check_branch
      %127 = sbr.rel (%p125) target = $region24
    $region23: #{encoder_forward.8} parent=5 // pred_region
      // Predicated region
      $region25: #{encoder_forward.8} parent=23 // pred_check
        %p128 = pneg %p29
      $region26: #{encoder_forward.8} parent=23 // pred_check_branch
        %130 = sbr.rel (%p128) target = $region28
      $region27: #{encoder_forward.8} parent=23 // pred_region
        %p131 = scmp.lt.s32.totalorder %s9, 1
        %s132 = scalar_select %p131, %s9, 1
        %s133 = smul.addr %s132, 6
        %s134 = smul.addr %s133, 4
        %s135 = scalar_lea.vmem %s0, %s134
      $region28: #{encoder_forward.8} parent=23 // pred_fallthru
        _
    $region24: #{encoder_forward.8} parent=5 // pred_fallthru
      _
    %p136 = scmp.le.s32.totalorder 1, %s9
    %p137 = scmp.lt.s32.totalorder %s9, 3
    %p138 = pnand %p136, %p137
    %p139 = pneg %p138
    // Predicated region
    $region29: #{encoder_forward.8} parent=5 // pred_check
      _
    $region30: #{encoder_forward.8} parent=5 // pred_check_branch
      %141 = sbr.rel (%p138) target = $region32
    $region31: #{encoder_forward.8} parent=5 // pred_region
      %s142 = ssub.s32 %s9, 1
      %p143 = scmp.lt.s32.totalorder %s14, 1
      %s144 = scalar_select %p143, %s14, 1
      %s145 = smul.addr %s144, 6
      %s146 = smul.addr %s145, 4
      %s147 = scalar_lea.vmem %s0, %s146
      %p148 = pneg %p35
      %p149 = pneg %p32
      %p150 = pneg %p56
      %p151 = pneg %p53
      %p152 = pneg %p77
      %p153 = pneg %p74
      %p154 = pneg %p103
      %p155 = pneg %p100
      %p156 = scmp.lt.s32.totalorder %s14, 1
      %s157 = scalar_select %p156, %s14, 1
      %s158 = smul.addr %s157, 2
      %s159 = smul.addr %s158, 4
      %s160 = scalar_lea.vmem %s3, %s159
      %p161 = scmp.lt.s32.totalorder %s14, 1
      %s162 = scalar_select %p161, %s14, 1
      %s163 = smul.addr %s162, 6
      %s164 = smul.addr %s163, 4
      %s165 = scalar_lea.vmem %s0, %s164
      %p166 = scmp.lt.s32.totalorder %s14, 1
      %s167 = scalar_select %p166, %s14, 1
      %s168 = smul.addr %s167, 2
      %s169 = smul.addr %s168, 4
      %s170 = scalar_lea.vmem %s3, %s169
      %v172 = vld [vmem:[%s165] sm:$0xf]
      %v173 = vld [vmem:[%s165 + $0x4] sm:$0xf]
      %v174 = vld [vmem:[%s1] sm:$0xf]
      %v175 = vld [vmem:[%s1 + $0x4] sm:$0xf]
      %v176 = vld [vmem:[%s1 + $0x8] sm:$0xf]
      %v177 = vld [vmem:[%s1 + $0xc] sm:$0xf]
      %v178 = vld [vmem:[%s1 + $0x10] sm:$0xf]
      %v179 = vld [vmem:[%s1 + $0x14] sm:$0xf]
      %v180 = vld [vmem:[%s1 + $0x18] sm:$0xf]
      %v181 = vld [vmem:[%s1 + $0x1c] sm:$0xf]
      %v182 = vld [vmem:[%s1 + $0x20] sm:$0xf]
      %v183 = vld [vmem:[%s1 + $0x24] sm:$0xf]
      %v184 = vld [vmem:[%s1 + $0x28] sm:$0xf]
      %v185 = vld [vmem:[%s1 + $0x2c] sm:$0xf]
      %v186 = vld [vmem:[%s1 + $0x30] sm:$0xf]
      %v187 = vld [vmem:[%s1 + $0x34] sm:$0xf]
      %v188 = vld [vmem:[%s1 + $0x38] sm:$0xf]
      %v189 = vld [vmem:[%s1 + $0x3c] sm:$0xf]
      %s190 = scalar_lea.vmem %s165, 12
      %v191 = vld [vmem:[%s190] sm:$0xf]
      %v192 = vld [vmem:[%s190 + $0x4] sm:$0xf]
      %s193 = scalar_lea.vmem %s1, 64
      %v194 = vld [vmem:[%s193] sm:$0xf]
      %v195 = vld [vmem:[%s193 + $0x4] sm:$0xf]
      %v196 = vld [vmem:[%s193 + $0x8] sm:$0xf]
      %v197 = vld [vmem:[%s193 + $0xc] sm:$0xf]
      %v198 = vld [vmem:[%s193 + $0x10] sm:$0xf]
      %v199 = vld [vmem:[%s193 + $0x14] sm:$0xf]
      %v200 = vld [vmem:[%s193 + $0x18] sm:$0xf]
      %v201 = vld [vmem:[%s193 + $0x1c] sm:$0xf]
      %v202 = vld [vmem:[%s193 + $0x20] sm:$0xf]
      %v203 = vld [vmem:[%s193 + $0x24] sm:$0xf]
      %v204 = vld [vmem:[%s193 + $0x28] sm:$0xf]
      %v205 = vld [vmem:[%s193 + $0x2c] sm:$0xf]
      %v206 = vld [vmem:[%s193 + $0x30] sm:$0xf]
      %v207 = vld [vmem:[%s193 + $0x34] sm:$0xf]
      %v208 = vld [vmem:[%s193 + $0x38] sm:$0xf]
      %v209 = vld [vmem:[%s193 + $0x3c] sm:$0xf]
      %v212 = vunpack.c.l.b16 %v191
      %v213 = vunpack.c.l.b16 %v192
      %v214 = vpack.c.b16 %v213, %v212
      %v232 = vunpack.c.l.b16 %v194
      %v233 = vunpack.c.l.b16 %v195
      %v234 = vunpack.c.l.b16 %v196
      %v235 = vunpack.c.l.b16 %v197
      %v236 = vunpack.c.l.b16 %v198
      %v237 = vunpack.c.l.b16 %v199
      %v238 = vunpack.c.l.b16 %v200
      %v239 = vunpack.c.l.b16 %v201
      %v240 = vunpack.c.l.b16 %v202
      %v241 = vunpack.c.l.b16 %v203
      %v242 = vunpack.c.l.b16 %v204
      %v243 = vunpack.c.l.b16 %v205
      %v244 = vunpack.c.l.b16 %v206
      %v245 = vunpack.c.l.b16 %v207
      %v246 = vunpack.c.l.b16 %v208
      %v247 = vunpack.c.l.b16 %v209
      %v248 = vpack.c.b16 %v233, %v232
      %v249 = vpack.c.b16 %v235, %v234
      %v250 = vpack.c.b16 %v237, %v236
      %v251 = vpack.c.b16 %v239, %v238
      %v252 = vpack.c.b16 %v241, %v240
      %v253 = vpack.c.b16 %v243, %v242
      %v254 = vpack.c.b16 %v245, %v244
      %v255 = vpack.c.b16 %v247, %v246
      %264 = vmatprep.subr.bf16.mxu0 0
      %265 = vmatpush1.bf16.msra.mxu0 %v255
      %266 = vmatprep.subr.bf16.mxu0 0
      %267 = vmatpush1.bf16.msra.mxu0 %v254
      %268 = vmatprep.subr.bf16.mxu0 0
      %269 = vmatpush1.bf16.msra.mxu0 %v253
      %270 = vmatprep.subr.bf16.mxu0 0
      %271 = vmatpush1.bf16.msra.mxu0 %v252
      %272 = vmatprep.subr.bf16.mxu0 0
      %273 = vmatpush1.bf16.msra.mxu0 %v251
      %274 = vmatprep.subr.bf16.mxu0 0
      %275 = vmatpush1.bf16.msra.mxu0 %v250
      %276 = vmatprep.subr.bf16.mxu0 0
      %277 = vmatpush1.bf16.msra.mxu0 %v249
      %278 = vmatprep.subr.bf16.mxu0 0
      %279 = vmatpush1.bf16.msra.mxu0 %v248
      %280 = vmatprep.subr.bf16.mxu0 0
      %281 = vmatpush2.bf16.msra.mxu0 0
      %282 = vmatprep.subr.bf16.mxu0 0
      %283 = vmatpush2.bf16.msra.mxu0 0
      %284 = vmatprep.subr.bf16.mxu0 0
      %285 = vmatpush2.bf16.msra.mxu0 0
      %286 = vmatprep.subr.bf16.mxu0 0
      %287 = vmatpush2.bf16.msra.mxu0 0
      %288 = vmatprep.subr.bf16.mxu0 0
      %289 = vmatpush2.bf16.msra.mxu0 0
      %290 = vmatprep.subr.bf16.mxu0 0
      %291 = vmatpush2.bf16.msra.mxu0 0
      %292 = vmatprep.subr.bf16.mxu0 0
      %293 = vmatpush2.bf16.msra.mxu0 0
      %294 = vmatprep.subr.bf16.mxu0 0
      %295 = vmatpush2.bf16.msra.mxu0 0
      %296 = vmatprep.mubr.bf16.mxu0 0
      %297 = vmatmul.mubr.bf16.gmra.mxu0 %v214
      %v298 = vpop.f32.mrf.mxu0
      %v299 = vadd.f32 0.0, %v298
      %v300 = vpop.f32.mrf.mxu0
      %v301 = vpop.f32.mrf.mxu0
      %v302 = vadd.f32 0.0, %v301
      %v303 = vpop.f32.mrf.mxu0
      %304 = vdwg.mxu0
      %v307 = vunpack.c.l.b16 %v172
      %v308 = vunpack.c.l.b16 %v173
      %v309 = vpack.c.b16 %v308, %v307
      %v327 = vunpack.c.l.b16 %v174
      %v328 = vunpack.c.l.b16 %v175
      %v329 = vunpack.c.l.b16 %v176
      %v330 = vunpack.c.l.b16 %v177
      %v331 = vunpack.c.l.b16 %v178
      %v332 = vunpack.c.l.b16 %v179
      %v333 = vunpack.c.l.b16 %v180
      %v334 = vunpack.c.l.b16 %v181
      %v335 = vunpack.c.l.b16 %v182
      %v336 = vunpack.c.l.b16 %v183
      %v337 = vunpack.c.l.b16 %v184
      %v338 = vunpack.c.l.b16 %v185
      %v339 = vunpack.c.l.b16 %v186
      %v340 = vunpack.c.l.b16 %v187
      %v341 = vunpack.c.l.b16 %v188
      %v342 = vunpack.c.l.b16 %v189
      %v343 = vpack.c.b16 %v328, %v327
      %v344 = vpack.c.b16 %v330, %v329
      %v345 = vpack.c.b16 %v332, %v331
      %v346 = vpack.c.b16 %v334, %v333
      %v347 = vpack.c.b16 %v336, %v335
      %v348 = vpack.c.b16 %v338, %v337
      %v349 = vpack.c.b16 %v340, %v339
      %v350 = vpack.c.b16 %v342, %v341
      %359 = vmatprep.subr.bf16.mxu0 0
      %360 = vmatpush1.bf16.msra.mxu0 %v350
      %361 = vmatprep.subr.bf16.mxu0 0
      %362 = vmatpush1.bf16.msra.mxu0 %v349
      %363 = vmatprep.subr.bf16.mxu0 0
      %364 = vmatpush1.bf16.msra.mxu0 %v348
      %365 = vmatprep.subr.bf16.mxu0 0
      %366 = vmatpush1.bf16.msra.mxu0 %v347
      %367 = vmatprep.subr.bf16.mxu0 0
      %368 = vmatpush1.bf16.msra.mxu0 %v346
      %369 = vmatprep.subr.bf16.mxu0 0
      %370 = vmatpush1.bf16.msra.mxu0 %v345
      %371 = vmatprep.subr.bf16.mxu0 0
      %372 = vmatpush1.bf16.msra.mxu0 %v344
      %373 = vmatprep.subr.bf16.mxu0 0
      %374 = vmatpush1.bf16.msra.mxu0 %v343
      %375 = vmatprep.subr.bf16.mxu0 0
      %376 = vmatpush2.bf16.msra.mxu0 0
      %377 = vmatprep.subr.bf16.mxu0 0
      %378 = vmatpush2.bf16.msra.mxu0 0
      %379 = vmatprep.subr.bf16.mxu0 0
      %380 = vmatpush2.bf16.msra.mxu0 0
      %381 = vmatprep.subr.bf16.mxu0 0
      %382 = vmatpush2.bf16.msra.mxu0 0
      %383 = vmatprep.subr.bf16.mxu0 0
      %384 = vmatpush2.bf16.msra.mxu0 0
      %385 = vmatprep.subr.bf16.mxu0 0
      %386 = vmatpush2.bf16.msra.mxu0 0
      %387 = vmatprep.subr.bf16.mxu0 0
      %388 = vmatpush2.bf16.msra.mxu0 0
      %389 = vmatprep.subr.bf16.mxu0 0
      %390 = vmatpush2.bf16.msra.mxu0 0
      %391 = vmatprep.mubr.bf16.mxu0 0
      %392 = vmatmul.mubr.bf16.gmra.mxu0 %v309
      %v393 = vpop.f32.mrf.mxu0
      %v394 = vadd.f32 %v299, %v393
      %v395 = vpop.f32.mrf.mxu0
      %v396 = vpop.f32.mrf.mxu0
      %v397 = vadd.f32 %v302, %v396
      %v398 = vpop.f32.mrf.mxu0
      %399 = vdwg.mxu0
      %v400 = vld [vmem:[%s165] sm:$0xc]
      %v401 = vld [vmem:[%s165 + $0x4] sm:$0xf]
      %v402 = vld [vmem:[%s165 + $0x8] sm:$0x3]
      %s403 = scalar_lea.vmem %s1, 128
      %v404 = vld [vmem:[%s403] sm:$0xf]
      %v405 = vld [vmem:[%s403 + $0x4] sm:$0xf]
      %v406 = vld [vmem:[%s403 + $0x8] sm:$0xf]
      %v407 = vld [vmem:[%s403 + $0xc] sm:$0xf]
      %v408 = vld [vmem:[%s403 + $0x10] sm:$0xf]
      %v409 = vld [vmem:[%s403 + $0x14] sm:$0xf]
      %v410 = vld [vmem:[%s403 + $0x18] sm:$0xf]
      %v411 = vld [vmem:[%s403 + $0x1c] sm:$0xf]
      %v412 = vld [vmem:[%s403 + $0x20] sm:$0xf]
      %v413 = vld [vmem:[%s403 + $0x24] sm:$0xf]
      %v414 = vld [vmem:[%s403 + $0x28] sm:$0xf]
      %v415 = vld [vmem:[%s403 + $0x2c] sm:$0xf]
      %v416 = vld [vmem:[%s403 + $0x30] sm:$0xf]
      %v417 = vld [vmem:[%s403 + $0x34] sm:$0xf]
      %v418 = vld [vmem:[%s403 + $0x38] sm:$0xf]
      %v419 = vld [vmem:[%s403 + $0x3c] sm:$0xf]
      %v423 = vunpack.c.l.b16 %v400
      %v424 = vunpack.c.l.b16 %v401
      %v425 = vunpack.c.l.b16 %v402
      %v426 = vpack.c.b16 %v424, %v423
      %v427 = vpack.c.b16 %v425, %v425
      %vm428 = vcmask 1045504
      %v429 = vrot.slane %v426, 2
      %v430 = vrot.slane %v427, 2
      %v431 = vsel %vm428, %v429, %v430
      %v449 = vunpack.c.l.b16 %v404
      %v450 = vunpack.c.l.b16 %v405
      %v451 = vunpack.c.l.b16 %v406
      %v452 = vunpack.c.l.b16 %v407
      %v453 = vunpack.c.l.b16 %v408
      %v454 = vunpack.c.l.b16 %v409
      %v455 = vunpack.c.l.b16 %v410
      %v456 = vunpack.c.l.b16 %v411
      %v457 = vunpack.c.l.b16 %v412
      %v458 = vunpack.c.l.b16 %v413
      %v459 = vunpack.c.l.b16 %v414
      %v460 = vunpack.c.l.b16 %v415
      %v461 = vunpack.c.l.b16 %v416
      %v462 = vunpack.c.l.b16 %v417
      %v463 = vunpack.c.l.b16 %v418
      %v464 = vunpack.c.l.b16 %v419
      %v465 = vpack.c.b16 %v450, %v449
      %v466 = vpack.c.b16 %v452, %v451
      %v467 = vpack.c.b16 %v454, %v453
      %v468 = vpack.c.b16 %v456, %v455
      %v469 = vpack.c.b16 %v458, %v457
      %v470 = vpack.c.b16 %v460, %v459
      %v471 = vpack.c.b16 %v462, %v461
      %v472 = vpack.c.b16 %v464, %v463
      %481 = vmatprep.subr.bf16.mxu0 0
      %482 = vmatpush1.bf16.msra.mxu0 %v472
      %483 = vmatprep.subr.bf16.mxu0 0
      %484 = vmatpush1.bf16.msra.mxu0 %v471
      %485 = vmatprep.subr.bf16.mxu0 0
      %486 = vmatpush1.bf16.msra.mxu0 %v470
      %487 = vmatprep.subr.bf16.mxu0 0
      %488 = vmatpush1.bf16.msra.mxu0 %v469
      %489 = vmatprep.subr.bf16.mxu0 0
      %490 = vmatpush1.bf16.msra.mxu0 %v468
      %491 = vmatprep.subr.bf16.mxu0 0
      %492 = vmatpush1.bf16.msra.mxu0 %v467
      %493 = vmatprep.subr.bf16.mxu0 0
      %494 = vmatpush1.bf16.msra.mxu0 %v466
      %495 = vmatprep.subr.bf16.mxu0 0
      %496 = vmatpush1.bf16.msra.mxu0 %v465
      %497 = vmatprep.subr.bf16.mxu0 0
      %498 = vmatpush2.bf16.msra.mxu0 0
      %499 = vmatprep.subr.bf16.mxu0 0
      %500 = vmatpush2.bf16.msra.mxu0 0
      %501 = vmatprep.subr.bf16.mxu0 0
      %502 = vmatpush2.bf16.msra.mxu0 0
      %503 = vmatprep.subr.bf16.mxu0 0
      %504 = vmatpush2.bf16.msra.mxu0 0
      %505 = vmatprep.subr.bf16.mxu0 0
      %506 = vmatpush2.bf16.msra.mxu0 0
      %507 = vmatprep.subr.bf16.mxu0 0
      %508 = vmatpush2.bf16.msra.mxu0 0
      %509 = vmatprep.subr.bf16.mxu0 0
      %510 = vmatpush2.bf16.msra.mxu0 0
      %511 = vmatprep.subr.bf16.mxu0 0
      %512 = vmatpush2.bf16.msra.mxu0 0
      %513 = vmatprep.mubr.bf16.mxu0 0
      %514 = vmatmul.mubr.bf16.gmra.mxu0 %v431
      %v515 = vpop.f32.mrf.mxu0
      %v516 = vadd.f32 0.0, %v515
      %v517 = vpop.f32.mrf.mxu0
      %v518 = vpop.f32.mrf.mxu0
      %v519 = vadd.f32 0.0, %v518
      %v520 = vpop.f32.mrf.mxu0
      %521 = vdwg.mxu0
      %v522 = vadd.f32 %v394, %v516
      %v523 = vadd.f32 %v397, %v519
      %v524 = vld [vmem:[%s190] sm:$0xc]
      %v525 = vld [vmem:[%s190 + $0x4] sm:$0xf]
      %v526 = vld [vmem:[%s190 + $0x8] sm:$0x3]
      %s527 = scalar_lea.vmem %s1, 192
      %v528 = vld [vmem:[%s527] sm:$0xf]
      %v529 = vld [vmem:[%s527 + $0x4] sm:$0xf]
      %v530 = vld [vmem:[%s527 + $0x8] sm:$0xf]
      %v531 = vld [vmem:[%s527 + $0xc] sm:$0xf]
      %v532 = vld [vmem:[%s527 + $0x10] sm:$0xf]
      %v533 = vld [vmem:[%s527 + $0x14] sm:$0xf]
      %v534 = vld [vmem:[%s527 + $0x18] sm:$0xf]
      %v535 = vld [vmem:[%s527 + $0x1c] sm:$0xf]
      %v536 = vld [vmem:[%s527 + $0x20] sm:$0xf]
      %v537 = vld [vmem:[%s527 + $0x24] sm:$0xf]
      %v538 = vld [vmem:[%s527 + $0x28] sm:$0xf]
      %v539 = vld [vmem:[%s527 + $0x2c] sm:$0xf]
      %v540 = vld [vmem:[%s527 + $0x30] sm:$0xf]
      %v541 = vld [vmem:[%s527 + $0x34] sm:$0xf]
      %v542 = vld [vmem:[%s527 + $0x38] sm:$0xf]
      %v543 = vld [vmem:[%s527 + $0x3c] sm:$0xf]
      %v547 = vunpack.c.l.b16 %v524
      %v548 = vunpack.c.l.b16 %v525
      %v549 = vunpack.c.l.b16 %v526
      %v550 = vpack.c.b16 %v548, %v547
      %v551 = vpack.c.b16 %v549, %v549
      %v552 = vrot.slane %v550, 2
      %v553 = vrot.slane %v551, 2
      %v554 = vsel %vm428, %v552, %v553
      %v572 = vunpack.c.l.b16 %v528
      %v573 = vunpack.c.l.b16 %v529
      %v574 = vunpack.c.l.b16 %v530
      %v575 = vunpack.c.l.b16 %v531
      %v576 = vunpack.c.l.b16 %v532
      %v577 = vunpack.c.l.b16 %v533
      %v578 = vunpack.c.l.b16 %v534
      %v579 = vunpack.c.l.b16 %v535
      %v580 = vunpack.c.l.b16 %v536
      %v581 = vunpack.c.l.b16 %v537
      %v582 = vunpack.c.l.b16 %v538
      %v583 = vunpack.c.l.b16 %v539
      %v584 = vunpack.c.l.b16 %v540
      %v585 = vunpack.c.l.b16 %v541
      %v586 = vunpack.c.l.b16 %v542
      %v587 = vunpack.c.l.b16 %v543
      %v588 = vpack.c.b16 %v573, %v572
      %v589 = vpack.c.b16 %v575, %v574
      %v590 = vpack.c.b16 %v577, %v576
      %v591 = vpack.c.b16 %v579, %v578
      %v592 = vpack.c.b16 %v581, %v580
      %v593 = vpack.c.b16 %v583, %v582
      %v594 = vpack.c.b16 %v585, %v584
      %v595 = vpack.c.b16 %v587, %v586
      %604 = vmatprep.subr.bf16.mxu0 0
      %605 = vmatpush1.bf16.msra.mxu0 %v595
      %606 = vmatprep.subr.bf16.mxu0 0
      %607 = vmatpush1.bf16.msra.mxu0 %v594
      %608 = vmatprep.subr.bf16.mxu0 0
      %609 = vmatpush1.bf16.msra.mxu0 %v593
      %610 = vmatprep.subr.bf16.mxu0 0
      %611 = vmatpush1.bf16.msra.mxu0 %v592
      %612 = vmatprep.subr.bf16.mxu0 0
      %613 = vmatpush1.bf16.msra.mxu0 %v591
      %614 = vmatprep.subr.bf16.mxu0 0
      %615 = vmatpush1.bf16.msra.mxu0 %v590
      %616 = vmatprep.subr.bf16.mxu0 0
      %617 = vmatpush1.bf16.msra.mxu0 %v589
      %618 = vmatprep.subr.bf16.mxu0 0
      %619 = vmatpush1.bf16.msra.mxu0 %v588
      %620 = vmatprep.subr.bf16.mxu0 0
      %621 = vmatpush2.bf16.msra.mxu0 0
      %622 = vmatprep.subr.bf16.mxu0 0
      %623 = vmatpush2.bf16.msra.mxu0 0
      %624 = vmatprep.subr.bf16.mxu0 0
      %625 = vmatpush2.bf16.msra.mxu0 0
      %626 = vmatprep.subr.bf16.mxu0 0
      %627 = vmatpush2.bf16.msra.mxu0 0
      %628 = vmatprep.subr.bf16.mxu0 0
      %629 = vmatpush2.bf16.msra.mxu0 0
      %630 = vmatprep.subr.bf16.mxu0 0
      %631 = vmatpush2.bf16.msra.mxu0 0
      %632 = vmatprep.subr.bf16.mxu0 0
      %633 = vmatpush2.bf16.msra.mxu0 0
      %634 = vmatprep.subr.bf16.mxu0 0
      %635 = vmatpush2.bf16.msra.mxu0 0
      %636 = vmatprep.mubr.bf16.mxu0 0
      %637 = vmatmul.mubr.bf16.gmra.mxu0 %v554
      %v638 = vpop.f32.mrf.mxu0
      %v639 = vadd.f32 0.0, %v638
      %v640 = vpop.f32.mrf.mxu0
      %v641 = vpop.f32.mrf.mxu0
      %v642 = vadd.f32 0.0, %v641
      %v643 = vpop.f32.mrf.mxu0
      %644 = vdwg.mxu0
      %v645 = vadd.f32 %v522, %v639
      %v646 = vadd.f32 %v523, %v642
      %v647 = vld [vmem:[%s2] sm:$0x1]
      %v648 = vlaneseq
      %v649 = vshrl.u32 %v648, 7
      %v650 = vsub.s32 0, %v649
      %v651 = vrot.slane %v647, %v650
      %v652 = vmul.f32 %v645, %v651
      %v653 = vmul.f32 %v646, %v651
      %v654 = vld [vmem:[%s2 + $0x1] sm:$0x1]
      %v655 = vlaneseq
      %v656 = vshrl.u32 %v655, 7
      %v657 = vsub.s32 0, %v656
      %v658 = vrot.slane %v654, %v657
      %v659 = vadd.f32 %v652, %v658
      %v660 = vadd.f32 %v653, %v658
      %v661 = vmax.f32 %v659, 0.0
      %v662 = vmax.f32 %v660, 0.0
      %v663 = vpack.c.bf16 %v662, %v661
      %v665 = vunpack.c.l.b16 %v663
      %v666 = vunpack.c.h.b16 %v663
      %v667 = vpack.c.b16 %v665, %v665
      %v668 = vpack.c.b16 %v666, %v666
      %vm671 = vcmask 519168
      %672 = vst.msk [vmem:[%s170] sm:$0xf] %vm671, %v667
      %673 = vst.msk [vmem:[%s170 + $0x4] sm:$0xf] %vm671, %v668
      %p674 = scmp.lt.s32.totalorder %s14, 1
      %s675 = scalar_select %p674, %s14, 1
      %s676 = smul.addr %s675, 2
      %s677 = smul.addr %s676, 4
      %s678 = scalar_lea.vmem %s3, %s677
      // Predicated region
      $region33: #{encoder_forward.8} parent=31 // pred_check
        %p679 = pneg %p100
      $region34: #{encoder_forward.8} parent=31 // pred_check_branch
        %681 = sbr.rel (%p679) target = $region36
      $region35: #{encoder_forward.8} parent=31 // pred_region
        _
      $region36: #{encoder_forward.8} parent=31 // pred_fallthru
        _
    $region32: #{encoder_forward.8} parent=5 // pred_fallthru
      _
    %p682 = scmp.le.s32.totalorder 2, %s9
    // Predicated region
    $region37: #{encoder_forward.8} parent=5 // pred_check
      %p683 = pneg %p682
    $region38: #{encoder_forward.8} parent=5 // pred_check_branch
      %685 = sbr.rel (%p683) target = $region40
    $region39: #{encoder_forward.8} parent=5 // pred_region
      %s686 = ssub.s32 %s9, 2
      // Predicated region
      $region41: #{encoder_forward.8} parent=39 // pred_check
        %p687 = pneg %p106
      $region42: #{encoder_forward.8} parent=39 // pred_check_branch
        %689 = sbr.rel (%p687) target = $region44
      $region43: #{encoder_forward.8} parent=39 // pred_region
        %p690 = scmp.lt.s32.totalorder %s15, 1
        %s691 = scalar_select %p690, %s15, 1
        %s692 = smul.addr %s691, 2
        %s693 = smul.addr %s692, 4
        %s694 = scalar_lea.vmem %s3, %s693
      $region44: #{encoder_forward.8} parent=39 // pred_fallthru
        _
    $region40: #{encoder_forward.8} parent=5 // pred_fallthru
      _
  $region6: #{encoder_forward.8} parent=0 // loop_footer
    %s13 = sadd.s32 1, %s9
  $region7: #{encoder_forward.8} parent=0 // loop_footer_branch
    %8 = sbr.rel target = $region3
  $region8: #{encoder_forward.8} parent=0 // loop_exit
    _

// kernel: encoder_forward.9
$region0: #{encoder_forward.9}
  #allocation0 [shape = 'u32[]', space=smem, size = 0x4, offset = 0x4, fixed_abs, tag = 'smem constant byte address 0x4 - core index']
  #allocation1 [shape = 'u32[144,128]{1,0:T(1,128)}', space=vmem, size = 0x12000, scoped, tag = 'internal scratch']
  %s0 = inlined_call_operand.vmem [shape: bf16[2,2,6,256], index: 0, kind: input, shape index: {}]
  %s1 = inlined_call_operand.vmem [shape: bf16[4,256,128], index: 1, kind: input, shape index: {}]
  %s2 = inlined_call_operand.vmem [shape: f32[2,128], index: 2, kind: input, shape index: {}]
  %s3 = inlined_call_operand.vmem [shape: bf16[2,4,128], index: 3, kind: output, shape index: {}]
  %s4 = sld [smem:[#allocation0]]
  $region45: #{encoder_forward.9} parent=0
    _
  %s6 = ssub.s32 1, %s4
  %s7 = scalar_select 0, %s6, %s4
  loop: start=0, step=1, limit=4
  $region2: #{encoder_forward.9} parent=0 // loop_pre_header
    _
  $region3: #{encoder_forward.9} parent=0 // loop_header
    %s9 = sphi 0, %s13
    %p10 = scmp.ge.s32.totalorder %s9, 4
    %s19 = sphi 0, %s21
    %s22 = sphi 0, %s19
    %s23 = sphi 0, %s22
    %s39 = sphi 0, %s23
    %s43 = sphi 0, %s43
    %s45 = sphi 0, %s43
    %s46 = sphi 0, %s45
    %s60 = sphi 0, %s46
    %s64 = sphi 0, %s64
    %s66 = sphi 0, %s64
    %s67 = sphi 0, %s66
    %s81 = sphi 0, %s67
    %s87 = sphi 0, %s89
    %s90 = sphi 0, %s87
    %s91 = sphi 0, %s90
    %s107 = sphi 0, %s91
  $region4: #{encoder_forward.9} parent=0 // loop_header_branch
    %12 = sbr.rel (%p10) target = $region8
  $region5: #{encoder_forward.9} parent=0 // loop_body
    %s14 = ssub.s32 %s9, 1
    %s15 = ssub.s32 %s9, 2
    %s16 = sadd.s32 %s9, 1
    %s17 = ssub.s32 %s9, %s16
    %p18 = scmp.eq.s32.totalorder %s17, 0
    %s20 = sadd.s32 %s19, 1
    %s21 = scalar_select %p18, %s19, %s20
    %p24 = pneg %p18
    %p25 = scmp.eq.s32.totalorder %s9, 1
    %p26 = por %p24, %p25
    %p27 = scmp.ne.s32.totalorder %s19, %s22
    %p28 = scmp.eq.s32.totalorder %s9, 0
    %p29 = por %p27, %p28
    %p30 = scmp.ne.s32.totalorder %s19, %s22
    %p31 = scmp.eq.s32.totalorder %s14, 1
    %p32 = por %p30, %p31
    %p33 = scmp.ne.s32.totalorder %s22, %s23
    %p34 = scmp.eq.s32.totalorder %s14, 0
    %p35 = por %p33, %p34
    %p36 = scmp.ne.s32.totalorder %s22, %s23
    %p37 = scmp.eq.s32.totalorder %s15, 1
    %p38 = por %p36, %p37
    %p40 = scmp.ne.s32.totalorder %s23, %s39
    %p41 = scmp.eq.s32.totalorder %s15, 0
    %p42 = por %p40, %p41
    %s44 = sadd.s32 %s43, 1
    %p47 = scmp.eq.s32.totalorder %s9, 1
    %p48 = scmp.ne.s32.totalorder %s43, %s45
    %p49 = scmp.eq.s32.totalorder %s9, 0
    %p50 = por %p48, %p49
    %p51 = scmp.ne.s32.totalorder %s43, %s45
    %p52 = scmp.eq.s32.totalorder %s14, 1
    %p53 = por %p51, %p52
    %p54 = scmp.ne.s32.totalorder %s45, %s46
    %p55 = scmp.eq.s32.totalorder %s14, 0
    %p56 = por %p54, %p55
    %p57 = scmp.ne.s32.totalorder %s45, %s46
    %p58 = scmp.eq.s32.totalorder %s15, 1
    %p59 = por %p57, %p58
    %p61 = scmp.ne.s32.totalorder %s46, %s60
    %p62 = scmp.eq.s32.totalorder %s15, 0
    %p63 = por %p61, %p62
    %s65 = sadd.s32 %s64, 1
    %p68 = scmp.eq.s32.totalorder %s9, 1
    %p69 = scmp.ne.s32.totalorder %s64, %s66
    %p70 = scmp.eq.s32.totalorder %s9, 0
    %p71 = por %p69, %p70
    %p72 = scmp.ne.s32.totalorder %s64, %s66
    %p73 = scmp.eq.s32.totalorder %s14, 1
    %p74 = por %p72, %p73
    %p75 = scmp.ne.s32.totalorder %s66, %s67
    %p76 = scmp.eq.s32.totalorder %s14, 0
    %p77 = por %p75, %p76
    %p78 = scmp.ne.s32.totalorder %s66, %s67
    %p79 = scmp.eq.s32.totalorder %s15, 1
    %p80 = por %p78, %p79
    %p82 = scmp.ne.s32.totalorder %s67, %s81
    %p83 = scmp.eq.s32.totalorder %s15, 0
    %p84 = por %p82, %p83
    %s85 = ssub.s32 %s9, %s16
    %p86 = scmp.eq.s32.totalorder %s85, 0
    %s88 = sadd.s32 %s87, 1
    %s89 = scalar_select %p86, %s87, %s88
    %p92 = pneg %p86
    %p93 = scmp.eq.s32.totalorder %s9, 1
    %p94 = por %p92, %p93
    %p95 = scmp.ne.s32.totalorder %s87, %s90
    %p96 = scmp.eq.s32.totalorder %s9, 0
    %p97 = por %p95, %p96
    %p98 = scmp.ne.s32.totalorder %s87, %s90
    %p99 = scmp.eq.s32.totalorder %s14, 1
    %p100 = por %p98, %p99
    %p101 = scmp.ne.s32.totalorder %s90, %s91
    %p102 = scmp.eq.s32.totalorder %s14, 0
    %p103 = por %p101, %p102
    %p104 = scmp.ne.s32.totalorder %s90, %s91
    %p105 = scmp.eq.s32.totalorder %s15, 1
    %p106 = por %p104, %p105
    %p108 = scmp.ne.s32.totalorder %s91, %s107
    %p109 = scmp.eq.s32.totalorder %s15, 0
    %p110 = por %p108, %p109
    %p111 = scmp.le.s32.totalorder 1, %s9
    %p112 = scmp.lt.s32.totalorder %s9, 3
    %p113 = pnand %p111, %p112
    %p114 = pneg %p113
    // Predicated region
    $region9: #{encoder_forward.9} parent=5 // pred_check
      _
    $region10: #{encoder_forward.9} parent=5 // pred_check_branch
      %116 = sbr.rel (%p113) target = $region12
    $region11: #{encoder_forward.9} parent=5 // pred_region
      %s117 = ssub.s32 %s9, 1
      // Predicated region
      $region13: #{encoder_forward.9} parent=11 // pred_check
        %p118 = pneg %p56
      $region14: #{encoder_forward.9} parent=11 // pred_check_branch
        %120 = sbr.rel (%p118) target = $region16
      $region15: #{encoder_forward.9} parent=11 // pred_region
        _
      $region16: #{encoder_forward.9} parent=11 // pred_fallthru
        _
      // Predicated region
      $region17: #{encoder_forward.9} parent=11 // pred_check
        %p121 = pneg %p77
      $region18: #{encoder_forward.9} parent=11 // pred_check_branch
        %123 = sbr.rel (%p121) target = $region20
      $region19: #{encoder_forward.9} parent=11 // pred_region
        _
      $region20: #{encoder_forward.9} parent=11 // pred_fallthru
        _
    $region12: #{encoder_forward.9} parent=5 // pred_fallthru
      _
    %p124 = scmp.lt.s32.totalorder %s9, 2
    // Predicated region
    $region21: #{encoder_forward.9} parent=5 // pred_check
      %p125 = pneg %p124
    $region22: #{encoder_forward.9} parent=5 // pred_check_branch
      %127 = sbr.rel (%p125) target = $region24
    $region23: #{encoder_forward.9} parent=5 // pred_region
      // Predicated region
      $region25: #{encoder_forward.9} parent=23 // pred_check
        %p128 = pneg %p29
      $region26: #{encoder_forward.9} parent=23 // pred_check_branch
        %130 = sbr.rel (%p128) target = $region28
      $region27: #{encoder_forward.9} parent=23 // pred_region
        %p131 = scmp.lt.s32.totalorder %s9, 1
        %s132 = scalar_select %p131, %s9, 1
        %s133 = smul.addr %s132, 4
        %s134 = smul.addr %s133, 4
        %s135 = scalar_lea.vmem %s0, %s134
      $region28: #{encoder_forward.9} parent=23 // pred_fallthru
        _
    $region24: #{encoder_forward.9} parent=5 // pred_fallthru
      _
    %p136 = scmp.le.s32.totalorder 1, %s9
    %p137 = scmp.lt.s32.totalorder %s9, 3
    %p138 = pnand %p136, %p137
    %p139 = pneg %p138
    // Predicated region
    $region29: #{encoder_forward.9} parent=5 // pred_check
      _
    $region30: #{encoder_forward.9} parent=5 // pred_check_branch
      %141 = sbr.rel (%p138) target = $region32
    $region31: #{encoder_forward.9} parent=5 // pred_region
      %s142 = ssub.s32 %s9, 1
      %p143 = scmp.lt.s32.totalorder %s14, 1
      %s144 = scalar_select %p143, %s14, 1
      %s145 = smul.addr %s144, 4
      %s146 = smul.addr %s145, 4
      %s147 = scalar_lea.vmem %s0, %s146
      %p148 = pneg %p35
      %p149 = pneg %p32
      %p150 = pneg %p56
      %p151 = pneg %p53
      %p152 = pneg %p77
      %p153 = pneg %p74
      %p154 = pneg %p103
      %p155 = pneg %p100
      %p156 = scmp.lt.s32.totalorder %s14, 1
      %s157 = scalar_select %p156, %s14, 1
      %s158 = smul.addr %s157, 2
      %s159 = scalar_lea.vmem %s3, %s158
      %p160 = scmp.lt.s32.totalorder %s14, 1
      %s161 = scalar_select %p160, %s14, 1
      %s162 = smul.addr %s161, 4
      %s163 = smul.addr %s162, 4
      %s164 = scalar_lea.vmem %s0, %s163
      %p165 = scmp.lt.s32.totalorder %s14, 1
      %s166 = scalar_select %p165, %s14, 1
      %s167 = smul.addr %s166, 2
      %s168 = scalar_lea.vmem %s3, %s167
      %v170 = vld [vmem:[%s164] sm:$0x33]
      %v171 = vld [vmem:[%s1] sm:$0xf]
      %v172 = vld [vmem:[%s1 + $0x4] sm:$0xf]
      %v173 = vld [vmem:[%s1 + $0x8] sm:$0xf]
      %v174 = vld [vmem:[%s1 + $0xc] sm:$0xf]
      %v175 = vld [vmem:[%s1 + $0x10] sm:$0xf]
      %v176 = vld [vmem:[%s1 + $0x14] sm:$0xf]
      %v177 = vld [vmem:[%s1 + $0x18] sm:$0xf]
      %v178 = vld [vmem:[%s1 + $0x1c] sm:$0xf]
      %v179 = vld [vmem:[%s1 + $0x20] sm:$0xf]
      %v180 = vld [vmem:[%s1 + $0x24] sm:$0xf]
      %v181 = vld [vmem:[%s1 + $0x28] sm:$0xf]
      %v182 = vld [vmem:[%s1 + $0x2c] sm:$0xf]
      %v183 = vld [vmem:[%s1 + $0x30] sm:$0xf]
      %v184 = vld [vmem:[%s1 + $0x34] sm:$0xf]
      %v185 = vld [vmem:[%s1 + $0x38] sm:$0xf]
      %v186 = vld [vmem:[%s1 + $0x3c] sm:$0xf]
      %v187 = vld [vmem:[%s1 + $0x40] sm:$0xf]
      %v188 = vld [vmem:[%s1 + $0x44] sm:$0xf]
      %v189 = vld [vmem:[%s1 + $0x48] sm:$0xf]
      %v190 = vld [vmem:[%s1 + $0x4c] sm:$0xf]
      %v191 = vld [vmem:[%s1 + $0x50] sm:$0xf]
      %v192 = vld [vmem:[%s1 + $0x54] sm:$0xf]
      %v193 = vld [vmem:[%s1 + $0x58] sm:$0xf]
      %v194 = vld [vmem:[%s1 + $0x5c] sm:$0xf]
      %v195 = vld [vmem:[%s1 + $0x60] sm:$0xf]
      %v196 = vld [vmem:[%s1 + $0x64] sm:$0xf]
      %v197 = vld [vmem:[%s1 + $0x68] sm:$0xf]
      %v198 = vld [vmem:[%s1 + $0x6c] sm:$0xf]
      %v199 = vld [vmem:[%s1 + $0x70] sm:$0xf]
      %v200 = vld [vmem:[%s1 + $0x74] sm:$0xf]
      %v201 = vld [vmem:[%s1 + $0x78] sm:$0xf]
      %v202 = vld [vmem:[%s1 + $0x7c] sm:$0xf]
      %s203 = scalar_lea.vmem %s164, 8
      %v204 = vld [vmem:[%s203] sm:$0x33]
      %s205 = scalar_lea.vmem %s1, 128
      %v206 = vld [vmem:[%s205] sm:$0xf]
      %v207 = vld [vmem:[%s205 + $0x4] sm:$0xf]
      %v208 = vld [vmem:[%s205 + $0x8] sm:$0xf]
      %v209 = vld [vmem:[%s205 + $0xc] sm:$0xf]
      %v210 = vld [vmem:[%s205 + $0x10] sm:$0xf]
      %v211 = vld [vmem:[%s205 + $0x14] sm:$0xf]
      %v212 = vld [vmem:[%s205 + $0x18] sm:$0xf]
      %v213 = vld [vmem:[%s205 + $0x1c] sm:$0xf]
      %v214 = vld [vmem:[%s205 + $0x20] sm:$0xf]
      %v215 = vld [vmem:[%s205 + $0x24] sm:$0xf]
      %v216 = vld [vmem:[%s205 + $0x28] sm:$0xf]
      %v217 = vld [vmem:[%s205 + $0x2c] sm:$0xf]
      %v218 = vld [vmem:[%s205 + $0x30] sm:$0xf]
      %v219 = vld [vmem:[%s205 + $0x34] sm:$0xf]
      %v220 = vld [vmem:[%s205 + $0x38] sm:$0xf]
      %v221 = vld [vmem:[%s205 + $0x3c] sm:$0xf]
      %v222 = vld [vmem:[%s205 + $0x40] sm:$0xf]
      %v223 = vld [vmem:[%s205 + $0x44] sm:$0xf]
      %v224 = vld [vmem:[%s205 + $0x48] sm:$0xf]
      %v225 = vld [vmem:[%s205 + $0x4c] sm:$0xf]
      %v226 = vld [vmem:[%s205 + $0x50] sm:$0xf]
      %v227 = vld [vmem:[%s205 + $0x54] sm:$0xf]
      %v228 = vld [vmem:[%s205 + $0x58] sm:$0xf]
      %v229 = vld [vmem:[%s205 + $0x5c] sm:$0xf]
      %v230 = vld [vmem:[%s205 + $0x60] sm:$0xf]
      %v231 = vld [vmem:[%s205 + $0x64] sm:$0xf]
      %v232 = vld [vmem:[%s205 + $0x68] sm:$0xf]
      %v233 = vld [vmem:[%s205 + $0x6c] sm:$0xf]
      %v234 = vld [vmem:[%s205 + $0x70] sm:$0xf]
      %v235 = vld [vmem:[%s205 + $0x74] sm:$0xf]
      %v236 = vld [vmem:[%s205 + $0x78] sm:$0xf]
      %v237 = vld [vmem:[%s205 + $0x7c] sm:$0xf]
      %v239 = vunpack.c.l.b16 %v204
      %v240 = vunpack.c.h.b16 %v204
      %v241 = vpack.c.b16 %v239, %v239
      %v242 = vpack.c.b16 %v240, %v240
      %v277 = vunpack.c.l.b16 %v206
      %v278 = vunpack.c.l.b16 %v207
      %v279 = vunpack.c.l.b16 %v208
      %v280 = vunpack.c.l.b16 %v209
      %v281 = vunpack.c.l.b16 %v210
      %v282 = vunpack.c.l.b16 %v211
      %v283 = vunpack.c.l.b16 %v212
      %v284 = vunpack.c.l.b16 %v213
      %v285 = vunpack.c.l.b16 %v214
      %v286 = vunpack.c.l.b16 %v215
      %v287 = vunpack.c.l.b16 %v216
      %v288 = vunpack.c.l.b16 %v217
      %v289 = vunpack.c.l.b16 %v218
      %v290 = vunpack.c.l.b16 %v219
      %v291 = vunpack.c.l.b16 %v220
      %v292 = vunpack.c.l.b16 %v221
      %v293 = vunpack.c.l.b16 %v222
      %v294 = vunpack.c.l.b16 %v223
      %v295 = vunpack.c.l.b16 %v224
      %v296 = vunpack.c.l.b16 %v225
      %v297 = vunpack.c.l.b16 %v226
      %v298 = vunpack.c.l.b16 %v227
      %v299 = vunpack.c.l.b16 %v228
      %v300 = vunpack.c.l.b16 %v229
      %v301 = vunpack.c.l.b16 %v230
      %v302 = vunpack.c.l.b16 %v231
      %v303 = vunpack.c.l.b16 %v232
      %v304 = vunpack.c.l.b16 %v233
      %v305 = vunpack.c.l.b16 %v234
      %v306 = vunpack.c.l.b16 %v235
      %v307 = vunpack.c.l.b16 %v236
      %v308 = vunpack.c.l.b16 %v237
      %v309 = vpack.c.b16 %v278, %v277
      %v310 = vpack.c.b16 %v280, %v279
      %v311 = vpack.c.b16 %v282, %v281
      %v312 = vpack.c.b16 %v284, %v283
      %v313 = vpack.c.b16 %v286, %v285
      %v314 = vpack.c.b16 %v288, %v287
      %v315 = vpack.c.b16 %v290, %v289
      %v316 = vpack.c.b16 %v292, %v291
      %v317 = vpack.c.b16 %v294, %v293
      %v318 = vpack.c.b16 %v296, %v295
      %v319 = vpack.c.b16 %v298, %v297
      %v320 = vpack.c.b16 %v300, %v299
      %v321 = vpack.c.b16 %v302, %v301
      %v322 = vpack.c.b16 %v304, %v303
      %v323 = vpack.c.b16 %v306, %v305
      %v324 = vpack.c.b16 %v308, %v307
      %341 = vmatprep.subr.bf16.mxu0 0
      %342 = vmatpush1.bf16.msra.mxu0 %v316
      %343 = vmatprep.subr.bf16.mxu0 0
      %344 = vmatpush1.bf16.msra.mxu0 %v315
      %345 = vmatprep.subr.bf16.mxu0 0
      %346 = vmatpush1.bf16.msra.mxu0 %v314
      %347 = vmatprep.subr.bf16.mxu0 0
      %348 = vmatpush1.bf16.msra.mxu0 %v313
      %349 = vmatprep.subr.bf16.mxu0 0
      %350 = vmatpush1.bf16.msra.mxu0 %v312
      %351 = vmatprep.subr.bf16.mxu0 0
      %352 = vmatpush1.bf16.msra.mxu0 %v311
      %353 = vmatprep.subr.bf16.mxu0 0
      %354 = vmatpush1.bf16.msra.mxu0 %v310
      %355 = vmatprep.subr.bf16.mxu0 0
      %356 = vmatpush1.bf16.msra.mxu0 %v309
      %357 = vmatprep.subr.bf16.mxu0 0
      %358 = vmatpush2.bf16.msra.mxu0 %v324
      %359 = vmatprep.subr.bf16.mxu0 0
      %360 = vmatpush2.bf16.msra.mxu0 %v323
      %361 = vmatprep.subr.bf16.mxu0 0
      %362 = vmatpush2.bf16.msra.mxu0 %v322
      %363 = vmatprep.subr.bf16.mxu0 0
      %364 = vmatpush2.bf16.msra.mxu0 %v321
      %365 = vmatprep.subr.bf16.mxu0 0
      %366 = vmatpush2.bf16.msra.mxu0 %v320
      %367 = vmatprep.subr.bf16.mxu0 0
      %368 = vmatpush2.bf16.msra.mxu0 %v319
      %369 = vmatprep.subr.bf16.mxu0 0
      %370 = vmatpush2.bf16.msra.mxu0 %v318
      %371 = vmatprep.subr.bf16.mxu0 0
      %372 = vmatpush2.bf16.msra.mxu0 %v317
      %373 = vmatprep.mubr.bf16.mxu0 %v242
      %374 = vmatmul.mubr.bf16.gmra.mxu0 %v241
      %v375 = vpop.f32.mrf.mxu0
      %v376 = vadd.f32 0.0, %v375
      %v377 = vpop.f32.mrf.mxu0
      %v378 = vpop.f32.mrf.mxu0
      %v379 = vpop.f32.mrf.mxu0
      %380 = vdwg.mxu0
      %v382 = vunpack.c.l.b16 %v170
      %v383 = vunpack.c.h.b16 %v170
      %v384 = vpack.c.b16 %v382, %v382
      %v385 = vpack.c.b16 %v383, %v383
      %v420 = vunpack.c.l.b16 %v171
      %v421 = vunpack.c.l.b16 %v172
      %v422 = vunpack.c.l.b16 %v173
      %v423 = vunpack.c.l.b16 %v174
      %v424 = vunpack.c.l.b16 %v175
      %v425 = vunpack.c.l.b16 %v176
      %v426 = vunpack.c.l.b16 %v177
      %v427 = vunpack.c.l.b16 %v178
      %v428 = vunpack.c.l.b16 %v179
      %v429 = vunpack.c.l.b16 %v180
      %v430 = vunpack.c.l.b16 %v181
      %v431 = vunpack.c.l.b16 %v182
      %v432 = vunpack.c.l.b16 %v183
      %v433 = vunpack.c.l.b16 %v184
      %v434 = vunpack.c.l.b16 %v185
      %v435 = vunpack.c.l.b16 %v186
      %v436 = vunpack.c.l.b16 %v187
      %v437 = vunpack.c.l.b16 %v188
      %v438 = vunpack.c.l.b16 %v189
      %v439 = vunpack.c.l.b16 %v190
      %v440 = vunpack.c.l.b16 %v191
      %v441 = vunpack.c.l.b16 %v192
      %v442 = vunpack.c.l.b16 %v193
      %v443 = vunpack.c.l.b16 %v194
      %v444 = vunpack.c.l.b16 %v195
      %v445 = vunpack.c.l.b16 %v196
      %v446 = vunpack.c.l.b16 %v197
      %v447 = vunpack.c.l.b16 %v198
      %v448 = vunpack.c.l.b16 %v199
      %v449 = vunpack.c.l.b16 %v200
      %v450 = vunpack.c.l.b16 %v201
      %v451 = vunpack.c.l.b16 %v202
      %v452 = vpack.c.b16 %v421, %v420
      %v453 = vpack.c.b16 %v423, %v422
      %v454 = vpack.c.b16 %v425, %v424
      %v455 = vpack.c.b16 %v427, %v426
      %v456 = vpack.c.b16 %v429, %v428
      %v457 = vpack.c.b16 %v431, %v430
      %v458 = vpack.c.b16 %v433, %v432
      %v459 = vpack.c.b16 %v435, %v434
      %v460 = vpack.c.b16 %v437, %v436
      %v461 = vpack.c.b16 %v439, %v438
      %v462 = vpack.c.b16 %v441, %v440
      %v463 = vpack.c.b16 %v443, %v442
      %v464 = vpack.c.b16 %v445, %v444
      %v465 = vpack.c.b16 %v447, %v446
      %v466 = vpack.c.b16 %v449, %v448
      %v467 = vpack.c.b16 %v451, %v450
      %484 = vmatprep.subr.bf16.mxu0 0
      %485 = vmatpush1.bf16.msra.mxu0 %v459
      %486 = vmatprep.subr.bf16.mxu0 0
      %487 = vmatpush1.bf16.msra.mxu0 %v458
      %488 = vmatprep.subr.bf16.mxu0 0
      %489 = vmatpush1.bf16.msra.mxu0 %v457
      %490 = vmatprep.subr.bf16.mxu0 0
      %491 = vmatpush1.bf16.msra.mxu0 %v456
      %492 = vmatprep.subr.bf16.mxu0 0
      %493 = vmatpush1.bf16.msra.mxu0 %v455
      %494 = vmatprep.subr.bf16.mxu0 0
      %495 = vmatpush1.bf16.msra.mxu0 %v454
      %496 = vmatprep.subr.bf16.mxu0 0
      %497 = vmatpush1.bf16.msra.mxu0 %v453
      %498 = vmatprep.subr.bf16.mxu0 0
      %499 = vmatpush1.bf16.msra.mxu0 %v452
      %500 = vmatprep.subr.bf16.mxu0 0
      %501 = vmatpush2.bf16.msra.mxu0 %v467
      %502 = vmatprep.subr.bf16.mxu0 0
      %503 = vmatpush2.bf16.msra.mxu0 %v466
      %504 = vmatprep.subr.bf16.mxu0 0
      %505 = vmatpush2.bf16.msra.mxu0 %v465
      %506 = vmatprep.subr.bf16.mxu0 0
      %507 = vmatpush2.bf16.msra.mxu0 %v464
      %508 = vmatprep.subr.bf16.mxu0 0
      %509 = vmatpush2.bf16.msra.mxu0 %v463
      %510 = vmatprep.subr.bf16.mxu0 0
      %511 = vmatpush2.bf16.msra.mxu0 %v462
      %512 = vmatprep.subr.bf16.mxu0 0
      %513 = vmatpush2.bf16.msra.mxu0 %v461
      %514 = vmatprep.subr.bf16.mxu0 0
      %515 = vmatpush2.bf16.msra.mxu0 %v460
      %516 = vmatprep.mubr.bf16.mxu0 %v385
      %517 = vmatmul.mubr.bf16.gmra.mxu0 %v384
      %v518 = vpop.f32.mrf.mxu0
      %v519 = vadd.f32 %v376, %v518
      %v520 = vpop.f32.mrf.mxu0
      %v521 = vpop.f32.mrf.mxu0
      %v522 = vpop.f32.mrf.mxu0
      %523 = vdwg.mxu0
      %v524 = vld [vmem:[%s164] sm:$0x66]
      %s525 = scalar_lea.vmem %s1, 256
      %v526 = vld [vmem:[%s525] sm:$0xf]
      %v527 = vld [vmem:[%s525 + $0x4] sm:$0xf]
      %v528 = vld [vmem:[%s525 + $0x8] sm:$0xf]
      %v529 = vld [vmem:[%s525 + $0xc] sm:$0xf]
      %v530 = vld [vmem:[%s525 + $0x10] sm:$0xf]
      %v531 = vld [vmem:[%s525 + $0x14] sm:$0xf]
      %v532 = vld [vmem:[%s525 + $0x18] sm:$0xf]
      %v533 = vld [vmem:[%s525 + $0x1c] sm:$0xf]
      %v534 = vld [vmem:[%s525 + $0x20] sm:$0xf]
      %v535 = vld [vmem:[%s525 + $0x24] sm:$0xf]
      %v536 = vld [vmem:[%s525 + $0x28] sm:$0xf]
      %v537 = vld [vmem:[%s525 + $0x2c] sm:$0xf]
      %v538 = vld [vmem:[%s525 + $0x30] sm:$0xf]
      %v539 = vld [vmem:[%s525 + $0x34] sm:$0xf]
      %v540 = vld [vmem:[%s525 + $0x38] sm:$0xf]
      %v541 = vld [vmem:[%s525 + $0x3c] sm:$0xf]
      %v542 = vld [vmem:[%s525 + $0x40] sm:$0xf]
      %v543 = vld [vmem:[%s525 + $0x44] sm:$0xf]
      %v544 = vld [vmem:[%s525 + $0x48] sm:$0xf]
      %v545 = vld [vmem:[%s525 + $0x4c] sm:$0xf]
      %v546 = vld [vmem:[%s525 + $0x50] sm:$0xf]
      %v547 = vld [vmem:[%s525 + $0x54] sm:$0xf]
      %v548 = vld [vmem:[%s525 + $0x58] sm:$0xf]
      %v549 = vld [vmem:[%s525 + $0x5c] sm:$0xf]
      %v550 = vld [vmem:[%s525 + $0x60] sm:$0xf]
      %v551 = vld [vmem:[%s525 + $0x64] sm:$0xf]
      %v552 = vld [vmem:[%s525 + $0x68] sm:$0xf]
      %v553 = vld [vmem:[%s525 + $0x6c] sm:$0xf]
      %v554 = vld [vmem:[%s525 + $0x70] sm:$0xf]
      %v555 = vld [vmem:[%s525 + $0x74] sm:$0xf]
      %v556 = vld [vmem:[%s525 + $0x78] sm:$0xf]
      %v557 = vld [vmem:[%s525 + $0x7c] sm:$0xf]
      %v559 = vunpack.c.l.b16 %v524
      %v560 = vunpack.c.h.b16 %v524
      %v561 = vpack.c.b16 %v559, %v559
      %v562 = vpack.c.b16 %v560, %v560
      %v563 = vrot.slane %v561, 1
      %v564 = vrot.slane %v562, 1
      %v599 = vunpack.c.l.b16 %v526
      %v600 = vunpack.c.l.b16 %v527
      %v601 = vunpack.c.l.b16 %v528
      %v602 = vunpack.c.l.b16 %v529
      %v603 = vunpack.c.l.b16 %v530
      %v604 = vunpack.c.l.b16 %v531
      %v605 = vunpack.c.l.b16 %v532
      %v606 = vunpack.c.l.b16 %v533
      %v607 = vunpack.c.l.b16 %v534
      %v608 = vunpack.c.l.b16 %v535
      %v609 = vunpack.c.l.b16 %v536
      %v610 = vunpack.c.l.b16 %v537
      %v611 = vunpack.c.l.b16 %v538
      %v612 = vunpack.c.l.b16 %v539
      %v613 = vunpack.c.l.b16 %v540
      %v614 = vunpack.c.l.b16 %v541
      %v615 = vunpack.c.l.b16 %v542
      %v616 = vunpack.c.l.b16 %v543
      %v617 = vunpack.c.l.b16 %v544
      %v618 = vunpack.c.l.b16 %v545
      %v619 = vunpack.c.l.b16 %v546
      %v620 = vunpack.c.l.b16 %v547
      %v621 = vunpack.c.l.b16 %v548
      %v622 = vunpack.c.l.b16 %v549
      %v623 = vunpack.c.l.b16 %v550
      %v624 = vunpack.c.l.b16 %v551
      %v625 = vunpack.c.l.b16 %v552
      %v626 = vunpack.c.l.b16 %v553
      %v627 = vunpack.c.l.b16 %v554
      %v628 = vunpack.c.l.b16 %v555
      %v629 = vunpack.c.l.b16 %v556
      %v630 = vunpack.c.l.b16 %v557
      %v631 = vpack.c.b16 %v600, %v599
      %v632 = vpack.c.b16 %v602, %v601
      %v633 = vpack.c.b16 %v604, %v603
      %v634 = vpack.c.b16 %v606, %v605
      %v635 = vpack.c.b16 %v608, %v607
      %v636 = vpack.c.b16 %v610, %v609
      %v637 = vpack.c.b16 %v612, %v611
      %v638 = vpack.c.b16 %v614, %v613
      %v639 = vpack.c.b16 %v616, %v615
      %v640 = vpack.c.b16 %v618, %v617
      %v641 = vpack.c.b16 %v620, %v619
      %v642 = vpack.c.b16 %v622, %v621
      %v643 = vpack.c.b16 %v624, %v623
      %v644 = vpack.c.b16 %v626, %v625
      %v645 = vpack.c.b16 %v628, %v627
      %v646 = vpack.c.b16 %v630, %v629
      %663 = vmatprep.subr.bf16.mxu0 0
      %664 = vmatpush1.bf16.msra.mxu0 %v638
      %665 = vmatprep.subr.bf16.mxu0 0
      %666 = vmatpush1.bf16.msra.mxu0 %v637
      %667 = vmatprep.subr.bf16.mxu0 0
      %668 = vmatpush1.bf16.msra.mxu0 %v636
      %669 = vmatprep.subr.bf16.mxu0 0
      %670 = vmatpush1.bf16.msra.mxu0 %v635
      %671 = vmatprep.subr.bf16.mxu0 0
      %672 = vmatpush1.bf16.msra.mxu0 %v634
      %673 = vmatprep.subr.bf16.mxu0 0
      %674 = vmatpush1.bf16.msra.mxu0 %v633
      %675 = vmatprep.subr.bf16.mxu0 0
      %676 = vmatpush1.bf16.msra.mxu0 %v632
      %677 = vmatprep.subr.bf16.mxu0 0
      %678 = vmatpush1.bf16.msra.mxu0 %v631
      %679 = vmatprep.subr.bf16.mxu0 0
      %680 = vmatpush2.bf16.msra.mxu0 %v646
      %681 = vmatprep.subr.bf16.mxu0 0
      %682 = vmatpush2.bf16.msra.mxu0 %v645
      %683 = vmatprep.subr.bf16.mxu0 0
      %684 = vmatpush2.bf16.msra.mxu0 %v644
      %685 = vmatprep.subr.bf16.mxu0 0
      %686 = vmatpush2.bf16.msra.mxu0 %v643
      %687 = vmatprep.subr.bf16.mxu0 0
      %688 = vmatpush2.bf16.msra.mxu0 %v642
      %689 = vmatprep.subr.bf16.mxu0 0
      %690 = vmatpush2.bf16.msra.mxu0 %v641
      %691 = vmatprep.subr.bf16.mxu0 0
      %692 = vmatpush2.bf16.msra.mxu0 %v640
      %693 = vmatprep.subr.bf16.mxu0 0
      %694 = vmatpush2.bf16.msra.mxu0 %v639
      %695 = vmatprep.mubr.bf16.mxu0 %v564
      %696 = vmatmul.mubr.bf16.gmra.mxu0 %v563
      %v697 = vpop.f32.mrf.mxu0
      %v698 = vadd.f32 0.0, %v697
      %v699 = vpop.f32.mrf.mxu0
      %v700 = vpop.f32.mrf.mxu0
      %v701 = vpop.f32.mrf.mxu0
      %702 = vdwg.mxu0
      %v703 = vadd.f32 %v519, %v698
      %v704 = vld [vmem:[%s203] sm:$0x66]
      %s705 = scalar_lea.vmem %s1, 384
      %v706 = vld [vmem:[%s705] sm:$0xf]
      %v707 = vld [vmem:[%s705 + $0x4] sm:$0xf]
      %v708 = vld [vmem:[%s705 + $0x8] sm:$0xf]
      %v709 = vld [vmem:[%s705 + $0xc] sm:$0xf]
      %v710 = vld [vmem:[%s705 + $0x10] sm:$0xf]
      %v711 = vld [vmem:[%s705 + $0x14] sm:$0xf]
      %v712 = vld [vmem:[%s705 + $0x18] sm:$0xf]
      %v713 = vld [vmem:[%s705 + $0x1c] sm:$0xf]
      %v714 = vld [vmem:[%s705 + $0x20] sm:$0xf]
      %v715 = vld [vmem:[%s705 + $0x24] sm:$0xf]
      %v716 = vld [vmem:[%s705 + $0x28] sm:$0xf]
      %v717 = vld [vmem:[%s705 + $0x2c] sm:$0xf]
      %v718 = vld [vmem:[%s705 + $0x30] sm:$0xf]
      %v719 = vld [vmem:[%s705 + $0x34] sm:$0xf]
      %v720 = vld [vmem:[%s705 + $0x38] sm:$0xf]
      %v721 = vld [vmem:[%s705 + $0x3c] sm:$0xf]
      %v722 = vld [vmem:[%s705 + $0x40] sm:$0xf]
      %v723 = vld [vmem:[%s705 + $0x44] sm:$0xf]
      %v724 = vld [vmem:[%s705 + $0x48] sm:$0xf]
      %v725 = vld [vmem:[%s705 + $0x4c] sm:$0xf]
      %v726 = vld [vmem:[%s705 + $0x50] sm:$0xf]
      %v727 = vld [vmem:[%s705 + $0x54] sm:$0xf]
      %v728 = vld [vmem:[%s705 + $0x58] sm:$0xf]
      %v729 = vld [vmem:[%s705 + $0x5c] sm:$0xf]
      %v730 = vld [vmem:[%s705 + $0x60] sm:$0xf]
      %v731 = vld [vmem:[%s705 + $0x64] sm:$0xf]
      %v732 = vld [vmem:[%s705 + $0x68] sm:$0xf]
      %v733 = vld [vmem:[%s705 + $0x6c] sm:$0xf]
      %v734 = vld [vmem:[%s705 + $0x70] sm:$0xf]
      %v735 = vld [vmem:[%s705 + $0x74] sm:$0xf]
      %v736 = vld [vmem:[%s705 + $0x78] sm:$0xf]
      %v737 = vld [vmem:[%s705 + $0x7c] sm:$0xf]
      %v739 = vunpack.c.l.b16 %v704
      %v740 = vunpack.c.h.b16 %v704
      %v741 = vpack.c.b16 %v739, %v739
      %v742 = vpack.c.b16 %v740, %v740
      %v743 = vrot.slane %v741, 1
      %v744 = vrot.slane %v742, 1
      %v779 = vunpack.c.l.b16 %v706
      %v780 = vunpack.c.l.b16 %v707
      %v781 = vunpack.c.l.b16 %v708
      %v782 = vunpack.c.l.b16 %v709
      %v783 = vunpack.c.l.b16 %v710
      %v784 = vunpack.c.l.b16 %v711
      %v785 = vunpack.c.l.b16 %v712
      %v786 = vunpack.c.l.b16 %v713
      %v787 = vunpack.c.l.b16 %v714
      %v788 = vunpack.c.l.b16 %v715
      %v789 = vunpack.c.l.b16 %v716
      %v790 = vunpack.c.l.b16 %v717
      %v791 = vunpack.c.l.b16 %v718
      %v792 = vunpack.c.l.b16 %v719
      %v793 = vunpack.c.l.b16 %v720
      %v794 = vunpack.c.l.b16 %v721
      %v795 = vunpack.c.l.b16 %v722
      %v796 = vunpack.c.l.b16 %v723
      %v797 = vunpack.c.l.b16 %v724
      %v798 = vunpack.c.l.b16 %v725
      %v799 = vunpack.c.l.b16 %v726
      %v800 = vunpack.c.l.b16 %v727
      %v801 = vunpack.c.l.b16 %v728
      %v802 = vunpack.c.l.b16 %v729
      %v803 = vunpack.c.l.b16 %v730
      %v804 = vunpack.c.l.b16 %v731
      %v805 = vunpack.c.l.b16 %v732
      %v806 = vunpack.c.l.b16 %v733
      %v807 = vunpack.c.l.b16 %v734
      %v808 = vunpack.c.l.b16 %v735
      %v809 = vunpack.c.l.b16 %v736
      %v810 = vunpack.c.l.b16 %v737
      %v811 = vpack.c.b16 %v780, %v779
      %v812 = vpack.c.b16 %v782, %v781
      %v813 = vpack.c.b16 %v784, %v783
      %v814 = vpack.c.b16 %v786, %v785
      %v815 = vpack.c.b16 %v788, %v787
      %v816 = vpack.c.b16 %v790, %v789
      %v817 = vpack.c.b16 %v792, %v791
      %v818 = vpack.c.b16 %v794, %v793
      %v819 = vpack.c.b16 %v796, %v795
      %v820 = vpack.c.b16 %v798, %v797
      %v821 = vpack.c.b16 %v800, %v799
      %v822 = vpack.c.b16 %v802, %v801
      %v823 = vpack.c.b16 %v804, %v803
      %v824 = vpack.c.b16 %v806, %v805
      %v825 = vpack.c.b16 %v808, %v807
      %v826 = vpack.c.b16 %v810, %v809
      %843 = vmatprep.subr.bf16.mxu0 0
      %844 = vmatpush1.bf16.msra.mxu0 %v818
      %845 = vmatprep.subr.bf16.mxu0 0
      %846 = vmatpush1.bf16.msra.mxu0 %v817
      %847 = vmatprep.subr.bf16.mxu0 0
      %848 = vmatpush1.bf16.msra.mxu0 %v816
      %849 = vmatprep.subr.bf16.mxu0 0
      %850 = vmatpush1.bf16.msra.mxu0 %v815
      %851 = vmatprep.subr.bf16.mxu0 0
      %852 = vmatpush1.bf16.msra.mxu0 %v814
      %853 = vmatprep.subr.bf16.mxu0 0
      %854 = vmatpush1.bf16.msra.mxu0 %v813
      %855 = vmatprep.subr.bf16.mxu0 0
      %856 = vmatpush1.bf16.msra.mxu0 %v812
      %857 = vmatprep.subr.bf16.mxu0 0
      %858 = vmatpush1.bf16.msra.mxu0 %v811
      %859 = vmatprep.subr.bf16.mxu0 0
      %860 = vmatpush2.bf16.msra.mxu0 %v826
      %861 = vmatprep.subr.bf16.mxu0 0
      %862 = vmatpush2.bf16.msra.mxu0 %v825
      %863 = vmatprep.subr.bf16.mxu0 0
      %864 = vmatpush2.bf16.msra.mxu0 %v824
      %865 = vmatprep.subr.bf16.mxu0 0
      %866 = vmatpush2.bf16.msra.mxu0 %v823
      %867 = vmatprep.subr.bf16.mxu0 0
      %868 = vmatpush2.bf16.msra.mxu0 %v822
      %869 = vmatprep.subr.bf16.mxu0 0
      %870 = vmatpush2.bf16.msra.mxu0 %v821
      %871 = vmatprep.subr.bf16.mxu0 0
      %872 = vmatpush2.bf16.msra.mxu0 %v820
      %873 = vmatprep.subr.bf16.mxu0 0
      %874 = vmatpush2.bf16.msra.mxu0 %v819
      %875 = vmatprep.mubr.bf16.mxu0 %v744
      %876 = vmatmul.mubr.bf16.gmra.mxu0 %v743
      %v877 = vpop.f32.mrf.mxu0
      %v878 = vadd.f32 0.0, %v877
      %v879 = vpop.f32.mrf.mxu0
      %v880 = vpop.f32.mrf.mxu0
      %v881 = vpop.f32.mrf.mxu0
      %882 = vdwg.mxu0
      %v883 = vadd.f32 %v703, %v878
      %v884 = vld [vmem:[%s2] sm:$0x1]
      %v885 = vlaneseq
      %v886 = vshrl.u32 %v885, 7
      %v887 = vsub.s32 0, %v886
      %v888 = vrot.slane %v884, %v887
      %v889 = vmul.f32 %v883, %v888
      %v890 = vld [vmem:[%s2 + $0x1] sm:$0x1]
      %v891 = vlaneseq
      %v892 = vshrl.u32 %v891, 7
      %v893 = vsub.s32 0, %v892
      %v894 = vrot.slane %v890, %v893
      %v895 = vadd.f32 %v889, %v894
      %v896 = vmax.f32 %v895, 0.0
      %v897 = vpack.c.bf16 %v896, %v896
      %898 = vst [vmem:[%s168] sm:$0x3] %v897
      %p899 = scmp.lt.s32.totalorder %s14, 1
      %s900 = scalar_select %p899, %s14, 1
      %s901 = smul.addr %s900, 2
      %s902 = scalar_lea.vmem %s3, %s901
      // Predicated region
      $region33: #{encoder_forward.9} parent=31 // pred_check
        %p903 = pneg %p100
      $region34: #{encoder_forward.9} parent=31 // pred_check_branch
        %905 = sbr.rel (%p903) target = $region36
      $region35: #{encoder_forward.9} parent=31 // pred_region
        _
      $region36: #{encoder_forward.9} parent=31 // pred_fallthru
        _
    $region32: #{encoder_forward.9} parent=5 // pred_fallthru
      _
    %p906 = scmp.le.s32.totalorder 2, %s9
    // Predicated region
    $region37: #{encoder_forward.9} parent=5 // pred_check
      %p907 = pneg %p906
    $region38: #{encoder_forward.9} parent=5 // pred_check_branch
      %909 = sbr.rel (%p907) target = $region40
    $region39: #{encoder_forward.9} parent=5 // pred_region
      %s910 = ssub.s32 %s9, 2
      // Predicated region
      $region41: #{encoder_forward.9} parent=39 // pred_check
        %p911 = pneg %p106
      $region42: #{encoder_forward.9} parent=39 // pred_check_branch
        %913 = sbr.rel (%p911) target = $region44
      $region43: #{encoder_forward.9} parent=39 // pred_region
        %p914 = scmp.lt.s32.totalorder %s15, 1
        %s915 = scalar_select %p914, %s15, 1
        %s916 = smul.addr %s915, 2
        %s917 = scalar_lea.vmem %s3, %s916
      $region44: #{encoder_forward.9} parent=39 // pred_fallthru
        _
    $region40: #{encoder_forward.9} parent=5 // pred_fallthru
      _
  $region6: #{encoder_forward.9} parent=0 // loop_footer
    %s13 = sadd.s32 1, %s9
  $region7: #{encoder_forward.9} parent=0 // loop_footer_branch
    %8 = sbr.rel target = $region3
  $region8: #{encoder_forward.9} parent=0 // loop_exit
    _

// kernel: encoder_forward.11
$region0: #{encoder_forward.11}
  #allocation0 [shape = 'u32[]', space=smem, size = 0x4, offset = 0x4, fixed_abs, tag = 'smem constant byte address 0x4 - core index']
  #allocation1 [shape = 'u32[144,128]{1,0:T(1,128)}', space=vmem, size = 0x12000, scoped, tag = 'internal scratch']
  %s0 = inlined_call_operand.vmem [shape: bf16[2,1,256], index: 0, kind: input, shape index: {}]
  %s1 = inlined_call_operand.vmem [shape: bf16[256,128], index: 1, kind: input, shape index: {}]
  %s2 = inlined_call_operand.vmem [shape: f32[1,128], index: 2, kind: input, shape index: {}]
  %s3 = inlined_call_operand.vmem [shape: bf16[128,32], index: 3, kind: input, shape index: {}]
  %s4 = inlined_call_operand.vmem [shape: f32[1,32], index: 4, kind: input, shape index: {}]
  %s5 = inlined_call_operand.hbm [shape: f32[2,32], index: 5, kind: output, shape index: {}]
  %s6 = sld [smem:[#allocation0]]
  $region30: #{encoder_forward.11} parent=0
    _
  %s8 = ssub.s32 1, %s6
  %s9 = scalar_select 0, %s8, %s6
  $region1: #{encoder_forward.11} parent=0
    #allocation2 [shape = 'u8[1024]{0}', space=vmem, size = 0x400, scoped, tag = 'output window, operand 0, single buffered']
    #allocation3 [shape = 's32[1]{0}', space=sflag, size = 0x4, scoped, tag = 'scoped memory for encoder_forward.11']
    %10 = vsyncpa [#allocation3], 0
    // Predicated region
    $region2: #{encoder_forward.11} parent=1 // pred_check
      _
    $region3: #{encoder_forward.11} parent=1 // pred_check_branch
      %12 = sbr.rel (0) target = $region5
    $region4: #{encoder_forward.11} parent=1 // pred_region
      _
    $region5: #{encoder_forward.11} parent=1 // pred_fallthru
      _
    // Predicated region
    $region6: #{encoder_forward.11} parent=1 // pred_check
      _
    $region7: #{encoder_forward.11} parent=1 // pred_check_branch
      %14 = sbr.rel (0) target = $region9
    $region8: #{encoder_forward.11} parent=1 // pred_region
      _
    $region9: #{encoder_forward.11} parent=1 // pred_fallthru
      _
    // Predicated region
    $region10: #{encoder_forward.11} parent=1 // pred_check
      _
    $region11: #{encoder_forward.11} parent=1 // pred_check_branch
      %16 = sbr.rel (0) target = $region13
    $region12: #{encoder_forward.11} parent=1 // pred_region
      _
    $region13: #{encoder_forward.11} parent=1 // pred_fallthru
      _
    // Predicated region
    $region14: #{encoder_forward.11} parent=1 // pred_check
      _
    $region15: #{encoder_forward.11} parent=1 // pred_check_branch
      %18 = sbr.rel (0) target = $region17
    $region16: #{encoder_forward.11} parent=1 // pred_region
      _
    $region17: #{encoder_forward.11} parent=1 // pred_fallthru
      _
    // Predicated region
    $region18: #{encoder_forward.11} parent=1 // pred_check
      _
    $region19: #{encoder_forward.11} parent=1 // pred_check_branch
      %20 = sbr.rel (0) target = $region21
    $region20: #{encoder_forward.11} parent=1 // pred_region
      _
    $region21: #{encoder_forward.11} parent=1 // pred_fallthru
      _
    %v22 = vld [vmem:[%s0] sm:$0x3]
    %v23 = vld [vmem:[%s0 + $0x2] sm:$0x3]
    %v24 = vunpack.c.l.bf16 %v22
    %v25 = vunpack.c.l.bf16 %v23
    %v26 = vadd.f32 %v24, 0.0
    %v27 = vadd.f32 %v25, 0.0
    %v30 = vlaneseq
    %v31 = vshrl.u32 %v30, 7
    %v32 = vsub.s32 0, %v31
    %v33 = vrot.slane %v26, %v32
    %v34 = vlaneseq
    %v35 = vshrl.u32 %v34, 7
    %v36 = vsub.s32 2, %v35
    %v37 = vrot.slane %v26, %v36
    %v38 = vlaneseq
    %v39 = vshrl.u32 %v38, 7
    %v40 = vsub.s32 0, %v39
    %v41 = vrot.slane %v27, %v40
    %v42 = vlaneseq
    %v43 = vshrl.u32 %v42, 7
    %v44 = vsub.s32 2, %v43
    %v45 = vrot.slane %v27, %v44
    %v50 = vpack.c.bf16 %v33, %v33
    %v51 = vpack.c.bf16 %v37, %v37
    %v52 = vpack.c.bf16 %v41, %v41
    %v53 = vpack.c.bf16 %v45, %v45
    %v54 = vld [vmem:[%s1] sm:$0xf]
    %v55 = vld [vmem:[%s1 + $0x4] sm:$0xf]
    %v56 = vld [vmem:[%s1 + $0x8] sm:$0xf]
    %v57 = vld [vmem:[%s1 + $0xc] sm:$0xf]
    %v58 = vld [vmem:[%s1 + $0x10] sm:$0xf]
    %v59 = vld [vmem:[%s1 + $0x14] sm:$0xf]
    %v60 = vld [vmem:[%s1 + $0x18] sm:$0xf]
    %v61 = vld [vmem:[%s1 + $0x1c] sm:$0xf]
    %v62 = vld [vmem:[%s1 + $0x20] sm:$0xf]
    %v63 = vld [vmem:[%s1 + $0x24] sm:$0xf]
    %v64 = vld [vmem:[%s1 + $0x28] sm:$0xf]
    %v65 = vld [vmem:[%s1 + $0x2c] sm:$0xf]
    %v66 = vld [vmem:[%s1 + $0x30] sm:$0xf]
    %v67 = vld [vmem:[%s1 + $0x34] sm:$0xf]
    %v68 = vld [vmem:[%s1 + $0x38] sm:$0xf]
    %v69 = vld [vmem:[%s1 + $0x3c] sm:$0xf]
    %v70 = vld [vmem:[%s1 + $0x40] sm:$0xf]
    %v71 = vld [vmem:[%s1 + $0x44] sm:$0xf]
    %v72 = vld [vmem:[%s1 + $0x48] sm:$0xf]
    %v73 = vld [vmem:[%s1 + $0x4c] sm:$0xf]
    %v74 = vld [vmem:[%s1 + $0x50] sm:$0xf]
    %v75 = vld [vmem:[%s1 + $0x54] sm:$0xf]
    %v76 = vld [vmem:[%s1 + $0x58] sm:$0xf]
    %v77 = vld [vmem:[%s1 + $0x5c] sm:$0xf]
    %v78 = vld [vmem:[%s1 + $0x60] sm:$0xf]
    %v79 = vld [vmem:[%s1 + $0x64] sm:$0xf]
    %v80 = vld [vmem:[%s1 + $0x68] sm:$0xf]
    %v81 = vld [vmem:[%s1 + $0x6c] sm:$0xf]
    %v82 = vld [vmem:[%s1 + $0x70] sm:$0xf]
    %v83 = vld [vmem:[%s1 + $0x74] sm:$0xf]
    %v84 = vld [vmem:[%s1 + $0x78] sm:$0xf]
    %v85 = vld [vmem:[%s1 + $0x7c] sm:$0xf]
    %v86 = vld [vmem:[%s2] sm:$0x1]
    %v88 = vlaneseq
    %v89 = vshrl.u32 %v88, 7
    %v90 = vsub.s32 0, %v89
    %v91 = vrot.slane %v86, %v90
    %v97 = vunpack.c.l.b16 %v50
    %v98 = vunpack.c.l.b16 %v51
    %v99 = vunpack.c.l.b16 %v52
    %v100 = vunpack.c.l.b16 %v53
    %v101 = vrot.slane %v99, 7
    %vm102 = vcmask 1041409
    %v103 = vsel %vm102, %v101, %v97
    %v104 = vrot.slane %v100, 7
    %v105 = vsel %vm102, %v104, %v98
    %v106 = vpack.c.b16 %v103, %v103
    %v107 = vpack.c.b16 %v105, %v105
    %v142 = vunpack.c.l.b16 %v54
    %v143 = vunpack.c.l.b16 %v55
    %v144 = vunpack.c.l.b16 %v56
    %v145 = vunpack.c.l.b16 %v57
    %v146 = vunpack.c.l.b16 %v58
    %v147 = vunpack.c.l.b16 %v59
    %v148 = vunpack.c.l.b16 %v60
    %v149 = vunpack.c.l.b16 %v61
    %v150 = vunpack.c.l.b16 %v62
    %v151 = vunpack.c.l.b16 %v63
    %v152 = vunpack.c.l.b16 %v64
    %v153 = vunpack.c.l.b16 %v65
    %v154 = vunpack.c.l.b16 %v66
    %v155 = vunpack.c.l.b16 %v67
    %v156 = vunpack.c.l.b16 %v68
    %v157 = vunpack.c.l.b16 %v69
    %v158 = vunpack.c.l.b16 %v70
    %v159 = vunpack.c.l.b16 %v71
    %v160 = vunpack.c.l.b16 %v72
    %v161 = vunpack.c.l.b16 %v73
    %v162 = vunpack.c.l.b16 %v74
    %v163 = vunpack.c.l.b16 %v75
    %v164 = vunpack.c.l.b16 %v76
    %v165 = vunpack.c.l.b16 %v77
    %v166 = vunpack.c.l.b16 %v78
    %v167 = vunpack.c.l.b16 %v79
    %v168 = vunpack.c.l.b16 %v80
    %v169 = vunpack.c.l.b16 %v81
    %v170 = vunpack.c.l.b16 %v82
    %v171 = vunpack.c.l.b16 %v83
    %v172 = vunpack.c.l.b16 %v84
    %v173 = vunpack.c.l.b16 %v85
    %v174 = vpack.c.b16 %v143, %v142
    %v175 = vpack.c.b16 %v145, %v144
    %v176 = vpack.c.b16 %v147, %v146
    %v177 = vpack.c.b16 %v149, %v148
    %v178 = vpack.c.b16 %v151, %v150
    %v179 = vpack.c.b16 %v153, %v152
    %v180 = vpack.c.b16 %v155, %v154
    %v181 = vpack.c.b16 %v157, %v156
    %v182 = vpack.c.b16 %v159, %v158
    %v183 = vpack.c.b16 %v161, %v160
    %v184 = vpack.c.b16 %v163, %v162
    %v185 = vpack.c.b16 %v165, %v164
    %v186 = vpack.c.b16 %v167, %v166
    %v187 = vpack.c.b16 %v169, %v168
    %v188 = vpack.c.b16 %v171, %v170
    %v189 = vpack.c.b16 %v173, %v172
    %206 = vmatprep.subr.bf16.mxu0 0
    %207 = vmatpush1.bf16.msra.mxu0 %v181
    %208 = vmatprep.subr.bf16.mxu0 0
    %209 = vmatpush1.bf16.msra.mxu0 %v180
    %210 = vmatprep.subr.bf16.mxu0 0
    %211 = vmatpush1.bf16.msra.mxu0 %v179
    %212 = vmatprep.subr.bf16.mxu0 0
    %213 = vmatpush1.bf16.msra.mxu0 %v178
    %214 = vmatprep.subr.bf16.mxu0 0
    %215 = vmatpush1.bf16.msra.mxu0 %v177
    %216 = vmatprep.subr.bf16.mxu0 0
    %217 = vmatpush1.bf16.msra.mxu0 %v176
    %218 = vmatprep.subr.bf16.mxu0 0
    %219 = vmatpush1.bf16.msra.mxu0 %v175
    %220 = vmatprep.subr.bf16.mxu0 0
    %221 = vmatpush1.bf16.msra.mxu0 %v174
    %222 = vmatprep.subr.bf16.mxu0 0
    %223 = vmatpush2.bf16.msra.mxu0 %v189
    %224 = vmatprep.subr.bf16.mxu0 0
    %225 = vmatpush2.bf16.msra.mxu0 %v188
    %226 = vmatprep.subr.bf16.mxu0 0
    %227 = vmatpush2.bf16.msra.mxu0 %v187
    %228 = vmatprep.subr.bf16.mxu0 0
    %229 = vmatpush2.bf16.msra.mxu0 %v186
    %230 = vmatprep.subr.bf16.mxu0 0
    %231 = vmatpush2.bf16.msra.mxu0 %v185
    %232 = vmatprep.subr.bf16.mxu0 0
    %233 = vmatpush2.bf16.msra.mxu0 %v184
    %234 = vmatprep.subr.bf16.mxu0 0
    %235 = vmatpush2.bf16.msra.mxu0 %v183
    %236 = vmatprep.subr.bf16.mxu0 0
    %237 = vmatpush2.bf16.msra.mxu0 %v182
    %238 = vmatprep.mubr.bf16.mxu0 %v107
    %239 = vmatmul.mubr.bf16.gmra.mxu0 %v106
    %v240 = vpop.f32.mrf.mxu0
    %v241 = vadd.f32 %v91, %v240
    %v242 = vpop.f32.mrf.mxu0
    %v243 = vpop.f32.mrf.mxu0
    %v244 = vpop.f32.mrf.mxu0
    %245 = vdwg.mxu0
    %v246 = vmax.f32 %v241, 0.0
    %v247 = vpack.c.bf16 %v246, %v246
    %v248 = vld [vmem:[%s3] sm:$0xf]
    %v249 = vld [vmem:[%s3 + $0x4] sm:$0xf]
    %v250 = vld [vmem:[%s3 + $0x8] sm:$0xf]
    %v251 = vld [vmem:[%s3 + $0xc] sm:$0xf]
    %v252 = vld [vmem:[%s3 + $0x10] sm:$0xf]
    %v253 = vld [vmem:[%s3 + $0x14] sm:$0xf]
    %v254 = vld [vmem:[%s3 + $0x18] sm:$0xf]
    %v255 = vld [vmem:[%s3 + $0x1c] sm:$0xf]
    %v256 = vld [vmem:[%s3 + $0x20] sm:$0xf]
    %v257 = vld [vmem:[%s3 + $0x24] sm:$0xf]
    %v258 = vld [vmem:[%s3 + $0x28] sm:$0xf]
    %v259 = vld [vmem:[%s3 + $0x2c] sm:$0xf]
    %v260 = vld [vmem:[%s3 + $0x30] sm:$0xf]
    %v261 = vld [vmem:[%s3 + $0x34] sm:$0xf]
    %v262 = vld [vmem:[%s3 + $0x38] sm:$0xf]
    %v263 = vld [vmem:[%s3 + $0x3c] sm:$0xf]
    %v264 = vld [vmem:[%s4] sm:$0x1]
    %v266 = vlaneseq
    %v267 = vshrl.u32 %v266, 7
    %v268 = vsub.s32 0, %v267
    %v269 = vrot.slane %v264, %v268
    %v287 = vunpack.c.l.b16 %v248
    %v288 = vunpack.c.l.b16 %v249
    %v289 = vunpack.c.l.b16 %v250
    %v290 = vunpack.c.l.b16 %v251
    %v291 = vunpack.c.l.b16 %v252
    %v292 = vunpack.c.l.b16 %v253
    %v293 = vunpack.c.l.b16 %v254
    %v294 = vunpack.c.l.b16 %v255
    %v295 = vunpack.c.l.b16 %v256
    %v296 = vunpack.c.l.b16 %v257
    %v297 = vunpack.c.l.b16 %v258
    %v298 = vunpack.c.l.b16 %v259
    %v299 = vunpack.c.l.b16 %v260
    %v300 = vunpack.c.l.b16 %v261
    %v301 = vunpack.c.l.b16 %v262
    %v302 = vunpack.c.l.b16 %v263
    %v303 = vpack.c.b16 %v288, %v287
    %v304 = vpack.c.b16 %v290, %v289
    %v305 = vpack.c.b16 %v292, %v291
    %v306 = vpack.c.b16 %v294, %v293
    %v307 = vpack.c.b16 %v296, %v295
    %v308 = vpack.c.b16 %v298, %v297
    %v309 = vpack.c.b16 %v300, %v299
    %v310 = vpack.c.b16 %v302, %v301
    %319 = vmatprep.subr.bf16.mxu0 0
    %320 = vmatpush1.bf16.msra.mxu0 %v310
    %321 = vmatprep.subr.bf16.mxu0 0
    %322 = vmatpush1.bf16.msra.mxu0 %v309
    %323 = vmatprep.subr.bf16.mxu0 0
    %324 = vmatpush1.bf16.msra.mxu0 %v308
    %325 = vmatprep.subr.bf16.mxu0 0
    %326 = vmatpush1.bf16.msra.mxu0 %v307
    %327 = vmatprep.subr.bf16.mxu0 0
    %328 = vmatpush1.bf16.msra.mxu0 %v306
    %329 = vmatprep.subr.bf16.mxu0 0
    %330 = vmatpush1.bf16.msra.mxu0 %v305
    %331 = vmatprep.subr.bf16.mxu0 0
    %332 = vmatpush1.bf16.msra.mxu0 %v304
    %333 = vmatprep.subr.bf16.mxu0 0
    %334 = vmatpush1.bf16.msra.mxu0 %v303
    %335 = vmatprep.subr.bf16.mxu0 0
    %336 = vmatpush2.bf16.msra.mxu0 0
    %337 = vmatprep.subr.bf16.mxu0 0
    %338 = vmatpush2.bf16.msra.mxu0 0
    %339 = vmatprep.subr.bf16.mxu0 0
    %340 = vmatpush2.bf16.msra.mxu0 0
    %341 = vmatprep.subr.bf16.mxu0 0
    %342 = vmatpush2.bf16.msra.mxu0 0
    %343 = vmatprep.subr.bf16.mxu0 0
    %344 = vmatpush2.bf16.msra.mxu0 0
    %345 = vmatprep.subr.bf16.mxu0 0
    %346 = vmatpush2.bf16.msra.mxu0 0
    %347 = vmatprep.subr.bf16.mxu0 0
    %348 = vmatpush2.bf16.msra.mxu0 0
    %349 = vmatprep.subr.bf16.mxu0 0
    %350 = vmatpush2.bf16.msra.mxu0 0
    %351 = vmatprep.mubr.bf16.mxu0 0
    %352 = vmatmul.mubr.bf16.gmra.mxu0 %v247
    %v353 = vpop.f32.mrf.mxu0
    %v354 = vadd.f32 %v269, %v353
    %v355 = vpop.f32.mrf.mxu0
    %v356 = vpop.f32.mrf.mxu0
    %v357 = vpop.f32.mrf.mxu0
    %358 = vdwg.mxu0
    %vm359 = vcmask 254976
    %360 = vst.msk [vmem:[#allocation2] sm:$0x3] %vm359, %v354
    // Predicated region
    $region22: #{encoder_forward.11} parent=1 // pred_check
      _
    $region23: #{encoder_forward.11} parent=1 // pred_check_branch
      %362 = sbr.rel (0) target = $region25
    $region24: #{encoder_forward.11} parent=1 // pred_region
      %s364 = ssub.s32 32, 32
      %365 = vsyncadd [#allocation3], %s364
      %s367 = sshll.u32 [#allocation2], 4
      %s368 = int_to_ptr.vmem [resolvable:$true] %s367
      %370 = dma.vmem_to_hbm [thread:$0]  %s368, 32, %s5, [#allocation3]
    $region25: #{encoder_forward.11} parent=1 // pred_fallthru
      _
    // Predicated region
    $region26: #{encoder_forward.11} parent=1 // pred_check
      _
    $region27: #{encoder_forward.11} parent=1 // pred_check_branch
      %372 = sbr.rel (0) target = $region29
    $region28: #{encoder_forward.11} parent=1 // pred_region
      %373 = dma.done [#allocation3], 32
    $region29: #{encoder_forward.11} parent=1 // pred_fallthru
      _
    %374 = vsyncpa [#allocation3], 1

// kernel: encoder_forward.10
$region0: #{encoder_forward.10}
  #allocation0 [shape = 'u32[]', space=smem, size = 0x4, offset = 0x4, fixed_abs, tag = 'smem constant byte address 0x4 - core index']
  #allocation1 [shape = 'u32[144,128]{1,0:T(1,128)}', space=vmem, size = 0x12000, scoped, tag = 'internal scratch']
  %s0 = inlined_call_operand.vmem [shape: bf16[2,2,2,512], index: 0, kind: input, shape index: {}]
  %s1 = inlined_call_operand.vmem [shape: bf16[4,512,256], index: 1, kind: input, shape index: {}]
  %s2 = inlined_call_operand.vmem [shape: f32[2,256], index: 2, kind: input, shape index: {}]
  %s3 = inlined_call_operand.vmem [shape: bf16[2,1,256], index: 3, kind: output, shape index: {}]
  %s4 = sld [smem:[#allocation0]]
  $region45: #{encoder_forward.10} parent=0
    _
  %s6 = ssub.s32 1, %s4
  %s7 = scalar_select 0, %s6, %s4
  loop: start=0, step=1, limit=4
  $region2: #{encoder_forward.10} parent=0 // loop_pre_header
    _
  $region3: #{encoder_forward.10} parent=0 // loop_header
    %s9 = sphi 0, %s13
    %p10 = scmp.ge.s32.totalorder %s9, 4
    %s19 = sphi 0, %s21
    %s22 = sphi 0, %s19
    %s23 = sphi 0, %s22
    %s39 = sphi 0, %s23
    %s43 = sphi 0, %s43
    %s45 = sphi 0, %s43
    %s46 = sphi 0, %s45
    %s60 = sphi 0, %s46
    %s64 = sphi 0, %s64
    %s66 = sphi 0, %s64
    %s67 = sphi 0, %s66
    %s81 = sphi 0, %s67
    %s87 = sphi 0, %s89
    %s90 = sphi 0, %s87
    %s91 = sphi 0, %s90
    %s107 = sphi 0, %s91
  $region4: #{encoder_forward.10} parent=0 // loop_header_branch
    %12 = sbr.rel (%p10) target = $region8
  $region5: #{encoder_forward.10} parent=0 // loop_body
    %s14 = ssub.s32 %s9, 1
    %s15 = ssub.s32 %s9, 2
    %s16 = sadd.s32 %s9, 1
    %s17 = ssub.s32 %s9, %s16
    %p18 = scmp.eq.s32.totalorder %s17, 0
    %s20 = sadd.s32 %s19, 1
    %s21 = scalar_select %p18, %s19, %s20
    %p24 = pneg %p18
    %p25 = scmp.eq.s32.totalorder %s9, 1
    %p26 = por %p24, %p25
    %p27 = scmp.ne.s32.totalorder %s19, %s22
    %p28 = scmp.eq.s32.totalorder %s9, 0
    %p29 = por %p27, %p28
    %p30 = scmp.ne.s32.totalorder %s19, %s22
    %p31 = scmp.eq.s32.totalorder %s14, 1
    %p32 = por %p30, %p31
    %p33 = scmp.ne.s32.totalorder %s22, %s23
    %p34 = scmp.eq.s32.totalorder %s14, 0
    %p35 = por %p33, %p34
    %p36 = scmp.ne.s32.totalorder %s22, %s23
    %p37 = scmp.eq.s32.totalorder %s15, 1
    %p38 = por %p36, %p37
    %p40 = scmp.ne.s32.totalorder %s23, %s39
    %p41 = scmp.eq.s32.totalorder %s15, 0
    %p42 = por %p40, %p41
    %s44 = sadd.s32 %s43, 1
    %p47 = scmp.eq.s32.totalorder %s9, 1
    %p48 = scmp.ne.s32.totalorder %s43, %s45
    %p49 = scmp.eq.s32.totalorder %s9, 0
    %p50 = por %p48, %p49
    %p51 = scmp.ne.s32.totalorder %s43, %s45
    %p52 = scmp.eq.s32.totalorder %s14, 1
    %p53 = por %p51, %p52
    %p54 = scmp.ne.s32.totalorder %s45, %s46
    %p55 = scmp.eq.s32.totalorder %s14, 0
    %p56 = por %p54, %p55
    %p57 = scmp.ne.s32.totalorder %s45, %s46
    %p58 = scmp.eq.s32.totalorder %s15, 1
    %p59 = por %p57, %p58
    %p61 = scmp.ne.s32.totalorder %s46, %s60
    %p62 = scmp.eq.s32.totalorder %s15, 0
    %p63 = por %p61, %p62
    %s65 = sadd.s32 %s64, 1
    %p68 = scmp.eq.s32.totalorder %s9, 1
    %p69 = scmp.ne.s32.totalorder %s64, %s66
    %p70 = scmp.eq.s32.totalorder %s9, 0
    %p71 = por %p69, %p70
    %p72 = scmp.ne.s32.totalorder %s64, %s66
    %p73 = scmp.eq.s32.totalorder %s14, 1
    %p74 = por %p72, %p73
    %p75 = scmp.ne.s32.totalorder %s66, %s67
    %p76 = scmp.eq.s32.totalorder %s14, 0
    %p77 = por %p75, %p76
    %p78 = scmp.ne.s32.totalorder %s66, %s67
    %p79 = scmp.eq.s32.totalorder %s15, 1
    %p80 = por %p78, %p79
    %p82 = scmp.ne.s32.totalorder %s67, %s81
    %p83 = scmp.eq.s32.totalorder %s15, 0
    %p84 = por %p82, %p83
    %s85 = ssub.s32 %s9, %s16
    %p86 = scmp.eq.s32.totalorder %s85, 0
    %s88 = sadd.s32 %s87, 1
    %s89 = scalar_select %p86, %s87, %s88
    %p92 = pneg %p86
    %p93 = scmp.eq.s32.totalorder %s9, 1
    %p94 = por %p92, %p93
    %p95 = scmp.ne.s32.totalorder %s87, %s90
    %p96 = scmp.eq.s32.totalorder %s9, 0
    %p97 = por %p95, %p96
    %p98 = scmp.ne.s32.totalorder %s87, %s90
    %p99 = scmp.eq.s32.totalorder %s14, 1
    %p100 = por %p98, %p99
    %p101 = scmp.ne.s32.totalorder %s90, %s91
    %p102 = scmp.eq.s32.totalorder %s14, 0
    %p103 = por %p101, %p102
    %p104 = scmp.ne.s32.totalorder %s90, %s91
    %p105 = scmp.eq.s32.totalorder %s15, 1
    %p106 = por %p104, %p105
    %p108 = scmp.ne.s32.totalorder %s91, %s107
    %p109 = scmp.eq.s32.totalorder %s15, 0
    %p110 = por %p108, %p109
    %p111 = scmp.le.s32.totalorder 1, %s9
    %p112 = scmp.lt.s32.totalorder %s9, 3
    %p113 = pnand %p111, %p112
    %p114 = pneg %p113
    // Predicated region
    $region9: #{encoder_forward.10} parent=5 // pred_check
      _
    $region10: #{encoder_forward.10} parent=5 // pred_check_branch
      %116 = sbr.rel (%p113) target = $region12
    $region11: #{encoder_forward.10} parent=5 // pred_region
      %s117 = ssub.s32 %s9, 1
      // Predicated region
      $region13: #{encoder_forward.10} parent=11 // pred_check
        %p118 = pneg %p56
      $region14: #{encoder_forward.10} parent=11 // pred_check_branch
        %120 = sbr.rel (%p118) target = $region16
      $region15: #{encoder_forward.10} parent=11 // pred_region
        _
      $region16: #{encoder_forward.10} parent=11 // pred_fallthru
        _
      // Predicated region
      $region17: #{encoder_forward.10} parent=11 // pred_check
        %p121 = pneg %p77
      $region18: #{encoder_forward.10} parent=11 // pred_check_branch
        %123 = sbr.rel (%p121) target = $region20
      $region19: #{encoder_forward.10} parent=11 // pred_region
        _
      $region20: #{encoder_forward.10} parent=11 // pred_fallthru
        _
    $region12: #{encoder_forward.10} parent=5 // pred_fallthru
      _
    %p124 = scmp.lt.s32.totalorder %s9, 2
    // Predicated region
    $region21: #{encoder_forward.10} parent=5 // pred_check
      %p125 = pneg %p124
    $region22: #{encoder_forward.10} parent=5 // pred_check_branch
      %127 = sbr.rel (%p125) target = $region24
    $region23: #{encoder_forward.10} parent=5 // pred_region
      // Predicated region
      $region25: #{encoder_forward.10} parent=23 // pred_check
        %p128 = pneg %p29
      $region26: #{encoder_forward.10} parent=23 // pred_check_branch
        %130 = sbr.rel (%p128) target = $region28
      $region27: #{encoder_forward.10} parent=23 // pred_region
        %p131 = scmp.lt.s32.totalorder %s9, 1
        %s132 = scalar_select %p131, %s9, 1
        %s133 = smul.addr %s132, 8
        %s134 = scalar_lea.vmem %s0, %s133
      $region28: #{encoder_forward.10} parent=23 // pred_fallthru
        _
    $region24: #{encoder_forward.10} parent=5 // pred_fallthru
      _
    %p135 = scmp.le.s32.totalorder 1, %s9
    %p136 = scmp.lt.s32.totalorder %s9, 3
    %p137 = pnand %p135, %p136
    %p138 = pneg %p137
    // Predicated region
    $region29: #{encoder_forward.10} parent=5 // pred_check
      _
    $region30: #{encoder_forward.10} parent=5 // pred_check_branch
      %140 = sbr.rel (%p137) target = $region32
    $region31: #{encoder_forward.10} parent=5 // pred_region
      %s141 = ssub.s32 %s9, 1
      %p142 = scmp.lt.s32.totalorder %s14, 1
      %s143 = scalar_select %p142, %s14, 1
      %s144 = smul.addr %s143, 8
      %s145 = scalar_lea.vmem %s0, %s144
      %p146 = pneg %p35
      %p147 = pneg %p32
      %p148 = pneg %p56
      %p149 = pneg %p53
      %p150 = pneg %p77
      %p151 = pneg %p74
      %p152 = pneg %p103
      %p153 = pneg %p100
      %p154 = scmp.lt.s32.totalorder %s14, 1
      %s155 = scalar_select %p154, %s14, 1
      %s156 = smul.addr %s155, 2
      %s157 = scalar_lea.vmem %s3, %s156
      %p158 = scmp.lt.s32.totalorder %s14, 1
      %s159 = scalar_select %p158, %s14, 1
      %s160 = smul.addr %s159, 8
      %s161 = scalar_lea.vmem %s0, %s160
      %p162 = scmp.lt.s32.totalorder %s14, 1
      %s163 = scalar_select %p162, %s14, 1
      %s164 = smul.addr %s163, 2
      %s165 = scalar_lea.vmem %s3, %s164
      %v166 = vld [vmem:[%s161] sm:$0xf]
      %v167 = vld [vmem:[%s1] sm:$0xff]
      %v168 = vld [vmem:[%s1 + $0x8] sm:$0xff]
      %v169 = vld [vmem:[%s1 + $0x10] sm:$0xff]
      %v170 = vld [vmem:[%s1 + $0x18] sm:$0xff]
      %v171 = vld [vmem:[%s1 + $0x20] sm:$0xff]
      %v172 = vld [vmem:[%s1 + $0x28] sm:$0xff]
      %v173 = vld [vmem:[%s1 + $0x30] sm:$0xff]
      %v174 = vld [vmem:[%s1 + $0x38] sm:$0xff]
      %v175 = vld [vmem:[%s1 + $0x40] sm:$0xff]
      %v176 = vld [vmem:[%s1 + $0x48] sm:$0xff]
      %v177 = vld [vmem:[%s1 + $0x50] sm:$0xff]
      %v178 = vld [vmem:[%s1 + $0x58] sm:$0xff]
      %v179 = vld [vmem:[%s1 + $0x60] sm:$0xff]
      %v180 = vld [vmem:[%s1 + $0x68] sm:$0xff]
      %v181 = vld [vmem:[%s1 + $0x70] sm:$0xff]
      %v182 = vld [vmem:[%s1 + $0x78] sm:$0xff]
      %v183 = vld [vmem:[%s1 + $0x80] sm:$0xff]
      %v184 = vld [vmem:[%s1 + $0x88] sm:$0xff]
      %v185 = vld [vmem:[%s1 + $0x90] sm:$0xff]
      %v186 = vld [vmem:[%s1 + $0x98] sm:$0xff]
      %v187 = vld [vmem:[%s1 + $0xa0] sm:$0xff]
      %v188 = vld [vmem:[%s1 + $0xa8] sm:$0xff]
      %v189 = vld [vmem:[%s1 + $0xb0] sm:$0xff]
      %v190 = vld [vmem:[%s1 + $0xb8] sm:$0xff]
      %v191 = vld [vmem:[%s1 + $0xc0] sm:$0xff]
      %v192 = vld [vmem:[%s1 + $0xc8] sm:$0xff]
      %v193 = vld [vmem:[%s1 + $0xd0] sm:$0xff]
      %v194 = vld [vmem:[%s1 + $0xd8] sm:$0xff]
      %v195 = vld [vmem:[%s1 + $0xe0] sm:$0xff]
      %v196 = vld [vmem:[%s1 + $0xe8] sm:$0xff]
      %v197 = vld [vmem:[%s1 + $0xf0] sm:$0xff]
      %v198 = vld [vmem:[%s1 + $0xf8] sm:$0xff]
      %v199 = vld [vmem:[%s1 + $0x100] sm:$0xff]
      %v200 = vld [vmem:[%s1 + $0x108] sm:$0xff]
      %v201 = vld [vmem:[%s1 + $0x110] sm:$0xff]
      %v202 = vld [vmem:[%s1 + $0x118] sm:$0xff]
      %v203 = vld [vmem:[%s1 + $0x120] sm:$0xff]
      %v204 = vld [vmem:[%s1 + $0x128] sm:$0xff]
      %v205 = vld [vmem:[%s1 + $0x130] sm:$0xff]
      %v206 = vld [vmem:[%s1 + $0x138] sm:$0xff]
      %v207 = vld [vmem:[%s1 + $0x140] sm:$0xff]
      %v208 = vld [vmem:[%s1 + $0x148] sm:$0xff]
      %v209 = vld [vmem:[%s1 + $0x150] sm:$0xff]
      %v210 = vld [vmem:[%s1 + $0x158] sm:$0xff]
      %v211 = vld [vmem:[%s1 + $0x160] sm:$0xff]
      %v212 = vld [vmem:[%s1 + $0x168] sm:$0xff]
      %v213 = vld [vmem:[%s1 + $0x170] sm:$0xff]
      %v214 = vld [vmem:[%s1 + $0x178] sm:$0xff]
      %v215 = vld [vmem:[%s1 + $0x180] sm:$0xff]
      %v216 = vld [vmem:[%s1 + $0x188] sm:$0xff]
      %v217 = vld [vmem:[%s1 + $0x190] sm:$0xff]
      %v218 = vld [vmem:[%s1 + $0x198] sm:$0xff]
      %v219 = vld [vmem:[%s1 + $0x1a0] sm:$0xff]
      %v220 = vld [vmem:[%s1 + $0x1a8] sm:$0xff]
      %v221 = vld [vmem:[%s1 + $0x1b0] sm:$0xff]
      %v222 = vld [vmem:[%s1 + $0x1b8] sm:$0xff]
      %v223 = vld [vmem:[%s1 + $0x1c0] sm:$0xff]
      %v224 = vld [vmem:[%s1 + $0x1c8] sm:$0xff]
      %v225 = vld [vmem:[%s1 + $0x1d0] sm:$0xff]
      %v226 = vld [vmem:[%s1 + $0x1d8] sm:$0xff]
      %v227 = vld [vmem:[%s1 + $0x1e0] sm:$0xff]
      %v228 = vld [vmem:[%s1 + $0x1e8] sm:$0xff]
      %v229 = vld [vmem:[%s1 + $0x1f0] sm:$0xff]
      %v230 = vld [vmem:[%s1 + $0x1f8] sm:$0xff]
      %s231 = scalar_lea.vmem %s161, 4
      %v232 = vld [vmem:[%s231] sm:$0xf]
      %s233 = scalar_lea.vmem %s1, 512
      %v234 = vld [vmem:[%s233] sm:$0xff]
      %v235 = vld [vmem:[%s233 + $0x8] sm:$0xff]
      %v236 = vld [vmem:[%s233 + $0x10] sm:$0xff]
      %v237 = vld [vmem:[%s233 + $0x18] sm:$0xff]
      %v238 = vld [vmem:[%s233 + $0x20] sm:$0xff]
      %v239 = vld [vmem:[%s233 + $0x28] sm:$0xff]
      %v240 = vld [vmem:[%s233 + $0x30] sm:$0xff]
      %v241 = vld [vmem:[%s233 + $0x38] sm:$0xff]
      %v242 = vld [vmem:[%s233 + $0x40] sm:$0xff]
      %v243 = vld [vmem:[%s233 + $0x48] sm:$0xff]
      %v244 = vld [vmem:[%s233 + $0x50] sm:$0xff]
      %v245 = vld [vmem:[%s233 + $0x58] sm:$0xff]
      %v246 = vld [vmem:[%s233 + $0x60] sm:$0xff]
      %v247 = vld [vmem:[%s233 + $0x68] sm:$0xff]
      %v248 = vld [vmem:[%s233 + $0x70] sm:$0xff]
      %v249 = vld [vmem:[%s233 + $0x78] sm:$0xff]
      %v250 = vld [vmem:[%s233 + $0x80] sm:$0xff]
      %v251 = vld [vmem:[%s233 + $0x88] sm:$0xff]
      %v252 = vld [vmem:[%s233 + $0x90] sm:$0xff]
      %v253 = vld [vmem:[%s233 + $0x98] sm:$0xff]
      %v254 = vld [vmem:[%s233 + $0xa0] sm:$0xff]
      %v255 = vld [vmem:[%s233 + $0xa8] sm:$0xff]
      %v256 = vld [vmem:[%s233 + $0xb0] sm:$0xff]
      %v257 = vld [vmem:[%s233 + $0xb8] sm:$0xff]
      %v258 = vld [vmem:[%s233 + $0xc0] sm:$0xff]
      %v259 = vld [vmem:[%s233 + $0xc8] sm:$0xff]
      %v260 = vld [vmem:[%s233 + $0xd0] sm:$0xff]
      %v261 = vld [vmem:[%s233 + $0xd8] sm:$0xff]
      %v262 = vld [vmem:[%s233 + $0xe0] sm:$0xff]
      %v263 = vld [vmem:[%s233 + $0xe8] sm:$0xff]
      %v264 = vld [vmem:[%s233 + $0xf0] sm:$0xff]
      %v265 = vld [vmem:[%s233 + $0xf8] sm:$0xff]
      %v266 = vld [vmem:[%s233 + $0x100] sm:$0xff]
      %v267 = vld [vmem:[%s233 + $0x108] sm:$0xff]
      %v268 = vld [vmem:[%s233 + $0x110] sm:$0xff]
      %v269 = vld [vmem:[%s233 + $0x118] sm:$0xff]
      %v270 = vld [vmem:[%s233 + $0x120] sm:$0xff]
      %v271 = vld [vmem:[%s233 + $0x128] sm:$0xff]
      %v272 = vld [vmem:[%s233 + $0x130] sm:$0xff]
      %v273 = vld [vmem:[%s233 + $0x138] sm:$0xff]
      %v274 = vld [vmem:[%s233 + $0x140] sm:$0xff]
      %v275 = vld [vmem:[%s233 + $0x148] sm:$0xff]
      %v276 = vld [vmem:[%s233 + $0x150] sm:$0xff]
      %v277 = vld [vmem:[%s233 + $0x158] sm:$0xff]
      %v278 = vld [vmem:[%s233 + $0x160] sm:$0xff]
      %v279 = vld [vmem:[%s233 + $0x168] sm:$0xff]
      %v280 = vld [vmem:[%s233 + $0x170] sm:$0xff]
      %v281 = vld [vmem:[%s233 + $0x178] sm:$0xff]
      %v282 = vld [vmem:[%s233 + $0x180] sm:$0xff]
      %v283 = vld [vmem:[%s233 + $0x188] sm:$0xff]
      %v284 = vld [vmem:[%s233 + $0x190] sm:$0xff]
      %v285 = vld [vmem:[%s233 + $0x198] sm:$0xff]
      %v286 = vld [vmem:[%s233 + $0x1a0] sm:$0xff]
      %v287 = vld [vmem:[%s233 + $0x1a8] sm:$0xff]
      %v288 = vld [vmem:[%s233 + $0x1b0] sm:$0xff]
      %v289 = vld [vmem:[%s233 + $0x1b8] sm:$0xff]
      %v290 = vld [vmem:[%s233 + $0x1c0] sm:$0xff]
      %v291 = vld [vmem:[%s233 + $0x1c8] sm:$0xff]
      %v292 = vld [vmem:[%s233 + $0x1d0] sm:$0xff]
      %v293 = vld [vmem:[%s233 + $0x1d8] sm:$0xff]
      %v294 = vld [vmem:[%s233 + $0x1e0] sm:$0xff]
      %v295 = vld [vmem:[%s233 + $0x1e8] sm:$0xff]
      %v296 = vld [vmem:[%s233 + $0x1f0] sm:$0xff]
      %v297 = vld [vmem:[%s233 + $0x1f8] sm:$0xff]
      %v300 = vunpack.c.l.s4 1966171168
      %v301 = vunpack.c.0.s8 %v300
      %v302 = vlaneseq
      %v303 = vshrl.u32 %v302, 7
      %v304 = vsub.s32 %v301, %v303
      %v305 = vrot.slane %v232, %v304
      %v306 = vcombine.high %v305, %v305
      %v308 = vunpack.c.l.s4 1966171168
      %v309 = vunpack.c.0.s8 %v308
      %v310 = vlaneseq
      %v311 = vshrl.u32 %v310, 7
      %v312 = vsub.s32 %v309, %v311
      %v313 = vrot.slane %v305, %v312
      %v315 = vunpack.c.l.s4 1966171168
      %v316 = vunpack.c.0.s8 %v315
      %v317 = vlaneseq
      %v318 = vshrl.u32 %v317, 7
      %v319 = vsub.s32 %v316, %v318
      %v320 = vrot.slane %v306, %v319
      %v321 = vcombine.high %v313, %v313
      %v322 = vcombine.high %v320, %v320
      %v391 = vunpack.c.l.b16 %v234
      %v392 = vunpack.c.h.b16 %v234
      %v393 = vunpack.c.l.b16 %v235
      %v394 = vunpack.c.h.b16 %v235
      %v395 = vunpack.c.l.b16 %v236
      %v396 = vunpack.c.h.b16 %v236
      %v397 = vunpack.c.l.b16 %v237
      %v398 = vunpack.c.h.b16 %v237
      %v399 = vunpack.c.l.b16 %v238
      %v400 = vunpack.c.h.b16 %v238
      %v401 = vunpack.c.l.b16 %v239
      %v402 = vunpack.c.h.b16 %v239
      %v403 = vunpack.c.l.b16 %v240
      %v404 = vunpack.c.h.b16 %v240
      %v405 = vunpack.c.l.b16 %v241
      %v406 = vunpack.c.h.b16 %v241
      %v407 = vunpack.c.l.b16 %v242
      %v408 = vunpack.c.h.b16 %v242
      %v409 = vunpack.c.l.b16 %v243
      %v410 = vunpack.c.h.b16 %v243
      %v411 = vunpack.c.l.b16 %v244
      %v412 = vunpack.c.h.b16 %v244
      %v413 = vunpack.c.l.b16 %v245
      %v414 = vunpack.c.h.b16 %v245
      %v415 = vunpack.c.l.b16 %v246
      %v416 = vunpack.c.h.b16 %v246
      %v417 = vunpack.c.l.b16 %v247
      %v418 = vunpack.c.h.b16 %v247
      %v419 = vunpack.c.l.b16 %v248
      %v420 = vunpack.c.h.b16 %v248
      %v421 = vunpack.c.l.b16 %v249
      %v422 = vunpack.c.h.b16 %v249
      %v423 = vunpack.c.l.b16 %v250
      %v424 = vunpack.c.h.b16 %v250
      %v425 = vunpack.c.l.b16 %v251
      %v426 = vunpack.c.h.b16 %v251
      %v427 = vunpack.c.l.b16 %v252
      %v428 = vunpack.c.h.b16 %v252
      %v429 = vunpack.c.l.b16 %v253
      %v430 = vunpack.c.h.b16 %v253
      %v431 = vunpack.c.l.b16 %v254
      %v432 = vunpack.c.h.b16 %v254
      %v433 = vunpack.c.l.b16 %v255
      %v434 = vunpack.c.h.b16 %v255
      %v435 = vunpack.c.l.b16 %v256
      %v436 = vunpack.c.h.b16 %v256
      %v437 = vunpack.c.l.b16 %v257
      %v438 = vunpack.c.h.b16 %v257
      %v439 = vunpack.c.l.b16 %v258
      %v440 = vunpack.c.h.b16 %v258
      %v441 = vunpack.c.l.b16 %v259
      %v442 = vunpack.c.h.b16 %v259
      %v443 = vunpack.c.l.b16 %v260
      %v444 = vunpack.c.h.b16 %v260
      %v445 = vunpack.c.l.b16 %v261
      %v446 = vunpack.c.h.b16 %v261
      %v447 = vunpack.c.l.b16 %v262
      %v448 = vunpack.c.h.b16 %v262
      %v449 = vunpack.c.l.b16 %v263
      %v450 = vunpack.c.h.b16 %v263
      %v451 = vunpack.c.l.b16 %v264
      %v452 = vunpack.c.h.b16 %v264
      %v453 = vunpack.c.l.b16 %v265
      %v454 = vunpack.c.h.b16 %v265
      %v455 = vunpack.c.l.b16 %v266
      %v456 = vunpack.c.h.b16 %v266
      %v457 = vunpack.c.l.b16 %v267
      %v458 = vunpack.c.h.b16 %v267
      %v459 = vunpack.c.l.b16 %v268
      %v460 = vunpack.c.h.b16 %v268
      %v461 = vunpack.c.l.b16 %v269
      %v462 = vunpack.c.h.b16 %v269
      %v463 = vunpack.c.l.b16 %v270
      %v464 = vunpack.c.h.b16 %v270
      %v465 = vunpack.c.l.b16 %v271
      %v466 = vunpack.c.h.b16 %v271
      %v467 = vunpack.c.l.b16 %v272
      %v468 = vunpack.c.h.b16 %v272
      %v469 = vunpack.c.l.b16 %v273
      %v470 = vunpack.c.h.b16 %v273
      %v471 = vunpack.c.l.b16 %v274
      %v472 = vunpack.c.h.b16 %v274
      %v473 = vunpack.c.l.b16 %v275
      %v474 = vunpack.c.h.b16 %v275
      %v475 = vunpack.c.l.b16 %v276
      %v476 = vunpack.c.h.b16 %v276
      %v477 = vunpack.c.l.b16 %v277
      %v478 = vunpack.c.h.b16 %v277
      %v479 = vunpack.c.l.b16 %v278
      %v480 = vunpack.c.h.b16 %v278
      %v481 = vunpack.c.l.b16 %v279
      %v482 = vunpack.c.h.b16 %v279
      %v483 = vunpack.c.l.b16 %v280
      %v484 = vunpack.c.h.b16 %v280
      %v485 = vunpack.c.l.b16 %v281
      %v486 = vunpack.c.h.b16 %v281
      %v487 = vunpack.c.l.b16 %v282
      %v488 = vunpack.c.h.b16 %v282
      %v489 = vunpack.c.l.b16 %v283
      %v490 = vunpack.c.h.b16 %v283
      %v491 = vunpack.c.l.b16 %v284
      %v492 = vunpack.c.h.b16 %v284
      %v493 = vunpack.c.l.b16 %v285
      %v494 = vunpack.c.h.b16 %v285
      %v495 = vunpack.c.l.b16 %v286
      %v496 = vunpack.c.h.b16 %v286
      %v497 = vunpack.c.l.b16 %v287
      %v498 = vunpack.c.h.b16 %v287
      %v499 = vunpack.c.l.b16 %v288
      %v500 = vunpack.c.h.b16 %v288
      %v501 = vunpack.c.l.b16 %v289
      %v502 = vunpack.c.h.b16 %v289
      %v503 = vunpack.c.l.b16 %v290
      %v504 = vunpack.c.h.b16 %v290
      %v505 = vunpack.c.l.b16 %v291
      %v506 = vunpack.c.h.b16 %v291
      %v507 = vunpack.c.l.b16 %v292
      %v508 = vunpack.c.h.b16 %v292
      %v509 = vunpack.c.l.b16 %v293
      %v510 = vunpack.c.h.b16 %v293
      %v511 = vunpack.c.l.b16 %v294
      %v512 = vunpack.c.h.b16 %v294
      %v513 = vunpack.c.l.b16 %v295
      %v514 = vunpack.c.h.b16 %v295
      %v515 = vunpack.c.l.b16 %v296
      %v516 = vunpack.c.h.b16 %v296
      %v517 = vunpack.c.l.b16 %v297
      %v518 = vunpack.c.h.b16 %v297
      %v519 = vpack.c.b16 %v393, %v391
      %v520 = vpack.c.b16 %v394, %v392
      %v521 = vpack.c.b16 %v397, %v395
      %v522 = vpack.c.b16 %v398, %v396
      %v523 = vpack.c.b16 %v401, %v399
      %v524 = vpack.c.b16 %v402, %v400
      %v525 = vpack.c.b16 %v405, %v403
      %v526 = vpack.c.b16 %v406, %v404
      %v527 = vpack.c.b16 %v409, %v407
      %v528 = vpack.c.b16 %v410, %v408
      %v529 = vpack.c.b16 %v413, %v411
      %v530 = vpack.c.b16 %v414, %v412
      %v531 = vpack.c.b16 %v417, %v415
      %v532 = vpack.c.b16 %v418, %v416
      %v533 = vpack.c.b16 %v421, %v419
      %v534 = vpack.c.b16 %v422, %v420
      %v535 = vpack.c.b16 %v425, %v423
      %v536 = vpack.c.b16 %v426, %v424
      %v537 = vpack.c.b16 %v429, %v427
      %v538 = vpack.c.b16 %v430, %v428
      %v539 = vpack.c.b16 %v433, %v431
      %v540 = vpack.c.b16 %v434, %v432
      %v541 = vpack.c.b16 %v437, %v435
      %v542 = vpack.c.b16 %v438, %v436
      %v543 = vpack.c.b16 %v441, %v439
      %v544 = vpack.c.b16 %v442, %v440
      %v545 = vpack.c.b16 %v445, %v443
      %v546 = vpack.c.b16 %v446, %v444
      %v547 = vpack.c.b16 %v449, %v447
      %v548 = vpack.c.b16 %v450, %v448
      %v549 = vpack.c.b16 %v453, %v451
      %v550 = vpack.c.b16 %v454, %v452
      %v551 = vpack.c.b16 %v457, %v455
      %v552 = vpack.c.b16 %v458, %v456
      %v553 = vpack.c.b16 %v461, %v459
      %v554 = vpack.c.b16 %v462, %v460
      %v555 = vpack.c.b16 %v465, %v463
      %v556 = vpack.c.b16 %v466, %v464
      %v557 = vpack.c.b16 %v469, %v467
      %v558 = vpack.c.b16 %v470, %v468
      %v559 = vpack.c.b16 %v473, %v471
      %v560 = vpack.c.b16 %v474, %v472
      %v561 = vpack.c.b16 %v477, %v475
      %v562 = vpack.c.b16 %v478, %v476
      %v563 = vpack.c.b16 %v481, %v479
      %v564 = vpack.c.b16 %v482, %v480
      %v565 = vpack.c.b16 %v485, %v483
      %v566 = vpack.c.b16 %v486, %v484
      %v567 = vpack.c.b16 %v489, %v487
      %v568 = vpack.c.b16 %v490, %v488
      %v569 = vpack.c.b16 %v493, %v491
      %v570 = vpack.c.b16 %v494, %v492
      %v571 = vpack.c.b16 %v497, %v495
      %v572 = vpack.c.b16 %v498, %v496
      %v573 = vpack.c.b16 %v501, %v499
      %v574 = vpack.c.b16 %v502, %v500
      %v575 = vpack.c.b16 %v505, %v503
      %v576 = vpack.c.b16 %v506, %v504
      %v577 = vpack.c.b16 %v509, %v507
      %v578 = vpack.c.b16 %v510, %v508
      %v579 = vpack.c.b16 %v513, %v511
      %v580 = vpack.c.b16 %v514, %v512
      %v581 = vpack.c.b16 %v517, %v515
      %v582 = vpack.c.b16 %v518, %v516
      %647 = vmatprep.subr.bf16.mxu0 %v534
      %648 = vmatpush1.bf16.msra.mxu0 %v533
      %649 = vmatprep.subr.bf16.mxu0 %v532
      %650 = vmatpush1.bf16.msra.mxu0 %v531
      %651 = vmatprep.subr.bf16.mxu0 %v530
      %652 = vmatpush1.bf16.msra.mxu0 %v529
      %653 = vmatprep.subr.bf16.mxu0 %v528
      %654 = vmatpush1.bf16.msra.mxu0 %v527
      %655 = vmatprep.subr.bf16.mxu0 %v526
      %656 = vmatpush1.bf16.msra.mxu0 %v525
      %657 = vmatprep.subr.bf16.mxu0 %v524
      %658 = vmatpush1.bf16.msra.mxu0 %v523
      %659 = vmatprep.subr.bf16.mxu0 %v522
      %660 = vmatpush1.bf16.msra.mxu0 %v521
      %661 = vmatprep.subr.bf16.mxu0 %v520
      %662 = vmatpush1.bf16.msra.mxu0 %v519
      %663 = vmatprep.subr.bf16.mxu0 %v550
      %664 = vmatpush2.bf16.msra.mxu0 %v549
      %665 = vmatprep.subr.bf16.mxu0 %v548
      %666 = vmatpush2.bf16.msra.mxu0 %v547
      %667 = vmatprep.subr.bf16.mxu0 %v546
      %668 = vmatpush2.bf16.msra.mxu0 %v545
      %669 = vmatprep.subr.bf16.mxu0 %v544
      %670 = vmatpush2.bf16.msra.mxu0 %v543
      %671 = vmatprep.subr.bf16.mxu0 %v542
      %672 = vmatpush2.bf16.msra.mxu0 %v541
      %673 = vmatprep.subr.bf16.mxu0 %v540
      %674 = vmatpush2.bf16.msra.mxu0 %v539
      %675 = vmatprep.subr.bf16.mxu0 %v538
      %676 = vmatpush2.bf16.msra.mxu0 %v537
      %677 = vmatprep.subr.bf16.mxu0 %v536
      %678 = vmatpush2.bf16.msra.mxu0 %v535
      %679 = vmatprep.mubr.bf16.mxu0 %v320
      %680 = vmatmul.mubr.bf16.gmra.mxu0 %v313
      %v681 = vpop.f32.mrf.mxu0
      %v682 = vadd.f32 0.0, %v681
      %v683 = vpop.f32.mrf.mxu0
      %v684 = vadd.f32 0.0, %v683
      %v685 = vpop.f32.mrf.mxu0
      %v686 = vpop.f32.mrf.mxu0
      %687 = vdwg.mxu0
      %688 = vmatprep.subr.bf16.mxu0 %v566
      %689 = vmatpush1.bf16.msra.mxu0 %v565
      %690 = vmatprep.subr.bf16.mxu0 %v564
      %691 = vmatpush1.bf16.msra.mxu0 %v563
      %692 = vmatprep.subr.bf16.mxu0 %v562
      %693 = vmatpush1.bf16.msra.mxu0 %v561
      %694 = vmatprep.subr.bf16.mxu0 %v560
      %695 = vmatpush1.bf16.msra.mxu0 %v559
      %696 = vmatprep.subr.bf16.mxu0 %v558
      %697 = vmatpush1.bf16.msra.mxu0 %v557
      %698 = vmatprep.subr.bf16.mxu0 %v556
      %699 = vmatpush1.bf16.msra.mxu0 %v555
      %700 = vmatprep.subr.bf16.mxu0 %v554
      %701 = vmatpush1.bf16.msra.mxu0 %v553
      %702 = vmatprep.subr.bf16.mxu0 %v552
      %703 = vmatpush1.bf16.msra.mxu0 %v551
      %704 = vmatprep.subr.bf16.mxu0 %v582
      %705 = vmatpush2.bf16.msra.mxu0 %v581
      %706 = vmatprep.subr.bf16.mxu0 %v580
      %707 = vmatpush2.bf16.msra.mxu0 %v579
      %708 = vmatprep.subr.bf16.mxu0 %v578
      %709 = vmatpush2.bf16.msra.mxu0 %v577
      %710 = vmatprep.subr.bf16.mxu0 %v576
      %711 = vmatpush2.bf16.msra.mxu0 %v575
      %712 = vmatprep.subr.bf16.mxu0 %v574
      %713 = vmatpush2.bf16.msra.mxu0 %v573
      %714 = vmatprep.subr.bf16.mxu0 %v572
      %715 = vmatpush2.bf16.msra.mxu0 %v571
      %716 = vmatprep.subr.bf16.mxu0 %v570
      %717 = vmatpush2.bf16.msra.mxu0 %v569
      %718 = vmatprep.subr.bf16.mxu0 %v568
      %719 = vmatpush2.bf16.msra.mxu0 %v567
      %720 = vmatprep.mubr.bf16.mxu0 %v322
      %721 = vmatmul.mubr.bf16.gmra.mxu0 %v321
      %v722 = vpop.f32.mrf.mxu0
      %v723 = vadd.f32 %v682, %v722
      %v724 = vpop.f32.mrf.mxu0
      %v725 = vadd.f32 %v684, %v724
      %v726 = vpop.f32.mrf.mxu0
      %v727 = vpop.f32.mrf.mxu0
      %728 = vdwg.mxu0
      %v731 = vunpack.c.l.s4 1966171168
      %v732 = vunpack.c.0.s8 %v731
      %v733 = vlaneseq
      %v734 = vshrl.u32 %v733, 7
      %v735 = vsub.s32 %v732, %v734
      %v736 = vrot.slane %v166, %v735
      %v737 = vcombine.high %v736, %v736
      %v739 = vunpack.c.l.s4 1966171168
      %v740 = vunpack.c.0.s8 %v739
      %v741 = vlaneseq
      %v742 = vshrl.u32 %v741, 7
      %v743 = vsub.s32 %v740, %v742
      %v744 = vrot.slane %v736, %v743
      %v746 = vunpack.c.l.s4 1966171168
      %v747 = vunpack.c.0.s8 %v746
      %v748 = vlaneseq
      %v749 = vshrl.u32 %v748, 7
      %v750 = vsub.s32 %v747, %v749
      %v751 = vrot.slane %v737, %v750
      %v752 = vcombine.high %v744, %v744
      %v753 = vcombine.high %v751, %v751
      %v822 = vunpack.c.l.b16 %v167
      %v823 = vunpack.c.h.b16 %v167
      %v824 = vunpack.c.l.b16 %v168
      %v825 = vunpack.c.h.b16 %v168
      %v826 = vunpack.c.l.b16 %v169
      %v827 = vunpack.c.h.b16 %v169
      %v828 = vunpack.c.l.b16 %v170
      %v829 = vunpack.c.h.b16 %v170
      %v830 = vunpack.c.l.b16 %v171
      %v831 = vunpack.c.h.b16 %v171
      %v832 = vunpack.c.l.b16 %v172
      %v833 = vunpack.c.h.b16 %v172
      %v834 = vunpack.c.l.b16 %v173
      %v835 = vunpack.c.h.b16 %v173
      %v836 = vunpack.c.l.b16 %v174
      %v837 = vunpack.c.h.b16 %v174
      %v838 = vunpack.c.l.b16 %v175
      %v839 = vunpack.c.h.b16 %v175
      %v840 = vunpack.c.l.b16 %v176
      %v841 = vunpack.c.h.b16 %v176
      %v842 = vunpack.c.l.b16 %v177
      %v843 = vunpack.c.h.b16 %v177
      %v844 = vunpack.c.l.b16 %v178
      %v845 = vunpack.c.h.b16 %v178
      %v846 = vunpack.c.l.b16 %v179
      %v847 = vunpack.c.h.b16 %v179
      %v848 = vunpack.c.l.b16 %v180
      %v849 = vunpack.c.h.b16 %v180
      %v850 = vunpack.c.l.b16 %v181
      %v851 = vunpack.c.h.b16 %v181
      %v852 = vunpack.c.l.b16 %v182
      %v853 = vunpack.c.h.b16 %v182
      %v854 = vunpack.c.l.b16 %v183
      %v855 = vunpack.c.h.b16 %v183
      %v856 = vunpack.c.l.b16 %v184
      %v857 = vunpack.c.h.b16 %v184
      %v858 = vunpack.c.l.b16 %v185
      %v859 = vunpack.c.h.b16 %v185
      %v860 = vunpack.c.l.b16 %v186
      %v861 = vunpack.c.h.b16 %v186
      %v862 = vunpack.c.l.b16 %v187
      %v863 = vunpack.c.h.b16 %v187
      %v864 = vunpack.c.l.b16 %v188
      %v865 = vunpack.c.h.b16 %v188
      %v866 = vunpack.c.l.b16 %v189
      %v867 = vunpack.c.h.b16 %v189
      %v868 = vunpack.c.l.b16 %v190
      %v869 = vunpack.c.h.b16 %v190
      %v870 = vunpack.c.l.b16 %v191
      %v871 = vunpack.c.h.b16 %v191
      %v872 = vunpack.c.l.b16 %v192
      %v873 = vunpack.c.h.b16 %v192
      %v874 = vunpack.c.l.b16 %v193
      %v875 = vunpack.c.h.b16 %v193
      %v876 = vunpack.c.l.b16 %v194
      %v877 = vunpack.c.h.b16 %v194
      %v878 = vunpack.c.l.b16 %v195
      %v879 = vunpack.c.h.b16 %v195
      %v880 = vunpack.c.l.b16 %v196
      %v881 = vunpack.c.h.b16 %v196
      %v882 = vunpack.c.l.b16 %v197
      %v883 = vunpack.c.h.b16 %v197
      %v884 = vunpack.c.l.b16 %v198
      %v885 = vunpack.c.h.b16 %v198
      %v886 = vunpack.c.l.b16 %v199
      %v887 = vunpack.c.h.b16 %v199
      %v888 = vunpack.c.l.b16 %v200
      %v889 = vunpack.c.h.b16 %v200
      %v890 = vunpack.c.l.b16 %v201
      %v891 = vunpack.c.h.b16 %v201
      %v892 = vunpack.c.l.b16 %v202
      %v893 = vunpack.c.h.b16 %v202
      %v894 = vunpack.c.l.b16 %v203
      %v895 = vunpack.c.h.b16 %v203
      %v896 = vunpack.c.l.b16 %v204
      %v897 = vunpack.c.h.b16 %v204
      %v898 = vunpack.c.l.b16 %v205
      %v899 = vunpack.c.h.b16 %v205
      %v900 = vunpack.c.l.b16 %v206
      %v901 = vunpack.c.h.b16 %v206
      %v902 = vunpack.c.l.b16 %v207
      %v903 = vunpack.c.h.b16 %v207
      %v904 = vunpack.c.l.b16 %v208
      %v905 = vunpack.c.h.b16 %v208
      %v906 = vunpack.c.l.b16 %v209
      %v907 = vunpack.c.h.b16 %v209
      %v908 = vunpack.c.l.b16 %v210
      %v909 = vunpack.c.h.b16 %v210
      %v910 = vunpack.c.l.b16 %v211
      %v911 = vunpack.c.h.b16 %v211
      %v912 = vunpack.c.l.b16 %v212
      %v913 = vunpack.c.h.b16 %v212
      %v914 = vunpack.c.l.b16 %v213
      %v915 = vunpack.c.h.b16 %v213
      %v916 = vunpack.c.l.b16 %v214
      %v917 = vunpack.c.h.b16 %v214
      %v918 = vunpack.c.l.b16 %v215
      %v919 = vunpack.c.h.b16 %v215
      %v920 = vunpack.c.l.b16 %v216
      %v921 = vunpack.c.h.b16 %v216
      %v922 = vunpack.c.l.b16 %v217
      %v923 = vunpack.c.h.b16 %v217
      %v924 = vunpack.c.l.b16 %v218
      %v925 = vunpack.c.h.b16 %v218
      %v926 = vunpack.c.l.b16 %v219
      %v927 = vunpack.c.h.b16 %v219
      %v928 = vunpack.c.l.b16 %v220
      %v929 = vunpack.c.h.b16 %v220
      %v930 = vunpack.c.l.b16 %v221
      %v931 = vunpack.c.h.b16 %v221
      %v932 = vunpack.c.l.b16 %v222
      %v933 = vunpack.c.h.b16 %v222
      %v934 = vunpack.c.l.b16 %v223
      %v935 = vunpack.c.h.b16 %v223
      %v936 = vunpack.c.l.b16 %v224
      %v937 = vunpack.c.h.b16 %v224
      %v938 = vunpack.c.l.b16 %v225
      %v939 = vunpack.c.h.b16 %v225
      %v940 = vunpack.c.l.b16 %v226
      %v941 = vunpack.c.h.b16 %v226
      %v942 = vunpack.c.l.b16 %v227
      %v943 = vunpack.c.h.b16 %v227
      %v944 = vunpack.c.l.b16 %v228
      %v945 = vunpack.c.h.b16 %v228
      %v946 = vunpack.c.l.b16 %v229
      %v947 = vunpack.c.h.b16 %v229
      %v948 = vunpack.c.l.b16 %v230
      %v949 = vunpack.c.h.b16 %v230
      %v950 = vpack.c.b16 %v824, %v822
      %v951 = vpack.c.b16 %v825, %v823
      %v952 = vpack.c.b16 %v828, %v826
      %v953 = vpack.c.b16 %v829, %v827
      %v954 = vpack.c.b16 %v832, %v830
      %v955 = vpack.c.b16 %v833, %v831
      %v956 = vpack.c.b16 %v836, %v834
      %v957 = vpack.c.b16 %v837, %v835
      %v958 = vpack.c.b16 %v840, %v838
      %v959 = vpack.c.b16 %v841, %v839
      %v960 = vpack.c.b16 %v844, %v842
      %v961 = vpack.c.b16 %v845, %v843
      %v962 = vpack.c.b16 %v848, %v846
      %v963 = vpack.c.b16 %v849, %v847
      %v964 = vpack.c.b16 %v852, %v850
      %v965 = vpack.c.b16 %v853, %v851
      %v966 = vpack.c.b16 %v856, %v854
      %v967 = vpack.c.b16 %v857, %v855
      %v968 = vpack.c.b16 %v860, %v858
      %v969 = vpack.c.b16 %v861, %v859
      %v970 = vpack.c.b16 %v864, %v862
      %v971 = vpack.c.b16 %v865, %v863
      %v972 = vpack.c.b16 %v868, %v866
      %v973 = vpack.c.b16 %v869, %v867
      %v974 = vpack.c.b16 %v872, %v870
      %v975 = vpack.c.b16 %v873, %v871
      %v976 = vpack.c.b16 %v876, %v874
      %v977 = vpack.c.b16 %v877, %v875
      %v978 = vpack.c.b16 %v880, %v878
      %v979 = vpack.c.b16 %v881, %v879
      %v980 = vpack.c.b16 %v884, %v882
      %v981 = vpack.c.b16 %v885, %v883
      %v982 = vpack.c.b16 %v888, %v886
      %v983 = vpack.c.b16 %v889, %v887
      %v984 = vpack.c.b16 %v892, %v890
      %v985 = vpack.c.b16 %v893, %v891
      %v986 = vpack.c.b16 %v896, %v894
      %v987 = vpack.c.b16 %v897, %v895
      %v988 = vpack.c.b16 %v900, %v898
      %v989 = vpack.c.b16 %v901, %v899
      %v990 = vpack.c.b16 %v904, %v902
      %v991 = vpack.c.b16 %v905, %v903
      %v992 = vpack.c.b16 %v908, %v906
      %v993 = vpack.c.b16 %v909, %v907
      %v994 = vpack.c.b16 %v912, %v910
      %v995 = vpack.c.b16 %v913, %v911
      %v996 = vpack.c.b16 %v916, %v914
      %v997 = vpack.c.b16 %v917, %v915
      %v998 = vpack.c.b16 %v920, %v918
      %v999 = vpack.c.b16 %v921, %v919
      %v1000 = vpack.c.b16 %v924, %v922
      %v1001 = vpack.c.b16 %v925, %v923
      %v1002 = vpack.c.b16 %v928, %v926
      %v1003 = vpack.c.b16 %v929, %v927
      %v1004 = vpack.c.b16 %v932, %v930
      %v1005 = vpack.c.b16 %v933, %v931
      %v1006 = vpack.c.b16 %v936, %v934
      %v1007 = vpack.c.b16 %v937, %v935
      %v1008 = vpack.c.b16 %v940, %v938
      %v1009 = vpack.c.b16 %v941, %v939
      %v1010 = vpack.c.b16 %v944, %v942
      %v1011 = vpack.c.b16 %v945, %v943
      %v1012 = vpack.c.b16 %v948, %v946
      %v1013 = vpack.c.b16 %v949, %v947
      %1078 = vmatprep.subr.bf16.mxu0 %v965
      %1079 = vmatpush1.bf16.msra.mxu0 %v964
      %1080 = vmatprep.subr.bf16.mxu0 %v963
      %1081 = vmatpush1.bf16.msra.mxu0 %v962
      %1082 = vmatprep.subr.bf16.mxu0 %v961
      %1083 = vmatpush1.bf16.msra.mxu0 %v960
      %1084 = vmatprep.subr.bf16.mxu0 %v959
      %1085 = vmatpush1.bf16.msra.mxu0 %v958
      %1086 = vmatprep.subr.bf16.mxu0 %v957
      %1087 = vmatpush1.bf16.msra.mxu0 %v956
      %1088 = vmatprep.subr.bf16.mxu0 %v955
      %1089 = vmatpush1.bf16.msra.mxu0 %v954
      %1090 = vmatprep.subr.bf16.mxu0 %v953
      %1091 = vmatpush1.bf16.msra.mxu0 %v952
      %1092 = vmatprep.subr.bf16.mxu0 %v951
      %1093 = vmatpush1.bf16.msra.mxu0 %v950
      %1094 = vmatprep.subr.bf16.mxu0 %v981
      %1095 = vmatpush2.bf16.msra.mxu0 %v980
      %1096 = vmatprep.subr.bf16.mxu0 %v979
      %1097 = vmatpush2.bf16.msra.mxu0 %v978
      %1098 = vmatprep.subr.bf16.mxu0 %v977
      %1099 = vmatpush2.bf16.msra.mxu0 %v976
      %1100 = vmatprep.subr.bf16.mxu0 %v975
      %1101 = vmatpush2.bf16.msra.mxu0 %v974
      %1102 = vmatprep.subr.bf16.mxu0 %v973
      %1103 = vmatpush2.bf16.msra.mxu0 %v972
      %1104 = vmatprep.subr.bf16.mxu0 %v971
      %1105 = vmatpush2.bf16.msra.mxu0 %v970
      %1106 = vmatprep.subr.bf16.mxu0 %v969
      %1107 = vmatpush2.bf16.msra.mxu0 %v968
      %1108 = vmatprep.subr.bf16.mxu0 %v967
      %1109 = vmatpush2.bf16.msra.mxu0 %v966
      %1110 = vmatprep.mubr.bf16.mxu0 %v751
      %1111 = vmatmul.mubr.bf16.gmra.mxu0 %v744
      %v1112 = vpop.f32.mrf.mxu0
      %v1113 = vadd.f32 %v723, %v1112
      %v1114 = vpop.f32.mrf.mxu0
      %v1115 = vadd.f32 %v725, %v1114
      %v1116 = vpop.f32.mrf.mxu0
      %v1117 = vpop.f32.mrf.mxu0
      %1118 = vdwg.mxu0
      %1119 = vmatprep.subr.bf16.mxu0 %v997
      %1120 = vmatpush1.bf16.msra.mxu0 %v996
      %1121 = vmatprep.subr.bf16.mxu0 %v995
      %1122 = vmatpush1.bf16.msra.mxu0 %v994
      %1123 = vmatprep.subr.bf16.mxu0 %v993
      %1124 = vmatpush1.bf16.msra.mxu0 %v992
      %1125 = vmatprep.subr.bf16.mxu0 %v991
      %1126 = vmatpush1.bf16.msra.mxu0 %v990
      %1127 = vmatprep.subr.bf16.mxu0 %v989
      %1128 = vmatpush1.bf16.msra.mxu0 %v988
      %1129 = vmatprep.subr.bf16.mxu0 %v987
      %1130 = vmatpush1.bf16.msra.mxu0 %v986
      %1131 = vmatprep.subr.bf16.mxu0 %v985
      %1132 = vmatpush1.bf16.msra.mxu0 %v984
      %1133 = vmatprep.subr.bf16.mxu0 %v983
      %1134 = vmatpush1.bf16.msra.mxu0 %v982
      %1135 = vmatprep.subr.bf16.mxu0 %v1013
      %1136 = vmatpush2.bf16.msra.mxu0 %v1012
      %1137 = vmatprep.subr.bf16.mxu0 %v1011
      %1138 = vmatpush2.bf16.msra.mxu0 %v1010
      %1139 = vmatprep.subr.bf16.mxu0 %v1009
      %1140 = vmatpush2.bf16.msra.mxu0 %v1008
      %1141 = vmatprep.subr.bf16.mxu0 %v1007
      %1142 = vmatpush2.bf16.msra.mxu0 %v1006
      %1143 = vmatprep.subr.bf16.mxu0 %v1005
      %1144 = vmatpush2.bf16.msra.mxu0 %v1004
      %1145 = vmatprep.subr.bf16.mxu0 %v1003
      %1146 = vmatpush2.bf16.msra.mxu0 %v1002
      %1147 = vmatprep.subr.bf16.mxu0 %v1001
      %1148 = vmatpush2.bf16.msra.mxu0 %v1000
      %1149 = vmatprep.subr.bf16.mxu0 %v999
      %1150 = vmatpush2.bf16.msra.mxu0 %v998
      %1151 = vmatprep.mubr.bf16.mxu0 %v753
      %1152 = vmatmul.mubr.bf16.gmra.mxu0 %v752
      %v1153 = vpop.f32.mrf.mxu0
      %v1154 = vadd.f32 %v1113, %v1153
      %v1155 = vpop.f32.mrf.mxu0
      %v1156 = vadd.f32 %v1115, %v1155
      %v1157 = vpop.f32.mrf.mxu0
      %v1158 = vpop.f32.mrf.mxu0
      %1159 = vdwg.mxu0
      %v1160 = vld [vmem:[%s161] sm:$0xf]
      %s1161 = scalar_lea.vmem %s1, 1024
      %v1162 = vld [vmem:[%s1161] sm:$0xff]
      %v1163 = vld [vmem:[%s1161 + $0x8] sm:$0xff]
      %v1164 = vld [vmem:[%s1161 + $0x10] sm:$0xff]
      %v1165 = vld [vmem:[%s1161 + $0x18] sm:$0xff]
      %v1166 = vld [vmem:[%s1161 + $0x20] sm:$0xff]
      %v1167 = vld [vmem:[%s1161 + $0x28] sm:$0xff]
      %v1168 = vld [vmem:[%s1161 + $0x30] sm:$0xff]
      %v1169 = vld [vmem:[%s1161 + $0x38] sm:$0xff]
      %v1170 = vld [vmem:[%s1161 + $0x40] sm:$0xff]
      %v1171 = vld [vmem:[%s1161 + $0x48] sm:$0xff]
      %v1172 = vld [vmem:[%s1161 + $0x50] sm:$0xff]
      %v1173 = vld [vmem:[%s1161 + $0x58] sm:$0xff]
      %v1174 = vld [vmem:[%s1161 + $0x60] sm:$0xff]
      %v1175 = vld [vmem:[%s1161 + $0x68] sm:$0xff]
      %v1176 = vld [vmem:[%s1161 + $0x70] sm:$0xff]
      %v1177 = vld [vmem:[%s1161 + $0x78] sm:$0xff]
      %v1178 = vld [vmem:[%s1161 + $0x80] sm:$0xff]
      %v1179 = vld [vmem:[%s1161 + $0x88] sm:$0xff]
      %v1180 = vld [vmem:[%s1161 + $0x90] sm:$0xff]
      %v1181 = vld [vmem:[%s1161 + $0x98] sm:$0xff]
      %v1182 = vld [vmem:[%s1161 + $0xa0] sm:$0xff]
      %v1183 = vld [vmem:[%s1161 + $0xa8] sm:$0xff]
      %v1184 = vld [vmem:[%s1161 + $0xb0] sm:$0xff]
      %v1185 = vld [vmem:[%s1161 + $0xb8] sm:$0xff]
      %v1186 = vld [vmem:[%s1161 + $0xc0] sm:$0xff]
      %v1187 = vld [vmem:[%s1161 + $0xc8] sm:$0xff]
      %v1188 = vld [vmem:[%s1161 + $0xd0] sm:$0xff]
      %v1189 = vld [vmem:[%s1161 + $0xd8] sm:$0xff]
      %v1190 = vld [vmem:[%s1161 + $0xe0] sm:$0xff]
      %v1191 = vld [vmem:[%s1161 + $0xe8] sm:$0xff]
      %v1192 = vld [vmem:[%s1161 + $0xf0] sm:$0xff]
      %v1193 = vld [vmem:[%s1161 + $0xf8] sm:$0xff]
      %v1194 = vld [vmem:[%s1161 + $0x100] sm:$0xff]
      %v1195 = vld [vmem:[%s1161 + $0x108] sm:$0xff]
      %v1196 = vld [vmem:[%s1161 + $0x110] sm:$0xff]
      %v1197 = vld [vmem:[%s1161 + $0x118] sm:$0xff]
      %v1198 = vld [vmem:[%s1161 + $0x120] sm:$0xff]
      %v1199 = vld [vmem:[%s1161 + $0x128] sm:$0xff]
      %v1200 = vld [vmem:[%s1161 + $0x130] sm:$0xff]
      %v1201 = vld [vmem:[%s1161 + $0x138] sm:$0xff]
      %v1202 = vld [vmem:[%s1161 + $0x140] sm:$0xff]
      %v1203 = vld [vmem:[%s1161 + $0x148] sm:$0xff]
      %v1204 = vld [vmem:[%s1161 + $0x150] sm:$0xff]
      %v1205 = vld [vmem:[%s1161 + $0x158] sm:$0xff]
      %v1206 = vld [vmem:[%s1161 + $0x160] sm:$0xff]
      %v1207 = vld [vmem:[%s1161 + $0x168] sm:$0xff]
      %v1208 = vld [vmem:[%s1161 + $0x170] sm:$0xff]
      %v1209 = vld [vmem:[%s1161 + $0x178] sm:$0xff]
      %v1210 = vld [vmem:[%s1161 + $0x180] sm:$0xff]
      %v1211 = vld [vmem:[%s1161 + $0x188] sm:$0xff]
      %v1212 = vld [vmem:[%s1161 + $0x190] sm:$0xff]
      %v1213 = vld [vmem:[%s1161 + $0x198] sm:$0xff]
      %v1214 = vld [vmem:[%s1161 + $0x1a0] sm:$0xff]
      %v1215 = vld [vmem:[%s1161 + $0x1a8] sm:$0xff]
      %v1216 = vld [vmem:[%s1161 + $0x1b0] sm:$0xff]
      %v1217 = vld [vmem:[%s1161 + $0x1b8] sm:$0xff]
      %v1218 = vld [vmem:[%s1161 + $0x1c0] sm:$0xff]
      %v1219 = vld [vmem:[%s1161 + $0x1c8] sm:$0xff]
      %v1220 = vld [vmem:[%s1161 + $0x1d0] sm:$0xff]
      %v1221 = vld [vmem:[%s1161 + $0x1d8] sm:$0xff]
      %v1222 = vld [vmem:[%s1161 + $0x1e0] sm:$0xff]
      %v1223 = vld [vmem:[%s1161 + $0x1e8] sm:$0xff]
      %v1224 = vld [vmem:[%s1161 + $0x1f0] sm:$0xff]
      %v1225 = vld [vmem:[%s1161 + $0x1f8] sm:$0xff]
      %v1228 = vunpack.c.l.s4 1966171168
      %v1229 = vunpack.c.0.s8 %v1228
      %v1230 = vlaneseq
      %v1231 = vshrl.u32 %v1230, 7
      %v1232 = vsub.s32 %v1229, %v1231
      %v1233 = vrot.slane %v1160, %v1232
      %v1234 = vcombine.high %v1233, %v1233
      %v1236 = vunpack.c.l.s4 1966171168
      %v1237 = vunpack.c.0.s8 %v1236
      %v1238 = vlaneseq
      %v1239 = vshrl.u32 %v1238, 7
      %v1240 = vsub.s32 %v1237, %v1239
      %v1241 = vrot.slane %v1233, %v1240
      %v1243 = vunpack.c.l.s4 1966171168
      %v1244 = vunpack.c.0.s8 %v1243
      %v1245 = vlaneseq
      %v1246 = vshrl.u32 %v1245, 7
      %v1247 = vsub.s32 %v1244, %v1246
      %v1248 = vrot.slane %v1234, %v1247
      %v1249 = vcombine.high %v1241, %v1241
      %v1250 = vcombine.high %v1248, %v1248
      %v1252 = vshrl.u32 %v1241, 16
      %v1255 = vshrl.u32 %v1248, 16
      %v1258 = vshrl.u32 %v1249, 16
      %v1261 = vshrl.u32 %v1250, 16
      %v1331 = vunpack.c.l.b16 %v1162
      %v1332 = vunpack.c.h.b16 %v1162
      %v1333 = vunpack.c.l.b16 %v1163
      %v1334 = vunpack.c.h.b16 %v1163
      %v1335 = vunpack.c.l.b16 %v1164
      %v1336 = vunpack.c.h.b16 %v1164
      %v1337 = vunpack.c.l.b16 %v1165
      %v1338 = vunpack.c.h.b16 %v1165
      %v1339 = vunpack.c.l.b16 %v1166
      %v1340 = vunpack.c.h.b16 %v1166
      %v1341 = vunpack.c.l.b16 %v1167
      %v1342 = vunpack.c.h.b16 %v1167
      %v1343 = vunpack.c.l.b16 %v1168
      %v1344 = vunpack.c.h.b16 %v1168
      %v1345 = vunpack.c.l.b16 %v1169
      %v1346 = vunpack.c.h.b16 %v1169
      %v1347 = vunpack.c.l.b16 %v1170
      %v1348 = vunpack.c.h.b16 %v1170
      %v1349 = vunpack.c.l.b16 %v1171
      %v1350 = vunpack.c.h.b16 %v1171
      %v1351 = vunpack.c.l.b16 %v1172
      %v1352 = vunpack.c.h.b16 %v1172
      %v1353 = vunpack.c.l.b16 %v1173
      %v1354 = vunpack.c.h.b16 %v1173
      %v1355 = vunpack.c.l.b16 %v1174
      %v1356 = vunpack.c.h.b16 %v1174
      %v1357 = vunpack.c.l.b16 %v1175
      %v1358 = vunpack.c.h.b16 %v1175
      %v1359 = vunpack.c.l.b16 %v1176
      %v1360 = vunpack.c.h.b16 %v1176
      %v1361 = vunpack.c.l.b16 %v1177
      %v1362 = vunpack.c.h.b16 %v1177
      %v1363 = vunpack.c.l.b16 %v1178
      %v1364 = vunpack.c.h.b16 %v1178
      %v1365 = vunpack.c.l.b16 %v1179
      %v1366 = vunpack.c.h.b16 %v1179
      %v1367 = vunpack.c.l.b16 %v1180
      %v1368 = vunpack.c.h.b16 %v1180
      %v1369 = vunpack.c.l.b16 %v1181
      %v1370 = vunpack.c.h.b16 %v1181
      %v1371 = vunpack.c.l.b16 %v1182
      %v1372 = vunpack.c.h.b16 %v1182
      %v1373 = vunpack.c.l.b16 %v1183
      %v1374 = vunpack.c.h.b16 %v1183
      %v1375 = vunpack.c.l.b16 %v1184
      %v1376 = vunpack.c.h.b16 %v1184
      %v1377 = vunpack.c.l.b16 %v1185
      %v1378 = vunpack.c.h.b16 %v1185
      %v1379 = vunpack.c.l.b16 %v1186
      %v1380 = vunpack.c.h.b16 %v1186
      %v1381 = vunpack.c.l.b16 %v1187
      %v1382 = vunpack.c.h.b16 %v1187
      %v1383 = vunpack.c.l.b16 %v1188
      %v1384 = vunpack.c.h.b16 %v1188
      %v1385 = vunpack.c.l.b16 %v1189
      %v1386 = vunpack.c.h.b16 %v1189
      %v1387 = vunpack.c.l.b16 %v1190
      %v1388 = vunpack.c.h.b16 %v1190
      %v1389 = vunpack.c.l.b16 %v1191
      %v1390 = vunpack.c.h.b16 %v1191
      %v1391 = vunpack.c.l.b16 %v1192
      %v1392 = vunpack.c.h.b16 %v1192
      %v1393 = vunpack.c.l.b16 %v1193
      %v1394 = vunpack.c.h.b16 %v1193
      %v1395 = vunpack.c.l.b16 %v1194
      %v1396 = vunpack.c.h.b16 %v1194
      %v1397 = vunpack.c.l.b16 %v1195
      %v1398 = vunpack.c.h.b16 %v1195
      %v1399 = vunpack.c.l.b16 %v1196
      %v1400 = vunpack.c.h.b16 %v1196
      %v1401 = vunpack.c.l.b16 %v1197
      %v1402 = vunpack.c.h.b16 %v1197
      %v1403 = vunpack.c.l.b16 %v1198
      %v1404 = vunpack.c.h.b16 %v1198
      %v1405 = vunpack.c.l.b16 %v1199
      %v1406 = vunpack.c.h.b16 %v1199
      %v1407 = vunpack.c.l.b16 %v1200
      %v1408 = vunpack.c.h.b16 %v1200
      %v1409 = vunpack.c.l.b16 %v1201
      %v1410 = vunpack.c.h.b16 %v1201
      %v1411 = vunpack.c.l.b16 %v1202
      %v1412 = vunpack.c.h.b16 %v1202
      %v1413 = vunpack.c.l.b16 %v1203
      %v1414 = vunpack.c.h.b16 %v1203
      %v1415 = vunpack.c.l.b16 %v1204
      %v1416 = vunpack.c.h.b16 %v1204
      %v1417 = vunpack.c.l.b16 %v1205
      %v1418 = vunpack.c.h.b16 %v1205
      %v1419 = vunpack.c.l.b16 %v1206
      %v1420 = vunpack.c.h.b16 %v1206
      %v1421 = vunpack.c.l.b16 %v1207
      %v1422 = vunpack.c.h.b16 %v1207
      %v1423 = vunpack.c.l.b16 %v1208
      %v1424 = vunpack.c.h.b16 %v1208
      %v1425 = vunpack.c.l.b16 %v1209
      %v1426 = vunpack.c.h.b16 %v1209
      %v1427 = vunpack.c.l.b16 %v1210
      %v1428 = vunpack.c.h.b16 %v1210
      %v1429 = vunpack.c.l.b16 %v1211
      %v1430 = vunpack.c.h.b16 %v1211
      %v1431 = vunpack.c.l.b16 %v1212
      %v1432 = vunpack.c.h.b16 %v1212
      %v1433 = vunpack.c.l.b16 %v1213
      %v1434 = vunpack.c.h.b16 %v1213
      %v1435 = vunpack.c.l.b16 %v1214
      %v1436 = vunpack.c.h.b16 %v1214
      %v1437 = vunpack.c.l.b16 %v1215
      %v1438 = vunpack.c.h.b16 %v1215
      %v1439 = vunpack.c.l.b16 %v1216
      %v1440 = vunpack.c.h.b16 %v1216
      %v1441 = vunpack.c.l.b16 %v1217
      %v1442 = vunpack.c.h.b16 %v1217
      %v1443 = vunpack.c.l.b16 %v1218
      %v1444 = vunpack.c.h.b16 %v1218
      %v1445 = vunpack.c.l.b16 %v1219
      %v1446 = vunpack.c.h.b16 %v1219
      %v1447 = vunpack.c.l.b16 %v1220
      %v1448 = vunpack.c.h.b16 %v1220
      %v1449 = vunpack.c.l.b16 %v1221
      %v1450 = vunpack.c.h.b16 %v1221
      %v1451 = vunpack.c.l.b16 %v1222
      %v1452 = vunpack.c.h.b16 %v1222
      %v1453 = vunpack.c.l.b16 %v1223
      %v1454 = vunpack.c.h.b16 %v1223
      %v1455 = vunpack.c.l.b16 %v1224
      %v1456 = vunpack.c.h.b16 %v1224
      %v1457 = vunpack.c.l.b16 %v1225
      %v1458 = vunpack.c.h.b16 %v1225
      %v1459 = vpack.c.b16 %v1333, %v1331
      %v1460 = vpack.c.b16 %v1334, %v1332
      %v1461 = vpack.c.b16 %v1337, %v1335
      %v1462 = vpack.c.b16 %v1338, %v1336
      %v1463 = vpack.c.b16 %v1341, %v1339
      %v1464 = vpack.c.b16 %v1342, %v1340
      %v1465 = vpack.c.b16 %v1345, %v1343
      %v1466 = vpack.c.b16 %v1346, %v1344
      %v1467 = vpack.c.b16 %v1349, %v1347
      %v1468 = vpack.c.b16 %v1350, %v1348
      %v1469 = vpack.c.b16 %v1353, %v1351
      %v1470 = vpack.c.b16 %v1354, %v1352
      %v1471 = vpack.c.b16 %v1357, %v1355
      %v1472 = vpack.c.b16 %v1358, %v1356
      %v1473 = vpack.c.b16 %v1361, %v1359
      %v1474 = vpack.c.b16 %v1362, %v1360
      %v1475 = vpack.c.b16 %v1365, %v1363
      %v1476 = vpack.c.b16 %v1366, %v1364
      %v1477 = vpack.c.b16 %v1369, %v1367
      %v1478 = vpack.c.b16 %v1370, %v1368
      %v1479 = vpack.c.b16 %v1373, %v1371
      %v1480 = vpack.c.b16 %v1374, %v1372
      %v1481 = vpack.c.b16 %v1377, %v1375
      %v1482 = vpack.c.b16 %v1378, %v1376
      %v1483 = vpack.c.b16 %v1381, %v1379
      %v1484 = vpack.c.b16 %v1382, %v1380
      %v1485 = vpack.c.b16 %v1385, %v1383
      %v1486 = vpack.c.b16 %v1386, %v1384
      %v1487 = vpack.c.b16 %v1389, %v1387
      %v1488 = vpack.c.b16 %v1390, %v1388
      %v1489 = vpack.c.b16 %v1393, %v1391
      %v1490 = vpack.c.b16 %v1394, %v1392
      %v1491 = vpack.c.b16 %v1397, %v1395
      %v1492 = vpack.c.b16 %v1398, %v1396
      %v1493 = vpack.c.b16 %v1401, %v1399
      %v1494 = vpack.c.b16 %v1402, %v1400
      %v1495 = vpack.c.b16 %v1405, %v1403
      %v1496 = vpack.c.b16 %v1406, %v1404
      %v1497 = vpack.c.b16 %v1409, %v1407
      %v1498 = vpack.c.b16 %v1410, %v1408
      %v1499 = vpack.c.b16 %v1413, %v1411
      %v1500 = vpack.c.b16 %v1414, %v1412
      %v1501 = vpack.c.b16 %v1417, %v1415
      %v1502 = vpack.c.b16 %v1418, %v1416
      %v1503 = vpack.c.b16 %v1421, %v1419
      %v1504 = vpack.c.b16 %v1422, %v1420
      %v1505 = vpack.c.b16 %v1425, %v1423
      %v1506 = vpack.c.b16 %v1426, %v1424
      %v1507 = vpack.c.b16 %v1429, %v1427
      %v1508 = vpack.c.b16 %v1430, %v1428
      %v1509 = vpack.c.b16 %v1433, %v1431
      %v1510 = vpack.c.b16 %v1434, %v1432
      %v1511 = vpack.c.b16 %v1437, %v1435
      %v1512 = vpack.c.b16 %v1438, %v1436
      %v1513 = vpack.c.b16 %v1441, %v1439
      %v1514 = vpack.c.b16 %v1442, %v1440
      %v1515 = vpack.c.b16 %v1445, %v1443
      %v1516 = vpack.c.b16 %v1446, %v1444
      %v1517 = vpack.c.b16 %v1449, %v1447
      %v1518 = vpack.c.b16 %v1450, %v1448
      %v1519 = vpack.c.b16 %v1453, %v1451
      %v1520 = vpack.c.b16 %v1454, %v1452
      %v1521 = vpack.c.b16 %v1457, %v1455
      %v1522 = vpack.c.b16 %v1458, %v1456
      %1587 = vmatprep.subr.bf16.mxu0 %v1474
      %1588 = vmatpush1.bf16.msra.mxu0 %v1473
      %1589 = vmatprep.subr.bf16.mxu0 %v1472
      %1590 = vmatpush1.bf16.msra.mxu0 %v1471
      %1591 = vmatprep.subr.bf16.mxu0 %v1470
      %1592 = vmatpush1.bf16.msra.mxu0 %v1469
      %1593 = vmatprep.subr.bf16.mxu0 %v1468
      %1594 = vmatpush1.bf16.msra.mxu0 %v1467
      %1595 = vmatprep.subr.bf16.mxu0 %v1466
      %1596 = vmatpush1.bf16.msra.mxu0 %v1465
      %1597 = vmatprep.subr.bf16.mxu0 %v1464
      %1598 = vmatpush1.bf16.msra.mxu0 %v1463
      %1599 = vmatprep.subr.bf16.mxu0 %v1462
      %1600 = vmatpush1.bf16.msra.mxu0 %v1461
      %1601 = vmatprep.subr.bf16.mxu0 %v1460
      %1602 = vmatpush1.bf16.msra.mxu0 %v1459
      %1603 = vmatprep.subr.bf16.mxu0 %v1490
      %1604 = vmatpush2.bf16.msra.mxu0 %v1489
      %1605 = vmatprep.subr.bf16.mxu0 %v1488
      %1606 = vmatpush2.bf16.msra.mxu0 %v1487
      %1607 = vmatprep.subr.bf16.mxu0 %v1486
      %1608 = vmatpush2.bf16.msra.mxu0 %v1485
      %1609 = vmatprep.subr.bf16.mxu0 %v1484
      %1610 = vmatpush2.bf16.msra.mxu0 %v1483
      %1611 = vmatprep.subr.bf16.mxu0 %v1482
      %1612 = vmatpush2.bf16.msra.mxu0 %v1481
      %1613 = vmatprep.subr.bf16.mxu0 %v1480
      %1614 = vmatpush2.bf16.msra.mxu0 %v1479
      %1615 = vmatprep.subr.bf16.mxu0 %v1478
      %1616 = vmatpush2.bf16.msra.mxu0 %v1477
      %1617 = vmatprep.subr.bf16.mxu0 %v1476
      %1618 = vmatpush2.bf16.msra.mxu0 %v1475
      %1619 = vmatprep.mubr.bf16.mxu0 %v1255
      %1620 = vmatmul.mubr.bf16.gmra.mxu0 %v1252
      %v1621 = vpop.f32.mrf.mxu0
      %v1622 = vadd.f32 0.0, %v1621
      %v1623 = vpop.f32.mrf.mxu0
      %v1624 = vadd.f32 0.0, %v1623
      %v1625 = vpop.f32.mrf.mxu0
      %v1626 = vpop.f32.mrf.mxu0
      %1627 = vdwg.mxu0
      %1628 = vmatprep.subr.bf16.mxu0 %v1506
      %1629 = vmatpush1.bf16.msra.mxu0 %v1505
      %1630 = vmatprep.subr.bf16.mxu0 %v1504
      %1631 = vmatpush1.bf16.msra.mxu0 %v1503
      %1632 = vmatprep.subr.bf16.mxu0 %v1502
      %1633 = vmatpush1.bf16.msra.mxu0 %v1501
      %1634 = vmatprep.subr.bf16.mxu0 %v1500
      %1635 = vmatpush1.bf16.msra.mxu0 %v1499
      %1636 = vmatprep.subr.bf16.mxu0 %v1498
      %1637 = vmatpush1.bf16.msra.mxu0 %v1497
      %1638 = vmatprep.subr.bf16.mxu0 %v1496
      %1639 = vmatpush1.bf16.msra.mxu0 %v1495
      %1640 = vmatprep.subr.bf16.mxu0 %v1494
      %1641 = vmatpush1.bf16.msra.mxu0 %v1493
      %1642 = vmatprep.subr.bf16.mxu0 %v1492
      %1643 = vmatpush1.bf16.msra.mxu0 %v1491
      %1644 = vmatprep.subr.bf16.mxu0 %v1522
      %1645 = vmatpush2.bf16.msra.mxu0 %v1521
      %1646 = vmatprep.subr.bf16.mxu0 %v1520
      %1647 = vmatpush2.bf16.msra.mxu0 %v1519
      %1648 = vmatprep.subr.bf16.mxu0 %v1518
      %1649 = vmatpush2.bf16.msra.mxu0 %v1517
      %1650 = vmatprep.subr.bf16.mxu0 %v1516
      %1651 = vmatpush2.bf16.msra.mxu0 %v1515
      %1652 = vmatprep.subr.bf16.mxu0 %v1514
      %1653 = vmatpush2.bf16.msra.mxu0 %v1513
      %1654 = vmatprep.subr.bf16.mxu0 %v1512
      %1655 = vmatpush2.bf16.msra.mxu0 %v1511
      %1656 = vmatprep.subr.bf16.mxu0 %v1510
      %1657 = vmatpush2.bf16.msra.mxu0 %v1509
      %1658 = vmatprep.subr.bf16.mxu0 %v1508
      %1659 = vmatpush2.bf16.msra.mxu0 %v1507
      %1660 = vmatprep.mubr.bf16.mxu0 %v1261
      %1661 = vmatmul.mubr.bf16.gmra.mxu0 %v1258
      %v1662 = vpop.f32.mrf.mxu0
      %v1663 = vadd.f32 %v1622, %v1662
      %v1664 = vpop.f32.mrf.mxu0
      %v1665 = vadd.f32 %v1624, %v1664
      %v1666 = vpop.f32.mrf.mxu0
      %v1667 = vpop.f32.mrf.mxu0
      %1668 = vdwg.mxu0
      %v1669 = vadd.f32 %v1154, %v1663
      %v1670 = vadd.f32 %v1156, %v1665
      %v1671 = vld [vmem:[%s231] sm:$0xf]
      %s1672 = scalar_lea.vmem %s1, 1536
      %v1673 = vld [vmem:[%s1672] sm:$0xff]
      %v1674 = vld [vmem:[%s1672 + $0x8] sm:$0xff]
      %v1675 = vld [vmem:[%s1672 + $0x10] sm:$0xff]
      %v1676 = vld [vmem:[%s1672 + $0x18] sm:$0xff]
      %v1677 = vld [vmem:[%s1672 + $0x20] sm:$0xff]
      %v1678 = vld [vmem:[%s1672 + $0x28] sm:$0xff]
      %v1679 = vld [vmem:[%s1672 + $0x30] sm:$0xff]
      %v1680 = vld [vmem:[%s1672 + $0x38] sm:$0xff]
      %v1681 = vld [vmem:[%s1672 + $0x40] sm:$0xff]
      %v1682 = vld [vmem:[%s1672 + $0x48] sm:$0xff]
      %v1683 = vld [vmem:[%s1672 + $0x50] sm:$0xff]
      %v1684 = vld [vmem:[%s1672 + $0x58] sm:$0xff]
      %v1685 = vld [vmem:[%s1672 + $0x60] sm:$0xff]
      %v1686 = vld [vmem:[%s1672 + $0x68] sm:$0xff]
      %v1687 = vld [vmem:[%s1672 + $0x70] sm:$0xff]
      %v1688 = vld [vmem:[%s1672 + $0x78] sm:$0xff]
      %v1689 = vld [vmem:[%s1672 + $0x80] sm:$0xff]
      %v1690 = vld [vmem:[%s1672 + $0x88] sm:$0xff]
      %v1691 = vld [vmem:[%s1672 + $0x90] sm:$0xff]
      %v1692 = vld [vmem:[%s1672 + $0x98] sm:$0xff]
      %v1693 = vld [vmem:[%s1672 + $0xa0] sm:$0xff]
      %v1694 = vld [vmem:[%s1672 + $0xa8] sm:$0xff]
      %v1695 = vld [vmem:[%s1672 + $0xb0] sm:$0xff]
      %v1696 = vld [vmem:[%s1672 + $0xb8] sm:$0xff]
      %v1697 = vld [vmem:[%s1672 + $0xc0] sm:$0xff]
      %v1698 = vld [vmem:[%s1672 + $0xc8] sm:$0xff]
      %v1699 = vld [vmem:[%s1672 + $0xd0] sm:$0xff]
      %v1700 = vld [vmem:[%s1672 + $0xd8] sm:$0xff]
      %v1701 = vld [vmem:[%s1672 + $0xe0] sm:$0xff]
      %v1702 = vld [vmem:[%s1672 + $0xe8] sm:$0xff]
      %v1703 = vld [vmem:[%s1672 + $0xf0] sm:$0xff]
      %v1704 = vld [vmem:[%s1672 + $0xf8] sm:$0xff]
      %v1705 = vld [vmem:[%s1672 + $0x100] sm:$0xff]
      %v1706 = vld [vmem:[%s1672 + $0x108] sm:$0xff]
      %v1707 = vld [vmem:[%s1672 + $0x110] sm:$0xff]
      %v1708 = vld [vmem:[%s1672 + $0x118] sm:$0xff]
      %v1709 = vld [vmem:[%s1672 + $0x120] sm:$0xff]
      %v1710 = vld [vmem:[%s1672 + $0x128] sm:$0xff]
      %v1711 = vld [vmem:[%s1672 + $0x130] sm:$0xff]
      %v1712 = vld [vmem:[%s1672 + $0x138] sm:$0xff]
      %v1713 = vld [vmem:[%s1672 + $0x140] sm:$0xff]
      %v1714 = vld [vmem:[%s1672 + $0x148] sm:$0xff]
      %v1715 = vld [vmem:[%s1672 + $0x150] sm:$0xff]
      %v1716 = vld [vmem:[%s1672 + $0x158] sm:$0xff]
      %v1717 = vld [vmem:[%s1672 + $0x160] sm:$0xff]
      %v1718 = vld [vmem:[%s1672 + $0x168] sm:$0xff]
      %v1719 = vld [vmem:[%s1672 + $0x170] sm:$0xff]
      %v1720 = vld [vmem:[%s1672 + $0x178] sm:$0xff]
      %v1721 = vld [vmem:[%s1672 + $0x180] sm:$0xff]
      %v1722 = vld [vmem:[%s1672 + $0x188] sm:$0xff]
      %v1723 = vld [vmem:[%s1672 + $0x190] sm:$0xff]
      %v1724 = vld [vmem:[%s1672 + $0x198] sm:$0xff]
      %v1725 = vld [vmem:[%s1672 + $0x1a0] sm:$0xff]
      %v1726 = vld [vmem:[%s1672 + $0x1a8] sm:$0xff]
      %v1727 = vld [vmem:[%s1672 + $0x1b0] sm:$0xff]
      %v1728 = vld [vmem:[%s1672 + $0x1b8] sm:$0xff]
      %v1729 = vld [vmem:[%s1672 + $0x1c0] sm:$0xff]
      %v1730 = vld [vmem:[%s1672 + $0x1c8] sm:$0xff]
      %v1731 = vld [vmem:[%s1672 + $0x1d0] sm:$0xff]
      %v1732 = vld [vmem:[%s1672 + $0x1d8] sm:$0xff]
      %v1733 = vld [vmem:[%s1672 + $0x1e0] sm:$0xff]
      %v1734 = vld [vmem:[%s1672 + $0x1e8] sm:$0xff]
      %v1735 = vld [vmem:[%s1672 + $0x1f0] sm:$0xff]
      %v1736 = vld [vmem:[%s1672 + $0x1f8] sm:$0xff]
      %v1739 = vunpack.c.l.s4 1966171168
      %v1740 = vunpack.c.0.s8 %v1739
      %v1741 = vlaneseq
      %v1742 = vshrl.u32 %v1741, 7
      %v1743 = vsub.s32 %v1740, %v1742
      %v1744 = vrot.slane %v1671, %v1743
      %v1745 = vcombine.high %v1744, %v1744
      %v1747 = vunpack.c.l.s4 1966171168
      %v1748 = vunpack.c.0.s8 %v1747
      %v1749 = vlaneseq
      %v1750 = vshrl.u32 %v1749, 7
      %v1751 = vsub.s32 %v1748, %v1750
      %v1752 = vrot.slane %v1744, %v1751
      %v1754 = vunpack.c.l.s4 1966171168
      %v1755 = vunpack.c.0.s8 %v1754
      %v1756 = vlaneseq
      %v1757 = vshrl.u32 %v1756, 7
      %v1758 = vsub.s32 %v1755, %v1757
      %v1759 = vrot.slane %v1745, %v1758
      %v1760 = vcombine.high %v1752, %v1752
      %v1761 = vcombine.high %v1759, %v1759
      %v1763 = vshrl.u32 %v1752, 16
      %v1766 = vshrl.u32 %v1759, 16
      %v1769 = vshrl.u32 %v1760, 16
      %v1772 = vshrl.u32 %v1761, 16
      %v1842 = vunpack.c.l.b16 %v1673
      %v1843 = vunpack.c.h.b16 %v1673
      %v1844 = vunpack.c.l.b16 %v1674
      %v1845 = vunpack.c.h.b16 %v1674
      %v1846 = vunpack.c.l.b16 %v1675
      %v1847 = vunpack.c.h.b16 %v1675
      %v1848 = vunpack.c.l.b16 %v1676
      %v1849 = vunpack.c.h.b16 %v1676
      %v1850 = vunpack.c.l.b16 %v1677
      %v1851 = vunpack.c.h.b16 %v1677
      %v1852 = vunpack.c.l.b16 %v1678
      %v1853 = vunpack.c.h.b16 %v1678
      %v1854 = vunpack.c.l.b16 %v1679
      %v1855 = vunpack.c.h.b16 %v1679
      %v1856 = vunpack.c.l.b16 %v1680
      %v1857 = vunpack.c.h.b16 %v1680
      %v1858 = vunpack.c.l.b16 %v1681
      %v1859 = vunpack.c.h.b16 %v1681
      %v1860 = vunpack.c.l.b16 %v1682
      %v1861 = vunpack.c.h.b16 %v1682
      %v1862 = vunpack.c.l.b16 %v1683
      %v1863 = vunpack.c.h.b16 %v1683
      %v1864 = vunpack.c.l.b16 %v1684
      %v1865 = vunpack.c.h.b16 %v1684
      %v1866 = vunpack.c.l.b16 %v1685
      %v1867 = vunpack.c.h.b16 %v1685
      %v1868 = vunpack.c.l.b16 %v1686
      %v1869 = vunpack.c.h.b16 %v1686
      %v1870 = vunpack.c.l.b16 %v1687
      %v1871 = vunpack.c.h.b16 %v1687
      %v1872 = vunpack.c.l.b16 %v1688
      %v1873 = vunpack.c.h.b16 %v1688
      %v1874 = vunpack.c.l.b16 %v1689
      %v1875 = vunpack.c.h.b16 %v1689
      %v1876 = vunpack.c.l.b16 %v1690
      %v1877 = vunpack.c.h.b16 %v1690
      %v1878 = vunpack.c.l.b16 %v1691
      %v1879 = vunpack.c.h.b16 %v1691
      %v1880 = vunpack.c.l.b16 %v1692
      %v1881 = vunpack.c.h.b16 %v1692
      %v1882 = vunpack.c.l.b16 %v1693
      %v1883 = vunpack.c.h.b16 %v1693
      %v1884 = vunpack.c.l.b16 %v1694
      %v1885 = vunpack.c.h.b16 %v1694
      %v1886 = vunpack.c.l.b16 %v1695
      %v1887 = vunpack.c.h.b16 %v1695
      %v1888 = vunpack.c.l.b16 %v1696
      %v1889 = vunpack.c.h.b16 %v1696
      %v1890 = vunpack.c.l.b16 %v1697
      %v1891 = vunpack.c.h.b16 %v1697
      %v1892 = vunpack.c.l.b16 %v1698
      %v1893 = vunpack.c.h.b16 %v1698
      %v1894 = vunpack.c.l.b16 %v1699
      %v1895 = vunpack.c.h.b16 %v1699
      %v1896 = vunpack.c.l.b16 %v1700
      %v1897 = vunpack.c.h.b16 %v1700
      %v1898 = vunpack.c.l.b16 %v1701
      %v1899 = vunpack.c.h.b16 %v1701
      %v1900 = vunpack.c.l.b16 %v1702
      %v1901 = vunpack.c.h.b16 %v1702
      %v1902 = vunpack.c.l.b16 %v1703
      %v1903 = vunpack.c.h.b16 %v1703
      %v1904 = vunpack.c.l.b16 %v1704
      %v1905 = vunpack.c.h.b16 %v1704
      %v1906 = vunpack.c.l.b16 %v1705
      %v1907 = vunpack.c.h.b16 %v1705
      %v1908 = vunpack.c.l.b16 %v1706
      %v1909 = vunpack.c.h.b16 %v1706
      %v1910 = vunpack.c.l.b16 %v1707
      %v1911 = vunpack.c.h.b16 %v1707
      %v1912 = vunpack.c.l.b16 %v1708
      %v1913 = vunpack.c.h.b16 %v1708
      %v1914 = vunpack.c.l.b16 %v1709
      %v1915 = vunpack.c.h.b16 %v1709
      %v1916 = vunpack.c.l.b16 %v1710
      %v1917 = vunpack.c.h.b16 %v1710
      %v1918 = vunpack.c.l.b16 %v1711
      %v1919 = vunpack.c.h.b16 %v1711
      %v1920 = vunpack.c.l.b16 %v1712
      %v1921 = vunpack.c.h.b16 %v1712
      %v1922 = vunpack.c.l.b16 %v1713
      %v1923 = vunpack.c.h.b16 %v1713
      %v1924 = vunpack.c.l.b16 %v1714
      %v1925 = vunpack.c.h.b16 %v1714
      %v1926 = vunpack.c.l.b16 %v1715
      %v1927 = vunpack.c.h.b16 %v1715
      %v1928 = vunpack.c.l.b16 %v1716
      %v1929 = vunpack.c.h.b16 %v1716
      %v1930 = vunpack.c.l.b16 %v1717
      %v1931 = vunpack.c.h.b16 %v1717
      %v1932 = vunpack.c.l.b16 %v1718
      %v1933 = vunpack.c.h.b16 %v1718
      %v1934 = vunpack.c.l.b16 %v1719
      %v1935 = vunpack.c.h.b16 %v1719
      %v1936 = vunpack.c.l.b16 %v1720
      %v1937 = vunpack.c.h.b16 %v1720
      %v1938 = vunpack.c.l.b16 %v1721
      %v1939 = vunpack.c.h.b16 %v1721
      %v1940 = vunpack.c.l.b16 %v1722
      %v1941 = vunpack.c.h.b16 %v1722
      %v1942 = vunpack.c.l.b16 %v1723
      %v1943 = vunpack.c.h.b16 %v1723
      %v1944 = vunpack.c.l.b16 %v1724
      %v1945 = vunpack.c.h.b16 %v1724
      %v1946 = vunpack.c.l.b16 %v1725
      %v1947 = vunpack.c.h.b16 %v1725
      %v1948 = vunpack.c.l.b16 %v1726
      %v1949 = vunpack.c.h.b16 %v1726
      %v1950 = vunpack.c.l.b16 %v1727
      %v1951 = vunpack.c.h.b16 %v1727
      %v1952 = vunpack.c.l.b16 %v1728
      %v1953 = vunpack.c.h.b16 %v1728
      %v1954 = vunpack.c.l.b16 %v1729
      %v1955 = vunpack.c.h.b16 %v1729
      %v1956 = vunpack.c.l.b16 %v1730
      %v1957 = vunpack.c.h.b16 %v1730
      %v1958 = vunpack.c.l.b16 %v1731
      %v1959 = vunpack.c.h.b16 %v1731
      %v1960 = vunpack.c.l.b16 %v1732
      %v1961 = vunpack.c.h.b16 %v1732
      %v1962 = vunpack.c.l.b16 %v1733
      %v1963 = vunpack.c.h.b16 %v1733
      %v1964 = vunpack.c.l.b16 %v1734
      %v1965 = vunpack.c.h.b16 %v1734
      %v1966 = vunpack.c.l.b16 %v1735
      %v1967 = vunpack.c.h.b16 %v1735
      %v1968 = vunpack.c.l.b16 %v1736
      %v1969 = vunpack.c.h.b16 %v1736
      %v1970 = vpack.c.b16 %v1844, %v1842
      %v1971 = vpack.c.b16 %v1845, %v1843
      %v1972 = vpack.c.b16 %v1848, %v1846
      %v1973 = vpack.c.b16 %v1849, %v1847
      %v1974 = vpack.c.b16 %v1852, %v1850
      %v1975 = vpack.c.b16 %v1853, %v1851
      %v1976 = vpack.c.b16 %v1856, %v1854
      %v1977 = vpack.c.b16 %v1857, %v1855
      %v1978 = vpack.c.b16 %v1860, %v1858
      %v1979 = vpack.c.b16 %v1861, %v1859
      %v1980 = vpack.c.b16 %v1864, %v1862
      %v1981 = vpack.c.b16 %v1865, %v1863
      %v1982 = vpack.c.b16 %v1868, %v1866
      %v1983 = vpack.c.b16 %v1869, %v1867
      %v1984 = vpack.c.b16 %v1872, %v1870
      %v1985 = vpack.c.b16 %v1873, %v1871
      %v1986 = vpack.c.b16 %v1876, %v1874
      %v1987 = vpack.c.b16 %v1877, %v1875
      %v1988 = vpack.c.b16 %v1880, %v1878
      %v1989 = vpack.c.b16 %v1881, %v1879
      %v1990 = vpack.c.b16 %v1884, %v1882
      %v1991 = vpack.c.b16 %v1885, %v1883
      %v1992 = vpack.c.b16 %v1888, %v1886
      %v1993 = vpack.c.b16 %v1889, %v1887
      %v1994 = vpack.c.b16 %v1892, %v1890
      %v1995 = vpack.c.b16 %v1893, %v1891
      %v1996 = vpack.c.b16 %v1896, %v1894
      %v1997 = vpack.c.b16 %v1897, %v1895
      %v1998 = vpack.c.b16 %v1900, %v1898
      %v1999 = vpack.c.b16 %v1901, %v1899
      %v2000 = vpack.c.b16 %v1904, %v1902
      %v2001 = vpack.c.b16 %v1905, %v1903
      %v2002 = vpack.c.b16 %v1908, %v1906
      %v2003 = vpack.c.b16 %v1909, %v1907
      %v2004 = vpack.c.b16 %v1912, %v1910
      %v2005 = vpack.c.b16 %v1913, %v1911
      %v2006 = vpack.c.b16 %v1916, %v1914
      %v2007 = vpack.c.b16 %v1917, %v1915
      %v2008 = vpack.c.b16 %v1920, %v1918
      %v2009 = vpack.c.b16 %v1921, %v1919
      %v2010 = vpack.c.b16 %v1924, %v1922
      %v2011 = vpack.c.b16 %v1925, %v1923
      %v2012 = vpack.c.b16 %v1928, %v1926
      %v2013 = vpack.c.b16 %v1929, %v1927
      %v2014 = vpack.c.b16 %v1932, %v1930
      %v2015 = vpack.c.b16 %v1933, %v1931
      %v2016 = vpack.c.b16 %v1936, %v1934
      %v2017 = vpack.c.b16 %v1937, %v1935
      %v2018 = vpack.c.b16 %v1940, %v1938
      %v2019 = vpack.c.b16 %v1941, %v1939
      %v2020 = vpack.c.b16 %v1944, %v1942
      %v2021 = vpack.c.b16 %v1945, %v1943
      %v2022 = vpack.c.b16 %v1948, %v1946
      %v2023 = vpack.c.b16 %v1949, %v1947
      %v2024 = vpack.c.b16 %v1952, %v1950
      %v2025 = vpack.c.b16 %v1953, %v1951
      %v2026 = vpack.c.b16 %v1956, %v1954
      %v2027 = vpack.c.b16 %v1957, %v1955
      %v2028 = vpack.c.b16 %v1960, %v1958
      %v2029 = vpack.c.b16 %v1961, %v1959
      %v2030 = vpack.c.b16 %v1964, %v1962
      %v2031 = vpack.c.b16 %v1965, %v1963
      %v2032 = vpack.c.b16 %v1968, %v1966
      %v2033 = vpack.c.b16 %v1969, %v1967
      %2098 = vmatprep.subr.bf16.mxu0 %v1985
      %2099 = vmatpush1.bf16.msra.mxu0 %v1984
      %2100 = vmatprep.subr.bf16.mxu0 %v1983
      %2101 = vmatpush1.bf16.msra.mxu0 %v1982
      %2102 = vmatprep.subr.bf16.mxu0 %v1981
      %2103 = vmatpush1.bf16.msra.mxu0 %v1980
      %2104 = vmatprep.subr.bf16.mxu0 %v1979
      %2105 = vmatpush1.bf16.msra.mxu0 %v1978
      %2106 = vmatprep.subr.bf16.mxu0 %v1977
      %2107 = vmatpush1.bf16.msra.mxu0 %v1976
      %2108 = vmatprep.subr.bf16.mxu0 %v1975
      %2109 = vmatpush1.bf16.msra.mxu0 %v1974
      %2110 = vmatprep.subr.bf16.mxu0 %v1973
      %2111 = vmatpush1.bf16.msra.mxu0 %v1972
      %2112 = vmatprep.subr.bf16.mxu0 %v1971
      %2113 = vmatpush1.bf16.msra.mxu0 %v1970
      %2114 = vmatprep.subr.bf16.mxu0 %v2001
      %2115 = vmatpush2.bf16.msra.mxu0 %v2000
      %2116 = vmatprep.subr.bf16.mxu0 %v1999
      %2117 = vmatpush2.bf16.msra.mxu0 %v1998
      %2118 = vmatprep.subr.bf16.mxu0 %v1997
      %2119 = vmatpush2.bf16.msra.mxu0 %v1996
      %2120 = vmatprep.subr.bf16.mxu0 %v1995
      %2121 = vmatpush2.bf16.msra.mxu0 %v1994
      %2122 = vmatprep.subr.bf16.mxu0 %v1993
      %2123 = vmatpush2.bf16.msra.mxu0 %v1992
      %2124 = vmatprep.subr.bf16.mxu0 %v1991
      %2125 = vmatpush2.bf16.msra.mxu0 %v1990
      %2126 = vmatprep.subr.bf16.mxu0 %v1989
      %2127 = vmatpush2.bf16.msra.mxu0 %v1988
      %2128 = vmatprep.subr.bf16.mxu0 %v1987
      %2129 = vmatpush2.bf16.msra.mxu0 %v1986
      %2130 = vmatprep.mubr.bf16.mxu0 %v1766
      %2131 = vmatmul.mubr.bf16.gmra.mxu0 %v1763
      %v2132 = vpop.f32.mrf.mxu0
      %v2133 = vadd.f32 0.0, %v2132
      %v2134 = vpop.f32.mrf.mxu0
      %v2135 = vadd.f32 0.0, %v2134
      %v2136 = vpop.f32.mrf.mxu0
      %v2137 = vpop.f32.mrf.mxu0
      %2138 = vdwg.mxu0
      %2139 = vmatprep.subr.bf16.mxu0 %v2017
      %2140 = vmatpush1.bf16.msra.mxu0 %v2016
      %2141 = vmatprep.subr.bf16.mxu0 %v2015
      %2142 = vmatpush1.bf16.msra.mxu0 %v2014
      %2143 = vmatprep.subr.bf16.mxu0 %v2013
      %2144 = vmatpush1.bf16.msra.mxu0 %v2012
      %2145 = vmatprep.subr.bf16.mxu0 %v2011
      %2146 = vmatpush1.bf16.msra.mxu0 %v2010
      %2147 = vmatprep.subr.bf16.mxu0 %v2009
      %2148 = vmatpush1.bf16.msra.mxu0 %v2008
      %2149 = vmatprep.subr.bf16.mxu0 %v2007
      %2150 = vmatpush1.bf16.msra.mxu0 %v2006
      %2151 = vmatprep.subr.bf16.mxu0 %v2005
      %2152 = vmatpush1.bf16.msra.mxu0 %v2004
      %2153 = vmatprep.subr.bf16.mxu0 %v2003
      %2154 = vmatpush1.bf16.msra.mxu0 %v2002
      %2155 = vmatprep.subr.bf16.mxu0 %v2033
      %2156 = vmatpush2.bf16.msra.mxu0 %v2032
      %2157 = vmatprep.subr.bf16.mxu0 %v2031
      %2158 = vmatpush2.bf16.msra.mxu0 %v2030
      %2159 = vmatprep.subr.bf16.mxu0 %v2029
      %2160 = vmatpush2.bf16.msra.mxu0 %v2028
      %2161 = vmatprep.subr.bf16.mxu0 %v2027
      %2162 = vmatpush2.bf16.msra.mxu0 %v2026
      %2163 = vmatprep.subr.bf16.mxu0 %v2025
      %2164 = vmatpush2.bf16.msra.mxu0 %v2024
      %2165 = vmatprep.subr.bf16.mxu0 %v2023
      %2166 = vmatpush2.bf16.msra.mxu0 %v2022
      %2167 = vmatprep.subr.bf16.mxu0 %v2021
      %2168 = vmatpush2.bf16.msra.mxu0 %v2020
      %2169 = vmatprep.subr.bf16.mxu0 %v2019
      %2170 = vmatpush2.bf16.msra.mxu0 %v2018
      %2171 = vmatprep.mubr.bf16.mxu0 %v1772
      %2172 = vmatmul.mubr.bf16.gmra.mxu0 %v1769
      %v2173 = vpop.f32.mrf.mxu0
      %v2174 = vadd.f32 %v2133, %v2173
      %v2175 = vpop.f32.mrf.mxu0
      %v2176 = vadd.f32 %v2135, %v2175
      %v2177 = vpop.f32.mrf.mxu0
      %v2178 = vpop.f32.mrf.mxu0
      %2179 = vdwg.mxu0
      %v2180 = vadd.f32 %v1669, %v2174
      %v2181 = vadd.f32 %v1670, %v2176
      %v2182 = vld [vmem:[%s2] ss:$2 sm:$0x3]
      %v2184 = vlaneseq
      %v2185 = vshrl.u32 %v2184, 7
      %v2186 = vsub.s32 0, %v2185
      %v2187 = vrot.slane %v2182, %v2186
      %v2188 = vlaneseq
      %v2189 = vshrl.u32 %v2188, 7
      %v2190 = vsub.s32 1, %v2189
      %v2191 = vrot.slane %v2182, %v2190
      %v2194 = vmul.f32 %v2180, %v2187
      %v2195 = vmul.f32 %v2181, %v2191
      %s2196 = scalar_lea.vmem %s2, 1
      %v2197 = vld [vmem:[%s2196] ss:$2 sm:$0x3]
      %v2199 = vlaneseq
      %v2200 = vshrl.u32 %v2199, 7
      %v2201 = vsub.s32 0, %v2200
      %v2202 = vrot.slane %v2197, %v2201
      %v2203 = vlaneseq
      %v2204 = vshrl.u32 %v2203, 7
      %v2205 = vsub.s32 1, %v2204
      %v2206 = vrot.slane %v2197, %v2205
      %v2209 = vadd.f32 %v2194, %v2202
      %v2210 = vadd.f32 %v2195, %v2206
      %v2211 = vmax.f32 %v2209, 0.0
      %v2212 = vmax.f32 %v2210, 0.0
      %v2213 = vpack.c.bf16 %v2211, %v2211
      %v2214 = vpack.c.bf16 %v2212, %v2212
      %v2217 = vcombine.low %v2213, %v2214
      %v2219 = vunpack.c.l.s4 1966171168
      %v2220 = vunpack.c.0.s8 %v2219
      %v2221 = vlaneseq
      %v2222 = vshrl.u32 %v2221, 7
      %v2223 = vsub.s32 %v2220, %v2222
      %v2224 = vrot.slane %v2217, %v2223
      %v2226 = vunpack.c.l.s4 1966171168
      %v2227 = vunpack.c.0.s8 %v2226
      %v2228 = vlaneseq
      %v2229 = vshrl.u32 %v2228, 7
      %v2230 = vsub.s32 %v2227, %v2229
      %v2231 = vrot.slane %v2224, %v2230
      %vm2233 = vcmask 1040384
      %vm2234 = vsmask.f32 256
      %vm2235 = vmand %vm2233, %vm2234
      %vm2236 = vcmask 1041409
      %vm2237 = vsmask.f32 1280
      %vm2238 = vmand %vm2236, %vm2237
      %vm2239 = vmor %vm2238, %vm2235
      %v2240 = vld [vmem:[%s165] sm:$0x3]
      %v2241 = vsel %vm2239, %v2231, %v2240
      %2242 = vst [vmem:[%s165] sm:$0x3] %v2241
      %p2243 = scmp.lt.s32.totalorder %s14, 1
      %s2244 = scalar_select %p2243, %s14, 1
      %s2245 = smul.addr %s2244, 2
      %s2246 = scalar_lea.vmem %s3, %s2245
      // Predicated region
      $region33: #{encoder_forward.10} parent=31 // pred_check
        %p2247 = pneg %p100
      $region34: #{encoder_forward.10} parent=31 // pred_check_branch
        %2249 = sbr.rel (%p2247) target = $region36
      $region35: #{encoder_forward.10} parent=31 // pred_region
        _
      $region36: #{encoder_forward.10} parent=31 // pred_fallthru
        _
    $region32: #{encoder_forward.10} parent=5 // pred_fallthru
      _
    %p2250 = scmp.le.s32.totalorder 2, %s9
    // Predicated region
    $region37: #{encoder_forward.10} parent=5 // pred_check
      %p2251 = pneg %p2250
    $region38: #{encoder_forward.10} parent=5 // pred_check_branch
      %2253 = sbr.rel (%p2251) target = $region40
    $region39: #{encoder_forward.10} parent=5 // pred_region
      %s2254 = ssub.s32 %s9, 2
      // Predicated region
      $region41: #{encoder_forward.10} parent=39 // pred_check
        %p2255 = pneg %p106
      $region42: #{encoder_forward.10} parent=39 // pred_check_branch
        %2257 = sbr.rel (%p2255) target = $region44
      $region43: #{encoder_forward.10} parent=39 // pred_region
        %p2258 = scmp.lt.s32.totalorder %s15, 1
        %s2259 = scalar_select %p2258, %s15, 1
        %s2260 = smul.addr %s2259, 2
        %s2261 = scalar_lea.vmem %s3, %s2260
      $region44: #{encoder_forward.10} parent=39 // pred_fallthru
        _
    $region40: #{encoder_forward.10} parent=5 // pred_fallthru
      _
  $region6: #{encoder_forward.10} parent=0 // loop_footer
    %s13 = sadd.s32 1, %s9
  $region7: #{encoder_forward.10} parent=0 // loop_footer_branch
    %8 = sbr.rel target = $region3
  $region8: #{encoder_forward.10} parent=0 // loop_exit
    _

</llo_original>
